<compile_context>
chip_gen: v7x
topology: tpu7x:2x2x1
jax: 0.10.0
libtpu: 0.0.40
codegen_flags: <defaults>
</compile_context>

<pallas_src>
import functools

import jax
import jax.numpy as jnp
from jax.experimental import pallas as pl
from jax.experimental.pallas import tpu as pltpu

# Keep the f32 reference and the f32 kernel path numerically tight.
jax.config.update("jax_default_matmul_precision", "highest")

VMEM = pltpu.MemorySpace.VMEM
SMEM = pltpu.MemorySpace.SMEM

# Set to jnp.bfloat16 on v6e/v7x for full-rate MXU (re-derive tolerances first).
MATMUL_DTYPE = jnp.float32
# 0/1 mask is exact in bf16 -> free bandwidth/VMEM saving.
ADJ_DTYPE = jnp.bfloat16
# Dense edge attrs (dominant HBM stream) stored half-width; upcast to f32 in-kernel.
E3_DTYPE = jnp.bfloat16

LEAKY_SLOPE = 0.01      # F.leaky_relu default negative_slope
NEG_BIG = 1e30          # additive softmax-mask magnitude


def _round_up(x, m):
    return (x + m - 1) // m * m


def _vmem_capacity_bytes():
    """Generation-aware VMEM capacity (v5e/v6e: 128 MiB, v7x: 64 MiB per TC)."""
    try:
        return int(pltpu.get_tpu_info().vmem_capacity_bytes)
    except Exception:
        return 64 * 2**20   # conservative fallback = v7x per-TensorCore VMEM


def _compiler_params(n_parallel_axes=1):
    cap = _vmem_capacity_bytes()
    return pltpu.CompilerParams(
        dimension_semantics=("parallel",) * n_parallel_axes,
        vmem_limit_bytes=min(int(0.8 * cap), 112 * 2**20))


def _elu(x):
    return jnp.where(x > 0, x, jnp.exp(jnp.minimum(x, 0.0)) - 1.0)


def _mm(a, b):
    """MXU matmul, f32 accumulation, explicit highest precision."""
    return jnp.dot(a.astype(MATMUL_DTYPE), b.astype(MATMUL_DTYPE),
                   preferred_element_type=jnp.float32,
                   precision=jax.lax.Precision.HIGHEST)


# ----------------------------------------------------------------------------
# Kernel 1: input projection  h = elu(x @ W^T + b), row-gridded & pipelined
# ----------------------------------------------------------------------------
def _proj_kernel(x_ref, w_ref, b_ref, o_ref):
    o_ref[...] = _elu(_mm(x_ref[...], w_ref[...]) + b_ref[...])


def _choose_row_tile(n, requested=None, cap=512):
    full = _round_up(max(n, 8), 8)
    if requested is not None:
        return min(max(8, _round_up(requested, 8)), full)
    return min(cap, full)


def project_inputs_one(x, w, b, *, row_tile=None):
    n, fin = x.shape
    h = w.shape[0]
    tile = _choose_row_tile(n, row_tile)
    grid = (pl.cdiv(n, tile),)
    return pl.pallas_call(
        _proj_kernel,
        out_shape=jax.ShapeDtypeStruct((n, h), jnp.float32),
        grid=grid,
        in_specs=[
            pl.BlockSpec((tile, fin), lambda i: (i, 0)),
            pl.BlockSpec((fin, h), lambda i: (0, 0)),
            pl.BlockSpec((1, h), lambda i: (0, 0)),
        ],
        out_specs=pl.BlockSpec((tile, h), lambda i: (i, 0)),
        compiler_params=_compiler_params(1),
    )(x, w.T, b.reshape(1, -1))


# ----------------------------------------------------------------------------
# Kernel 2: one BipartiteAttentionConv direction (dense masked-softmax attention)
# fused with the residual (+ x_dst) and the ELU that encode() applies afterwards.
# Gridded over destination-node tiles ("parallel": 2-TC split on v7x).
# Xs (projected sources) and a_src (source attention logits) are PRECOMPUTED per
# direction per layer and stay VMEM-resident across the grid.
# ----------------------------------------------------------------------------
def _bip_attn_kernel(v_e_ref,                 # SMEM [edge_dim] : att_edge @ W_edge
                     xs_proj_ref,             # [Ns,H]  = x_src @ W_src^T (resident)
                     a_src_ref,               # [1,Ns]  source attention logits
                     xd_ref,                  # [T,Hin] dst-node tile
                     u_dst_ref,               # [Hin,1] = (att_dst @ W_dst)^T
                     weT_ref,                 # [edge_dim,H]
                     e3_ref,                  # [edge_dim,T,Ns] tile
                     adj_ref,                 # [T,Ns] 0/1 mask tile
                     o_ref,                   # [T,H]
                     *, edge_dim):
    adj = adj_ref[...].astype(jnp.float32)
    xd = xd_ref[...]

    # per-dst attention term (tiny matvec; x_dst is needed for the residual anyway)
    a_dst = _mm(xd, u_dst_ref[...])                                          # [T,1]

    # edge attention term; the additive softmax mask is folded into its seed
    # ((adj-1)*BIG = -BIG at non-edges, 0 at edges) -> no extra where/select.
    a_edge = (adj - 1.0) * jnp.float32(NEG_BIG)
    for k in range(edge_dim):                       # static unroll, edge_dim tiny
        a_edge = a_edge + v_e_ref[k] * e3_ref[k].astype(jnp.float32)

    score = a_dst + a_src_ref[...] + a_edge                                  # [T,Ns]
    score = jnp.where(score > 0, score, LEAKY_SLOPE * score)                 # leaky_relu

    # masked softmax over the source axis (== PyG scatter-softmax over dst groups).
    # Empty dst rows -> p = 0 everywhere -> alpha = 0 -> out = x_dst (matches PyG).
    m = jnp.max(score, axis=1, keepdims=True)
    p = jnp.exp(score - m) * adj
    denom = jnp.sum(p, axis=1, keepdims=True)
    alpha = p / jnp.maximum(denom, jnp.float32(1e-30))   # exact divide (tolerance!)

    # message aggregation:  sum_j alpha_ij * (x_src_proj[j] + edge_proj[i,j])
    out = _mm(alpha, xs_proj_ref[...])                                       # [T,H]
    for k in range(edge_dim):
        c_k = jnp.sum(alpha * e3_ref[k].astype(jnp.float32), axis=1, keepdims=True)
        out = out + c_k * weT_ref[k:k + 1, :]     # VPU outer product, no MXU rank-1
    out = out + xd                                                           # residual
    o_ref[...] = _elu(out)                                                   # fused ELU


def _choose_tile_nd(n_dst, n_src, edge_dim, hin, h, requested=None):
    """Dst tile: multiple of 16 (bf16 sublane packing), sized from the chip's VMEM."""
    cap_tile = _round_up(max(n_dst, 16), 16)
    if requested is not None:
        return min(max(16, _round_up(requested, 16)), cap_tile)
    e3_b = jnp.dtype(E3_DTYPE).itemsize
    adj_b = jnp.dtype(ADJ_DTYPE).itemsize
    budget = int(0.45 * _vmem_capacity_bytes())
    resident = 4 * (n_src * (h + 1) + hin + edge_dim * h)          # Xs, a_src, u_dst, weT
    tile = min(512, cap_tile)
    while tile > 16:
        per_buf = tile * (edge_dim * n_src * e3_b + n_src * adj_b + hin * 4 + h * 4)
        temps = 4 * tile * n_src * 4                               # score/p/alpha/a_edge
        if 2 * per_buf + resident + temps <= budget:
            break
        tile = max(16, _round_up(tile // 2, 16))
    return tile


def bip_attn_conv(xs_proj, a_src, x_dst, p, e3, adj, *, tile_nd=None):
    """One BipartiteAttentionConv direction (+ residual + ELU), dense formulation."""
    n_src, h = xs_proj.shape
    n_dst, hin = x_dst.shape
    edge_dim = p["w_edge"].shape[1]

    tile = _choose_tile_nd(n_dst, n_src, edge_dim, hin, h, tile_nd)
    grid = (pl.cdiv(n_dst, tile),)    # ragged last tile handled by Pallas masking

    # tiny parameter-side precomputes (glue)
    u_dst = (p["att_dst"] @ p["w_dst"]).T                  # [Hin,1]
    weT = p["w_edge"].T                                    # [edge_dim,H]
    v_e = (p["att_edge"] @ p["w_edge"]).reshape(edge_dim)  # [edge_dim]

    kernel = functools.partial(_bip_attn_kernel, edge_dim=edge_dim)
    return pl.pallas_call(
        kernel,
        out_shape=jax.ShapeDtypeStruct((n_dst, h), jnp.float32),
        grid=grid,
        in_specs=[
            pl.BlockSpec(memory_space=SMEM),                              # v_e
            pl.BlockSpec((n_src, h), lambda i: (0, 0)),                   # Xs (resident)
            pl.BlockSpec((1, n_src), lambda i: (0, 0)),                   # a_src
            pl.BlockSpec((tile, hin), lambda i: (i, 0)),                  # x_dst tile
            pl.BlockSpec((hin, 1), lambda i: (0, 0)),                     # u_dst
            pl.BlockSpec((edge_dim, h), lambda i: (0, 0)),                # weT
            # TODO(synk): pipeline_mode=pl.Buffered(3) on e3/adj if DMA latency is
            # still exposed at small fallback tiles (don't deepen on v7x if it
            # forces a smaller tile under the 64 MiB per-TC VMEM).
            pl.BlockSpec((edge_dim, tile, n_src), lambda i: (0, i, 0)),   # e3 tile
            pl.BlockSpec((tile, n_src), lambda i: (i, 0)),                # adj tile
        ],
        out_specs=pl.BlockSpec((tile, h), lambda i: (i, 0)),
        compiler_params=_compiler_params(1),
    )(v_e, xs_proj, a_src, x_dst, u_dst, weT, e3, adj)
    # TODO(synk): for very large source-node counts (esp. v7x's 64 MiB per-TC VMEM),
    # tile the src axis too (online softmax) instead of keeping Xs/adj columns whole.
    # TODO(synk): for short dst grids on v7x, merge both directions into one
    # pallas_call with a leading "direction" parallel axis to keep both TCs busy.


# ----------------------------------------------------------------------------
# Kernel 3: fused head per node type — final latent projection + 2-layer
# attribute decoder (hidden activation never leaves VMEM), row-gridded.
# ----------------------------------------------------------------------------
def _head_kernel(h_ref, fw_ref, fb_ref, w1_ref, b1_ref, w2_ref, b2_ref,
                 z_ref, xhat_ref):
    z = _mm(h_ref[...], fw_ref[...]) + fb_ref[...]
    z_ref[...] = z
    # TODO(synk): decoder dropout between ReLU and second linear is identity (eval).
    t = jnp.maximum(_mm(z, w1_ref[...]) + b1_ref[...], 0.0)
    xhat_ref[...] = _mm(t, w2_ref[...]) + b2_ref[...]


def decode_head(h, fw, fb, w1, b1, w2, b2, *, row_tile=None):
    n, hid = h.shape
    latent = fw.shape[0]
    dec_hid = w1.shape[0]
    out_dim = w2.shape[0]
    tile = _choose_row_tile(n, row_tile)
    grid = (pl.cdiv(n, tile),)
    return pl.pallas_call(
        _head_kernel,
        out_shape=(jax.ShapeDtypeStruct((n, latent), jnp.float32),
                   jax.ShapeDtypeStruct((n, out_dim), jnp.float32)),
        grid=grid,
        in_specs=[
            pl.BlockSpec((tile, hid), lambda i: (i, 0)),
            pl.BlockSpec((hid, latent), lambda i: (0, 0)),
            pl.BlockSpec((1, latent), lambda i: (0, 0)),
            pl.BlockSpec((latent, dec_hid), lambda i: (0, 0)),
            pl.BlockSpec((1, dec_hid), lambda i: (0, 0)),
            pl.BlockSpec((dec_hid, out_dim), lambda i: (0, 0)),
            pl.BlockSpec((1, out_dim), lambda i: (0, 0)),
        ],
        out_specs=(pl.BlockSpec((tile, latent), lambda i: (i, 0)),
                   pl.BlockSpec((tile, out_dim), lambda i: (i, 0))),
        compiler_params=_compiler_params(1),
    )(h, fw.T, fb.reshape(1, -1), w1.T, b1.reshape(1, -1), w2.T, b2.reshape(1, -1))


# ----------------------------------------------------------------------------
# Full model forward (encode -> decode_features).
# adj_pm/e3_pm and adj_mp/e3_mp are BOTH precomputed once per graph (outside the
# jit) so no transpose / pad of the dominant e3 stream happens per forward call.
# ----------------------------------------------------------------------------
def model_forward(params, x_member, x_provider,
                  adj_pm, e3_pm, adj_mp, e3_mp,
                  *, tile_nd=None, row_tile=None):
    # TODO(synk): dropout layers are identity here (eval mode / training=False).
    h_m = project_inputs_one(x_member, params["proj_member_w"],
                             params["proj_member_b"], row_tile=row_tile)
    h_p = project_inputs_one(x_provider, params["proj_provider_w"],
                             params["proj_provider_b"], row_tile=row_tile)

    for conv in params["convs"]:
        # Per-direction source projection + source attention logits, computed ONCE
        # per layer (hoisted out of the dst grid; small XLA glue matmuls, per review).
        xs_m = h_p @ conv["member"]["w_src"].T                     # [Np, H]
        a_src_m = (xs_m @ conv["member"]["att_src"].T).reshape(1, -1)
        xs_p = h_m @ conv["provider"]["w_src"].T                   # [Nm, H]
        a_src_p = (xs_p @ conv["provider"]["att_src"].T).reshape(1, -1)

        # Each call's "parallel" dst axis already spreads across v7x's 2 TCs.
        new_m = bip_attn_conv(xs_m, a_src_m, h_m, conv["member"],
                              e3_pm, adj_pm, tile_nd=tile_nd)
        new_p = bip_attn_conv(xs_p, a_src_p, h_p, conv["provider"],
                              e3_mp, adj_mp, tile_nd=tile_nd)
        h_m, h_p = new_m, new_p

    z_m, x_hat_m = decode_head(h_m, params["final_member_w"], params["final_member_b"],
                               params["dec_m_w1"], params["dec_m_b1"],
                               params["dec_m_w2"], params["dec_m_b2"], row_tile=row_tile)
    z_p, x_hat_p = decode_head(h_p, params["final_provider_w"], params["final_provider_b"],
                               params["dec_p_w1"], params["dec_p_b1"],
                               params["dec_p_w2"], params["dec_p_b2"], row_tile=row_tile)
    return x_hat_m, x_hat_p, z_m, z_p


# ----------------------------------------------------------------------------
# Pure-JAX edge-list reference (mirrors the PyTorch/PyG semantics) for checking
# ----------------------------------------------------------------------------
def _ref_conv(x_src, x_dst, p, edge_src, edge_dst, edge_attr):
    xs_p = x_src @ p["w_src"].T
    xd_p = x_dst @ p["w_dst"].T
    e_p = edge_attr @ p["w_edge"].T
    a = ((xs_p[edge_src] * p["att_src"]).sum(-1)
         + (xd_p[edge_dst] * p["att_dst"]).sum(-1)
         + (e_p * p["att_edge"]).sum(-1))
    a = jnp.where(a > 0, a, LEAKY_SLOPE * a)
    n_dst = x_dst.shape[0]
    a_max = jax.ops.segment_max(a, edge_dst, num_segments=n_dst)
    ex = jnp.exp(a - a_max[edge_dst])
    denom = jax.ops.segment_sum(ex, edge_dst, num_segments=n_dst)
    alpha = ex / jnp.maximum(denom[edge_dst], 1e-30)
    msg = alpha[:, None] * (xs_p[edge_src] + e_p)
    out = jax.ops.segment_sum(msg, edge_dst, num_segments=n_dst)
    return out + x_dst


def reference_forward(params, x_member, x_provider, prov_idx, mem_idx, edge_attr):
    h_m = _elu(x_member @ params["proj_member_w"].T + params["proj_member_b"])
    h_p = _elu(x_provider @ params["proj_provider_w"].T + params["proj_provider_b"])
    for conv in params["convs"]:
        new_m = _elu(_ref_conv(h_p, h_m, conv["member"], prov_idx, mem_idx, edge_attr))
        new_p = _elu(_ref_conv(h_m, h_p, conv["provider"], mem_idx, prov_idx, edge_attr))
        h_m, h_p = new_m, new_p
    z_m = h_m @ params["final_member_w"].T + params["final_member_b"]
    z_p = h_p @ params["final_provider_w"].T + params["final_provider_b"]

    def dec(z, w1, b1, w2, b2):
        h = jnp.maximum(z @ w1.T + b1, 0.0)
        return h @ w2.T + b2

    x_hat_m = dec(z_m, params["dec_m_w1"], params["dec_m_b1"],
                  params["dec_m_w2"], params["dec_m_b2"])
    x_hat_p = dec(z_p, params["dec_p_w1"], params["dec_p_b1"],
                  params["dec_p_w2"], params["dec_p_b2"])
    return x_hat_m, x_hat_p, z_m, z_p


# ----------------------------------------------------------------------------
# Deterministic parameter init (shapes from the module __init__; torch layout [out,in])
# ----------------------------------------------------------------------------
def init_params(key, in_m, in_p, edge_dim, hidden, latent, num_conv=2):
    def xavier(k, shape):
        fan_out, fan_in = shape
        lim = (6.0 / (fan_in + fan_out)) ** 0.5
        return jax.random.uniform(k, shape, jnp.float32, -lim, lim)

    def bias(k, shape, fan_in):
        lim = 1.0 / (fan_in ** 0.5)
        return jax.random.uniform(k, shape, jnp.float32, -lim, lim)

    ki = iter(jax.random.split(key, 64))
    p = {}
    p["proj_member_w"] = xavier(next(ki), (hidden, in_m))
    p["proj_member_b"] = bias(next(ki), (hidden,), in_m)
    p["proj_provider_w"] = xavier(next(ki), (hidden, in_p))
    p["proj_provider_b"] = bias(next(ki), (hidden,), in_p)
    convs = []
    for _ in range(num_conv):
        layer = {}
        for name in ("member", "provider"):
            layer[name] = {
                "w_src": xavier(next(ki), (hidden, hidden)),
                "w_dst": xavier(next(ki), (hidden, hidden)),
                "w_edge": xavier(next(ki), (hidden, edge_dim)),
                "att_src": xavier(next(ki), (1, hidden)),
                "att_dst": xavier(next(ki), (1, hidden)),
                "att_edge": xavier(next(ki), (1, hidden)),
            }
        convs.append(layer)
    p["convs"] = convs
    p["final_member_w"] = xavier(next(ki), (latent, hidden))
    p["final_member_b"] = bias(next(ki), (latent,), hidden)
    p["final_provider_w"] = xavier(next(ki), (latent, hidden))
    p["final_provider_b"] = bias(next(ki), (latent,), hidden)
    p["dec_m_w1"] = xavier(next(ki), (hidden, latent))
    p["dec_m_b1"] = bias(next(ki), (hidden,), latent)
    p["dec_m_w2"] = xavier(next(ki), (in_m, hidden))
    p["dec_m_b2"] = bias(next(ki), (in_m,), hidden)
    p["dec_p_w1"] = xavier(next(ki), (hidden, latent))
    p["dec_p_b1"] = bias(next(ki), (hidden,), latent)
    p["dec_p_w2"] = xavier(next(ki), (in_p, hidden))
    p["dec_p_b2"] = bias(next(ki), (in_p,), hidden)
    return p


# ----------------------------------------------------------------------------
if __name__ == "__main__":
    key = jax.random.PRNGKey(0)
    in_m, in_p, edge_dim, hidden, latent = 10, 6, 4, 32, 16
    n_member, n_provider = 20, 12            # exercises ragged dst tiles + grid > 1
    k1, k2, k3, k4, k5 = jax.random.split(key, 5)

    x_member = jax.random.normal(k1, (n_member, in_m), jnp.float32)
    x_provider = jax.random.normal(k2, (n_provider, in_p), jnp.float32)

    # deterministic bipartite edge set (unique (member, provider) pairs) + edge attrs
    num_edges = 60
    pair_idx = jax.random.choice(k3, n_member * n_provider, (num_edges,), replace=False)
    mem_idx = pair_idx // n_provider     # dst of ('provider','to','member')
    prov_idx = pair_idx % n_provider     # src of ('provider','to','member')
    edge_attr = jax.random.normal(k4, (num_edges, edge_dim), jnp.float32)
    # Dense edge attrs are stored in E3_DTYPE (bf16); quantize ONCE and feed the same
    # rounded values to the reference so the comparison isolates kernel structure.
    edge_attr_q = edge_attr.astype(E3_DTYPE).astype(jnp.float32)

    # Densify ONCE per graph (static): adjacency mask + dense edge attrs in BOTH
    # layouts [edge_dim, n_dst, n_src] — no per-forward transpose / pad of e3.
    adj_pm_f = jnp.zeros((n_member, n_provider), jnp.float32).at[mem_idx, prov_idx].set(1.0)
    e_dense = (jnp.zeros((n_member, n_provider, edge_dim), jnp.float32)
               .at[mem_idx, prov_idx].set(edge_attr_q))
    adj_pm = adj_pm_f.astype(ADJ_DTYPE)                              # [Nm, Np]
    adj_mp = adj_pm_f.T.astype(ADJ_DTYPE)                            # [Np, Nm]
    e3_pm = jnp.transpose(e_dense, (2, 0, 1)).astype(E3_DTYPE)       # [E, Nm, Np]
    e3_mp = jnp.transpose(e_dense, (2, 1, 0)).astype(E3_DTYPE)       # [E, Np, Nm]

    params = init_params(k5, in_m, in_p, edge_dim, hidden, latent, num_conv=2)

    # small tiles to exercise the grids + ragged-tile paths at demo scale
    fwd = jax.jit(functools.partial(model_forward, tile_nd=16, row_tile=8))
    outs = fwd(params, x_member, x_provider, adj_pm, e3_pm, adj_mp, e3_mp)
    outs = jax.block_until_ready(outs)

    refs = reference_forward(params, x_member, x_provider, prov_idx, mem_idx, edge_attr_q)
    for o, r in zip(outs, refs):
        assert o.shape == r.shape and o.dtype == r.dtype
        err = float(jnp.max(jnp.abs(o - r)))
        assert jnp.allclose(o, r, atol=2e-3, rtol=2e-3), err

    print("KERNEL_OK")
</pallas_src>

<mosaic_0001>
module attributes {stable_mosaic.version = 11 : i64} {
  func.func @_proj_kernel(%arg0: i32, %arg1: memref<8x10xf32, #tpu.memory_space<vmem>>, %arg2: memref<10x32xf32, #tpu.memory_space<vmem>>, %arg3: memref<1x32xf32, #tpu.memory_space<vmem>>, %arg4: memref<8x32xf32, #tpu.memory_space<vmem>>) attributes {dimension_semantics = [#tpu.dimension_semantics<parallel>], iteration_bounds = array<i64: 3>, scalar_prefetch = 0 : i64, scratch_operands = 0 : i64, tpu.core_type = #tpu.core_type<tc>, window_params = [{transform_indices = @transform_0, window_bounds = array<i64: 8, 10>}, {pipeline_mode = #tpu.pipeline_mode<synchronous>, transform_indices = @transform_1, window_bounds = array<i64: 10, 32>}, {pipeline_mode = #tpu.pipeline_mode<synchronous>, transform_indices = @transform_2, window_bounds = array<i64: 1, 32>}, {transform_indices = @transform_3, window_bounds = array<i64: 8, 32>}]} {
    %c0 = arith.constant 0 : index
    %c0_0 = arith.constant 0 : index
    %0 = vector.load %arg1[%c0, %c0_0] : memref<8x10xf32, #tpu.memory_space<vmem>>, vector<8x10xf32>
    %c0_1 = arith.constant 0 : index
    %c0_2 = arith.constant 0 : index
    %1 = vector.load %arg2[%c0_1, %c0_2] : memref<10x32xf32, #tpu.memory_space<vmem>>, vector<10x32xf32>
    %cst = arith.constant dense<0.000000e+00> : vector<8x32xf32>
    %2 = tpu.matmul %0, %1, %cst {dimension_numbers = #tpu.dot_dimension_numbers<[1], [0], [0], [1], [0, 0, 1, 1], [], []>, precision = #tpu.contract_precision<fp32>} : vector<8x10xf32>, vector<10x32xf32>, vector<8x32xf32> -> vector<8x32xf32>
    %c0_3 = arith.constant 0 : index
    %c0_4 = arith.constant 0 : index
    %3 = vector.load %arg3[%c0_3, %c0_4] : memref<1x32xf32, #tpu.memory_space<vmem>>, vector<1x32xf32>
    %4 = vector.broadcast %3 : vector<1x32xf32> to vector<8x32xf32>
    %5 = arith.addf %2, %4 : vector<8x32xf32>
    %cst_5 = arith.constant 0.000000e+00 : f32
    %6 = vector.broadcast %cst_5 : f32 to vector<8x32xf32>
    %7 = arith.cmpf ogt, %5, %6 : vector<8x32xf32>
    %cst_6 = arith.constant 0.000000e+00 : f32
    %8 = vector.broadcast %cst_6 : f32 to vector<8x32xf32>
    %9 = arith.minimumf %5, %8 : vector<8x32xf32>
    %10 = math.exp %9 : vector<8x32xf32>
    %cst_7 = arith.constant 1.000000e+00 : f32
    %11 = vector.broadcast %cst_7 : f32 to vector<8x32xf32>
    %12 = arith.subf %10, %11 : vector<8x32xf32>
    %13 = arith.select %7, %5, %12 : vector<8x32xi1>, vector<8x32xf32>
    %c0_8 = arith.constant 0 : index
    %c0_9 = arith.constant 0 : index
    %14 = vector.load %arg4[%c0_8, %c0_9] : memref<8x32xf32, #tpu.memory_space<vmem>>, vector<8x32xf32>
    tpu.vector_store %arg4[%c0_8, %c0_9], %13 {strides = array<i32>} : memref<8x32xf32, #tpu.memory_space<vmem>>, vector<8x32xf32>,
    return
  }
  func.func @transform_0(%arg0: i32) -> (i32, i32) {
    %c0_i32 = arith.constant 0 : i32
    %c0_i32_0 = arith.constant 0 : i32
    return %arg0, %c0_i32 : i32, i32
  }
  func.func @transform_1(%arg0: i32) -> (i32, i32) {
    %c0_i32 = arith.constant 0 : i32
    %c0_i32_0 = arith.constant 0 : i32
    %c0_i32_1 = arith.constant 0 : i32
    return %c0_i32, %c0_i32_0 : i32, i32
  }
  func.func @transform_2(%arg0: i32) -> (i32, i32) {
    %c0_i32 = arith.constant 0 : i32
    %c0_i32_0 = arith.constant 0 : i32
    %c0_i32_1 = arith.constant 0 : i32
    return %c0_i32, %c0_i32_0 : i32, i32
  }
  func.func @transform_3(%arg0: i32) -> (i32, i32) {
    %c0_i32 = arith.constant 0 : i32
    %c0_i32_0 = arith.constant 0 : i32
    return %arg0, %c0_i32 : i32, i32
  }
}

module attributes {stable_mosaic.version = 11 : i64} {
  func.func @_proj_kernel(%arg0: i32, %arg1: memref<8x6xf32, #tpu.memory_space<vmem>>, %arg2: memref<6x32xf32, #tpu.memory_space<vmem>>, %arg3: memref<1x32xf32, #tpu.memory_space<vmem>>, %arg4: memref<8x32xf32, #tpu.memory_space<vmem>>) attributes {dimension_semantics = [#tpu.dimension_semantics<parallel>], iteration_bounds = array<i64: 2>, scalar_prefetch = 0 : i64, scratch_operands = 0 : i64, tpu.core_type = #tpu.core_type<tc>, window_params = [{transform_indices = @transform_0, window_bounds = array<i64: 8, 6>}, {pipeline_mode = #tpu.pipeline_mode<synchronous>, transform_indices = @transform_1, window_bounds = array<i64: 6, 32>}, {pipeline_mode = #tpu.pipeline_mode<synchronous>, transform_indices = @transform_2, window_bounds = array<i64: 1, 32>}, {transform_indices = @transform_3, window_bounds = array<i64: 8, 32>}]} {
    %c0 = arith.constant 0 : index
    %c0_0 = arith.constant 0 : index
    %0 = vector.load %arg1[%c0, %c0_0] : memref<8x6xf32, #tpu.memory_space<vmem>>, vector<8x6xf32>
    %c0_1 = arith.constant 0 : index
    %c0_2 = arith.constant 0 : index
    %1 = vector.load %arg2[%c0_1, %c0_2] : memref<6x32xf32, #tpu.memory_space<vmem>>, vector<6x32xf32>
    %cst = arith.constant dense<0.000000e+00> : vector<8x32xf32>
    %2 = tpu.matmul %0, %1, %cst {dimension_numbers = #tpu.dot_dimension_numbers<[1], [0], [0], [1], [0, 0, 1, 1], [], []>, precision = #tpu.contract_precision<fp32>} : vector<8x6xf32>, vector<6x32xf32>, vector<8x32xf32> -> vector<8x32xf32>
    %c0_3 = arith.constant 0 : index
    %c0_4 = arith.constant 0 : index
    %3 = vector.load %arg3[%c0_3, %c0_4] : memref<1x32xf32, #tpu.memory_space<vmem>>, vector<1x32xf32>
    %4 = vector.broadcast %3 : vector<1x32xf32> to vector<8x32xf32>
    %5 = arith.addf %2, %4 : vector<8x32xf32>
    %cst_5 = arith.constant 0.000000e+00 : f32
    %6 = vector.broadcast %cst_5 : f32 to vector<8x32xf32>
    %7 = arith.cmpf ogt, %5, %6 : vector<8x32xf32>
    %cst_6 = arith.constant 0.000000e+00 : f32
    %8 = vector.broadcast %cst_6 : f32 to vector<8x32xf32>
    %9 = arith.minimumf %5, %8 : vector<8x32xf32>
    %10 = math.exp %9 : vector<8x32xf32>
    %cst_7 = arith.constant 1.000000e+00 : f32
    %11 = vector.broadcast %cst_7 : f32 to vector<8x32xf32>
    %12 = arith.subf %10, %11 : vector<8x32xf32>
    %13 = arith.select %7, %5, %12 : vector<8x32xi1>, vector<8x32xf32>
    %c0_8 = arith.constant 0 : index
    %c0_9 = arith.constant 0 : index
    %14 = vector.load %arg4[%c0_8, %c0_9] : memref<8x32xf32, #tpu.memory_space<vmem>>, vector<8x32xf32>
    tpu.vector_store %arg4[%c0_8, %c0_9], %13 {strides = array<i32>} : memref<8x32xf32, #tpu.memory_space<vmem>>, vector<8x32xf32>,
    return
  }
  func.func @transform_0(%arg0: i32) -> (i32, i32) {
    %c0_i32 = arith.constant 0 : i32
    %c0_i32_0 = arith.constant 0 : i32
    return %arg0, %c0_i32 : i32, i32
  }
  func.func @transform_1(%arg0: i32) -> (i32, i32) {
    %c0_i32 = arith.constant 0 : i32
    %c0_i32_0 = arith.constant 0 : i32
    %c0_i32_1 = arith.constant 0 : i32
    return %c0_i32, %c0_i32_0 : i32, i32
  }
  func.func @transform_2(%arg0: i32) -> (i32, i32) {
    %c0_i32 = arith.constant 0 : i32
    %c0_i32_0 = arith.constant 0 : i32
    %c0_i32_1 = arith.constant 0 : i32
    return %c0_i32, %c0_i32_0 : i32, i32
  }
  func.func @transform_3(%arg0: i32) -> (i32, i32) {
    %c0_i32 = arith.constant 0 : i32
    %c0_i32_0 = arith.constant 0 : i32
    return %arg0, %c0_i32 : i32, i32
  }
}

module attributes {stable_mosaic.version = 11 : i64} {
  func.func @_bip_attn_kernel(%arg0: i32, %arg1: memref<4xf32, #tpu.memory_space<smem>>, %arg2: memref<20x32xf32, #tpu.memory_space<vmem>>, %arg3: memref<1x20xf32, #tpu.memory_space<vmem>>, %arg4: memref<16x32xf32, #tpu.memory_space<vmem>>, %arg5: memref<32x1xf32, #tpu.memory_space<vmem>>, %arg6: memref<4x32xf32, #tpu.memory_space<vmem>>, %arg7: memref<4x16x20xbf16, #tpu.memory_space<vmem>>, %arg8: memref<16x20xbf16, #tpu.memory_space<vmem>>, %arg9: memref<16x32xf32, #tpu.memory_space<vmem>>) attributes {dimension_semantics = [#tpu.dimension_semantics<parallel>], iteration_bounds = array<i64: 1>, scalar_prefetch = 0 : i64, scratch_operands = 0 : i64, tpu.core_type = #tpu.core_type<tc>, window_params = [{transform_indices = @transform_0, window_bounds = array<i64: 4>}, {pipeline_mode = #tpu.pipeline_mode<synchronous>, transform_indices = @transform_1, window_bounds = array<i64: 20, 32>}, {pipeline_mode = #tpu.pipeline_mode<synchronous>, transform_indices = @transform_2, window_bounds = array<i64: 1, 20>}, {transform_indices = @transform_3, window_bounds = array<i64: 16, 32>}, {pipeline_mode = #tpu.pipeline_mode<synchronous>, transform_indices = @transform_4, window_bounds = array<i64: 32, 1>}, {pipeline_mode = #tpu.pipeline_mode<synchronous>, transform_indices = @transform_5, window_bounds = array<i64: 4, 32>}, {transform_indices = @transform_6, window_bounds = array<i64: 4, 16, 20>}, {transform_indices = @transform_7, window_bounds = array<i64: 16, 20>}, {transform_indices = @transform_8, window_bounds = array<i64: 16, 32>}]} {
    %c0 = arith.constant 0 : index
    %c0_0 = arith.constant 0 : index
    %0 = vector.load %arg8[%c0, %c0_0] : memref<16x20xbf16, #tpu.memory_space<vmem>>, vector<16x20xbf16>
    %1 = arith.extf %0 : vector<16x20xbf16> to vector<16x20xf32>
    %c0_1 = arith.constant 0 : index
    %c0_2 = arith.constant 0 : index
    %2 = vector.load %arg4[%c0_1, %c0_2] : memref<16x32xf32, #tpu.memory_space<vmem>>, vector<16x32xf32>
    %c0_3 = arith.constant 0 : index
    %c0_4 = arith.constant 0 : index
    %3 = vector.load %arg5[%c0_3, %c0_4] : memref<32x1xf32, #tpu.memory_space<vmem>>, vector<32x1xf32>
    %cst = arith.constant dense<0.000000e+00> : vector<16x1xf32>
    %4 = tpu.matmul %2, %3, %cst {dimension_numbers = #tpu.dot_dimension_numbers<[1], [0], [0], [1], [0, 0, 1, 1], [], []>, precision = #tpu.contract_precision<fp32>} : vector<16x32xf32>, vector<32x1xf32>, vector<16x1xf32> -> vector<16x1xf32>
    %cst_5 = arith.constant 1.000000e+00 : f32
    %5 = vector.broadcast %cst_5 : f32 to vector<16x20xf32>
    %6 = arith.subf %1, %5 : vector<16x20xf32>
    %cst_6 = arith.constant 1.000000e+30 : f32
    %7 = vector.broadcast %cst_6 : f32 to vector<16x20xf32>
    %8 = arith.mulf %6, %7 : vector<16x20xf32>
    %c0_7 = arith.constant 0 : index
    %9 = memref.load %arg1[%c0_7] : memref<4xf32, #tpu.memory_space<smem>>
    %c0_8 = arith.constant 0 : index
    %c0_9 = arith.constant 0 : index
    %c0_10 = arith.constant 0 : index
    %10 = vector.load %arg7[%c0_8, %c0_9, %c0_10] : memref<4x16x20xbf16, #tpu.memory_space<vmem>>, vector<1x16x20xbf16>
    %11 = vector.shape_cast %10 : vector<1x16x20xbf16> to vector<16x20xbf16>
    %12 = arith.extf %11 : vector<16x20xbf16> to vector<16x20xf32>
    %13 = vector.broadcast %9 : f32 to vector<16x20xf32>
    %14 = arith.mulf %13, %12 : vector<16x20xf32>
    %15 = arith.addf %8, %14 : vector<16x20xf32>
    %c1 = arith.constant 1 : index
    %16 = memref.load %arg1[%c1] : memref<4xf32, #tpu.memory_space<smem>>
    %c1_11 = arith.constant 1 : index
    %c0_12 = arith.constant 0 : index
    %c0_13 = arith.constant 0 : index
    %17 = vector.load %arg7[%c1_11, %c0_12, %c0_13] : memref<4x16x20xbf16, #tpu.memory_space<vmem>>, vector<1x16x20xbf16>
    %18 = vector.shape_cast %17 : vector<1x16x20xbf16> to vector<16x20xbf16>
    %19 = arith.extf %18 : vector<16x20xbf16> to vector<16x20xf32>
    %20 = vector.broadcast %16 : f32 to vector<16x20xf32>
    %21 = arith.mulf %20, %19 : vector<16x20xf32>
    %22 = arith.addf %15, %21 : vector<16x20xf32>
    %c2 = arith.constant 2 : index
    %23 = memref.load %arg1[%c2] : memref<4xf32, #tpu.memory_space<smem>>
    %c2_14 = arith.constant 2 : index
    %c0_15 = arith.constant 0 : index
    %c0_16 = arith.constant 0 : index
    %24 = vector.load %arg7[%c2_14, %c0_15, %c0_16] : memref<4x16x20xbf16, #tpu.memory_space<vmem>>, vector<1x16x20xbf16>
    %25 = vector.shape_cast %24 : vector<1x16x20xbf16> to vector<16x20xbf16>
    %26 = arith.extf %25 : vector<16x20xbf16> to vector<16x20xf32>
    %27 = vector.broadcast %23 : f32 to vector<16x20xf32>
    %28 = arith.mulf %27, %26 : vector<16x20xf32>
    %29 = arith.addf %22, %28 : vector<16x20xf32>
    %c3 = arith.constant 3 : index
    %30 = memref.load %arg1[%c3] : memref<4xf32, #tpu.memory_space<smem>>
    %c3_17 = arith.constant 3 : index
    %c0_18 = arith.constant 0 : index
    %c0_19 = arith.constant 0 : index
    %31 = vector.load %arg7[%c3_17, %c0_18, %c0_19] : memref<4x16x20xbf16, #tpu.memory_space<vmem>>, vector<1x16x20xbf16>
    %32 = vector.shape_cast %31 : vector<1x16x20xbf16> to vector<16x20xbf16>
    %33 = arith.extf %32 : vector<16x20xbf16> to vector<16x20xf32>
    %34 = vector.broadcast %30 : f32 to vector<16x20xf32>
    %35 = arith.mulf %34, %33 : vector<16x20xf32>
    %36 = arith.addf %29, %35 : vector<16x20xf32>
    %c0_20 = arith.constant 0 : index
    %c0_21 = arith.constant 0 : index
    %37 = vector.load %arg3[%c0_20, %c0_21] : memref<1x20xf32, #tpu.memory_space<vmem>>, vector<1x20xf32>
    %38 = vector.broadcast %4 : vector<16x1xf32> to vector<16x20xf32>
    %39 = vector.broadcast %37 : vector<1x20xf32> to vector<16x20xf32>
    %40 = arith.addf %38, %39 : vector<16x20xf32>
    %41 = arith.addf %40, %36 : vector<16x20xf32>
    %cst_22 = arith.constant 0.000000e+00 : f32
    %42 = vector.broadcast %cst_22 : f32 to vector<16x20xf32>
    %43 = arith.cmpf ogt, %41, %42 : vector<16x20xf32>
    %cst_23 = arith.constant 0.00999999977 : f32
    %44 = vector.broadcast %cst_23 : f32 to vector<16x20xf32>
    %45 = arith.mulf %44, %41 : vector<16x20xf32>
    %46 = arith.select %43, %41, %45 : vector<16x20xi1>, vector<16x20xf32>
    %cst_24 = arith.constant dense<0xFF800000> : vector<16xf32>
    %47 = vector.multi_reduction <maximumf>, %46, %cst_24 [1] : vector<16x20xf32> to vector<16xf32>
    %48 = vector.shape_cast %47 : vector<16xf32> to vector<16x1xf32>
    %49 = vector.broadcast %48 : vector<16x1xf32> to vector<16x20xf32>
    %50 = arith.subf %46, %49 : vector<16x20xf32>
    %51 = math.exp %50 : vector<16x20xf32>
    %52 = arith.mulf %51, %1 : vector<16x20xf32>
    %cst_25 = arith.constant dense<0.000000e+00> : vector<16xf32>
    %53 = vector.multi_reduction <add>, %52, %cst_25 [1] : vector<16x20xf32> to vector<16xf32>
    %54 = vector.shape_cast %53 : vector<16xf32> to vector<16x1xf32>
    %cst_26 = arith.constant 1.000000e-30 : f32
    %55 = vector.broadcast %cst_26 : f32 to vector<16x1xf32>
    %56 = arith.maximumf %54, %55 : vector<16x1xf32>
    %57 = vector.broadcast %56 : vector<16x1xf32> to vector<16x20xf32>
    %58 = arith.divf %52, %57 : vector<16x20xf32>
    %c0_27 = arith.constant 0 : index
    %c0_28 = arith.constant 0 : index
    %59 = vector.load %arg2[%c0_27, %c0_28] : memref<20x32xf32, #tpu.memory_space<vmem>>, vector<20x32xf32>
    %cst_29 = arith.constant dense<0.000000e+00> : vector<16x32xf32>
    %60 = tpu.matmul %58, %59, %cst_29 {dimension_numbers = #tpu.dot_dimension_numbers<[1], [0], [0], [1], [0, 0, 1, 1], [], []>, precision = #tpu.contract_precision<fp32>} : vector<16x20xf32>, vector<20x32xf32>, vector<16x32xf32> -> vector<16x32xf32>
    %c0_30 = arith.constant 0 : index
    %c0_31 = arith.constant 0 : index
    %c0_32 = arith.constant 0 : index
    %61 = vector.load %arg7[%c0_30, %c0_31, %c0_32] : memref<4x16x20xbf16, #tpu.memory_space<vmem>>, vector<1x16x20xbf16>
    %62 = vector.shape_cast %61 : vector<1x16x20xbf16> to vector<16x20xbf16>
    %63 = arith.extf %62 : vector<16x20xbf16> to vector<16x20xf32>
    %64 = arith.mulf %58, %63 : vector<16x20xf32>
    %cst_33 = arith.constant dense<0.000000e+00> : vector<16xf32>
    %65 = vector.multi_reduction <add>, %64, %cst_33 [1] : vector<16x20xf32> to vector<16xf32>
    %66 = vector.shape_cast %65 : vector<16xf32> to vector<16x1xf32>
    %c0_34 = arith.constant 0 : index
    %c0_35 = arith.constant 0 : index
    %67 = vector.load %arg6[%c0_34, %c0_35] : memref<4x32xf32, #tpu.memory_space<vmem>>, vector<1x32xf32>
    %68 = vector.broadcast %66 : vector<16x1xf32> to vector<16x32xf32>
    %69 = vector.broadcast %67 : vector<1x32xf32> to vector<16x32xf32>
    %70 = arith.mulf %68, %69 : vector<16x32xf32>
    %71 = arith.addf %60, %70 : vector<16x32xf32>
    %c1_36 = arith.constant 1 : index
    %c0_37 = arith.constant 0 : index
    %c0_38 = arith.constant 0 : index
    %72 = vector.load %arg7[%c1_36, %c0_37, %c0_38] : memref<4x16x20xbf16, #tpu.memory_space<vmem>>, vector<1x16x20xbf16>
    %73 = vector.shape_cast %72 : vector<1x16x20xbf16> to vector<16x20xbf16>
    %74 = arith.extf %73 : vector<16x20xbf16> to vector<16x20xf32>
    %75 = arith.mulf %58, %74 : vector<16x20xf32>
    %cst_39 = arith.constant dense<0.000000e+00> : vector<16xf32>
    %76 = vector.multi_reduction <add>, %75, %cst_39 [1] : vector<16x20xf32> to vector<16xf32>
    %77 = vector.shape_cast %76 : vector<16xf32> to vector<16x1xf32>
    %c1_40 = arith.constant 1 : index
    %c0_41 = arith.constant 0 : index
    %78 = vector.load %arg6[%c1_40, %c0_41] : memref<4x32xf32, #tpu.memory_space<vmem>>, vector<1x32xf32>
    %79 = vector.broadcast %77 : vector<16x1xf32> to vector<16x32xf32>
    %80 = vector.broadcast %78 : vector<1x32xf32> to vector<16x32xf32>
    %81 = arith.mulf %79, %80 : vector<16x32xf32>
    %82 = arith.addf %71, %81 : vector<16x32xf32>
    %c2_42 = arith.constant 2 : index
    %c0_43 = arith.constant 0 : index
    %c0_44 = arith.constant 0 : index
    %83 = vector.load %arg7[%c2_42, %c0_43, %c0_44] : memref<4x16x20xbf16, #tpu.memory_space<vmem>>, vector<1x16x20xbf16>
    %84 = vector.shape_cast %83 : vector<1x16x20xbf16> to vector<16x20xbf16>
    %85 = arith.extf %84 : vector<16x20xbf16> to vector<16x20xf32>
    %86 = arith.mulf %58, %85 : vector<16x20xf32>
    %cst_45 = arith.constant dense<0.000000e+00> : vector<16xf32>
    %87 = vector.multi_reduction <add>, %86, %cst_45 [1] : vector<16x20xf32> to vector<16xf32>
    %88 = vector.shape_cast %87 : vector<16xf32> to vector<16x1xf32>
    %c2_46 = arith.constant 2 : index
    %c0_47 = arith.constant 0 : index
    %89 = vector.load %arg6[%c2_46, %c0_47] : memref<4x32xf32, #tpu.memory_space<vmem>>, vector<1x32xf32>
    %90 = vector.broadcast %88 : vector<16x1xf32> to vector<16x32xf32>
    %91 = vector.broadcast %89 : vector<1x32xf32> to vector<16x32xf32>
    %92 = arith.mulf %90, %91 : vector<16x32xf32>
    %93 = arith.addf %82, %92 : vector<16x32xf32>
    %c3_48 = arith.constant 3 : index
    %c0_49 = arith.constant 0 : index
    %c0_50 = arith.constant 0 : index
    %94 = vector.load %arg7[%c3_48, %c0_49, %c0_50] : memref<4x16x20xbf16, #tpu.memory_space<vmem>>, vector<1x16x20xbf16>
    %95 = vector.shape_cast %94 : vector<1x16x20xbf16> to vector<16x20xbf16>
    %96 = arith.extf %95 : vector<16x20xbf16> to vector<16x20xf32>
    %97 = arith.mulf %58, %96 : vector<16x20xf32>
    %cst_51 = arith.constant dense<0.000000e+00> : vector<16xf32>
    %98 = vector.multi_reduction <add>, %97, %cst_51 [1] : vector<16x20xf32> to vector<16xf32>
    %99 = vector.shape_cast %98 : vector<16xf32> to vector<16x1xf32>
    %c3_52 = arith.constant 3 : index
    %c0_53 = arith.constant 0 : index
    %100 = vector.load %arg6[%c3_52, %c0_53] : memref<4x32xf32, #tpu.memory_space<vmem>>, vector<1x32xf32>
    %101 = vector.broadcast %99 : vector<16x1xf32> to vector<16x32xf32>
    %102 = vector.broadcast %100 : vector<1x32xf32> to vector<16x32xf32>
    %103 = arith.mulf %101, %102 : vector<16x32xf32>
    %104 = arith.addf %93, %103 : vector<16x32xf32>
    %105 = arith.addf %104, %2 : vector<16x32xf32>
    %cst_54 = arith.constant 0.000000e+00 : f32
    %106 = vector.broadcast %cst_54 : f32 to vector<16x32xf32>
    %107 = arith.cmpf ogt, %105, %106 : vector<16x32xf32>
    %cst_55 = arith.constant 0.000000e+00 : f32
    %108 = vector.broadcast %cst_55 : f32 to vector<16x32xf32>
    %109 = arith.minimumf %105, %108 : vector<16x32xf32>
    %110 = math.exp %109 : vector<16x32xf32>
    %cst_56 = arith.constant 1.000000e+00 : f32
    %111 = vector.broadcast %cst_56 : f32 to vector<16x32xf32>
    %112 = arith.subf %110, %111 : vector<16x32xf32>
    %113 = arith.select %107, %105, %112 : vector<16x32xi1>, vector<16x32xf32>
    %c0_57 = arith.constant 0 : index
    %c0_58 = arith.constant 0 : index
    %114 = vector.load %arg9[%c0_57, %c0_58] : memref<16x32xf32, #tpu.memory_space<vmem>>, vector<16x32xf32>
    tpu.vector_store %arg9[%c0_57, %c0_58], %113 {strides = array<i32>} : memref<16x32xf32, #tpu.memory_space<vmem>>, vector<16x32xf32>,
    return
  }
  func.func @transform_0(%arg0: i32) -> i32 {
    %c0_i32 = arith.constant 0 : i32
    %c0_i32_0 = arith.constant 0 : i32
    return %c0_i32 : i32
  }
  func.func @transform_1(%arg0: i32) -> (i32, i32) {
    %c0_i32 = arith.constant 0 : i32
    %c0_i32_0 = arith.constant 0 : i32
    %c0_i32_1 = arith.constant 0 : i32
    return %c0_i32, %c0_i32_0 : i32, i32
  }
  func.func @transform_2(%arg0: i32) -> (i32, i32) {
    %c0_i32 = arith.constant 0 : i32
    %c0_i32_0 = arith.constant 0 : i32
    %c0_i32_1 = arith.constant 0 : i32
    return %c0_i32, %c0_i32_0 : i32, i32
  }
  func.func @transform_3(%arg0: i32) -> (i32, i32) {
    %c0_i32 = arith.constant 0 : i32
    %c0_i32_0 = arith.constant 0 : i32
    return %arg0, %c0_i32 : i32, i32
  }
  func.func @transform_4(%arg0: i32) -> (i32, i32) {
    %c0_i32 = arith.constant 0 : i32
    %c0_i32_0 = arith.constant 0 : i32
    %c0_i32_1 = arith.constant 0 : i32
    return %c0_i32, %c0_i32_0 : i32, i32
  }
  func.func @transform_5(%arg0: i32) -> (i32, i32) {
    %c0_i32 = arith.constant 0 : i32
    %c0_i32_0 = arith.constant 0 : i32
    %c0_i32_1 = arith.constant 0 : i32
    return %c0_i32, %c0_i32_0 : i32, i32
  }
  func.func @transform_6(%arg0: i32) -> (i32, i32, i32) {
    %c0_i32 = arith.constant 0 : i32
    %c0_i32_0 = arith.constant 0 : i32
    %c0_i32_1 = arith.constant 0 : i32
    return %c0_i32, %arg0, %c0_i32_0 : i32, i32, i32
  }
  func.func @transform_7(%arg0: i32) -> (i32, i32) {
    %c0_i32 = arith.constant 0 : i32
    %c0_i32_0 = arith.constant 0 : i32
    return %arg0, %c0_i32 : i32, i32
  }
  func.func @transform_8(%arg0: i32) -> (i32, i32) {
    %c0_i32 = arith.constant 0 : i32
    %c0_i32_0 = arith.constant 0 : i32
    return %arg0, %c0_i32 : i32, i32
  }
}

module attributes {stable_mosaic.version = 11 : i64} {
  func.func @_bip_attn_kernel(%arg0: i32, %arg1: memref<4xf32, #tpu.memory_space<smem>>, %arg2: memref<12x32xf32, #tpu.memory_space<vmem>>, %arg3: memref<1x12xf32, #tpu.memory_space<vmem>>, %arg4: memref<16x32xf32, #tpu.memory_space<vmem>>, %arg5: memref<32x1xf32, #tpu.memory_space<vmem>>, %arg6: memref<4x32xf32, #tpu.memory_space<vmem>>, %arg7: memref<4x16x12xbf16, #tpu.memory_space<vmem>>, %arg8: memref<16x12xbf16, #tpu.memory_space<vmem>>, %arg9: memref<16x32xf32, #tpu.memory_space<vmem>>) attributes {dimension_semantics = [#tpu.dimension_semantics<parallel>], iteration_bounds = array<i64: 2>, scalar_prefetch = 0 : i64, scratch_operands = 0 : i64, tpu.core_type = #tpu.core_type<tc>, window_params = [{transform_indices = @transform_0, window_bounds = array<i64: 4>}, {pipeline_mode = #tpu.pipeline_mode<synchronous>, transform_indices = @transform_1, window_bounds = array<i64: 12, 32>}, {pipeline_mode = #tpu.pipeline_mode<synchronous>, transform_indices = @transform_2, window_bounds = array<i64: 1, 12>}, {transform_indices = @transform_3, window_bounds = array<i64: 16, 32>}, {pipeline_mode = #tpu.pipeline_mode<synchronous>, transform_indices = @transform_4, window_bounds = array<i64: 32, 1>}, {pipeline_mode = #tpu.pipeline_mode<synchronous>, transform_indices = @transform_5, window_bounds = array<i64: 4, 32>}, {transform_indices = @transform_6, window_bounds = array<i64: 4, 16, 12>}, {transform_indices = @transform_7, window_bounds = array<i64: 16, 12>}, {transform_indices = @transform_8, window_bounds = array<i64: 16, 32>}]} {
    %c0 = arith.constant 0 : index
    %c0_0 = arith.constant 0 : index
    %0 = vector.load %arg8[%c0, %c0_0] : memref<16x12xbf16, #tpu.memory_space<vmem>>, vector<16x12xbf16>
    %1 = arith.extf %0 : vector<16x12xbf16> to vector<16x12xf32>
    %c0_1 = arith.constant 0 : index
    %c0_2 = arith.constant 0 : index
    %2 = vector.load %arg4[%c0_1, %c0_2] : memref<16x32xf32, #tpu.memory_space<vmem>>, vector<16x32xf32>
    %c0_3 = arith.constant 0 : index
    %c0_4 = arith.constant 0 : index
    %3 = vector.load %arg5[%c0_3, %c0_4] : memref<32x1xf32, #tpu.memory_space<vmem>>, vector<32x1xf32>
    %cst = arith.constant dense<0.000000e+00> : vector<16x1xf32>
    %4 = tpu.matmul %2, %3, %cst {dimension_numbers = #tpu.dot_dimension_numbers<[1], [0], [0], [1], [0, 0, 1, 1], [], []>, precision = #tpu.contract_precision<fp32>} : vector<16x32xf32>, vector<32x1xf32>, vector<16x1xf32> -> vector<16x1xf32>
    %cst_5 = arith.constant 1.000000e+00 : f32
    %5 = vector.broadcast %cst_5 : f32 to vector<16x12xf32>
    %6 = arith.subf %1, %5 : vector<16x12xf32>
    %cst_6 = arith.constant 1.000000e+30 : f32
    %7 = vector.broadcast %cst_6 : f32 to vector<16x12xf32>
    %8 = arith.mulf %6, %7 : vector<16x12xf32>
    %c0_7 = arith.constant 0 : index
    %9 = memref.load %arg1[%c0_7] : memref<4xf32, #tpu.memory_space<smem>>
    %c0_8 = arith.constant 0 : index
    %c0_9 = arith.constant 0 : index
    %c0_10 = arith.constant 0 : index
    %10 = vector.load %arg7[%c0_8, %c0_9, %c0_10] : memref<4x16x12xbf16, #tpu.memory_space<vmem>>, vector<1x16x12xbf16>
    %11 = vector.shape_cast %10 : vector<1x16x12xbf16> to vector<16x12xbf16>
    %12 = arith.extf %11 : vector<16x12xbf16> to vector<16x12xf32>
    %13 = vector.broadcast %9 : f32 to vector<16x12xf32>
    %14 = arith.mulf %13, %12 : vector<16x12xf32>
    %15 = arith.addf %8, %14 : vector<16x12xf32>
    %c1 = arith.constant 1 : index
    %16 = memref.load %arg1[%c1] : memref<4xf32, #tpu.memory_space<smem>>
    %c1_11 = arith.constant 1 : index
    %c0_12 = arith.constant 0 : index
    %c0_13 = arith.constant 0 : index
    %17 = vector.load %arg7[%c1_11, %c0_12, %c0_13] : memref<4x16x12xbf16, #tpu.memory_space<vmem>>, vector<1x16x12xbf16>
    %18 = vector.shape_cast %17 : vector<1x16x12xbf16> to vector<16x12xbf16>
    %19 = arith.extf %18 : vector<16x12xbf16> to vector<16x12xf32>
    %20 = vector.broadcast %16 : f32 to vector<16x12xf32>
    %21 = arith.mulf %20, %19 : vector<16x12xf32>
    %22 = arith.addf %15, %21 : vector<16x12xf32>
    %c2 = arith.constant 2 : index
    %23 = memref.load %arg1[%c2] : memref<4xf32, #tpu.memory_space<smem>>
    %c2_14 = arith.constant 2 : index
    %c0_15 = arith.constant 0 : index
    %c0_16 = arith.constant 0 : index
    %24 = vector.load %arg7[%c2_14, %c0_15, %c0_16] : memref<4x16x12xbf16, #tpu.memory_space<vmem>>, vector<1x16x12xbf16>
    %25 = vector.shape_cast %24 : vector<1x16x12xbf16> to vector<16x12xbf16>
    %26 = arith.extf %25 : vector<16x12xbf16> to vector<16x12xf32>
    %27 = vector.broadcast %23 : f32 to vector<16x12xf32>
    %28 = arith.mulf %27, %26 : vector<16x12xf32>
    %29 = arith.addf %22, %28 : vector<16x12xf32>
    %c3 = arith.constant 3 : index
    %30 = memref.load %arg1[%c3] : memref<4xf32, #tpu.memory_space<smem>>
    %c3_17 = arith.constant 3 : index
    %c0_18 = arith.constant 0 : index
    %c0_19 = arith.constant 0 : index
    %31 = vector.load %arg7[%c3_17, %c0_18, %c0_19] : memref<4x16x12xbf16, #tpu.memory_space<vmem>>, vector<1x16x12xbf16>
    %32 = vector.shape_cast %31 : vector<1x16x12xbf16> to vector<16x12xbf16>
    %33 = arith.extf %32 : vector<16x12xbf16> to vector<16x12xf32>
    %34 = vector.broadcast %30 : f32 to vector<16x12xf32>
    %35 = arith.mulf %34, %33 : vector<16x12xf32>
    %36 = arith.addf %29, %35 : vector<16x12xf32>
    %c0_20 = arith.constant 0 : index
    %c0_21 = arith.constant 0 : index
    %37 = vector.load %arg3[%c0_20, %c0_21] : memref<1x12xf32, #tpu.memory_space<vmem>>, vector<1x12xf32>
    %38 = vector.broadcast %4 : vector<16x1xf32> to vector<16x12xf32>
    %39 = vector.broadcast %37 : vector<1x12xf32> to vector<16x12xf32>
    %40 = arith.addf %38, %39 : vector<16x12xf32>
    %41 = arith.addf %40, %36 : vector<16x12xf32>
    %cst_22 = arith.constant 0.000000e+00 : f32
    %42 = vector.broadcast %cst_22 : f32 to vector<16x12xf32>
    %43 = arith.cmpf ogt, %41, %42 : vector<16x12xf32>
    %cst_23 = arith.constant 0.00999999977 : f32
    %44 = vector.broadcast %cst_23 : f32 to vector<16x12xf32>
    %45 = arith.mulf %44, %41 : vector<16x12xf32>
    %46 = arith.select %43, %41, %45 : vector<16x12xi1>, vector<16x12xf32>
    %cst_24 = arith.constant dense<0xFF800000> : vector<16xf32>
    %47 = vector.multi_reduction <maximumf>, %46, %cst_24 [1] : vector<16x12xf32> to vector<16xf32>
    %48 = vector.shape_cast %47 : vector<16xf32> to vector<16x1xf32>
    %49 = vector.broadcast %48 : vector<16x1xf32> to vector<16x12xf32>
    %50 = arith.subf %46, %49 : vector<16x12xf32>
    %51 = math.exp %50 : vector<16x12xf32>
    %52 = arith.mulf %51, %1 : vector<16x12xf32>
    %cst_25 = arith.constant dense<0.000000e+00> : vector<16xf32>
    %53 = vector.multi_reduction <add>, %52, %cst_25 [1] : vector<16x12xf32> to vector<16xf32>
    %54 = vector.shape_cast %53 : vector<16xf32> to vector<16x1xf32>
    %cst_26 = arith.constant 1.000000e-30 : f32
    %55 = vector.broadcast %cst_26 : f32 to vector<16x1xf32>
    %56 = arith.maximumf %54, %55 : vector<16x1xf32>
    %57 = vector.broadcast %56 : vector<16x1xf32> to vector<16x12xf32>
    %58 = arith.divf %52, %57 : vector<16x12xf32>
    %c0_27 = arith.constant 0 : index
    %c0_28 = arith.constant 0 : index
    %59 = vector.load %arg2[%c0_27, %c0_28] : memref<12x32xf32, #tpu.memory_space<vmem>>, vector<12x32xf32>
    %cst_29 = arith.constant dense<0.000000e+00> : vector<16x32xf32>
    %60 = tpu.matmul %58, %59, %cst_29 {dimension_numbers = #tpu.dot_dimension_numbers<[1], [0], [0], [1], [0, 0, 1, 1], [], []>, precision = #tpu.contract_precision<fp32>} : vector<16x12xf32>, vector<12x32xf32>, vector<16x32xf32> -> vector<16x32xf32>
    %c0_30 = arith.constant 0 : index
    %c0_31 = arith.constant 0 : index
    %c0_32 = arith.constant 0 : index
    %61 = vector.load %arg7[%c0_30, %c0_31, %c0_32] : memref<4x16x12xbf16, #tpu.memory_space<vmem>>, vector<1x16x12xbf16>
    %62 = vector.shape_cast %61 : vector<1x16x12xbf16> to vector<16x12xbf16>
    %63 = arith.extf %62 : vector<16x12xbf16> to vector<16x12xf32>
    %64 = arith.mulf %58, %63 : vector<16x12xf32>
    %cst_33 = arith.constant dense<0.000000e+00> : vector<16xf32>
    %65 = vector.multi_reduction <add>, %64, %cst_33 [1] : vector<16x12xf32> to vector<16xf32>
    %66 = vector.shape_cast %65 : vector<16xf32> to vector<16x1xf32>
    %c0_34 = arith.constant 0 : index
    %c0_35 = arith.constant 0 : index
    %67 = vector.load %arg6[%c0_34, %c0_35] : memref<4x32xf32, #tpu.memory_space<vmem>>, vector<1x32xf32>
    %68 = vector.broadcast %66 : vector<16x1xf32> to vector<16x32xf32>
    %69 = vector.broadcast %67 : vector<1x32xf32> to vector<16x32xf32>
    %70 = arith.mulf %68, %69 : vector<16x32xf32>
    %71 = arith.addf %60, %70 : vector<16x32xf32>
    %c1_36 = arith.constant 1 : index
    %c0_37 = arith.constant 0 : index
    %c0_38 = arith.constant 0 : index
    %72 = vector.load %arg7[%c1_36, %c0_37, %c0_38] : memref<4x16x12xbf16, #tpu.memory_space<vmem>>, vector<1x16x12xbf16>
    %73 = vector.shape_cast %72 : vector<1x16x12xbf16> to vector<16x12xbf16>
    %74 = arith.extf %73 : vector<16x12xbf16> to vector<16x12xf32>
    %75 = arith.mulf %58, %74 : vector<16x12xf32>
    %cst_39 = arith.constant dense<0.000000e+00> : vector<16xf32>
    %76 = vector.multi_reduction <add>, %75, %cst_39 [1] : vector<16x12xf32> to vector<16xf32>
    %77 = vector.shape_cast %76 : vector<16xf32> to vector<16x1xf32>
    %c1_40 = arith.constant 1 : index
    %c0_41 = arith.constant 0 : index
    %78 = vector.load %arg6[%c1_40, %c0_41] : memref<4x32xf32, #tpu.memory_space<vmem>>, vector<1x32xf32>
    %79 = vector.broadcast %77 : vector<16x1xf32> to vector<16x32xf32>
    %80 = vector.broadcast %78 : vector<1x32xf32> to vector<16x32xf32>
    %81 = arith.mulf %79, %80 : vector<16x32xf32>
    %82 = arith.addf %71, %81 : vector<16x32xf32>
    %c2_42 = arith.constant 2 : index
    %c0_43 = arith.constant 0 : index
    %c0_44 = arith.constant 0 : index
    %83 = vector.load %arg7[%c2_42, %c0_43, %c0_44] : memref<4x16x12xbf16, #tpu.memory_space<vmem>>, vector<1x16x12xbf16>
    %84 = vector.shape_cast %83 : vector<1x16x12xbf16> to vector<16x12xbf16>
    %85 = arith.extf %84 : vector<16x12xbf16> to vector<16x12xf32>
    %86 = arith.mulf %58, %85 : vector<16x12xf32>
    %cst_45 = arith.constant dense<0.000000e+00> : vector<16xf32>
    %87 = vector.multi_reduction <add>, %86, %cst_45 [1] : vector<16x12xf32> to vector<16xf32>
    %88 = vector.shape_cast %87 : vector<16xf32> to vector<16x1xf32>
    %c2_46 = arith.constant 2 : index
    %c0_47 = arith.constant 0 : index
    %89 = vector.load %arg6[%c2_46, %c0_47] : memref<4x32xf32, #tpu.memory_space<vmem>>, vector<1x32xf32>
    %90 = vector.broadcast %88 : vector<16x1xf32> to vector<16x32xf32>
    %91 = vector.broadcast %89 : vector<1x32xf32> to vector<16x32xf32>
    %92 = arith.mulf %90, %91 : vector<16x32xf32>
    %93 = arith.addf %82, %92 : vector<16x32xf32>
    %c3_48 = arith.constant 3 : index
    %c0_49 = arith.constant 0 : index
    %c0_50 = arith.constant 0 : index
    %94 = vector.load %arg7[%c3_48, %c0_49, %c0_50] : memref<4x16x12xbf16, #tpu.memory_space<vmem>>, vector<1x16x12xbf16>
    %95 = vector.shape_cast %94 : vector<1x16x12xbf16> to vector<16x12xbf16>
    %96 = arith.extf %95 : vector<16x12xbf16> to vector<16x12xf32>
    %97 = arith.mulf %58, %96 : vector<16x12xf32>
    %cst_51 = arith.constant dense<0.000000e+00> : vector<16xf32>
    %98 = vector.multi_reduction <add>, %97, %cst_51 [1] : vector<16x12xf32> to vector<16xf32>
    %99 = vector.shape_cast %98 : vector<16xf32> to vector<16x1xf32>
    %c3_52 = arith.constant 3 : index
    %c0_53 = arith.constant 0 : index
    %100 = vector.load %arg6[%c3_52, %c0_53] : memref<4x32xf32, #tpu.memory_space<vmem>>, vector<1x32xf32>
    %101 = vector.broadcast %99 : vector<16x1xf32> to vector<16x32xf32>
    %102 = vector.broadcast %100 : vector<1x32xf32> to vector<16x32xf32>
    %103 = arith.mulf %101, %102 : vector<16x32xf32>
    %104 = arith.addf %93, %103 : vector<16x32xf32>
    %105 = arith.addf %104, %2 : vector<16x32xf32>
    %cst_54 = arith.constant 0.000000e+00 : f32
    %106 = vector.broadcast %cst_54 : f32 to vector<16x32xf32>
    %107 = arith.cmpf ogt, %105, %106 : vector<16x32xf32>
    %cst_55 = arith.constant 0.000000e+00 : f32
    %108 = vector.broadcast %cst_55 : f32 to vector<16x32xf32>
    %109 = arith.minimumf %105, %108 : vector<16x32xf32>
    %110 = math.exp %109 : vector<16x32xf32>
    %cst_56 = arith.constant 1.000000e+00 : f32
    %111 = vector.broadcast %cst_56 : f32 to vector<16x32xf32>
    %112 = arith.subf %110, %111 : vector<16x32xf32>
    %113 = arith.select %107, %105, %112 : vector<16x32xi1>, vector<16x32xf32>
    %c0_57 = arith.constant 0 : index
    %c0_58 = arith.constant 0 : index
    %114 = vector.load %arg9[%c0_57, %c0_58] : memref<16x32xf32, #tpu.memory_space<vmem>>, vector<16x32xf32>
    tpu.vector_store %arg9[%c0_57, %c0_58], %113 {strides = array<i32>} : memref<16x32xf32, #tpu.memory_space<vmem>>, vector<16x32xf32>,
    return
  }
  func.func @transform_0(%arg0: i32) -> i32 {
    %c0_i32 = arith.constant 0 : i32
    %c0_i32_0 = arith.constant 0 : i32
    return %c0_i32 : i32
  }
  func.func @transform_1(%arg0: i32) -> (i32, i32) {
    %c0_i32 = arith.constant 0 : i32
    %c0_i32_0 = arith.constant 0 : i32
    %c0_i32_1 = arith.constant 0 : i32
    return %c0_i32, %c0_i32_0 : i32, i32
  }
  func.func @transform_2(%arg0: i32) -> (i32, i32) {
    %c0_i32 = arith.constant 0 : i32
    %c0_i32_0 = arith.constant 0 : i32
    %c0_i32_1 = arith.constant 0 : i32
    return %c0_i32, %c0_i32_0 : i32, i32
  }
  func.func @transform_3(%arg0: i32) -> (i32, i32) {
    %c0_i32 = arith.constant 0 : i32
    %c0_i32_0 = arith.constant 0 : i32
    return %arg0, %c0_i32 : i32, i32
  }
  func.func @transform_4(%arg0: i32) -> (i32, i32) {
    %c0_i32 = arith.constant 0 : i32
    %c0_i32_0 = arith.constant 0 : i32
    %c0_i32_1 = arith.constant 0 : i32
    return %c0_i32, %c0_i32_0 : i32, i32
  }
  func.func @transform_5(%arg0: i32) -> (i32, i32) {
    %c0_i32 = arith.constant 0 : i32
    %c0_i32_0 = arith.constant 0 : i32
    %c0_i32_1 = arith.constant 0 : i32
    return %c0_i32, %c0_i32_0 : i32, i32
  }
  func.func @transform_6(%arg0: i32) -> (i32, i32, i32) {
    %c0_i32 = arith.constant 0 : i32
    %c0_i32_0 = arith.constant 0 : i32
    %c0_i32_1 = arith.constant 0 : i32
    return %c0_i32, %arg0, %c0_i32_0 : i32, i32, i32
  }
  func.func @transform_7(%arg0: i32) -> (i32, i32) {
    %c0_i32 = arith.constant 0 : i32
    %c0_i32_0 = arith.constant 0 : i32
    return %arg0, %c0_i32 : i32, i32
  }
  func.func @transform_8(%arg0: i32) -> (i32, i32) {
    %c0_i32 = arith.constant 0 : i32
    %c0_i32_0 = arith.constant 0 : i32
    return %arg0, %c0_i32 : i32, i32
  }
}

module attributes {stable_mosaic.version = 11 : i64} {
  func.func @_head_kernel(%arg0: i32, %arg1: memref<8x32xf32, #tpu.memory_space<vmem>>, %arg2: memref<32x16xf32, #tpu.memory_space<vmem>>, %arg3: memref<1x16xf32, #tpu.memory_space<vmem>>, %arg4: memref<16x32xf32, #tpu.memory_space<vmem>>, %arg5: memref<1x32xf32, #tpu.memory_space<vmem>>, %arg6: memref<32x10xf32, #tpu.memory_space<vmem>>, %arg7: memref<1x10xf32, #tpu.memory_space<vmem>>, %arg8: memref<8x16xf32, #tpu.memory_space<vmem>>, %arg9: memref<8x10xf32, #tpu.memory_space<vmem>>) attributes {dimension_semantics = [#tpu.dimension_semantics<parallel>], iteration_bounds = array<i64: 3>, scalar_prefetch = 0 : i64, scratch_operands = 0 : i64, tpu.core_type = #tpu.core_type<tc>, window_params = [{transform_indices = @transform_0, window_bounds = array<i64: 8, 32>}, {pipeline_mode = #tpu.pipeline_mode<synchronous>, transform_indices = @transform_1, window_bounds = array<i64: 32, 16>}, {pipeline_mode = #tpu.pipeline_mode<synchronous>, transform_indices = @transform_2, window_bounds = array<i64: 1, 16>}, {pipeline_mode = #tpu.pipeline_mode<synchronous>, transform_indices = @transform_3, window_bounds = array<i64: 16, 32>}, {pipeline_mode = #tpu.pipeline_mode<synchronous>, transform_indices = @transform_4, window_bounds = array<i64: 1, 32>}, {pipeline_mode = #tpu.pipeline_mode<synchronous>, transform_indices = @transform_5, window_bounds = array<i64: 32, 10>}, {pipeline_mode = #tpu.pipeline_mode<synchronous>, transform_indices = @transform_6, window_bounds = array<i64: 1, 10>}, {transform_indices = @transform_7, window_bounds = array<i64: 8, 16>}, {transform_indices = @transform_8, window_bounds = array<i64: 8, 10>}]} {
    %c0 = arith.constant 0 : index
    %c0_0 = arith.constant 0 : index
    %0 = vector.load %arg1[%c0, %c0_0] : memref<8x32xf32, #tpu.memory_space<vmem>>, vector<8x32xf32>
    %c0_1 = arith.constant 0 : index
    %c0_2 = arith.constant 0 : index
    %1 = vector.load %arg2[%c0_1, %c0_2] : memref<32x16xf32, #tpu.memory_space<vmem>>, vector<32x16xf32>
    %cst = arith.constant dense<0.000000e+00> : vector<8x16xf32>
    %2 = tpu.matmul %0, %1, %cst {dimension_numbers = #tpu.dot_dimension_numbers<[1], [0], [0], [1], [0, 0, 1, 1], [], []>, precision = #tpu.contract_precision<fp32>} : vector<8x32xf32>, vector<32x16xf32>, vector<8x16xf32> -> vector<8x16xf32>
    %c0_3 = arith.constant 0 : index
    %c0_4 = arith.constant 0 : index
    %3 = vector.load %arg3[%c0_3, %c0_4] : memref<1x16xf32, #tpu.memory_space<vmem>>, vector<1x16xf32>
    %4 = vector.broadcast %3 : vector<1x16xf32> to vector<8x16xf32>
    %5 = arith.addf %2, %4 : vector<8x16xf32>
    %c0_5 = arith.constant 0 : index
    %c0_6 = arith.constant 0 : index
    %6 = vector.load %arg8[%c0_5, %c0_6] : memref<8x16xf32, #tpu.memory_space<vmem>>, vector<8x16xf32>
    tpu.vector_store %arg8[%c0_5, %c0_6], %5 {strides = array<i32>} : memref<8x16xf32, #tpu.memory_space<vmem>>, vector<8x16xf32>,
    %c0_7 = arith.constant 0 : index
    %c0_8 = arith.constant 0 : index
    %7 = vector.load %arg4[%c0_7, %c0_8] : memref<16x32xf32, #tpu.memory_space<vmem>>, vector<16x32xf32>
    %cst_9 = arith.constant dense<0.000000e+00> : vector<8x32xf32>
    %8 = tpu.matmul %5, %7, %cst_9 {dimension_numbers = #tpu.dot_dimension_numbers<[1], [0], [0], [1], [0, 0, 1, 1], [], []>, precision = #tpu.contract_precision<fp32>} : vector<8x16xf32>, vector<16x32xf32>, vector<8x32xf32> -> vector<8x32xf32>
    %c0_10 = arith.constant 0 : index
    %c0_11 = arith.constant 0 : index
    %9 = vector.load %arg5[%c0_10, %c0_11] : memref<1x32xf32, #tpu.memory_space<vmem>>, vector<1x32xf32>
    %10 = vector.broadcast %9 : vector<1x32xf32> to vector<8x32xf32>
    %11 = arith.addf %8, %10 : vector<8x32xf32>
    %cst_12 = arith.constant 0.000000e+00 : f32
    %12 = vector.broadcast %cst_12 : f32 to vector<8x32xf32>
    %13 = arith.maximumf %11, %12 : vector<8x32xf32>
    %c0_13 = arith.constant 0 : index
    %c0_14 = arith.constant 0 : index
    %14 = vector.load %arg6[%c0_13, %c0_14] : memref<32x10xf32, #tpu.memory_space<vmem>>, vector<32x10xf32>
    %cst_15 = arith.constant dense<0.000000e+00> : vector<8x10xf32>
    %15 = tpu.matmul %13, %14, %cst_15 {dimension_numbers = #tpu.dot_dimension_numbers<[1], [0], [0], [1], [0, 0, 1, 1], [], []>, precision = #tpu.contract_precision<fp32>} : vector<8x32xf32>, vector<32x10xf32>, vector<8x10xf32> -> vector<8x10xf32>
    %c0_16 = arith.constant 0 : index
    %c0_17 = arith.constant 0 : index
    %16 = vector.load %arg7[%c0_16, %c0_17] : memref<1x10xf32, #tpu.memory_space<vmem>>, vector<1x10xf32>
    %17 = vector.broadcast %16 : vector<1x10xf32> to vector<8x10xf32>
    %18 = arith.addf %15, %17 : vector<8x10xf32>
    %c0_18 = arith.constant 0 : index
    %c0_19 = arith.constant 0 : index
    %19 = vector.load %arg9[%c0_18, %c0_19] : memref<8x10xf32, #tpu.memory_space<vmem>>, vector<8x10xf32>
    tpu.vector_store %arg9[%c0_18, %c0_19], %18 {strides = array<i32>} : memref<8x10xf32, #tpu.memory_space<vmem>>, vector<8x10xf32>,
    return
  }
  func.func @transform_0(%arg0: i32) -> (i32, i32) {
    %c0_i32 = arith.constant 0 : i32
    %c0_i32_0 = arith.constant 0 : i32
    return %arg0, %c0_i32 : i32, i32
  }
  func.func @transform_1(%arg0: i32) -> (i32, i32) {
    %c0_i32 = arith.constant 0 : i32
    %c0_i32_0 = arith.constant 0 : i32
    %c0_i32_1 = arith.constant 0 : i32
    return %c0_i32, %c0_i32_0 : i32, i32
  }
  func.func @transform_2(%arg0: i32) -> (i32, i32) {
    %c0_i32 = arith.constant 0 : i32
    %c0_i32_0 = arith.constant 0 : i32
    %c0_i32_1 = arith.constant 0 : i32
    return %c0_i32, %c0_i32_0 : i32, i32
  }
  func.func @transform_3(%arg0: i32) -> (i32, i32) {
    %c0_i32 = arith.constant 0 : i32
    %c0_i32_0 = arith.constant 0 : i32
    %c0_i32_1 = arith.constant 0 : i32
    return %c0_i32, %c0_i32_0 : i32, i32
  }
  func.func @transform_4(%arg0: i32) -> (i32, i32) {
    %c0_i32 = arith.constant 0 : i32
    %c0_i32_0 = arith.constant 0 : i32
    %c0_i32_1 = arith.constant 0 : i32
    return %c0_i32, %c0_i32_0 : i32, i32
  }
  func.func @transform_5(%arg0: i32) -> (i32, i32) {
    %c0_i32 = arith.constant 0 : i32
    %c0_i32_0 = arith.constant 0 : i32
    %c0_i32_1 = arith.constant 0 : i32
    return %c0_i32, %c0_i32_0 : i32, i32
  }
  func.func @transform_6(%arg0: i32) -> (i32, i32) {
    %c0_i32 = arith.constant 0 : i32
    %c0_i32_0 = arith.constant 0 : i32
    %c0_i32_1 = arith.constant 0 : i32
    return %c0_i32, %c0_i32_0 : i32, i32
  }
  func.func @transform_7(%arg0: i32) -> (i32, i32) {
    %c0_i32 = arith.constant 0 : i32
    %c0_i32_0 = arith.constant 0 : i32
    return %arg0, %c0_i32 : i32, i32
  }
  func.func @transform_8(%arg0: i32) -> (i32, i32) {
    %c0_i32 = arith.constant 0 : i32
    %c0_i32_0 = arith.constant 0 : i32
    return %arg0, %c0_i32 : i32, i32
  }
}

module attributes {stable_mosaic.version = 11 : i64} {
  func.func @_head_kernel(%arg0: i32, %arg1: memref<8x32xf32, #tpu.memory_space<vmem>>, %arg2: memref<32x16xf32, #tpu.memory_space<vmem>>, %arg3: memref<1x16xf32, #tpu.memory_space<vmem>>, %arg4: memref<16x32xf32, #tpu.memory_space<vmem>>, %arg5: memref<1x32xf32, #tpu.memory_space<vmem>>, %arg6: memref<32x6xf32, #tpu.memory_space<vmem>>, %arg7: memref<1x6xf32, #tpu.memory_space<vmem>>, %arg8: memref<8x16xf32, #tpu.memory_space<vmem>>, %arg9: memref<8x6xf32, #tpu.memory_space<vmem>>) attributes {dimension_semantics = [#tpu.dimension_semantics<parallel>], iteration_bounds = array<i64: 2>, scalar_prefetch = 0 : i64, scratch_operands = 0 : i64, tpu.core_type = #tpu.core_type<tc>, window_params = [{transform_indices = @transform_0, window_bounds = array<i64: 8, 32>}, {pipeline_mode = #tpu.pipeline_mode<synchronous>, transform_indices = @transform_1, window_bounds = array<i64: 32, 16>}, {pipeline_mode = #tpu.pipeline_mode<synchronous>, transform_indices = @transform_2, window_bounds = array<i64: 1, 16>}, {pipeline_mode = #tpu.pipeline_mode<synchronous>, transform_indices = @transform_3, window_bounds = array<i64: 16, 32>}, {pipeline_mode = #tpu.pipeline_mode<synchronous>, transform_indices = @transform_4, window_bounds = array<i64: 1, 32>}, {pipeline_mode = #tpu.pipeline_mode<synchronous>, transform_indices = @transform_5, window_bounds = array<i64: 32, 6>}, {pipeline_mode = #tpu.pipeline_mode<synchronous>, transform_indices = @transform_6, window_bounds = array<i64: 1, 6>}, {transform_indices = @transform_7, window_bounds = array<i64: 8, 16>}, {transform_indices = @transform_8, window_bounds = array<i64: 8, 6>}]} {
    %c0 = arith.constant 0 : index
    %c0_0 = arith.constant 0 : index
    %0 = vector.load %arg1[%c0, %c0_0] : memref<8x32xf32, #tpu.memory_space<vmem>>, vector<8x32xf32>
    %c0_1 = arith.constant 0 : index
    %c0_2 = arith.constant 0 : index
    %1 = vector.load %arg2[%c0_1, %c0_2] : memref<32x16xf32, #tpu.memory_space<vmem>>, vector<32x16xf32>
    %cst = arith.constant dense<0.000000e+00> : vector<8x16xf32>
    %2 = tpu.matmul %0, %1, %cst {dimension_numbers = #tpu.dot_dimension_numbers<[1], [0], [0], [1], [0, 0, 1, 1], [], []>, precision = #tpu.contract_precision<fp32>} : vector<8x32xf32>, vector<32x16xf32>, vector<8x16xf32> -> vector<8x16xf32>
    %c0_3 = arith.constant 0 : index
    %c0_4 = arith.constant 0 : index
    %3 = vector.load %arg3[%c0_3, %c0_4] : memref<1x16xf32, #tpu.memory_space<vmem>>, vector<1x16xf32>
    %4 = vector.broadcast %3 : vector<1x16xf32> to vector<8x16xf32>
    %5 = arith.addf %2, %4 : vector<8x16xf32>
    %c0_5 = arith.constant 0 : index
    %c0_6 = arith.constant 0 : index
    %6 = vector.load %arg8[%c0_5, %c0_6] : memref<8x16xf32, #tpu.memory_space<vmem>>, vector<8x16xf32>
    tpu.vector_store %arg8[%c0_5, %c0_6], %5 {strides = array<i32>} : memref<8x16xf32, #tpu.memory_space<vmem>>, vector<8x16xf32>,
    %c0_7 = arith.constant 0 : index
    %c0_8 = arith.constant 0 : index
    %7 = vector.load %arg4[%c0_7, %c0_8] : memref<16x32xf32, #tpu.memory_space<vmem>>, vector<16x32xf32>
    %cst_9 = arith.constant dense<0.000000e+00> : vector<8x32xf32>
    %8 = tpu.matmul %5, %7, %cst_9 {dimension_numbers = #tpu.dot_dimension_numbers<[1], [0], [0], [1], [0, 0, 1, 1], [], []>, precision = #tpu.contract_precision<fp32>} : vector<8x16xf32>, vector<16x32xf32>, vector<8x32xf32> -> vector<8x32xf32>
    %c0_10 = arith.constant 0 : index
    %c0_11 = arith.constant 0 : index
    %9 = vector.load %arg5[%c0_10, %c0_11] : memref<1x32xf32, #tpu.memory_space<vmem>>, vector<1x32xf32>
    %10 = vector.broadcast %9 : vector<1x32xf32> to vector<8x32xf32>
    %11 = arith.addf %8, %10 : vector<8x32xf32>
    %cst_12 = arith.constant 0.000000e+00 : f32
    %12 = vector.broadcast %cst_12 : f32 to vector<8x32xf32>
    %13 = arith.maximumf %11, %12 : vector<8x32xf32>
    %c0_13 = arith.constant 0 : index
    %c0_14 = arith.constant 0 : index
    %14 = vector.load %arg6[%c0_13, %c0_14] : memref<32x6xf32, #tpu.memory_space<vmem>>, vector<32x6xf32>
    %cst_15 = arith.constant dense<0.000000e+00> : vector<8x6xf32>
    %15 = tpu.matmul %13, %14, %cst_15 {dimension_numbers = #tpu.dot_dimension_numbers<[1], [0], [0], [1], [0, 0, 1, 1], [], []>, precision = #tpu.contract_precision<fp32>} : vector<8x32xf32>, vector<32x6xf32>, vector<8x6xf32> -> vector<8x6xf32>
    %c0_16 = arith.constant 0 : index
    %c0_17 = arith.constant 0 : index
    %16 = vector.load %arg7[%c0_16, %c0_17] : memref<1x6xf32, #tpu.memory_space<vmem>>, vector<1x6xf32>
    %17 = vector.broadcast %16 : vector<1x6xf32> to vector<8x6xf32>
    %18 = arith.addf %15, %17 : vector<8x6xf32>
    %c0_18 = arith.constant 0 : index
    %c0_19 = arith.constant 0 : index
    %19 = vector.load %arg9[%c0_18, %c0_19] : memref<8x6xf32, #tpu.memory_space<vmem>>, vector<8x6xf32>
    tpu.vector_store %arg9[%c0_18, %c0_19], %18 {strides = array<i32>} : memref<8x6xf32, #tpu.memory_space<vmem>>, vector<8x6xf32>,
    return
  }
  func.func @transform_0(%arg0: i32) -> (i32, i32) {
    %c0_i32 = arith.constant 0 : i32
    %c0_i32_0 = arith.constant 0 : i32
    return %arg0, %c0_i32 : i32, i32
  }
  func.func @transform_1(%arg0: i32) -> (i32, i32) {
    %c0_i32 = arith.constant 0 : i32
    %c0_i32_0 = arith.constant 0 : i32
    %c0_i32_1 = arith.constant 0 : i32
    return %c0_i32, %c0_i32_0 : i32, i32
  }
  func.func @transform_2(%arg0: i32) -> (i32, i32) {
    %c0_i32 = arith.constant 0 : i32
    %c0_i32_0 = arith.constant 0 : i32
    %c0_i32_1 = arith.constant 0 : i32
    return %c0_i32, %c0_i32_0 : i32, i32
  }
  func.func @transform_3(%arg0: i32) -> (i32, i32) {
    %c0_i32 = arith.constant 0 : i32
    %c0_i32_0 = arith.constant 0 : i32
    %c0_i32_1 = arith.constant 0 : i32
    return %c0_i32, %c0_i32_0 : i32, i32
  }
  func.func @transform_4(%arg0: i32) -> (i32, i32) {
    %c0_i32 = arith.constant 0 : i32
    %c0_i32_0 = arith.constant 0 : i32
    %c0_i32_1 = arith.constant 0 : i32
    return %c0_i32, %c0_i32_0 : i32, i32
  }
  func.func @transform_5(%arg0: i32) -> (i32, i32) {
    %c0_i32 = arith.constant 0 : i32
    %c0_i32_0 = arith.constant 0 : i32
    %c0_i32_1 = arith.constant 0 : i32
    return %c0_i32, %c0_i32_0 : i32, i32
  }
  func.func @transform_6(%arg0: i32) -> (i32, i32) {
    %c0_i32 = arith.constant 0 : i32
    %c0_i32_0 = arith.constant 0 : i32
    %c0_i32_1 = arith.constant 0 : i32
    return %c0_i32, %c0_i32_0 : i32, i32
  }
  func.func @transform_7(%arg0: i32) -> (i32, i32) {
    %c0_i32 = arith.constant 0 : i32
    %c0_i32_0 = arith.constant 0 : i32
    return %arg0, %c0_i32 : i32, i32
  }
  func.func @transform_8(%arg0: i32) -> (i32, i32) {
    %c0_i32 = arith.constant 0 : i32
    %c0_i32_0 = arith.constant 0 : i32
    return %arg0, %c0_i32 : i32, i32
  }
}

</mosaic_0001>

<llo_original>
// kernel: model_forward.9
$region0: #{model_forward.9}
  #allocation0 [shape = 'u32[]', space=smem, size = 0x4, offset = 0x4, fixed_abs, tag = 'smem constant byte address 0x4 - core index']
  #allocation1 [shape = 'u32[144,128]{1,0:T(1,128)}', space=vmem, size = 0x12000, scoped, tag = 'internal scratch']
  %s0 = inlined_call_operand.vmem [shape: f32[12,6], index: 0, kind: input, shape index: {}]
  %s1 = inlined_call_operand.vmem [shape: f32[6,32], index: 1, kind: input, shape index: {}]
  %s2 = inlined_call_operand.vmem [shape: f32[1,32], index: 2, kind: input, shape index: {}]
  %s3 = inlined_call_operand.vmem [shape: f32[12,32], index: 3, kind: output, shape index: {}]
  %s4 = sld [smem:[#allocation0]]
  $region45: #{model_forward.9} parent=0
    _
  %s6 = ssub.s32 1, %s4
  %s7 = scalar_select 0, %s6, %s4
  loop: start=0, step=1, limit=4
  $region2: #{model_forward.9} parent=0 // loop_pre_header
    _
  $region3: #{model_forward.9} parent=0 // loop_header
    %s9 = sphi 0, %s13
    %p10 = scmp.ge.s32.totalorder %s9, 4
    %s19 = sphi 0, %s21
    %s22 = sphi 0, %s19
    %s23 = sphi 0, %s22
    %s39 = sphi 0, %s23
    %s43 = sphi 0, %s43
    %s45 = sphi 0, %s43
    %s46 = sphi 0, %s45
    %s60 = sphi 0, %s46
    %s64 = sphi 0, %s64
    %s66 = sphi 0, %s64
    %s67 = sphi 0, %s66
    %s81 = sphi 0, %s67
    %s87 = sphi 0, %s89
    %s90 = sphi 0, %s87
    %s91 = sphi 0, %s90
    %s107 = sphi 0, %s91
  $region4: #{model_forward.9} parent=0 // loop_header_branch
    %12 = sbr.rel (%p10) target = $region8
  $region5: #{model_forward.9} parent=0 // loop_body
    %s14 = ssub.s32 %s9, 1
    %s15 = ssub.s32 %s9, 2
    %s16 = sadd.s32 %s9, 1
    %s17 = ssub.s32 %s9, %s16
    %p18 = scmp.eq.s32.totalorder %s17, 0
    %s20 = sadd.s32 %s19, 1
    %s21 = scalar_select %p18, %s19, %s20
    %p24 = pneg %p18
    %p25 = scmp.eq.s32.totalorder %s9, 1
    %p26 = por %p24, %p25
    %p27 = scmp.ne.s32.totalorder %s19, %s22
    %p28 = scmp.eq.s32.totalorder %s9, 0
    %p29 = por %p27, %p28
    %p30 = scmp.ne.s32.totalorder %s19, %s22
    %p31 = scmp.eq.s32.totalorder %s14, 1
    %p32 = por %p30, %p31
    %p33 = scmp.ne.s32.totalorder %s22, %s23
    %p34 = scmp.eq.s32.totalorder %s14, 0
    %p35 = por %p33, %p34
    %p36 = scmp.ne.s32.totalorder %s22, %s23
    %p37 = scmp.eq.s32.totalorder %s15, 1
    %p38 = por %p36, %p37
    %p40 = scmp.ne.s32.totalorder %s23, %s39
    %p41 = scmp.eq.s32.totalorder %s15, 0
    %p42 = por %p40, %p41
    %s44 = sadd.s32 %s43, 1
    %p47 = scmp.eq.s32.totalorder %s9, 1
    %p48 = scmp.ne.s32.totalorder %s43, %s45
    %p49 = scmp.eq.s32.totalorder %s9, 0
    %p50 = por %p48, %p49
    %p51 = scmp.ne.s32.totalorder %s43, %s45
    %p52 = scmp.eq.s32.totalorder %s14, 1
    %p53 = por %p51, %p52
    %p54 = scmp.ne.s32.totalorder %s45, %s46
    %p55 = scmp.eq.s32.totalorder %s14, 0
    %p56 = por %p54, %p55
    %p57 = scmp.ne.s32.totalorder %s45, %s46
    %p58 = scmp.eq.s32.totalorder %s15, 1
    %p59 = por %p57, %p58
    %p61 = scmp.ne.s32.totalorder %s46, %s60
    %p62 = scmp.eq.s32.totalorder %s15, 0
    %p63 = por %p61, %p62
    %s65 = sadd.s32 %s64, 1
    %p68 = scmp.eq.s32.totalorder %s9, 1
    %p69 = scmp.ne.s32.totalorder %s64, %s66
    %p70 = scmp.eq.s32.totalorder %s9, 0
    %p71 = por %p69, %p70
    %p72 = scmp.ne.s32.totalorder %s64, %s66
    %p73 = scmp.eq.s32.totalorder %s14, 1
    %p74 = por %p72, %p73
    %p75 = scmp.ne.s32.totalorder %s66, %s67
    %p76 = scmp.eq.s32.totalorder %s14, 0
    %p77 = por %p75, %p76
    %p78 = scmp.ne.s32.totalorder %s66, %s67
    %p79 = scmp.eq.s32.totalorder %s15, 1
    %p80 = por %p78, %p79
    %p82 = scmp.ne.s32.totalorder %s67, %s81
    %p83 = scmp.eq.s32.totalorder %s15, 0
    %p84 = por %p82, %p83
    %s85 = ssub.s32 %s9, %s16
    %p86 = scmp.eq.s32.totalorder %s85, 0
    %s88 = sadd.s32 %s87, 1
    %s89 = scalar_select %p86, %s87, %s88
    %p92 = pneg %p86
    %p93 = scmp.eq.s32.totalorder %s9, 1
    %p94 = por %p92, %p93
    %p95 = scmp.ne.s32.totalorder %s87, %s90
    %p96 = scmp.eq.s32.totalorder %s9, 0
    %p97 = por %p95, %p96
    %p98 = scmp.ne.s32.totalorder %s87, %s90
    %p99 = scmp.eq.s32.totalorder %s14, 1
    %p100 = por %p98, %p99
    %p101 = scmp.ne.s32.totalorder %s90, %s91
    %p102 = scmp.eq.s32.totalorder %s14, 0
    %p103 = por %p101, %p102
    %p104 = scmp.ne.s32.totalorder %s90, %s91
    %p105 = scmp.eq.s32.totalorder %s15, 1
    %p106 = por %p104, %p105
    %p108 = scmp.ne.s32.totalorder %s91, %s107
    %p109 = scmp.eq.s32.totalorder %s15, 0
    %p110 = por %p108, %p109
    %p111 = scmp.le.s32.totalorder 1, %s9
    %p112 = scmp.lt.s32.totalorder %s9, 3
    %p113 = pnand %p111, %p112
    %p114 = pneg %p113
    // Predicated region
    $region9: #{model_forward.9} parent=5 // pred_check
      _
    $region10: #{model_forward.9} parent=5 // pred_check_branch
      %116 = sbr.rel (%p113) target = $region12
    $region11: #{model_forward.9} parent=5 // pred_region
      %s117 = ssub.s32 %s9, 1
      // Predicated region
      $region13: #{model_forward.9} parent=11 // pred_check
        %p118 = pneg %p56
      $region14: #{model_forward.9} parent=11 // pred_check_branch
        %120 = sbr.rel (%p118) target = $region16
      $region15: #{model_forward.9} parent=11 // pred_region
        _
      $region16: #{model_forward.9} parent=11 // pred_fallthru
        _
      // Predicated region
      $region17: #{model_forward.9} parent=11 // pred_check
        %p121 = pneg %p77
      $region18: #{model_forward.9} parent=11 // pred_check_branch
        %123 = sbr.rel (%p121) target = $region20
      $region19: #{model_forward.9} parent=11 // pred_region
        _
      $region20: #{model_forward.9} parent=11 // pred_fallthru
        _
    $region12: #{model_forward.9} parent=5 // pred_fallthru
      _
    %p124 = scmp.lt.s32.totalorder %s9, 2
    // Predicated region
    $region21: #{model_forward.9} parent=5 // pred_check
      %p125 = pneg %p124
    $region22: #{model_forward.9} parent=5 // pred_check_branch
      %127 = sbr.rel (%p125) target = $region24
    $region23: #{model_forward.9} parent=5 // pred_region
      // Predicated region
      $region25: #{model_forward.9} parent=23 // pred_check
        %p128 = pneg %p29
      $region26: #{model_forward.9} parent=23 // pred_check_branch
        %130 = sbr.rel (%p128) target = $region28
      $region27: #{model_forward.9} parent=23 // pred_region
        %p131 = scmp.lt.s32.totalorder %s9, 1
        %s132 = scalar_select %p131, %s9, 1
        %s133 = smul.addr %s132, 8
        %s134 = scalar_lea.vmem %s0, %s133
      $region28: #{model_forward.9} parent=23 // pred_fallthru
        _
    $region24: #{model_forward.9} parent=5 // pred_fallthru
      _
    %p135 = scmp.le.s32.totalorder 1, %s9
    %p136 = scmp.lt.s32.totalorder %s9, 3
    %p137 = pnand %p135, %p136
    %p138 = pneg %p137
    // Predicated region
    $region29: #{model_forward.9} parent=5 // pred_check
      _
    $region30: #{model_forward.9} parent=5 // pred_check_branch
      %140 = sbr.rel (%p137) target = $region32
    $region31: #{model_forward.9} parent=5 // pred_region
      %s141 = ssub.s32 %s9, 1
      %p142 = scmp.lt.s32.totalorder %s14, 1
      %s143 = scalar_select %p142, %s14, 1
      %s144 = smul.addr %s143, 8
      %s145 = scalar_lea.vmem %s0, %s144
      %p146 = pneg %p35
      %p147 = pneg %p32
      %p148 = pneg %p56
      %p149 = pneg %p53
      %p150 = pneg %p77
      %p151 = pneg %p74
      %p152 = pneg %p103
      %p153 = pneg %p100
      %p154 = scmp.lt.s32.totalorder %s14, 1
      %s155 = scalar_select %p154, %s14, 1
      %s156 = smul.addr %s155, 8
      %s157 = scalar_lea.vmem %s3, %s156
      %p158 = scmp.lt.s32.totalorder %s14, 1
      %s159 = scalar_select %p158, %s14, 1
      %s160 = smul.addr %s159, 8
      %s161 = scalar_lea.vmem %s0, %s160
      %p162 = scmp.lt.s32.totalorder %s14, 1
      %s163 = scalar_select %p162, %s14, 1
      %s164 = smul.addr %s163, 8
      %s165 = scalar_lea.vmem %s3, %s164
      %v166 = vld [vmem:[%s161] sm:$0xff]
      %v167 = vld [vmem:[%s1] sm:$0x3f]
      %v168 = vld [vmem:[%s2] sm:$0x1]
      %v170 = vlaneseq
      %v171 = vshrl.u32 %v170, 7
      %v172 = vsub.s32 0, %v171
      %v173 = vrot.slane %v168, %v172
      %vm175 = vcmask 48128
      %v177 = vsel %vm175, %v166, 0
      %vm179 = vcmask 1045504
      %v181 = vsel %vm179, %v167, 0
      %183 = vmatprep.subr.mxu0 0.0
      %v184 = vand.u32 %v181, 4294901760
      %185 = vmatpush1.msra.mxu0 %v184
      %186 = vmatprep.subr.mxu0 0.0
      %187 = vmatpush1.msra.mxu0 0.0
      %188 = vmatprep.subr.mxu0 0.0
      %189 = vmatpush1.msra.mxu0 0.0
      %190 = vmatprep.subr.mxu0 0.0
      %191 = vmatpush1.msra.mxu0 0.0
      %192 = vmatprep.subr.mxu0 0.0
      %193 = vmatpush1.msra.mxu0 0.0
      %194 = vmatprep.subr.mxu0 0.0
      %195 = vmatpush1.msra.mxu0 0.0
      %196 = vmatprep.subr.mxu0 0.0
      %197 = vmatpush1.msra.mxu0 0.0
      %198 = vmatprep.subr.mxu0 0.0
      %199 = vmatpush1.msra.mxu0 0.0
      %200 = vmatprep.subr.mxu0 0.0
      %201 = vmatpush1.msra.mxu0 0.0
      %202 = vmatprep.subr.mxu0 0.0
      %203 = vmatpush1.msra.mxu0 0.0
      %204 = vmatprep.subr.mxu0 0.0
      %205 = vmatpush1.msra.mxu0 0.0
      %206 = vmatprep.subr.mxu0 0.0
      %207 = vmatpush1.msra.mxu0 0.0
      %208 = vmatprep.subr.mxu0 0.0
      %209 = vmatpush1.msra.mxu0 0.0
      %210 = vmatprep.subr.mxu0 0.0
      %211 = vmatpush1.msra.mxu0 0.0
      %212 = vmatprep.subr.mxu0 0.0
      %213 = vmatpush1.msra.mxu0 0.0
      %214 = vmatprep.subr.mxu0 0.0
      %215 = vmatpush1.msra.mxu0 0.0
      %216 = vmatprep.subr.mxu0 0.0
      %217 = vmatpush1.msra.mxu0 0.0
      %218 = vmatprep.subr.mxu0 0.0
      %219 = vmatpush1.msra.mxu0 0.0
      %220 = vmatprep.subr.mxu0 0.0
      %221 = vmatpush1.msra.mxu0 0.0
      %222 = vmatprep.subr.mxu0 0.0
      %223 = vmatpush1.msra.mxu0 0.0
      %224 = vmatprep.subr.mxu0 0.0
      %225 = vmatpush1.msra.mxu0 0.0
      %226 = vmatprep.subr.mxu0 0.0
      %227 = vmatpush1.msra.mxu0 0.0
      %228 = vmatprep.subr.mxu0 0.0
      %229 = vmatpush1.msra.mxu0 0.0
      %230 = vmatprep.subr.mxu0 0.0
      %231 = vmatpush1.msra.mxu0 0.0
      %232 = vmatprep.subr.mxu0 0.0
      %233 = vmatpush1.msra.mxu0 0.0
      %234 = vmatprep.subr.mxu0 0.0
      %235 = vmatpush1.msra.mxu0 0.0
      %236 = vmatprep.subr.mxu0 0.0
      %237 = vmatpush1.msra.mxu0 0.0
      %238 = vmatprep.subr.mxu0 0.0
      %239 = vmatpush1.msra.mxu0 0.0
      %240 = vmatprep.subr.mxu0 0.0
      %241 = vmatpush1.msra.mxu0 0.0
      %242 = vmatprep.subr.mxu0 0.0
      %243 = vmatpush1.msra.mxu0 0.0
      %244 = vmatprep.subr.mxu0 0.0
      %245 = vmatpush1.msra.mxu0 0.0
      %246 = vmatprep.subr.mxu0 0.0
      %247 = vmatpush1.msra.mxu0 0.0
      %248 = vmatprep.mubr.f32.mxu0 0.0
      %v249 = vand.u32 %v177, 4294901760
      %v250 = vsub.f32 %v177, %v249
      %v251 = vand.u32 %v250, 4294901760
      %v252 = vsub.f32 %v250, %v251
      %v253 = vand.u32 %v252, 4294901760
      %254 = vmatmul.mubr.f32.gmra.mrb[0].mxu0 %v253
      %v255 = vpop.f32.mrb[0].mxu0
      %v256 = vadd.f32 %v173, %v255
      %v257 = vpop.f32.mrb[0].mxu0
      %258 = vdwg.mxu0
      %259 = vmatprep.subr.mxu0 0.0
      %v260 = vand.u32 %v181, 4294901760
      %v261 = vsub.f32 %v181, %v260
      %v262 = vand.u32 %v261, 4294901760
      %v263 = vsub.f32 %v261, %v262
      %v264 = vand.u32 %v263, 4294901760
      %265 = vmatpush1.msra.mxu0 %v264
      %266 = vmatprep.subr.mxu0 0.0
      %267 = vmatpush1.msra.mxu0 0.0
      %268 = vmatprep.subr.mxu0 0.0
      %269 = vmatpush1.msra.mxu0 0.0
      %270 = vmatprep.subr.mxu0 0.0
      %271 = vmatpush1.msra.mxu0 0.0
      %272 = vmatprep.subr.mxu0 0.0
      %273 = vmatpush1.msra.mxu0 0.0
      %274 = vmatprep.subr.mxu0 0.0
      %275 = vmatpush1.msra.mxu0 0.0
      %276 = vmatprep.subr.mxu0 0.0
      %277 = vmatpush1.msra.mxu0 0.0
      %278 = vmatprep.subr.mxu0 0.0
      %279 = vmatpush1.msra.mxu0 0.0
      %280 = vmatprep.subr.mxu0 0.0
      %281 = vmatpush1.msra.mxu0 0.0
      %282 = vmatprep.subr.mxu0 0.0
      %283 = vmatpush1.msra.mxu0 0.0
      %284 = vmatprep.subr.mxu0 0.0
      %285 = vmatpush1.msra.mxu0 0.0
      %286 = vmatprep.subr.mxu0 0.0
      %287 = vmatpush1.msra.mxu0 0.0
      %288 = vmatprep.subr.mxu0 0.0
      %289 = vmatpush1.msra.mxu0 0.0
      %290 = vmatprep.subr.mxu0 0.0
      %291 = vmatpush1.msra.mxu0 0.0
      %292 = vmatprep.subr.mxu0 0.0
      %293 = vmatpush1.msra.mxu0 0.0
      %294 = vmatprep.subr.mxu0 0.0
      %295 = vmatpush1.msra.mxu0 0.0
      %296 = vmatprep.subr.mxu0 0.0
      %297 = vmatpush1.msra.mxu0 0.0
      %298 = vmatprep.subr.mxu0 0.0
      %299 = vmatpush1.msra.mxu0 0.0
      %300 = vmatprep.subr.mxu0 0.0
      %301 = vmatpush1.msra.mxu0 0.0
      %302 = vmatprep.subr.mxu0 0.0
      %303 = vmatpush1.msra.mxu0 0.0
      %304 = vmatprep.subr.mxu0 0.0
      %305 = vmatpush1.msra.mxu0 0.0
      %306 = vmatprep.subr.mxu0 0.0
      %307 = vmatpush1.msra.mxu0 0.0
      %308 = vmatprep.subr.mxu0 0.0
      %309 = vmatpush1.msra.mxu0 0.0
      %310 = vmatprep.subr.mxu0 0.0
      %311 = vmatpush1.msra.mxu0 0.0
      %312 = vmatprep.subr.mxu0 0.0
      %313 = vmatpush1.msra.mxu0 0.0
      %314 = vmatprep.subr.mxu0 0.0
      %315 = vmatpush1.msra.mxu0 0.0
      %316 = vmatprep.subr.mxu0 0.0
      %317 = vmatpush1.msra.mxu0 0.0
      %318 = vmatprep.subr.mxu0 0.0
      %319 = vmatpush1.msra.mxu0 0.0
      %320 = vmatprep.subr.mxu0 0.0
      %321 = vmatpush1.msra.mxu0 0.0
      %322 = vmatprep.subr.mxu0 0.0
      %323 = vmatpush1.msra.mxu0 0.0
      %324 = vmatprep.subr.mxu0 0.0
      %325 = vmatpush1.msra.mxu0 0.0
      %326 = vmatprep.subr.mxu0 0.0
      %327 = vmatpush1.msra.mxu0 0.0
      %328 = vmatprep.mubr.f32.mxu0 0.0
      %v329 = vand.u32 %v177, 4294901760
      %330 = vmatmul.mubr.f32.gmra.mrb[0].mxu0 %v329
      %v331 = vpop.f32.mrb[0].mxu0
      %v332 = vadd.f32 %v256, %v331
      %v333 = vpop.f32.mrb[0].mxu0
      %334 = vdwg.mxu0
      %335 = vmatprep.subr.mxu0 0.0
      %v336 = vand.u32 %v181, 4294901760
      %v337 = vsub.f32 %v181, %v336
      %338 = vmatpush1.msra.mxu0 %v337
      %339 = vmatprep.subr.mxu0 0.0
      %340 = vmatpush1.msra.mxu0 0.0
      %341 = vmatprep.subr.mxu0 0.0
      %342 = vmatpush1.msra.mxu0 0.0
      %343 = vmatprep.subr.mxu0 0.0
      %344 = vmatpush1.msra.mxu0 0.0
      %345 = vmatprep.subr.mxu0 0.0
      %346 = vmatpush1.msra.mxu0 0.0
      %347 = vmatprep.subr.mxu0 0.0
      %348 = vmatpush1.msra.mxu0 0.0
      %349 = vmatprep.subr.mxu0 0.0
      %350 = vmatpush1.msra.mxu0 0.0
      %351 = vmatprep.subr.mxu0 0.0
      %352 = vmatpush1.msra.mxu0 0.0
      %353 = vmatprep.subr.mxu0 0.0
      %354 = vmatpush1.msra.mxu0 0.0
      %355 = vmatprep.subr.mxu0 0.0
      %356 = vmatpush1.msra.mxu0 0.0
      %357 = vmatprep.subr.mxu0 0.0
      %358 = vmatpush1.msra.mxu0 0.0
      %359 = vmatprep.subr.mxu0 0.0
      %360 = vmatpush1.msra.mxu0 0.0
      %361 = vmatprep.subr.mxu0 0.0
      %362 = vmatpush1.msra.mxu0 0.0
      %363 = vmatprep.subr.mxu0 0.0
      %364 = vmatpush1.msra.mxu0 0.0
      %365 = vmatprep.subr.mxu0 0.0
      %366 = vmatpush1.msra.mxu0 0.0
      %367 = vmatprep.subr.mxu0 0.0
      %368 = vmatpush1.msra.mxu0 0.0
      %369 = vmatprep.subr.mxu0 0.0
      %370 = vmatpush1.msra.mxu0 0.0
      %371 = vmatprep.subr.mxu0 0.0
      %372 = vmatpush1.msra.mxu0 0.0
      %373 = vmatprep.subr.mxu0 0.0
      %374 = vmatpush1.msra.mxu0 0.0
      %375 = vmatprep.subr.mxu0 0.0
      %376 = vmatpush1.msra.mxu0 0.0
      %377 = vmatprep.subr.mxu0 0.0
      %378 = vmatpush1.msra.mxu0 0.0
      %379 = vmatprep.subr.mxu0 0.0
      %380 = vmatpush1.msra.mxu0 0.0
      %381 = vmatprep.subr.mxu0 0.0
      %382 = vmatpush1.msra.mxu0 0.0
      %383 = vmatprep.subr.mxu0 0.0
      %384 = vmatpush1.msra.mxu0 0.0
      %385 = vmatprep.subr.mxu0 0.0
      %386 = vmatpush1.msra.mxu0 0.0
      %387 = vmatprep.subr.mxu0 0.0
      %388 = vmatpush1.msra.mxu0 0.0
      %389 = vmatprep.subr.mxu0 0.0
      %390 = vmatpush1.msra.mxu0 0.0
      %391 = vmatprep.subr.mxu0 0.0
      %392 = vmatpush1.msra.mxu0 0.0
      %393 = vmatprep.subr.mxu0 0.0
      %394 = vmatpush1.msra.mxu0 0.0
      %395 = vmatprep.subr.mxu0 0.0
      %396 = vmatpush1.msra.mxu0 0.0
      %397 = vmatprep.subr.mxu0 0.0
      %398 = vmatpush1.msra.mxu0 0.0
      %399 = vmatprep.subr.mxu0 0.0
      %400 = vmatpush1.msra.mxu0 0.0
      %401 = vmatprep.mubr.f32.mxu0 0.0
      %v402 = vand.u32 %v177, 4294901760
      %v403 = vsub.f32 %v177, %v402
      %404 = vmatmul.mubr.f32.gmra.mrb[0].mxu0 %v403
      %v405 = vpop.f32.mrb[0].mxu0
      %v406 = vadd.f32 %v332, %v405
      %v407 = vpop.f32.mrb[0].mxu0
      %408 = vdwg.mxu0
      %409 = vmatprep.subr.mxu0 0.0
      %v410 = vand.u32 %v181, 4294901760
      %411 = vmatpush1.msra.mxu0 %v410
      %412 = vmatprep.subr.mxu0 0.0
      %413 = vmatpush1.msra.mxu0 0.0
      %414 = vmatprep.subr.mxu0 0.0
      %415 = vmatpush1.msra.mxu0 0.0
      %416 = vmatprep.subr.mxu0 0.0
      %417 = vmatpush1.msra.mxu0 0.0
      %418 = vmatprep.subr.mxu0 0.0
      %419 = vmatpush1.msra.mxu0 0.0
      %420 = vmatprep.subr.mxu0 0.0
      %421 = vmatpush1.msra.mxu0 0.0
      %422 = vmatprep.subr.mxu0 0.0
      %423 = vmatpush1.msra.mxu0 0.0
      %424 = vmatprep.subr.mxu0 0.0
      %425 = vmatpush1.msra.mxu0 0.0
      %426 = vmatprep.subr.mxu0 0.0
      %427 = vmatpush1.msra.mxu0 0.0
      %428 = vmatprep.subr.mxu0 0.0
      %429 = vmatpush1.msra.mxu0 0.0
      %430 = vmatprep.subr.mxu0 0.0
      %431 = vmatpush1.msra.mxu0 0.0
      %432 = vmatprep.subr.mxu0 0.0
      %433 = vmatpush1.msra.mxu0 0.0
      %434 = vmatprep.subr.mxu0 0.0
      %435 = vmatpush1.msra.mxu0 0.0
      %436 = vmatprep.subr.mxu0 0.0
      %437 = vmatpush1.msra.mxu0 0.0
      %438 = vmatprep.subr.mxu0 0.0
      %439 = vmatpush1.msra.mxu0 0.0
      %440 = vmatprep.subr.mxu0 0.0
      %441 = vmatpush1.msra.mxu0 0.0
      %442 = vmatprep.subr.mxu0 0.0
      %443 = vmatpush1.msra.mxu0 0.0
      %444 = vmatprep.subr.mxu0 0.0
      %445 = vmatpush1.msra.mxu0 0.0
      %446 = vmatprep.subr.mxu0 0.0
      %447 = vmatpush1.msra.mxu0 0.0
      %448 = vmatprep.subr.mxu0 0.0
      %449 = vmatpush1.msra.mxu0 0.0
      %450 = vmatprep.subr.mxu0 0.0
      %451 = vmatpush1.msra.mxu0 0.0
      %452 = vmatprep.subr.mxu0 0.0
      %453 = vmatpush1.msra.mxu0 0.0
      %454 = vmatprep.subr.mxu0 0.0
      %455 = vmatpush1.msra.mxu0 0.0
      %456 = vmatprep.subr.mxu0 0.0
      %457 = vmatpush1.msra.mxu0 0.0
      %458 = vmatprep.subr.mxu0 0.0
      %459 = vmatpush1.msra.mxu0 0.0
      %460 = vmatprep.subr.mxu0 0.0
      %461 = vmatpush1.msra.mxu0 0.0
      %462 = vmatprep.subr.mxu0 0.0
      %463 = vmatpush1.msra.mxu0 0.0
      %464 = vmatprep.subr.mxu0 0.0
      %465 = vmatpush1.msra.mxu0 0.0
      %466 = vmatprep.subr.mxu0 0.0
      %467 = vmatpush1.msra.mxu0 0.0
      %468 = vmatprep.subr.mxu0 0.0
      %469 = vmatpush1.msra.mxu0 0.0
      %470 = vmatprep.subr.mxu0 0.0
      %471 = vmatpush1.msra.mxu0 0.0
      %472 = vmatprep.subr.mxu0 0.0
      %473 = vmatpush1.msra.mxu0 0.0
      %474 = vmatprep.mubr.f32.mxu0 0.0
      %v475 = vand.u32 %v177, 4294901760
      %v476 = vsub.f32 %v177, %v475
      %v477 = vand.u32 %v476, 4294901760
      %478 = vmatmul.mubr.f32.gmra.mrb[0].mxu0 %v477
      %v479 = vpop.f32.mrb[0].mxu0
      %v480 = vadd.f32 %v406, %v479
      %v481 = vpop.f32.mrb[0].mxu0
      %482 = vdwg.mxu0
      %483 = vmatprep.subr.mxu0 0.0
      %v484 = vand.u32 %v181, 4294901760
      %v485 = vsub.f32 %v181, %v484
      %v486 = vand.u32 %v485, 4294901760
      %487 = vmatpush1.msra.mxu0 %v486
      %488 = vmatprep.subr.mxu0 0.0
      %489 = vmatpush1.msra.mxu0 0.0
      %490 = vmatprep.subr.mxu0 0.0
      %491 = vmatpush1.msra.mxu0 0.0
      %492 = vmatprep.subr.mxu0 0.0
      %493 = vmatpush1.msra.mxu0 0.0
      %494 = vmatprep.subr.mxu0 0.0
      %495 = vmatpush1.msra.mxu0 0.0
      %496 = vmatprep.subr.mxu0 0.0
      %497 = vmatpush1.msra.mxu0 0.0
      %498 = vmatprep.subr.mxu0 0.0
      %499 = vmatpush1.msra.mxu0 0.0
      %500 = vmatprep.subr.mxu0 0.0
      %501 = vmatpush1.msra.mxu0 0.0
      %502 = vmatprep.subr.mxu0 0.0
      %503 = vmatpush1.msra.mxu0 0.0
      %504 = vmatprep.subr.mxu0 0.0
      %505 = vmatpush1.msra.mxu0 0.0
      %506 = vmatprep.subr.mxu0 0.0
      %507 = vmatpush1.msra.mxu0 0.0
      %508 = vmatprep.subr.mxu0 0.0
      %509 = vmatpush1.msra.mxu0 0.0
      %510 = vmatprep.subr.mxu0 0.0
      %511 = vmatpush1.msra.mxu0 0.0
      %512 = vmatprep.subr.mxu0 0.0
      %513 = vmatpush1.msra.mxu0 0.0
      %514 = vmatprep.subr.mxu0 0.0
      %515 = vmatpush1.msra.mxu0 0.0
      %516 = vmatprep.subr.mxu0 0.0
      %517 = vmatpush1.msra.mxu0 0.0
      %518 = vmatprep.subr.mxu0 0.0
      %519 = vmatpush1.msra.mxu0 0.0
      %520 = vmatprep.subr.mxu0 0.0
      %521 = vmatpush1.msra.mxu0 0.0
      %522 = vmatprep.subr.mxu0 0.0
      %523 = vmatpush1.msra.mxu0 0.0
      %524 = vmatprep.subr.mxu0 0.0
      %525 = vmatpush1.msra.mxu0 0.0
      %526 = vmatprep.subr.mxu0 0.0
      %527 = vmatpush1.msra.mxu0 0.0
      %528 = vmatprep.subr.mxu0 0.0
      %529 = vmatpush1.msra.mxu0 0.0
      %530 = vmatprep.subr.mxu0 0.0
      %531 = vmatpush1.msra.mxu0 0.0
      %532 = vmatprep.subr.mxu0 0.0
      %533 = vmatpush1.msra.mxu0 0.0
      %534 = vmatprep.subr.mxu0 0.0
      %535 = vmatpush1.msra.mxu0 0.0
      %536 = vmatprep.subr.mxu0 0.0
      %537 = vmatpush1.msra.mxu0 0.0
      %538 = vmatprep.subr.mxu0 0.0
      %539 = vmatpush1.msra.mxu0 0.0
      %540 = vmatprep.subr.mxu0 0.0
      %541 = vmatpush1.msra.mxu0 0.0
      %542 = vmatprep.subr.mxu0 0.0
      %543 = vmatpush1.msra.mxu0 0.0
      %544 = vmatprep.subr.mxu0 0.0
      %545 = vmatpush1.msra.mxu0 0.0
      %546 = vmatprep.subr.mxu0 0.0
      %547 = vmatpush1.msra.mxu0 0.0
      %548 = vmatprep.subr.mxu0 0.0
      %549 = vmatpush1.msra.mxu0 0.0
      %550 = vmatprep.mubr.f32.mxu0 0.0
      %v551 = vand.u32 %v177, 4294901760
      %552 = vmatmul.mubr.f32.gmra.mrb[0].mxu0 %v551
      %v553 = vpop.f32.mrb[0].mxu0
      %v554 = vadd.f32 %v480, %v553
      %v555 = vpop.f32.mrb[0].mxu0
      %556 = vdwg.mxu0
      %557 = vmatprep.subr.mxu0 0.0
      %v558 = vand.u32 %v181, 4294901760
      %559 = vmatpush1.msra.mxu0 %v558
      %560 = vmatprep.subr.mxu0 0.0
      %561 = vmatpush1.msra.mxu0 0.0
      %562 = vmatprep.subr.mxu0 0.0
      %563 = vmatpush1.msra.mxu0 0.0
      %564 = vmatprep.subr.mxu0 0.0
      %565 = vmatpush1.msra.mxu0 0.0
      %566 = vmatprep.subr.mxu0 0.0
      %567 = vmatpush1.msra.mxu0 0.0
      %568 = vmatprep.subr.mxu0 0.0
      %569 = vmatpush1.msra.mxu0 0.0
      %570 = vmatprep.subr.mxu0 0.0
      %571 = vmatpush1.msra.mxu0 0.0
      %572 = vmatprep.subr.mxu0 0.0
      %573 = vmatpush1.msra.mxu0 0.0
      %574 = vmatprep.subr.mxu0 0.0
      %575 = vmatpush1.msra.mxu0 0.0
      %576 = vmatprep.subr.mxu0 0.0
      %577 = vmatpush1.msra.mxu0 0.0
      %578 = vmatprep.subr.mxu0 0.0
      %579 = vmatpush1.msra.mxu0 0.0
      %580 = vmatprep.subr.mxu0 0.0
      %581 = vmatpush1.msra.mxu0 0.0
      %582 = vmatprep.subr.mxu0 0.0
      %583 = vmatpush1.msra.mxu0 0.0
      %584 = vmatprep.subr.mxu0 0.0
      %585 = vmatpush1.msra.mxu0 0.0
      %586 = vmatprep.subr.mxu0 0.0
      %587 = vmatpush1.msra.mxu0 0.0
      %588 = vmatprep.subr.mxu0 0.0
      %589 = vmatpush1.msra.mxu0 0.0
      %590 = vmatprep.subr.mxu0 0.0
      %591 = vmatpush1.msra.mxu0 0.0
      %592 = vmatprep.subr.mxu0 0.0
      %593 = vmatpush1.msra.mxu0 0.0
      %594 = vmatprep.subr.mxu0 0.0
      %595 = vmatpush1.msra.mxu0 0.0
      %596 = vmatprep.subr.mxu0 0.0
      %597 = vmatpush1.msra.mxu0 0.0
      %598 = vmatprep.subr.mxu0 0.0
      %599 = vmatpush1.msra.mxu0 0.0
      %600 = vmatprep.subr.mxu0 0.0
      %601 = vmatpush1.msra.mxu0 0.0
      %602 = vmatprep.subr.mxu0 0.0
      %603 = vmatpush1.msra.mxu0 0.0
      %604 = vmatprep.subr.mxu0 0.0
      %605 = vmatpush1.msra.mxu0 0.0
      %606 = vmatprep.subr.mxu0 0.0
      %607 = vmatpush1.msra.mxu0 0.0
      %608 = vmatprep.subr.mxu0 0.0
      %609 = vmatpush1.msra.mxu0 0.0
      %610 = vmatprep.subr.mxu0 0.0
      %611 = vmatpush1.msra.mxu0 0.0
      %612 = vmatprep.subr.mxu0 0.0
      %613 = vmatpush1.msra.mxu0 0.0
      %614 = vmatprep.subr.mxu0 0.0
      %615 = vmatpush1.msra.mxu0 0.0
      %616 = vmatprep.subr.mxu0 0.0
      %617 = vmatpush1.msra.mxu0 0.0
      %618 = vmatprep.subr.mxu0 0.0
      %619 = vmatpush1.msra.mxu0 0.0
      %620 = vmatprep.subr.mxu0 0.0
      %621 = vmatpush1.msra.mxu0 0.0
      %622 = vmatprep.mubr.f32.mxu0 0.0
      %v623 = vand.u32 %v177, 4294901760
      %624 = vmatmul.mubr.f32.gmra.mrb[0].mxu0 %v623
      %v625 = vpop.f32.mrb[0].mxu0
      %v626 = vadd.f32 %v554, %v625
      %v627 = vpop.f32.mrb[0].mxu0
      %628 = vdwg.mxu0
      %vm629 = vcmp.gt.f32.partialorder %v626, 0.0
      %v630 = vmin.f32 %v626, 0.0
      %v631 = vmul.f32 %v630, 1.442695
      %v632 = vpow.pop %v631
      %v633 = vsub.f32 %v632, 1.0
      %v634 = vsel %vm629, %v626, %v633
      %vm635 = vcmask 261120
      %636 = vst.msk [vmem:[%s165] sm:$0xff] %vm635, %v634
      %p637 = scmp.lt.s32.totalorder %s14, 1
      %s638 = scalar_select %p637, %s14, 1
      %s639 = smul.addr %s638, 8
      %s640 = scalar_lea.vmem %s3, %s639
      // Predicated region
      $region33: #{model_forward.9} parent=31 // pred_check
        %p641 = pneg %p100
      $region34: #{model_forward.9} parent=31 // pred_check_branch
        %643 = sbr.rel (%p641) target = $region36
      $region35: #{model_forward.9} parent=31 // pred_region
        _
      $region36: #{model_forward.9} parent=31 // pred_fallthru
        _
    $region32: #{model_forward.9} parent=5 // pred_fallthru
      _
    %p644 = scmp.le.s32.totalorder 2, %s9
    // Predicated region
    $region37: #{model_forward.9} parent=5 // pred_check
      %p645 = pneg %p644
    $region38: #{model_forward.9} parent=5 // pred_check_branch
      %647 = sbr.rel (%p645) target = $region40
    $region39: #{model_forward.9} parent=5 // pred_region
      %s648 = ssub.s32 %s9, 2
      // Predicated region
      $region41: #{model_forward.9} parent=39 // pred_check
        %p649 = pneg %p106
      $region42: #{model_forward.9} parent=39 // pred_check_branch
        %651 = sbr.rel (%p649) target = $region44
      $region43: #{model_forward.9} parent=39 // pred_region
        %p652 = scmp.lt.s32.totalorder %s15, 1
        %s653 = scalar_select %p652, %s15, 1
        %s654 = smul.addr %s653, 8
        %s655 = scalar_lea.vmem %s3, %s654
      $region44: #{model_forward.9} parent=39 // pred_fallthru
        _
    $region40: #{model_forward.9} parent=5 // pred_fallthru
      _
  $region6: #{model_forward.9} parent=0 // loop_footer
    %s13 = sadd.s32 1, %s9
  $region7: #{model_forward.9} parent=0 // loop_footer_branch
    %8 = sbr.rel target = $region3
  $region8: #{model_forward.9} parent=0 // loop_exit
    _

// kernel: model_forward.8
$region0: #{model_forward.8}
  #allocation0 [shape = 'u32[]', space=smem, size = 0x4, offset = 0x4, fixed_abs, tag = 'smem constant byte address 0x4 - core index']
  #allocation1 [shape = 'u32[144,128]{1,0:T(1,128)}', space=vmem, size = 0x12000, scoped, tag = 'internal scratch']
  %s0 = inlined_call_operand.vmem [shape: f32[20,10], index: 0, kind: input, shape index: {}]
  %s1 = inlined_call_operand.vmem [shape: f32[10,32], index: 1, kind: input, shape index: {}]
  %s2 = inlined_call_operand.vmem [shape: f32[1,32], index: 2, kind: input, shape index: {}]
  %s3 = inlined_call_operand.vmem [shape: f32[20,32], index: 3, kind: output, shape index: {}]
  %s4 = sld [smem:[#allocation0]]
  $region45: #{model_forward.8} parent=0
    _
  %s6 = ssub.s32 1, %s4
  %s7 = scalar_select 0, %s6, %s4
  loop: start=0, step=1, limit=5
  $region2: #{model_forward.8} parent=0 // loop_pre_header
    _
  $region3: #{model_forward.8} parent=0 // loop_header
    %s9 = sphi 0, %s13
    %p10 = scmp.ge.s32.totalorder %s9, 5
    %s19 = sphi 0, %s21
    %s22 = sphi 0, %s19
    %s23 = sphi 0, %s22
    %s39 = sphi 0, %s23
    %s43 = sphi 0, %s43
    %s45 = sphi 0, %s43
    %s46 = sphi 0, %s45
    %s60 = sphi 0, %s46
    %s64 = sphi 0, %s64
    %s66 = sphi 0, %s64
    %s67 = sphi 0, %s66
    %s81 = sphi 0, %s67
    %s87 = sphi 0, %s89
    %s90 = sphi 0, %s87
    %s91 = sphi 0, %s90
    %s107 = sphi 0, %s91
  $region4: #{model_forward.8} parent=0 // loop_header_branch
    %12 = sbr.rel (%p10) target = $region8
  $region5: #{model_forward.8} parent=0 // loop_body
    %s14 = ssub.s32 %s9, 1
    %s15 = ssub.s32 %s9, 2
    %s16 = sadd.s32 %s9, 1
    %s17 = ssub.s32 %s9, %s16
    %p18 = scmp.eq.s32.totalorder %s17, 0
    %s20 = sadd.s32 %s19, 1
    %s21 = scalar_select %p18, %s19, %s20
    %p24 = pneg %p18
    %p25 = scmp.eq.s32.totalorder %s9, 2
    %p26 = por %p24, %p25
    %p27 = scmp.ne.s32.totalorder %s19, %s22
    %p28 = scmp.eq.s32.totalorder %s9, 0
    %p29 = por %p27, %p28
    %p30 = scmp.ne.s32.totalorder %s19, %s22
    %p31 = scmp.eq.s32.totalorder %s14, 2
    %p32 = por %p30, %p31
    %p33 = scmp.ne.s32.totalorder %s22, %s23
    %p34 = scmp.eq.s32.totalorder %s14, 0
    %p35 = por %p33, %p34
    %p36 = scmp.ne.s32.totalorder %s22, %s23
    %p37 = scmp.eq.s32.totalorder %s15, 2
    %p38 = por %p36, %p37
    %p40 = scmp.ne.s32.totalorder %s23, %s39
    %p41 = scmp.eq.s32.totalorder %s15, 0
    %p42 = por %p40, %p41
    %s44 = sadd.s32 %s43, 1
    %p47 = scmp.eq.s32.totalorder %s9, 2
    %p48 = scmp.ne.s32.totalorder %s43, %s45
    %p49 = scmp.eq.s32.totalorder %s9, 0
    %p50 = por %p48, %p49
    %p51 = scmp.ne.s32.totalorder %s43, %s45
    %p52 = scmp.eq.s32.totalorder %s14, 2
    %p53 = por %p51, %p52
    %p54 = scmp.ne.s32.totalorder %s45, %s46
    %p55 = scmp.eq.s32.totalorder %s14, 0
    %p56 = por %p54, %p55
    %p57 = scmp.ne.s32.totalorder %s45, %s46
    %p58 = scmp.eq.s32.totalorder %s15, 2
    %p59 = por %p57, %p58
    %p61 = scmp.ne.s32.totalorder %s46, %s60
    %p62 = scmp.eq.s32.totalorder %s15, 0
    %p63 = por %p61, %p62
    %s65 = sadd.s32 %s64, 1
    %p68 = scmp.eq.s32.totalorder %s9, 2
    %p69 = scmp.ne.s32.totalorder %s64, %s66
    %p70 = scmp.eq.s32.totalorder %s9, 0
    %p71 = por %p69, %p70
    %p72 = scmp.ne.s32.totalorder %s64, %s66
    %p73 = scmp.eq.s32.totalorder %s14, 2
    %p74 = por %p72, %p73
    %p75 = scmp.ne.s32.totalorder %s66, %s67
    %p76 = scmp.eq.s32.totalorder %s14, 0
    %p77 = por %p75, %p76
    %p78 = scmp.ne.s32.totalorder %s66, %s67
    %p79 = scmp.eq.s32.totalorder %s15, 2
    %p80 = por %p78, %p79
    %p82 = scmp.ne.s32.totalorder %s67, %s81
    %p83 = scmp.eq.s32.totalorder %s15, 0
    %p84 = por %p82, %p83
    %s85 = ssub.s32 %s9, %s16
    %p86 = scmp.eq.s32.totalorder %s85, 0
    %s88 = sadd.s32 %s87, 1
    %s89 = scalar_select %p86, %s87, %s88
    %p92 = pneg %p86
    %p93 = scmp.eq.s32.totalorder %s9, 2
    %p94 = por %p92, %p93
    %p95 = scmp.ne.s32.totalorder %s87, %s90
    %p96 = scmp.eq.s32.totalorder %s9, 0
    %p97 = por %p95, %p96
    %p98 = scmp.ne.s32.totalorder %s87, %s90
    %p99 = scmp.eq.s32.totalorder %s14, 2
    %p100 = por %p98, %p99
    %p101 = scmp.ne.s32.totalorder %s90, %s91
    %p102 = scmp.eq.s32.totalorder %s14, 0
    %p103 = por %p101, %p102
    %p104 = scmp.ne.s32.totalorder %s90, %s91
    %p105 = scmp.eq.s32.totalorder %s15, 2
    %p106 = por %p104, %p105
    %p108 = scmp.ne.s32.totalorder %s91, %s107
    %p109 = scmp.eq.s32.totalorder %s15, 0
    %p110 = por %p108, %p109
    %p111 = scmp.le.s32.totalorder 1, %s9
    %p112 = scmp.lt.s32.totalorder %s9, 4
    %p113 = pnand %p111, %p112
    %p114 = pneg %p113
    // Predicated region
    $region9: #{model_forward.8} parent=5 // pred_check
      _
    $region10: #{model_forward.8} parent=5 // pred_check_branch
      %116 = sbr.rel (%p113) target = $region12
    $region11: #{model_forward.8} parent=5 // pred_region
      %s117 = ssub.s32 %s9, 1
      // Predicated region
      $region13: #{model_forward.8} parent=11 // pred_check
        %p118 = pneg %p56
      $region14: #{model_forward.8} parent=11 // pred_check_branch
        %120 = sbr.rel (%p118) target = $region16
      $region15: #{model_forward.8} parent=11 // pred_region
        _
      $region16: #{model_forward.8} parent=11 // pred_fallthru
        _
      // Predicated region
      $region17: #{model_forward.8} parent=11 // pred_check
        %p121 = pneg %p77
      $region18: #{model_forward.8} parent=11 // pred_check_branch
        %123 = sbr.rel (%p121) target = $region20
      $region19: #{model_forward.8} parent=11 // pred_region
        _
      $region20: #{model_forward.8} parent=11 // pred_fallthru
        _
    $region12: #{model_forward.8} parent=5 // pred_fallthru
      _
    %p124 = scmp.lt.s32.totalorder %s9, 3
    // Predicated region
    $region21: #{model_forward.8} parent=5 // pred_check
      %p125 = pneg %p124
    $region22: #{model_forward.8} parent=5 // pred_check_branch
      %127 = sbr.rel (%p125) target = $region24
    $region23: #{model_forward.8} parent=5 // pred_region
      // Predicated region
      $region25: #{model_forward.8} parent=23 // pred_check
        %p128 = pneg %p29
      $region26: #{model_forward.8} parent=23 // pred_check_branch
        %130 = sbr.rel (%p128) target = $region28
      $region27: #{model_forward.8} parent=23 // pred_region
        %p131 = scmp.lt.s32.totalorder %s9, 2
        %s132 = scalar_select %p131, %s9, 2
        %s133 = smul.addr %s132, 8
        %s134 = scalar_lea.vmem %s0, %s133
      $region28: #{model_forward.8} parent=23 // pred_fallthru
        _
    $region24: #{model_forward.8} parent=5 // pred_fallthru
      _
    %p135 = scmp.le.s32.totalorder 1, %s9
    %p136 = scmp.lt.s32.totalorder %s9, 4
    %p137 = pnand %p135, %p136
    %p138 = pneg %p137
    // Predicated region
    $region29: #{model_forward.8} parent=5 // pred_check
      _
    $region30: #{model_forward.8} parent=5 // pred_check_branch
      %140 = sbr.rel (%p137) target = $region32
    $region31: #{model_forward.8} parent=5 // pred_region
      %s141 = ssub.s32 %s9, 1
      %p142 = scmp.lt.s32.totalorder %s14, 2
      %s143 = scalar_select %p142, %s14, 2
      %s144 = smul.addr %s143, 8
      %s145 = scalar_lea.vmem %s0, %s144
      %p146 = pneg %p35
      %p147 = pneg %p32
      %p148 = pneg %p56
      %p149 = pneg %p53
      %p150 = pneg %p77
      %p151 = pneg %p74
      %p152 = pneg %p103
      %p153 = pneg %p100
      %p154 = scmp.lt.s32.totalorder %s14, 2
      %s155 = scalar_select %p154, %s14, 2
      %s156 = smul.addr %s155, 8
      %s157 = scalar_lea.vmem %s3, %s156
      %p158 = scmp.lt.s32.totalorder %s14, 2
      %s159 = scalar_select %p158, %s14, 2
      %s160 = smul.addr %s159, 8
      %s161 = scalar_lea.vmem %s0, %s160
      %p162 = scmp.lt.s32.totalorder %s14, 2
      %s163 = scalar_select %p162, %s14, 2
      %s164 = smul.addr %s163, 8
      %s165 = scalar_lea.vmem %s3, %s164
      %v166 = vld [vmem:[%s161] sm:$0xff]
      %v167 = vld [vmem:[%s1] sm:$0xff]
      %v168 = vld [vmem:[%s1 + $0x8] sm:$0x3]
      %v169 = vld [vmem:[%s2] sm:$0x1]
      %v171 = vlaneseq
      %v172 = vshrl.u32 %v171, 7
      %v173 = vsub.s32 0, %v172
      %v174 = vrot.slane %v169, %v173
      %vm176 = vcmask 80896
      %v178 = vsel %vm176, %v166, 0
      %vm180 = vcmask 1041408
      %v182 = vsel %vm180, %v168, 0
      %184 = vmatprep.subr.mxu0 0.0
      %v185 = vand.u32 %v167, 4294901760
      %186 = vmatpush1.msra.mxu0 %v185
      %187 = vmatprep.subr.mxu0 0.0
      %v188 = vand.u32 %v182, 4294901760
      %189 = vmatpush1.msra.mxu0 %v188
      %190 = vmatprep.subr.mxu0 0.0
      %191 = vmatpush1.msra.mxu0 0.0
      %192 = vmatprep.subr.mxu0 0.0
      %193 = vmatpush1.msra.mxu0 0.0
      %194 = vmatprep.subr.mxu0 0.0
      %195 = vmatpush1.msra.mxu0 0.0
      %196 = vmatprep.subr.mxu0 0.0
      %197 = vmatpush1.msra.mxu0 0.0
      %198 = vmatprep.subr.mxu0 0.0
      %199 = vmatpush1.msra.mxu0 0.0
      %200 = vmatprep.subr.mxu0 0.0
      %201 = vmatpush1.msra.mxu0 0.0
      %202 = vmatprep.subr.mxu0 0.0
      %203 = vmatpush1.msra.mxu0 0.0
      %204 = vmatprep.subr.mxu0 0.0
      %205 = vmatpush1.msra.mxu0 0.0
      %206 = vmatprep.subr.mxu0 0.0
      %207 = vmatpush1.msra.mxu0 0.0
      %208 = vmatprep.subr.mxu0 0.0
      %209 = vmatpush1.msra.mxu0 0.0
      %210 = vmatprep.subr.mxu0 0.0
      %211 = vmatpush1.msra.mxu0 0.0
      %212 = vmatprep.subr.mxu0 0.0
      %213 = vmatpush1.msra.mxu0 0.0
      %214 = vmatprep.subr.mxu0 0.0
      %215 = vmatpush1.msra.mxu0 0.0
      %216 = vmatprep.subr.mxu0 0.0
      %217 = vmatpush1.msra.mxu0 0.0
      %218 = vmatprep.subr.mxu0 0.0
      %219 = vmatpush1.msra.mxu0 0.0
      %220 = vmatprep.subr.mxu0 0.0
      %221 = vmatpush1.msra.mxu0 0.0
      %222 = vmatprep.subr.mxu0 0.0
      %223 = vmatpush1.msra.mxu0 0.0
      %224 = vmatprep.subr.mxu0 0.0
      %225 = vmatpush1.msra.mxu0 0.0
      %226 = vmatprep.subr.mxu0 0.0
      %227 = vmatpush1.msra.mxu0 0.0
      %228 = vmatprep.subr.mxu0 0.0
      %229 = vmatpush1.msra.mxu0 0.0
      %230 = vmatprep.subr.mxu0 0.0
      %231 = vmatpush1.msra.mxu0 0.0
      %232 = vmatprep.subr.mxu0 0.0
      %233 = vmatpush1.msra.mxu0 0.0
      %234 = vmatprep.subr.mxu0 0.0
      %235 = vmatpush1.msra.mxu0 0.0
      %236 = vmatprep.subr.mxu0 0.0
      %237 = vmatpush1.msra.mxu0 0.0
      %238 = vmatprep.subr.mxu0 0.0
      %239 = vmatpush1.msra.mxu0 0.0
      %240 = vmatprep.subr.mxu0 0.0
      %241 = vmatpush1.msra.mxu0 0.0
      %242 = vmatprep.subr.mxu0 0.0
      %243 = vmatpush1.msra.mxu0 0.0
      %244 = vmatprep.subr.mxu0 0.0
      %245 = vmatpush1.msra.mxu0 0.0
      %246 = vmatprep.subr.mxu0 0.0
      %247 = vmatpush1.msra.mxu0 0.0
      %248 = vmatprep.subr.mxu0 0.0
      %249 = vmatpush1.msra.mxu0 0.0
      %250 = vmatprep.mubr.f32.mxu0 0.0
      %v251 = vand.u32 %v178, 4294901760
      %v252 = vsub.f32 %v178, %v251
      %v253 = vand.u32 %v252, 4294901760
      %v254 = vsub.f32 %v252, %v253
      %v255 = vand.u32 %v254, 4294901760
      %256 = vmatmul.mubr.f32.gmra.mrb[0].mxu0 %v255
      %v257 = vpop.f32.mrb[0].mxu0
      %v258 = vadd.f32 %v174, %v257
      %v259 = vpop.f32.mrb[0].mxu0
      %260 = vdwg.mxu0
      %261 = vmatprep.subr.mxu0 0.0
      %v262 = vand.u32 %v167, 4294901760
      %v263 = vsub.f32 %v167, %v262
      %v264 = vand.u32 %v263, 4294901760
      %v265 = vsub.f32 %v263, %v264
      %v266 = vand.u32 %v265, 4294901760
      %267 = vmatpush1.msra.mxu0 %v266
      %268 = vmatprep.subr.mxu0 0.0
      %v269 = vand.u32 %v182, 4294901760
      %v270 = vsub.f32 %v182, %v269
      %v271 = vand.u32 %v270, 4294901760
      %v272 = vsub.f32 %v270, %v271
      %v273 = vand.u32 %v272, 4294901760
      %274 = vmatpush1.msra.mxu0 %v273
      %275 = vmatprep.subr.mxu0 0.0
      %276 = vmatpush1.msra.mxu0 0.0
      %277 = vmatprep.subr.mxu0 0.0
      %278 = vmatpush1.msra.mxu0 0.0
      %279 = vmatprep.subr.mxu0 0.0
      %280 = vmatpush1.msra.mxu0 0.0
      %281 = vmatprep.subr.mxu0 0.0
      %282 = vmatpush1.msra.mxu0 0.0
      %283 = vmatprep.subr.mxu0 0.0
      %284 = vmatpush1.msra.mxu0 0.0
      %285 = vmatprep.subr.mxu0 0.0
      %286 = vmatpush1.msra.mxu0 0.0
      %287 = vmatprep.subr.mxu0 0.0
      %288 = vmatpush1.msra.mxu0 0.0
      %289 = vmatprep.subr.mxu0 0.0
      %290 = vmatpush1.msra.mxu0 0.0
      %291 = vmatprep.subr.mxu0 0.0
      %292 = vmatpush1.msra.mxu0 0.0
      %293 = vmatprep.subr.mxu0 0.0
      %294 = vmatpush1.msra.mxu0 0.0
      %295 = vmatprep.subr.mxu0 0.0
      %296 = vmatpush1.msra.mxu0 0.0
      %297 = vmatprep.subr.mxu0 0.0
      %298 = vmatpush1.msra.mxu0 0.0
      %299 = vmatprep.subr.mxu0 0.0
      %300 = vmatpush1.msra.mxu0 0.0
      %301 = vmatprep.subr.mxu0 0.0
      %302 = vmatpush1.msra.mxu0 0.0
      %303 = vmatprep.subr.mxu0 0.0
      %304 = vmatpush1.msra.mxu0 0.0
      %305 = vmatprep.subr.mxu0 0.0
      %306 = vmatpush1.msra.mxu0 0.0
      %307 = vmatprep.subr.mxu0 0.0
      %308 = vmatpush1.msra.mxu0 0.0
      %309 = vmatprep.subr.mxu0 0.0
      %310 = vmatpush1.msra.mxu0 0.0
      %311 = vmatprep.subr.mxu0 0.0
      %312 = vmatpush1.msra.mxu0 0.0
      %313 = vmatprep.subr.mxu0 0.0
      %314 = vmatpush1.msra.mxu0 0.0
      %315 = vmatprep.subr.mxu0 0.0
      %316 = vmatpush1.msra.mxu0 0.0
      %317 = vmatprep.subr.mxu0 0.0
      %318 = vmatpush1.msra.mxu0 0.0
      %319 = vmatprep.subr.mxu0 0.0
      %320 = vmatpush1.msra.mxu0 0.0
      %321 = vmatprep.subr.mxu0 0.0
      %322 = vmatpush1.msra.mxu0 0.0
      %323 = vmatprep.subr.mxu0 0.0
      %324 = vmatpush1.msra.mxu0 0.0
      %325 = vmatprep.subr.mxu0 0.0
      %326 = vmatpush1.msra.mxu0 0.0
      %327 = vmatprep.subr.mxu0 0.0
      %328 = vmatpush1.msra.mxu0 0.0
      %329 = vmatprep.subr.mxu0 0.0
      %330 = vmatpush1.msra.mxu0 0.0
      %331 = vmatprep.subr.mxu0 0.0
      %332 = vmatpush1.msra.mxu0 0.0
      %333 = vmatprep.subr.mxu0 0.0
      %334 = vmatpush1.msra.mxu0 0.0
      %335 = vmatprep.mubr.f32.mxu0 0.0
      %v336 = vand.u32 %v178, 4294901760
      %337 = vmatmul.mubr.f32.gmra.mrb[0].mxu0 %v336
      %v338 = vpop.f32.mrb[0].mxu0
      %v339 = vadd.f32 %v258, %v338
      %v340 = vpop.f32.mrb[0].mxu0
      %341 = vdwg.mxu0
      %342 = vmatprep.subr.mxu0 0.0
      %v343 = vand.u32 %v167, 4294901760
      %v344 = vsub.f32 %v167, %v343
      %345 = vmatpush1.msra.mxu0 %v344
      %346 = vmatprep.subr.mxu0 0.0
      %v347 = vand.u32 %v182, 4294901760
      %v348 = vsub.f32 %v182, %v347
      %349 = vmatpush1.msra.mxu0 %v348
      %350 = vmatprep.subr.mxu0 0.0
      %351 = vmatpush1.msra.mxu0 0.0
      %352 = vmatprep.subr.mxu0 0.0
      %353 = vmatpush1.msra.mxu0 0.0
      %354 = vmatprep.subr.mxu0 0.0
      %355 = vmatpush1.msra.mxu0 0.0
      %356 = vmatprep.subr.mxu0 0.0
      %357 = vmatpush1.msra.mxu0 0.0
      %358 = vmatprep.subr.mxu0 0.0
      %359 = vmatpush1.msra.mxu0 0.0
      %360 = vmatprep.subr.mxu0 0.0
      %361 = vmatpush1.msra.mxu0 0.0
      %362 = vmatprep.subr.mxu0 0.0
      %363 = vmatpush1.msra.mxu0 0.0
      %364 = vmatprep.subr.mxu0 0.0
      %365 = vmatpush1.msra.mxu0 0.0
      %366 = vmatprep.subr.mxu0 0.0
      %367 = vmatpush1.msra.mxu0 0.0
      %368 = vmatprep.subr.mxu0 0.0
      %369 = vmatpush1.msra.mxu0 0.0
      %370 = vmatprep.subr.mxu0 0.0
      %371 = vmatpush1.msra.mxu0 0.0
      %372 = vmatprep.subr.mxu0 0.0
      %373 = vmatpush1.msra.mxu0 0.0
      %374 = vmatprep.subr.mxu0 0.0
      %375 = vmatpush1.msra.mxu0 0.0
      %376 = vmatprep.subr.mxu0 0.0
      %377 = vmatpush1.msra.mxu0 0.0
      %378 = vmatprep.subr.mxu0 0.0
      %379 = vmatpush1.msra.mxu0 0.0
      %380 = vmatprep.subr.mxu0 0.0
      %381 = vmatpush1.msra.mxu0 0.0
      %382 = vmatprep.subr.mxu0 0.0
      %383 = vmatpush1.msra.mxu0 0.0
      %384 = vmatprep.subr.mxu0 0.0
      %385 = vmatpush1.msra.mxu0 0.0
      %386 = vmatprep.subr.mxu0 0.0
      %387 = vmatpush1.msra.mxu0 0.0
      %388 = vmatprep.subr.mxu0 0.0
      %389 = vmatpush1.msra.mxu0 0.0
      %390 = vmatprep.subr.mxu0 0.0
      %391 = vmatpush1.msra.mxu0 0.0
      %392 = vmatprep.subr.mxu0 0.0
      %393 = vmatpush1.msra.mxu0 0.0
      %394 = vmatprep.subr.mxu0 0.0
      %395 = vmatpush1.msra.mxu0 0.0
      %396 = vmatprep.subr.mxu0 0.0
      %397 = vmatpush1.msra.mxu0 0.0
      %398 = vmatprep.subr.mxu0 0.0
      %399 = vmatpush1.msra.mxu0 0.0
      %400 = vmatprep.subr.mxu0 0.0
      %401 = vmatpush1.msra.mxu0 0.0
      %402 = vmatprep.subr.mxu0 0.0
      %403 = vmatpush1.msra.mxu0 0.0
      %404 = vmatprep.subr.mxu0 0.0
      %405 = vmatpush1.msra.mxu0 0.0
      %406 = vmatprep.subr.mxu0 0.0
      %407 = vmatpush1.msra.mxu0 0.0
      %408 = vmatprep.subr.mxu0 0.0
      %409 = vmatpush1.msra.mxu0 0.0
      %410 = vmatprep.mubr.f32.mxu0 0.0
      %v411 = vand.u32 %v178, 4294901760
      %v412 = vsub.f32 %v178, %v411
      %413 = vmatmul.mubr.f32.gmra.mrb[0].mxu0 %v412
      %v414 = vpop.f32.mrb[0].mxu0
      %v415 = vadd.f32 %v339, %v414
      %v416 = vpop.f32.mrb[0].mxu0
      %417 = vdwg.mxu0
      %418 = vmatprep.subr.mxu0 0.0
      %v419 = vand.u32 %v167, 4294901760
      %420 = vmatpush1.msra.mxu0 %v419
      %421 = vmatprep.subr.mxu0 0.0
      %v422 = vand.u32 %v182, 4294901760
      %423 = vmatpush1.msra.mxu0 %v422
      %424 = vmatprep.subr.mxu0 0.0
      %425 = vmatpush1.msra.mxu0 0.0
      %426 = vmatprep.subr.mxu0 0.0
      %427 = vmatpush1.msra.mxu0 0.0
      %428 = vmatprep.subr.mxu0 0.0
      %429 = vmatpush1.msra.mxu0 0.0
      %430 = vmatprep.subr.mxu0 0.0
      %431 = vmatpush1.msra.mxu0 0.0
      %432 = vmatprep.subr.mxu0 0.0
      %433 = vmatpush1.msra.mxu0 0.0
      %434 = vmatprep.subr.mxu0 0.0
      %435 = vmatpush1.msra.mxu0 0.0
      %436 = vmatprep.subr.mxu0 0.0
      %437 = vmatpush1.msra.mxu0 0.0
      %438 = vmatprep.subr.mxu0 0.0
      %439 = vmatpush1.msra.mxu0 0.0
      %440 = vmatprep.subr.mxu0 0.0
      %441 = vmatpush1.msra.mxu0 0.0
      %442 = vmatprep.subr.mxu0 0.0
      %443 = vmatpush1.msra.mxu0 0.0
      %444 = vmatprep.subr.mxu0 0.0
      %445 = vmatpush1.msra.mxu0 0.0
      %446 = vmatprep.subr.mxu0 0.0
      %447 = vmatpush1.msra.mxu0 0.0
      %448 = vmatprep.subr.mxu0 0.0
      %449 = vmatpush1.msra.mxu0 0.0
      %450 = vmatprep.subr.mxu0 0.0
      %451 = vmatpush1.msra.mxu0 0.0
      %452 = vmatprep.subr.mxu0 0.0
      %453 = vmatpush1.msra.mxu0 0.0
      %454 = vmatprep.subr.mxu0 0.0
      %455 = vmatpush1.msra.mxu0 0.0
      %456 = vmatprep.subr.mxu0 0.0
      %457 = vmatpush1.msra.mxu0 0.0
      %458 = vmatprep.subr.mxu0 0.0
      %459 = vmatpush1.msra.mxu0 0.0
      %460 = vmatprep.subr.mxu0 0.0
      %461 = vmatpush1.msra.mxu0 0.0
      %462 = vmatprep.subr.mxu0 0.0
      %463 = vmatpush1.msra.mxu0 0.0
      %464 = vmatprep.subr.mxu0 0.0
      %465 = vmatpush1.msra.mxu0 0.0
      %466 = vmatprep.subr.mxu0 0.0
      %467 = vmatpush1.msra.mxu0 0.0
      %468 = vmatprep.subr.mxu0 0.0
      %469 = vmatpush1.msra.mxu0 0.0
      %470 = vmatprep.subr.mxu0 0.0
      %471 = vmatpush1.msra.mxu0 0.0
      %472 = vmatprep.subr.mxu0 0.0
      %473 = vmatpush1.msra.mxu0 0.0
      %474 = vmatprep.subr.mxu0 0.0
      %475 = vmatpush1.msra.mxu0 0.0
      %476 = vmatprep.subr.mxu0 0.0
      %477 = vmatpush1.msra.mxu0 0.0
      %478 = vmatprep.subr.mxu0 0.0
      %479 = vmatpush1.msra.mxu0 0.0
      %480 = vmatprep.subr.mxu0 0.0
      %481 = vmatpush1.msra.mxu0 0.0
      %482 = vmatprep.subr.mxu0 0.0
      %483 = vmatpush1.msra.mxu0 0.0
      %484 = vmatprep.mubr.f32.mxu0 0.0
      %v485 = vand.u32 %v178, 4294901760
      %v486 = vsub.f32 %v178, %v485
      %v487 = vand.u32 %v486, 4294901760
      %488 = vmatmul.mubr.f32.gmra.mrb[0].mxu0 %v487
      %v489 = vpop.f32.mrb[0].mxu0
      %v490 = vadd.f32 %v415, %v489
      %v491 = vpop.f32.mrb[0].mxu0
      %492 = vdwg.mxu0
      %493 = vmatprep.subr.mxu0 0.0
      %v494 = vand.u32 %v167, 4294901760
      %v495 = vsub.f32 %v167, %v494
      %v496 = vand.u32 %v495, 4294901760
      %497 = vmatpush1.msra.mxu0 %v496
      %498 = vmatprep.subr.mxu0 0.0
      %v499 = vand.u32 %v182, 4294901760
      %v500 = vsub.f32 %v182, %v499
      %v501 = vand.u32 %v500, 4294901760
      %502 = vmatpush1.msra.mxu0 %v501
      %503 = vmatprep.subr.mxu0 0.0
      %504 = vmatpush1.msra.mxu0 0.0
      %505 = vmatprep.subr.mxu0 0.0
      %506 = vmatpush1.msra.mxu0 0.0
      %507 = vmatprep.subr.mxu0 0.0
      %508 = vmatpush1.msra.mxu0 0.0
      %509 = vmatprep.subr.mxu0 0.0
      %510 = vmatpush1.msra.mxu0 0.0
      %511 = vmatprep.subr.mxu0 0.0
      %512 = vmatpush1.msra.mxu0 0.0
      %513 = vmatprep.subr.mxu0 0.0
      %514 = vmatpush1.msra.mxu0 0.0
      %515 = vmatprep.subr.mxu0 0.0
      %516 = vmatpush1.msra.mxu0 0.0
      %517 = vmatprep.subr.mxu0 0.0
      %518 = vmatpush1.msra.mxu0 0.0
      %519 = vmatprep.subr.mxu0 0.0
      %520 = vmatpush1.msra.mxu0 0.0
      %521 = vmatprep.subr.mxu0 0.0
      %522 = vmatpush1.msra.mxu0 0.0
      %523 = vmatprep.subr.mxu0 0.0
      %524 = vmatpush1.msra.mxu0 0.0
      %525 = vmatprep.subr.mxu0 0.0
      %526 = vmatpush1.msra.mxu0 0.0
      %527 = vmatprep.subr.mxu0 0.0
      %528 = vmatpush1.msra.mxu0 0.0
      %529 = vmatprep.subr.mxu0 0.0
      %530 = vmatpush1.msra.mxu0 0.0
      %531 = vmatprep.subr.mxu0 0.0
      %532 = vmatpush1.msra.mxu0 0.0
      %533 = vmatprep.subr.mxu0 0.0
      %534 = vmatpush1.msra.mxu0 0.0
      %535 = vmatprep.subr.mxu0 0.0
      %536 = vmatpush1.msra.mxu0 0.0
      %537 = vmatprep.subr.mxu0 0.0
      %538 = vmatpush1.msra.mxu0 0.0
      %539 = vmatprep.subr.mxu0 0.0
      %540 = vmatpush1.msra.mxu0 0.0
      %541 = vmatprep.subr.mxu0 0.0
      %542 = vmatpush1.msra.mxu0 0.0
      %543 = vmatprep.subr.mxu0 0.0
      %544 = vmatpush1.msra.mxu0 0.0
      %545 = vmatprep.subr.mxu0 0.0
      %546 = vmatpush1.msra.mxu0 0.0
      %547 = vmatprep.subr.mxu0 0.0
      %548 = vmatpush1.msra.mxu0 0.0
      %549 = vmatprep.subr.mxu0 0.0
      %550 = vmatpush1.msra.mxu0 0.0
      %551 = vmatprep.subr.mxu0 0.0
      %552 = vmatpush1.msra.mxu0 0.0
      %553 = vmatprep.subr.mxu0 0.0
      %554 = vmatpush1.msra.mxu0 0.0
      %555 = vmatprep.subr.mxu0 0.0
      %556 = vmatpush1.msra.mxu0 0.0
      %557 = vmatprep.subr.mxu0 0.0
      %558 = vmatpush1.msra.mxu0 0.0
      %559 = vmatprep.subr.mxu0 0.0
      %560 = vmatpush1.msra.mxu0 0.0
      %561 = vmatprep.subr.mxu0 0.0
      %562 = vmatpush1.msra.mxu0 0.0
      %563 = vmatprep.mubr.f32.mxu0 0.0
      %v564 = vand.u32 %v178, 4294901760
      %565 = vmatmul.mubr.f32.gmra.mrb[0].mxu0 %v564
      %v566 = vpop.f32.mrb[0].mxu0
      %v567 = vadd.f32 %v490, %v566
      %v568 = vpop.f32.mrb[0].mxu0
      %569 = vdwg.mxu0
      %570 = vmatprep.subr.mxu0 0.0
      %v571 = vand.u32 %v167, 4294901760
      %572 = vmatpush1.msra.mxu0 %v571
      %573 = vmatprep.subr.mxu0 0.0
      %v574 = vand.u32 %v182, 4294901760
      %575 = vmatpush1.msra.mxu0 %v574
      %576 = vmatprep.subr.mxu0 0.0
      %577 = vmatpush1.msra.mxu0 0.0
      %578 = vmatprep.subr.mxu0 0.0
      %579 = vmatpush1.msra.mxu0 0.0
      %580 = vmatprep.subr.mxu0 0.0
      %581 = vmatpush1.msra.mxu0 0.0
      %582 = vmatprep.subr.mxu0 0.0
      %583 = vmatpush1.msra.mxu0 0.0
      %584 = vmatprep.subr.mxu0 0.0
      %585 = vmatpush1.msra.mxu0 0.0
      %586 = vmatprep.subr.mxu0 0.0
      %587 = vmatpush1.msra.mxu0 0.0
      %588 = vmatprep.subr.mxu0 0.0
      %589 = vmatpush1.msra.mxu0 0.0
      %590 = vmatprep.subr.mxu0 0.0
      %591 = vmatpush1.msra.mxu0 0.0
      %592 = vmatprep.subr.mxu0 0.0
      %593 = vmatpush1.msra.mxu0 0.0
      %594 = vmatprep.subr.mxu0 0.0
      %595 = vmatpush1.msra.mxu0 0.0
      %596 = vmatprep.subr.mxu0 0.0
      %597 = vmatpush1.msra.mxu0 0.0
      %598 = vmatprep.subr.mxu0 0.0
      %599 = vmatpush1.msra.mxu0 0.0
      %600 = vmatprep.subr.mxu0 0.0
      %601 = vmatpush1.msra.mxu0 0.0
      %602 = vmatprep.subr.mxu0 0.0
      %603 = vmatpush1.msra.mxu0 0.0
      %604 = vmatprep.subr.mxu0 0.0
      %605 = vmatpush1.msra.mxu0 0.0
      %606 = vmatprep.subr.mxu0 0.0
      %607 = vmatpush1.msra.mxu0 0.0
      %608 = vmatprep.subr.mxu0 0.0
      %609 = vmatpush1.msra.mxu0 0.0
      %610 = vmatprep.subr.mxu0 0.0
      %611 = vmatpush1.msra.mxu0 0.0
      %612 = vmatprep.subr.mxu0 0.0
      %613 = vmatpush1.msra.mxu0 0.0
      %614 = vmatprep.subr.mxu0 0.0
      %615 = vmatpush1.msra.mxu0 0.0
      %616 = vmatprep.subr.mxu0 0.0
      %617 = vmatpush1.msra.mxu0 0.0
      %618 = vmatprep.subr.mxu0 0.0
      %619 = vmatpush1.msra.mxu0 0.0
      %620 = vmatprep.subr.mxu0 0.0
      %621 = vmatpush1.msra.mxu0 0.0
      %622 = vmatprep.subr.mxu0 0.0
      %623 = vmatpush1.msra.mxu0 0.0
      %624 = vmatprep.subr.mxu0 0.0
      %625 = vmatpush1.msra.mxu0 0.0
      %626 = vmatprep.subr.mxu0 0.0
      %627 = vmatpush1.msra.mxu0 0.0
      %628 = vmatprep.subr.mxu0 0.0
      %629 = vmatpush1.msra.mxu0 0.0
      %630 = vmatprep.subr.mxu0 0.0
      %631 = vmatpush1.msra.mxu0 0.0
      %632 = vmatprep.subr.mxu0 0.0
      %633 = vmatpush1.msra.mxu0 0.0
      %634 = vmatprep.subr.mxu0 0.0
      %635 = vmatpush1.msra.mxu0 0.0
      %636 = vmatprep.mubr.f32.mxu0 0.0
      %v637 = vand.u32 %v178, 4294901760
      %638 = vmatmul.mubr.f32.gmra.mrb[0].mxu0 %v637
      %v639 = vpop.f32.mrb[0].mxu0
      %v640 = vadd.f32 %v567, %v639
      %v641 = vpop.f32.mrb[0].mxu0
      %642 = vdwg.mxu0
      %vm643 = vcmp.gt.f32.partialorder %v640, 0.0
      %v644 = vmin.f32 %v640, 0.0
      %v645 = vmul.f32 %v644, 1.442695
      %v646 = vpow.pop %v645
      %v647 = vsub.f32 %v646, 1.0
      %v648 = vsel %vm643, %v640, %v647
      %vm649 = vcmask 261120
      %650 = vst.msk [vmem:[%s165] sm:$0xff] %vm649, %v648
      %p651 = scmp.lt.s32.totalorder %s14, 2
      %s652 = scalar_select %p651, %s14, 2
      %s653 = smul.addr %s652, 8
      %s654 = scalar_lea.vmem %s3, %s653
      // Predicated region
      $region33: #{model_forward.8} parent=31 // pred_check
        %p655 = pneg %p100
      $region34: #{model_forward.8} parent=31 // pred_check_branch
        %657 = sbr.rel (%p655) target = $region36
      $region35: #{model_forward.8} parent=31 // pred_region
        _
      $region36: #{model_forward.8} parent=31 // pred_fallthru
        _
    $region32: #{model_forward.8} parent=5 // pred_fallthru
      _
    %p658 = scmp.le.s32.totalorder 2, %s9
    // Predicated region
    $region37: #{model_forward.8} parent=5 // pred_check
      %p659 = pneg %p658
    $region38: #{model_forward.8} parent=5 // pred_check_branch
      %661 = sbr.rel (%p659) target = $region40
    $region39: #{model_forward.8} parent=5 // pred_region
      %s662 = ssub.s32 %s9, 2
      // Predicated region
      $region41: #{model_forward.8} parent=39 // pred_check
        %p663 = pneg %p106
      $region42: #{model_forward.8} parent=39 // pred_check_branch
        %665 = sbr.rel (%p663) target = $region44
      $region43: #{model_forward.8} parent=39 // pred_region
        %p666 = scmp.lt.s32.totalorder %s15, 2
        %s667 = scalar_select %p666, %s15, 2
        %s668 = smul.addr %s667, 8
        %s669 = scalar_lea.vmem %s3, %s668
      $region44: #{model_forward.8} parent=39 // pred_fallthru
        _
    $region40: #{model_forward.8} parent=5 // pred_fallthru
      _
  $region6: #{model_forward.8} parent=0 // loop_footer
    %s13 = sadd.s32 1, %s9
  $region7: #{model_forward.8} parent=0 // loop_footer_branch
    %8 = sbr.rel target = $region3
  $region8: #{model_forward.8} parent=0 // loop_exit
    _

// kernel: model_forward.11
$region0: #{model_forward.11}
  #allocation0 [shape = 'u32[]', space=smem, size = 0x4, offset = 0x4, fixed_abs, tag = 'smem constant byte address 0x4 - core index']
  #allocation1 [shape = 'u32[144,128]{1,0:T(1,128)}', space=vmem, size = 0x12000, scoped, tag = 'internal scratch']
  %s0 = inlined_call_operand.vmem [shape: f32[4], index: 0, kind: input, shape index: {}]
  %s1 = inlined_call_operand.vmem [shape: f32[20,32], index: 1, kind: input, shape index: {}]
  %s2 = inlined_call_operand.vmem [shape: f32[1,20], index: 2, kind: input, shape index: {}]
  %s3 = inlined_call_operand.vmem [shape: f32[12,32], index: 3, kind: input, shape index: {}]
  %s4 = inlined_call_operand.vmem [shape: f32[32,1], index: 4, kind: input, shape index: {}]
  %s5 = inlined_call_operand.vmem [shape: f32[4,32], index: 5, kind: input, shape index: {}]
  %s6 = inlined_call_operand.vmem [shape: bf16[4,12,20], index: 6, kind: input, shape index: {}]
  %s7 = inlined_call_operand.vmem [shape: bf16[12,20], index: 7, kind: input, shape index: {}]
  %s8 = inlined_call_operand.vmem [shape: f32[12,32], index: 8, kind: output, shape index: {}]
  %s9 = sld [smem:[#allocation0]]
  $region46: #{model_forward.11} parent=0
    _
  %s11 = ssub.s32 1, %s9
  %s12 = scalar_select 0, %s11, %s9
  $region1: #{model_forward.11} parent=0
    #allocation2 [shape = 'u8[512]{0}', space=smem, size = 0x200, scoped, tag = 'input window, operand 0, single buffered']
    #allocation3 [shape = 's32[1]{0}', space=sflag, size = 0x4, scoped, tag = 'scoped memory for model_forward.11']
    %13 = vsyncpa [#allocation3], 0
    // Predicated region
    $region2: #{model_forward.11} parent=1 // pred_check
      _
    $region3: #{model_forward.11} parent=1 // pred_check_branch
      %15 = sbr.rel (0) target = $region5
    $region4: #{model_forward.11} parent=1 // pred_region
      %s17 = ssub.s32 16, 16
      %18 = vsyncadd [#allocation3], %s17
      %s20 = sshll.u32 %s0, 4
      %s21 = int_to_ptr.vmem [resolvable:$true] %s20
      %23 = dma.vmem_to_smem %s21, 16, [#allocation2], [#allocation3]
    $region5: #{model_forward.11} parent=1 // pred_fallthru
      _
    // Predicated region
    $region6: #{model_forward.11} parent=1 // pred_check
      _
    $region7: #{model_forward.11} parent=1 // pred_check_branch
      %25 = sbr.rel (0) target = $region9
    $region8: #{model_forward.11} parent=1 // pred_region
      _
    $region9: #{model_forward.11} parent=1 // pred_fallthru
      _
    // Predicated region
    $region10: #{model_forward.11} parent=1 // pred_check
      _
    $region11: #{model_forward.11} parent=1 // pred_check_branch
      %27 = sbr.rel (0) target = $region13
    $region12: #{model_forward.11} parent=1 // pred_region
      _
    $region13: #{model_forward.11} parent=1 // pred_fallthru
      _
    // Predicated region
    $region14: #{model_forward.11} parent=1 // pred_check
      _
    $region15: #{model_forward.11} parent=1 // pred_check_branch
      %29 = sbr.rel (0) target = $region17
    $region16: #{model_forward.11} parent=1 // pred_region
      _
    $region17: #{model_forward.11} parent=1 // pred_fallthru
      _
    // Predicated region
    $region18: #{model_forward.11} parent=1 // pred_check
      _
    $region19: #{model_forward.11} parent=1 // pred_check_branch
      %31 = sbr.rel (0) target = $region21
    $region20: #{model_forward.11} parent=1 // pred_region
      _
    $region21: #{model_forward.11} parent=1 // pred_fallthru
      _
    // Predicated region
    $region22: #{model_forward.11} parent=1 // pred_check
      _
    $region23: #{model_forward.11} parent=1 // pred_check_branch
      %33 = sbr.rel (0) target = $region25
    $region24: #{model_forward.11} parent=1 // pred_region
      _
    $region25: #{model_forward.11} parent=1 // pred_fallthru
      _
    // Predicated region
    $region26: #{model_forward.11} parent=1 // pred_check
      _
    $region27: #{model_forward.11} parent=1 // pred_check_branch
      %35 = sbr.rel (0) target = $region29
    $region28: #{model_forward.11} parent=1 // pred_region
      _
    $region29: #{model_forward.11} parent=1 // pred_fallthru
      _
    // Predicated region
    $region30: #{model_forward.11} parent=1 // pred_check
      _
    $region31: #{model_forward.11} parent=1 // pred_check_branch
      %37 = sbr.rel (0) target = $region33
    $region32: #{model_forward.11} parent=1 // pred_region
      _
    $region33: #{model_forward.11} parent=1 // pred_fallthru
      _
    // Predicated region
    $region34: #{model_forward.11} parent=1 // pred_check
      _
    $region35: #{model_forward.11} parent=1 // pred_check_branch
      %39 = sbr.rel (0) target = $region37
    $region36: #{model_forward.11} parent=1 // pred_region
      %40 = dma.done [#allocation3], 16
    $region37: #{model_forward.11} parent=1 // pred_fallthru
      _
    %41 = sfence
    %v42 = vld [vmem:[%s7] sm:$0xf]
    %v43 = vld [vmem:[%s7 + $0x4] sm:$0xf]
    %v44 = vunpack.c.l.bf16 %v42
    %v45 = vunpack.c.l.bf16 %v43
    %v46 = vld [vmem:[%s3] sm:$0xff]
    %v47 = vld [vmem:[%s3 + $0x8] sm:$0xff]
    %v48 = vld [vmem:[%s4] sm:$0xff]
    %v49 = vld [vmem:[%s4 + $0x8] sm:$0xff]
    %v50 = vld [vmem:[%s4 + $0x10] sm:$0xff]
    %v51 = vld [vmem:[%s4 + $0x18] sm:$0xff]
    %vm52 = vcmask 261120
    %v54 = vsel %vm52, %v46, 0
    %v57 = vsel %vm52, %v47, 0
    %59 = vmatprep.subr.mxu0 0.0
    %v60 = vand.u32 %v48, 4294901760
    %61 = vmatpush1.msra.mxu0 %v60
    %62 = vmatprep.subr.mxu0 0.0
    %v63 = vand.u32 %v49, 4294901760
    %64 = vmatpush1.msra.mxu0 %v63
    %65 = vmatprep.subr.mxu0 0.0
    %v66 = vand.u32 %v50, 4294901760
    %67 = vmatpush1.msra.mxu0 %v66
    %68 = vmatprep.subr.mxu0 0.0
    %v69 = vand.u32 %v51, 4294901760
    %70 = vmatpush1.msra.mxu0 %v69
    %71 = vmatprep.subr.mxu0 0.0
    %72 = vmatpush1.msra.mxu0 0.0
    %73 = vmatprep.subr.mxu0 0.0
    %74 = vmatpush1.msra.mxu0 0.0
    %75 = vmatprep.subr.mxu0 0.0
    %76 = vmatpush1.msra.mxu0 0.0
    %77 = vmatprep.subr.mxu0 0.0
    %78 = vmatpush1.msra.mxu0 0.0
    %79 = vmatprep.subr.mxu0 0.0
    %80 = vmatpush1.msra.mxu0 0.0
    %81 = vmatprep.subr.mxu0 0.0
    %82 = vmatpush1.msra.mxu0 0.0
    %83 = vmatprep.subr.mxu0 0.0
    %84 = vmatpush1.msra.mxu0 0.0
    %85 = vmatprep.subr.mxu0 0.0
    %86 = vmatpush1.msra.mxu0 0.0
    %87 = vmatprep.subr.mxu0 0.0
    %88 = vmatpush1.msra.mxu0 0.0
    %89 = vmatprep.subr.mxu0 0.0
    %90 = vmatpush1.msra.mxu0 0.0
    %91 = vmatprep.subr.mxu0 0.0
    %92 = vmatpush1.msra.mxu0 0.0
    %93 = vmatprep.subr.mxu0 0.0
    %94 = vmatpush1.msra.mxu0 0.0
    %95 = vmatprep.subr.mxu0 0.0
    %96 = vmatpush1.msra.mxu0 0.0
    %97 = vmatprep.subr.mxu0 0.0
    %98 = vmatpush1.msra.mxu0 0.0
    %99 = vmatprep.subr.mxu0 0.0
    %100 = vmatpush1.msra.mxu0 0.0
    %101 = vmatprep.subr.mxu0 0.0
    %102 = vmatpush1.msra.mxu0 0.0
    %103 = vmatprep.subr.mxu0 0.0
    %104 = vmatpush1.msra.mxu0 0.0
    %105 = vmatprep.subr.mxu0 0.0
    %106 = vmatpush1.msra.mxu0 0.0
    %107 = vmatprep.subr.mxu0 0.0
    %108 = vmatpush1.msra.mxu0 0.0
    %109 = vmatprep.subr.mxu0 0.0
    %110 = vmatpush1.msra.mxu0 0.0
    %111 = vmatprep.subr.mxu0 0.0
    %112 = vmatpush1.msra.mxu0 0.0
    %113 = vmatprep.subr.mxu0 0.0
    %114 = vmatpush1.msra.mxu0 0.0
    %115 = vmatprep.subr.mxu0 0.0
    %116 = vmatpush1.msra.mxu0 0.0
    %117 = vmatprep.subr.mxu0 0.0
    %118 = vmatpush1.msra.mxu0 0.0
    %119 = vmatprep.subr.mxu0 0.0
    %120 = vmatpush1.msra.mxu0 0.0
    %121 = vmatprep.subr.mxu0 0.0
    %122 = vmatpush1.msra.mxu0 0.0
    %123 = vmatprep.subr.mxu0 0.0
    %124 = vmatpush1.msra.mxu0 0.0
    %125 = vmatprep.subr.mxu0 0.0
    %126 = vmatpush1.msra.mxu0 0.0
    %127 = vmatprep.mubr.f32.mxu0 0.0
    %v128 = vand.u32 %v54, 4294901760
    %v129 = vsub.f32 %v54, %v128
    %v130 = vand.u32 %v129, 4294901760
    %v131 = vsub.f32 %v129, %v130
    %v132 = vand.u32 %v131, 4294901760
    %133 = vmatmul.mubr.f32.gmra.mrb[0].mxu0 %v132
    %v134 = vpop.f32.mrb[0].mxu0
    %v135 = vadd.f32 0.0, %v134
    %v136 = vpop.f32.mrb[0].mxu0
    %137 = vmatprep.mubr.f32.mxu0 0.0
    %v138 = vand.u32 %v57, 4294901760
    %v139 = vsub.f32 %v57, %v138
    %v140 = vand.u32 %v139, 4294901760
    %v141 = vsub.f32 %v139, %v140
    %v142 = vand.u32 %v141, 4294901760
    %143 = vmatmul.mubr.f32.gmra.mrb[0].mxu0 %v142
    %v144 = vpop.f32.mrb[0].mxu0
    %v145 = vadd.f32 0.0, %v144
    %v146 = vpop.f32.mrb[0].mxu0
    %147 = vdwg.mxu0
    %148 = vmatprep.subr.mxu0 0.0
    %v149 = vand.u32 %v48, 4294901760
    %v150 = vsub.f32 %v48, %v149
    %v151 = vand.u32 %v150, 4294901760
    %v152 = vsub.f32 %v150, %v151
    %v153 = vand.u32 %v152, 4294901760
    %154 = vmatpush1.msra.mxu0 %v153
    %155 = vmatprep.subr.mxu0 0.0
    %v156 = vand.u32 %v49, 4294901760
    %v157 = vsub.f32 %v49, %v156
    %v158 = vand.u32 %v157, 4294901760
    %v159 = vsub.f32 %v157, %v158
    %v160 = vand.u32 %v159, 4294901760
    %161 = vmatpush1.msra.mxu0 %v160
    %162 = vmatprep.subr.mxu0 0.0
    %v163 = vand.u32 %v50, 4294901760
    %v164 = vsub.f32 %v50, %v163
    %v165 = vand.u32 %v164, 4294901760
    %v166 = vsub.f32 %v164, %v165
    %v167 = vand.u32 %v166, 4294901760
    %168 = vmatpush1.msra.mxu0 %v167
    %169 = vmatprep.subr.mxu0 0.0
    %v170 = vand.u32 %v51, 4294901760
    %v171 = vsub.f32 %v51, %v170
    %v172 = vand.u32 %v171, 4294901760
    %v173 = vsub.f32 %v171, %v172
    %v174 = vand.u32 %v173, 4294901760
    %175 = vmatpush1.msra.mxu0 %v174
    %176 = vmatprep.subr.mxu0 0.0
    %177 = vmatpush1.msra.mxu0 0.0
    %178 = vmatprep.subr.mxu0 0.0
    %179 = vmatpush1.msra.mxu0 0.0
    %180 = vmatprep.subr.mxu0 0.0
    %181 = vmatpush1.msra.mxu0 0.0
    %182 = vmatprep.subr.mxu0 0.0
    %183 = vmatpush1.msra.mxu0 0.0
    %184 = vmatprep.subr.mxu0 0.0
    %185 = vmatpush1.msra.mxu0 0.0
    %186 = vmatprep.subr.mxu0 0.0
    %187 = vmatpush1.msra.mxu0 0.0
    %188 = vmatprep.subr.mxu0 0.0
    %189 = vmatpush1.msra.mxu0 0.0
    %190 = vmatprep.subr.mxu0 0.0
    %191 = vmatpush1.msra.mxu0 0.0
    %192 = vmatprep.subr.mxu0 0.0
    %193 = vmatpush1.msra.mxu0 0.0
    %194 = vmatprep.subr.mxu0 0.0
    %195 = vmatpush1.msra.mxu0 0.0
    %196 = vmatprep.subr.mxu0 0.0
    %197 = vmatpush1.msra.mxu0 0.0
    %198 = vmatprep.subr.mxu0 0.0
    %199 = vmatpush1.msra.mxu0 0.0
    %200 = vmatprep.subr.mxu0 0.0
    %201 = vmatpush1.msra.mxu0 0.0
    %202 = vmatprep.subr.mxu0 0.0
    %203 = vmatpush1.msra.mxu0 0.0
    %204 = vmatprep.subr.mxu0 0.0
    %205 = vmatpush1.msra.mxu0 0.0
    %206 = vmatprep.subr.mxu0 0.0
    %207 = vmatpush1.msra.mxu0 0.0
    %208 = vmatprep.subr.mxu0 0.0
    %209 = vmatpush1.msra.mxu0 0.0
    %210 = vmatprep.subr.mxu0 0.0
    %211 = vmatpush1.msra.mxu0 0.0
    %212 = vmatprep.subr.mxu0 0.0
    %213 = vmatpush1.msra.mxu0 0.0
    %214 = vmatprep.subr.mxu0 0.0
    %215 = vmatpush1.msra.mxu0 0.0
    %216 = vmatprep.subr.mxu0 0.0
    %217 = vmatpush1.msra.mxu0 0.0
    %218 = vmatprep.subr.mxu0 0.0
    %219 = vmatpush1.msra.mxu0 0.0
    %220 = vmatprep.subr.mxu0 0.0
    %221 = vmatpush1.msra.mxu0 0.0
    %222 = vmatprep.subr.mxu0 0.0
    %223 = vmatpush1.msra.mxu0 0.0
    %224 = vmatprep.subr.mxu0 0.0
    %225 = vmatpush1.msra.mxu0 0.0
    %226 = vmatprep.subr.mxu0 0.0
    %227 = vmatpush1.msra.mxu0 0.0
    %228 = vmatprep.subr.mxu0 0.0
    %229 = vmatpush1.msra.mxu0 0.0
    %230 = vmatprep.subr.mxu0 0.0
    %231 = vmatpush1.msra.mxu0 0.0
    %232 = vmatprep.mubr.f32.mxu0 0.0
    %v233 = vand.u32 %v54, 4294901760
    %234 = vmatmul.mubr.f32.gmra.mrb[0].mxu0 %v233
    %v235 = vpop.f32.mrb[0].mxu0
    %v236 = vadd.f32 %v135, %v235
    %v237 = vpop.f32.mrb[0].mxu0
    %238 = vmatprep.mubr.f32.mxu0 0.0
    %v239 = vand.u32 %v57, 4294901760
    %240 = vmatmul.mubr.f32.gmra.mrb[0].mxu0 %v239
    %v241 = vpop.f32.mrb[0].mxu0
    %v242 = vadd.f32 %v145, %v241
    %v243 = vpop.f32.mrb[0].mxu0
    %244 = vdwg.mxu0
    %245 = vmatprep.subr.mxu0 0.0
    %v246 = vand.u32 %v48, 4294901760
    %v247 = vsub.f32 %v48, %v246
    %248 = vmatpush1.msra.mxu0 %v247
    %249 = vmatprep.subr.mxu0 0.0
    %v250 = vand.u32 %v49, 4294901760
    %v251 = vsub.f32 %v49, %v250
    %252 = vmatpush1.msra.mxu0 %v251
    %253 = vmatprep.subr.mxu0 0.0
    %v254 = vand.u32 %v50, 4294901760
    %v255 = vsub.f32 %v50, %v254
    %256 = vmatpush1.msra.mxu0 %v255
    %257 = vmatprep.subr.mxu0 0.0
    %v258 = vand.u32 %v51, 4294901760
    %v259 = vsub.f32 %v51, %v258
    %260 = vmatpush1.msra.mxu0 %v259
    %261 = vmatprep.subr.mxu0 0.0
    %262 = vmatpush1.msra.mxu0 0.0
    %263 = vmatprep.subr.mxu0 0.0
    %264 = vmatpush1.msra.mxu0 0.0
    %265 = vmatprep.subr.mxu0 0.0
    %266 = vmatpush1.msra.mxu0 0.0
    %267 = vmatprep.subr.mxu0 0.0
    %268 = vmatpush1.msra.mxu0 0.0
    %269 = vmatprep.subr.mxu0 0.0
    %270 = vmatpush1.msra.mxu0 0.0
    %271 = vmatprep.subr.mxu0 0.0
    %272 = vmatpush1.msra.mxu0 0.0
    %273 = vmatprep.subr.mxu0 0.0
    %274 = vmatpush1.msra.mxu0 0.0
    %275 = vmatprep.subr.mxu0 0.0
    %276 = vmatpush1.msra.mxu0 0.0
    %277 = vmatprep.subr.mxu0 0.0
    %278 = vmatpush1.msra.mxu0 0.0
    %279 = vmatprep.subr.mxu0 0.0
    %280 = vmatpush1.msra.mxu0 0.0
    %281 = vmatprep.subr.mxu0 0.0
    %282 = vmatpush1.msra.mxu0 0.0
    %283 = vmatprep.subr.mxu0 0.0
    %284 = vmatpush1.msra.mxu0 0.0
    %285 = vmatprep.subr.mxu0 0.0
    %286 = vmatpush1.msra.mxu0 0.0
    %287 = vmatprep.subr.mxu0 0.0
    %288 = vmatpush1.msra.mxu0 0.0
    %289 = vmatprep.subr.mxu0 0.0
    %290 = vmatpush1.msra.mxu0 0.0
    %291 = vmatprep.subr.mxu0 0.0
    %292 = vmatpush1.msra.mxu0 0.0
    %293 = vmatprep.subr.mxu0 0.0
    %294 = vmatpush1.msra.mxu0 0.0
    %295 = vmatprep.subr.mxu0 0.0
    %296 = vmatpush1.msra.mxu0 0.0
    %297 = vmatprep.subr.mxu0 0.0
    %298 = vmatpush1.msra.mxu0 0.0
    %299 = vmatprep.subr.mxu0 0.0
    %300 = vmatpush1.msra.mxu0 0.0
    %301 = vmatprep.subr.mxu0 0.0
    %302 = vmatpush1.msra.mxu0 0.0
    %303 = vmatprep.subr.mxu0 0.0
    %304 = vmatpush1.msra.mxu0 0.0
    %305 = vmatprep.subr.mxu0 0.0
    %306 = vmatpush1.msra.mxu0 0.0
    %307 = vmatprep.subr.mxu0 0.0
    %308 = vmatpush1.msra.mxu0 0.0
    %309 = vmatprep.subr.mxu0 0.0
    %310 = vmatpush1.msra.mxu0 0.0
    %311 = vmatprep.subr.mxu0 0.0
    %312 = vmatpush1.msra.mxu0 0.0
    %313 = vmatprep.subr.mxu0 0.0
    %314 = vmatpush1.msra.mxu0 0.0
    %315 = vmatprep.subr.mxu0 0.0
    %316 = vmatpush1.msra.mxu0 0.0
    %317 = vmatprep.mubr.f32.mxu0 0.0
    %v318 = vand.u32 %v54, 4294901760
    %v319 = vsub.f32 %v54, %v318
    %320 = vmatmul.mubr.f32.gmra.mrb[0].mxu0 %v319
    %v321 = vpop.f32.mrb[0].mxu0
    %v322 = vadd.f32 %v236, %v321
    %v323 = vpop.f32.mrb[0].mxu0
    %324 = vmatprep.mubr.f32.mxu0 0.0
    %v325 = vand.u32 %v57, 4294901760
    %v326 = vsub.f32 %v57, %v325
    %327 = vmatmul.mubr.f32.gmra.mrb[0].mxu0 %v326
    %v328 = vpop.f32.mrb[0].mxu0
    %v329 = vadd.f32 %v242, %v328
    %v330 = vpop.f32.mrb[0].mxu0
    %331 = vdwg.mxu0
    %332 = vmatprep.subr.mxu0 0.0
    %v333 = vand.u32 %v48, 4294901760
    %334 = vmatpush1.msra.mxu0 %v333
    %335 = vmatprep.subr.mxu0 0.0
    %v336 = vand.u32 %v49, 4294901760
    %337 = vmatpush1.msra.mxu0 %v336
    %338 = vmatprep.subr.mxu0 0.0
    %v339 = vand.u32 %v50, 4294901760
    %340 = vmatpush1.msra.mxu0 %v339
    %341 = vmatprep.subr.mxu0 0.0
    %v342 = vand.u32 %v51, 4294901760
    %343 = vmatpush1.msra.mxu0 %v342
    %344 = vmatprep.subr.mxu0 0.0
    %345 = vmatpush1.msra.mxu0 0.0
    %346 = vmatprep.subr.mxu0 0.0
    %347 = vmatpush1.msra.mxu0 0.0
    %348 = vmatprep.subr.mxu0 0.0
    %349 = vmatpush1.msra.mxu0 0.0
    %350 = vmatprep.subr.mxu0 0.0
    %351 = vmatpush1.msra.mxu0 0.0
    %352 = vmatprep.subr.mxu0 0.0
    %353 = vmatpush1.msra.mxu0 0.0
    %354 = vmatprep.subr.mxu0 0.0
    %355 = vmatpush1.msra.mxu0 0.0
    %356 = vmatprep.subr.mxu0 0.0
    %357 = vmatpush1.msra.mxu0 0.0
    %358 = vmatprep.subr.mxu0 0.0
    %359 = vmatpush1.msra.mxu0 0.0
    %360 = vmatprep.subr.mxu0 0.0
    %361 = vmatpush1.msra.mxu0 0.0
    %362 = vmatprep.subr.mxu0 0.0
    %363 = vmatpush1.msra.mxu0 0.0
    %364 = vmatprep.subr.mxu0 0.0
    %365 = vmatpush1.msra.mxu0 0.0
    %366 = vmatprep.subr.mxu0 0.0
    %367 = vmatpush1.msra.mxu0 0.0
    %368 = vmatprep.subr.mxu0 0.0
    %369 = vmatpush1.msra.mxu0 0.0
    %370 = vmatprep.subr.mxu0 0.0
    %371 = vmatpush1.msra.mxu0 0.0
    %372 = vmatprep.subr.mxu0 0.0
    %373 = vmatpush1.msra.mxu0 0.0
    %374 = vmatprep.subr.mxu0 0.0
    %375 = vmatpush1.msra.mxu0 0.0
    %376 = vmatprep.subr.mxu0 0.0
    %377 = vmatpush1.msra.mxu0 0.0
    %378 = vmatprep.subr.mxu0 0.0
    %379 = vmatpush1.msra.mxu0 0.0
    %380 = vmatprep.subr.mxu0 0.0
    %381 = vmatpush1.msra.mxu0 0.0
    %382 = vmatprep.subr.mxu0 0.0
    %383 = vmatpush1.msra.mxu0 0.0
    %384 = vmatprep.subr.mxu0 0.0
    %385 = vmatpush1.msra.mxu0 0.0
    %386 = vmatprep.subr.mxu0 0.0
    %387 = vmatpush1.msra.mxu0 0.0
    %388 = vmatprep.subr.mxu0 0.0
    %389 = vmatpush1.msra.mxu0 0.0
    %390 = vmatprep.subr.mxu0 0.0
    %391 = vmatpush1.msra.mxu0 0.0
    %392 = vmatprep.subr.mxu0 0.0
    %393 = vmatpush1.msra.mxu0 0.0
    %394 = vmatprep.subr.mxu0 0.0
    %395 = vmatpush1.msra.mxu0 0.0
    %396 = vmatprep.subr.mxu0 0.0
    %397 = vmatpush1.msra.mxu0 0.0
    %398 = vmatprep.subr.mxu0 0.0
    %399 = vmatpush1.msra.mxu0 0.0
    %400 = vmatprep.mubr.f32.mxu0 0.0
    %v401 = vand.u32 %v54, 4294901760
    %v402 = vsub.f32 %v54, %v401
    %v403 = vand.u32 %v402, 4294901760
    %404 = vmatmul.mubr.f32.gmra.mrb[0].mxu0 %v403
    %v405 = vpop.f32.mrb[0].mxu0
    %v406 = vadd.f32 %v322, %v405
    %v407 = vpop.f32.mrb[0].mxu0
    %408 = vmatprep.mubr.f32.mxu0 0.0
    %v409 = vand.u32 %v57, 4294901760
    %v410 = vsub.f32 %v57, %v409
    %v411 = vand.u32 %v410, 4294901760
    %412 = vmatmul.mubr.f32.gmra.mrb[0].mxu0 %v411
    %v413 = vpop.f32.mrb[0].mxu0
    %v414 = vadd.f32 %v329, %v413
    %v415 = vpop.f32.mrb[0].mxu0
    %416 = vdwg.mxu0
    %417 = vmatprep.subr.mxu0 0.0
    %v418 = vand.u32 %v48, 4294901760
    %v419 = vsub.f32 %v48, %v418
    %v420 = vand.u32 %v419, 4294901760
    %421 = vmatpush1.msra.mxu0 %v420
    %422 = vmatprep.subr.mxu0 0.0
    %v423 = vand.u32 %v49, 4294901760
    %v424 = vsub.f32 %v49, %v423
    %v425 = vand.u32 %v424, 4294901760
    %426 = vmatpush1.msra.mxu0 %v425
    %427 = vmatprep.subr.mxu0 0.0
    %v428 = vand.u32 %v50, 4294901760
    %v429 = vsub.f32 %v50, %v428
    %v430 = vand.u32 %v429, 4294901760
    %431 = vmatpush1.msra.mxu0 %v430
    %432 = vmatprep.subr.mxu0 0.0
    %v433 = vand.u32 %v51, 4294901760
    %v434 = vsub.f32 %v51, %v433
    %v435 = vand.u32 %v434, 4294901760
    %436 = vmatpush1.msra.mxu0 %v435
    %437 = vmatprep.subr.mxu0 0.0
    %438 = vmatpush1.msra.mxu0 0.0
    %439 = vmatprep.subr.mxu0 0.0
    %440 = vmatpush1.msra.mxu0 0.0
    %441 = vmatprep.subr.mxu0 0.0
    %442 = vmatpush1.msra.mxu0 0.0
    %443 = vmatprep.subr.mxu0 0.0
    %444 = vmatpush1.msra.mxu0 0.0
    %445 = vmatprep.subr.mxu0 0.0
    %446 = vmatpush1.msra.mxu0 0.0
    %447 = vmatprep.subr.mxu0 0.0
    %448 = vmatpush1.msra.mxu0 0.0
    %449 = vmatprep.subr.mxu0 0.0
    %450 = vmatpush1.msra.mxu0 0.0
    %451 = vmatprep.subr.mxu0 0.0
    %452 = vmatpush1.msra.mxu0 0.0
    %453 = vmatprep.subr.mxu0 0.0
    %454 = vmatpush1.msra.mxu0 0.0
    %455 = vmatprep.subr.mxu0 0.0
    %456 = vmatpush1.msra.mxu0 0.0
    %457 = vmatprep.subr.mxu0 0.0
    %458 = vmatpush1.msra.mxu0 0.0
    %459 = vmatprep.subr.mxu0 0.0
    %460 = vmatpush1.msra.mxu0 0.0
    %461 = vmatprep.subr.mxu0 0.0
    %462 = vmatpush1.msra.mxu0 0.0
    %463 = vmatprep.subr.mxu0 0.0
    %464 = vmatpush1.msra.mxu0 0.0
    %465 = vmatprep.subr.mxu0 0.0
    %466 = vmatpush1.msra.mxu0 0.0
    %467 = vmatprep.subr.mxu0 0.0
    %468 = vmatpush1.msra.mxu0 0.0
    %469 = vmatprep.subr.mxu0 0.0
    %470 = vmatpush1.msra.mxu0 0.0
    %471 = vmatprep.subr.mxu0 0.0
    %472 = vmatpush1.msra.mxu0 0.0
    %473 = vmatprep.subr.mxu0 0.0
    %474 = vmatpush1.msra.mxu0 0.0
    %475 = vmatprep.subr.mxu0 0.0
    %476 = vmatpush1.msra.mxu0 0.0
    %477 = vmatprep.subr.mxu0 0.0
    %478 = vmatpush1.msra.mxu0 0.0
    %479 = vmatprep.subr.mxu0 0.0
    %480 = vmatpush1.msra.mxu0 0.0
    %481 = vmatprep.subr.mxu0 0.0
    %482 = vmatpush1.msra.mxu0 0.0
    %483 = vmatprep.subr.mxu0 0.0
    %484 = vmatpush1.msra.mxu0 0.0
    %485 = vmatprep.subr.mxu0 0.0
    %486 = vmatpush1.msra.mxu0 0.0
    %487 = vmatprep.subr.mxu0 0.0
    %488 = vmatpush1.msra.mxu0 0.0
    %489 = vmatprep.subr.mxu0 0.0
    %490 = vmatpush1.msra.mxu0 0.0
    %491 = vmatprep.subr.mxu0 0.0
    %492 = vmatpush1.msra.mxu0 0.0
    %493 = vmatprep.mubr.f32.mxu0 0.0
    %v494 = vand.u32 %v54, 4294901760
    %495 = vmatmul.mubr.f32.gmra.mrb[0].mxu0 %v494
    %v496 = vpop.f32.mrb[0].mxu0
    %v497 = vadd.f32 %v406, %v496
    %v498 = vpop.f32.mrb[0].mxu0
    %499 = vmatprep.mubr.f32.mxu0 0.0
    %v500 = vand.u32 %v57, 4294901760
    %501 = vmatmul.mubr.f32.gmra.mrb[0].mxu0 %v500
    %v502 = vpop.f32.mrb[0].mxu0
    %v503 = vadd.f32 %v414, %v502
    %v504 = vpop.f32.mrb[0].mxu0
    %505 = vdwg.mxu0
    %506 = vmatprep.subr.mxu0 0.0
    %v507 = vand.u32 %v48, 4294901760
    %508 = vmatpush1.msra.mxu0 %v507
    %509 = vmatprep.subr.mxu0 0.0
    %v510 = vand.u32 %v49, 4294901760
    %511 = vmatpush1.msra.mxu0 %v510
    %512 = vmatprep.subr.mxu0 0.0
    %v513 = vand.u32 %v50, 4294901760
    %514 = vmatpush1.msra.mxu0 %v513
    %515 = vmatprep.subr.mxu0 0.0
    %v516 = vand.u32 %v51, 4294901760
    %517 = vmatpush1.msra.mxu0 %v516
    %518 = vmatprep.subr.mxu0 0.0
    %519 = vmatpush1.msra.mxu0 0.0
    %520 = vmatprep.subr.mxu0 0.0
    %521 = vmatpush1.msra.mxu0 0.0
    %522 = vmatprep.subr.mxu0 0.0
    %523 = vmatpush1.msra.mxu0 0.0
    %524 = vmatprep.subr.mxu0 0.0
    %525 = vmatpush1.msra.mxu0 0.0
    %526 = vmatprep.subr.mxu0 0.0
    %527 = vmatpush1.msra.mxu0 0.0
    %528 = vmatprep.subr.mxu0 0.0
    %529 = vmatpush1.msra.mxu0 0.0
    %530 = vmatprep.subr.mxu0 0.0
    %531 = vmatpush1.msra.mxu0 0.0
    %532 = vmatprep.subr.mxu0 0.0
    %533 = vmatpush1.msra.mxu0 0.0
    %534 = vmatprep.subr.mxu0 0.0
    %535 = vmatpush1.msra.mxu0 0.0
    %536 = vmatprep.subr.mxu0 0.0
    %537 = vmatpush1.msra.mxu0 0.0
    %538 = vmatprep.subr.mxu0 0.0
    %539 = vmatpush1.msra.mxu0 0.0
    %540 = vmatprep.subr.mxu0 0.0
    %541 = vmatpush1.msra.mxu0 0.0
    %542 = vmatprep.subr.mxu0 0.0
    %543 = vmatpush1.msra.mxu0 0.0
    %544 = vmatprep.subr.mxu0 0.0
    %545 = vmatpush1.msra.mxu0 0.0
    %546 = vmatprep.subr.mxu0 0.0
    %547 = vmatpush1.msra.mxu0 0.0
    %548 = vmatprep.subr.mxu0 0.0
    %549 = vmatpush1.msra.mxu0 0.0
    %550 = vmatprep.subr.mxu0 0.0
    %551 = vmatpush1.msra.mxu0 0.0
    %552 = vmatprep.subr.mxu0 0.0
    %553 = vmatpush1.msra.mxu0 0.0
    %554 = vmatprep.subr.mxu0 0.0
    %555 = vmatpush1.msra.mxu0 0.0
    %556 = vmatprep.subr.mxu0 0.0
    %557 = vmatpush1.msra.mxu0 0.0
    %558 = vmatprep.subr.mxu0 0.0
    %559 = vmatpush1.msra.mxu0 0.0
    %560 = vmatprep.subr.mxu0 0.0
    %561 = vmatpush1.msra.mxu0 0.0
    %562 = vmatprep.subr.mxu0 0.0
    %563 = vmatpush1.msra.mxu0 0.0
    %564 = vmatprep.subr.mxu0 0.0
    %565 = vmatpush1.msra.mxu0 0.0
    %566 = vmatprep.subr.mxu0 0.0
    %567 = vmatpush1.msra.mxu0 0.0
    %568 = vmatprep.subr.mxu0 0.0
    %569 = vmatpush1.msra.mxu0 0.0
    %570 = vmatprep.subr.mxu0 0.0
    %571 = vmatpush1.msra.mxu0 0.0
    %572 = vmatprep.subr.mxu0 0.0
    %573 = vmatpush1.msra.mxu0 0.0
    %574 = vmatprep.mubr.f32.mxu0 0.0
    %v575 = vand.u32 %v54, 4294901760
    %576 = vmatmul.mubr.f32.gmra.mrb[0].mxu0 %v575
    %v577 = vpop.f32.mrb[0].mxu0
    %v578 = vadd.f32 %v497, %v577
    %v579 = vpop.f32.mrb[0].mxu0
    %580 = vmatprep.mubr.f32.mxu0 0.0
    %v581 = vand.u32 %v57, 4294901760
    %582 = vmatmul.mubr.f32.gmra.mrb[0].mxu0 %v581
    %v583 = vpop.f32.mrb[0].mxu0
    %v584 = vadd.f32 %v503, %v583
    %v585 = vpop.f32.mrb[0].mxu0
    %586 = vdwg.mxu0
    %v587 = vsub.f32 %v44, 1.0
    %v588 = vsub.f32 %v45, 1.0
    %v589 = vmul.f32 %v587, 1e+30
    %v590 = vmul.f32 %v588, 1e+30
    %s591 = sld [smem:[#allocation2]]
    %v592 = vld [vmem:[%s6] sm:$0xf]
    %v593 = vld [vmem:[%s6 + $0x4] sm:$0xf]
    %v594 = vunpack.c.l.bf16 %v592
    %v595 = vunpack.c.l.bf16 %v593
    %v596 = vstv %s591
    %v597 = vmul.f32 %v596, %v594
    %v598 = vmul.f32 %v596, %v595
    %v599 = vadd.f32 %v589, %v597
    %v600 = vadd.f32 %v590, %v598
    %s601 = sld [smem:[#allocation2 + $0x1]]
    %s602 = scalar_lea.vmem %s6, 8
    %v603 = vld [vmem:[%s602] sm:$0xf]
    %v604 = vld [vmem:[%s602 + $0x4] sm:$0xf]
    %v605 = vunpack.c.l.bf16 %v603
    %v606 = vunpack.c.l.bf16 %v604
    %v607 = vstv %s601
    %v608 = vmul.f32 %v607, %v605
    %v609 = vmul.f32 %v607, %v606
    %v610 = vadd.f32 %v599, %v608
    %v611 = vadd.f32 %v600, %v609
    %s612 = sld [smem:[#allocation2 + $0x2]]
    %s613 = scalar_lea.vmem %s6, 16
    %v614 = vld [vmem:[%s613] sm:$0xf]
    %v615 = vld [vmem:[%s613 + $0x4] sm:$0xf]
    %v616 = vunpack.c.l.bf16 %v614
    %v617 = vunpack.c.l.bf16 %v615
    %v618 = vstv %s612
    %v619 = vmul.f32 %v618, %v616
    %v620 = vmul.f32 %v618, %v617
    %v621 = vadd.f32 %v610, %v619
    %v622 = vadd.f32 %v611, %v620
    %s623 = sld [smem:[#allocation2 + $0x3]]
    %s624 = scalar_lea.vmem %s6, 24
    %v625 = vld [vmem:[%s624] sm:$0xf]
    %v626 = vld [vmem:[%s624 + $0x4] sm:$0xf]
    %v627 = vunpack.c.l.bf16 %v625
    %v628 = vunpack.c.l.bf16 %v626
    %v629 = vstv %s623
    %v630 = vmul.f32 %v629, %v627
    %v631 = vmul.f32 %v629, %v628
    %v632 = vadd.f32 %v621, %v630
    %v633 = vadd.f32 %v622, %v631
    %v634 = vld [vmem:[%s2] sm:$0x1]
    %636 = vset.pattern.permute.xlu0 0
    %637 = vperm.xlu0 %636, %v578
    %v638 = vpop.permute.xlu0 %637
    %641 = vset.pattern.permute.xlu0 0
    %642 = vperm.xlu0 %641, %v584
    %v643 = vpop.permute.xlu0 %642
    %v646 = vlaneseq
    %v647 = vshrl.u32 %v646, 7
    %v648 = vsub.s32 0, %v647
    %v649 = vrot.slane %v634, %v648
    %v651 = vadd.f32 %v638, %v649
    %v652 = vadd.f32 %v643, %v649
    %v653 = vadd.f32 %v651, %v632
    %v654 = vadd.f32 %v652, %v633
    %vm655 = vcmp.gt.f32.partialorder %v653, 0.0
    %vm656 = vcmp.gt.f32.partialorder %v654, 0.0
    %v657 = vmul.f32 %v653, 0.01
    %v658 = vmul.f32 %v654, 0.01
    %v659 = vsel %vm655, %v653, %v657
    %v660 = vsel %vm656, %v654, %v658
    %vm661 = vcmask 162816
    %v662 = vsel %vm661, %v659, -inf
    %663 = vmax.xlane.f32.xlu0 %v662
    %v664 = vpop.xlane.xlu0 %663
    %v665 = vsel %vm661, %v660, -inf
    %666 = vmax.xlane.f32.xlu0 %v665
    %v667 = vpop.xlane.xlu0 %666
    %v668 = vsub.f32 %v659, %v664
    %v669 = vsub.f32 %v660, %v667
    %v670 = vmul.f32 %v668, 1.442695
    %v671 = vpow.pop %v670
    %v672 = vmul.f32 %v669, 1.442695
    %v673 = vpow.pop %v672
    %v674 = vmul.f32 %v671, %v44
    %v675 = vmul.f32 %v673, %v45
    %v676 = vsel %vm661, %v674, 0.0
    %677 = vadd.xlane.f32.xlu0 %v676
    %v678 = vpop.xlane.xlu0 %677
    %v679 = vsel %vm661, %v675, 0.0
    %680 = vadd.xlane.f32.xlu0 %v679
    %v681 = vpop.xlane.xlu0 %680
    %v682 = vmax.f32 %v678, 1e-30
    %v683 = vmax.f32 %v681, 1e-30
    %v684 = vrcp.pop %v682
    %v685 = vmul.f32 %v674, %v684
    %v686 = vrcp.pop %v683
    %v687 = vmul.f32 %v675, %v686
    %v688 = vld [vmem:[%s1] sm:$0xff]
    %v689 = vld [vmem:[%s1 + $0x8] sm:$0xff]
    %v690 = vld [vmem:[%s1 + $0x10] sm:$0xf]
    %v691 = vmul.f32 %v685, %v594
    %v692 = vmul.f32 %v687, %v595
    %v693 = vsel %vm661, %v691, 0.0
    %694 = vadd.xlane.f32.xlu0 %v693
    %v695 = vpop.xlane.xlu0 %694
    %v696 = vsel %vm661, %v692, 0.0
    %697 = vadd.xlane.f32.xlu0 %v696
    %v698 = vpop.xlane.xlu0 %697
    %v699 = vld [vmem:[%s5] sm:$0x1]
    %v700 = vlaneseq
    %v701 = vshrl.u32 %v700, 7
    %v702 = vsub.s32 0, %v701
    %v703 = vrot.slane %v699, %v702
    %v704 = vmul.f32 %v695, %v703
    %v705 = vmul.f32 %v698, %v703
    %v707 = vsel %vm661, %v685, 0
    %v710 = vsel %vm661, %v687, 0
    %vm712 = vcmask 1043456
    %v714 = vsel %vm712, %v690, 0
    %716 = vmatprep.subr.mxu0 0.0
    %v717 = vand.u32 %v688, 4294901760
    %718 = vmatpush1.msra.mxu0 %v717
    %719 = vmatprep.subr.mxu0 0.0
    %v720 = vand.u32 %v689, 4294901760
    %721 = vmatpush1.msra.mxu0 %v720
    %722 = vmatprep.subr.mxu0 0.0
    %v723 = vand.u32 %v714, 4294901760
    %724 = vmatpush1.msra.mxu0 %v723
    %725 = vmatprep.subr.mxu0 0.0
    %726 = vmatpush1.msra.mxu0 0.0
    %727 = vmatprep.subr.mxu0 0.0
    %728 = vmatpush1.msra.mxu0 0.0
    %729 = vmatprep.subr.mxu0 0.0
    %730 = vmatpush1.msra.mxu0 0.0
    %731 = vmatprep.subr.mxu0 0.0
    %732 = vmatpush1.msra.mxu0 0.0
    %733 = vmatprep.subr.mxu0 0.0
    %734 = vmatpush1.msra.mxu0 0.0
    %735 = vmatprep.subr.mxu0 0.0
    %736 = vmatpush1.msra.mxu0 0.0
    %737 = vmatprep.subr.mxu0 0.0
    %738 = vmatpush1.msra.mxu0 0.0
    %739 = vmatprep.subr.mxu0 0.0
    %740 = vmatpush1.msra.mxu0 0.0
    %741 = vmatprep.subr.mxu0 0.0
    %742 = vmatpush1.msra.mxu0 0.0
    %743 = vmatprep.subr.mxu0 0.0
    %744 = vmatpush1.msra.mxu0 0.0
    %745 = vmatprep.subr.mxu0 0.0
    %746 = vmatpush1.msra.mxu0 0.0
    %747 = vmatprep.subr.mxu0 0.0
    %748 = vmatpush1.msra.mxu0 0.0
    %749 = vmatprep.subr.mxu0 0.0
    %750 = vmatpush1.msra.mxu0 0.0
    %751 = vmatprep.subr.mxu0 0.0
    %752 = vmatpush1.msra.mxu0 0.0
    %753 = vmatprep.subr.mxu0 0.0
    %754 = vmatpush1.msra.mxu0 0.0
    %755 = vmatprep.subr.mxu0 0.0
    %756 = vmatpush1.msra.mxu0 0.0
    %757 = vmatprep.subr.mxu0 0.0
    %758 = vmatpush1.msra.mxu0 0.0
    %759 = vmatprep.subr.mxu0 0.0
    %760 = vmatpush1.msra.mxu0 0.0
    %761 = vmatprep.subr.mxu0 0.0
    %762 = vmatpush1.msra.mxu0 0.0
    %763 = vmatprep.subr.mxu0 0.0
    %764 = vmatpush1.msra.mxu0 0.0
    %765 = vmatprep.subr.mxu0 0.0
    %766 = vmatpush1.msra.mxu0 0.0
    %767 = vmatprep.subr.mxu0 0.0
    %768 = vmatpush1.msra.mxu0 0.0
    %769 = vmatprep.subr.mxu0 0.0
    %770 = vmatpush1.msra.mxu0 0.0
    %771 = vmatprep.subr.mxu0 0.0
    %772 = vmatpush1.msra.mxu0 0.0
    %773 = vmatprep.subr.mxu0 0.0
    %774 = vmatpush1.msra.mxu0 0.0
    %775 = vmatprep.subr.mxu0 0.0
    %776 = vmatpush1.msra.mxu0 0.0
    %777 = vmatprep.subr.mxu0 0.0
    %778 = vmatpush1.msra.mxu0 0.0
    %779 = vmatprep.subr.mxu0 0.0
    %780 = vmatpush1.msra.mxu0 0.0
    %781 = vmatprep.subr.mxu0 0.0
    %782 = vmatpush1.msra.mxu0 0.0
    %783 = vmatprep.mubr.f32.mxu0 0.0
    %v784 = vand.u32 %v707, 4294901760
    %v785 = vsub.f32 %v707, %v784
    %v786 = vand.u32 %v785, 4294901760
    %v787 = vsub.f32 %v785, %v786
    %v788 = vand.u32 %v787, 4294901760
    %789 = vmatmul.mubr.f32.gmra.mrb[0].mxu0 %v788
    %v790 = vpop.f32.mrb[0].mxu0
    %v791 = vadd.f32 %v704, %v790
    %v792 = vpop.f32.mrb[0].mxu0
    %793 = vmatprep.mubr.f32.mxu0 0.0
    %v794 = vand.u32 %v710, 4294901760
    %v795 = vsub.f32 %v710, %v794
    %v796 = vand.u32 %v795, 4294901760
    %v797 = vsub.f32 %v795, %v796
    %v798 = vand.u32 %v797, 4294901760
    %799 = vmatmul.mubr.f32.gmra.mrb[0].mxu0 %v798
    %v800 = vpop.f32.mrb[0].mxu0
    %v801 = vadd.f32 %v705, %v800
    %v802 = vpop.f32.mrb[0].mxu0
    %803 = vdwg.mxu0
    %804 = vmatprep.subr.mxu0 0.0
    %v805 = vand.u32 %v688, 4294901760
    %v806 = vsub.f32 %v688, %v805
    %v807 = vand.u32 %v806, 4294901760
    %v808 = vsub.f32 %v806, %v807
    %v809 = vand.u32 %v808, 4294901760
    %810 = vmatpush1.msra.mxu0 %v809
    %811 = vmatprep.subr.mxu0 0.0
    %v812 = vand.u32 %v689, 4294901760
    %v813 = vsub.f32 %v689, %v812
    %v814 = vand.u32 %v813, 4294901760
    %v815 = vsub.f32 %v813, %v814
    %v816 = vand.u32 %v815, 4294901760
    %817 = vmatpush1.msra.mxu0 %v816
    %818 = vmatprep.subr.mxu0 0.0
    %v819 = vand.u32 %v714, 4294901760
    %v820 = vsub.f32 %v714, %v819
    %v821 = vand.u32 %v820, 4294901760
    %v822 = vsub.f32 %v820, %v821
    %v823 = vand.u32 %v822, 4294901760
    %824 = vmatpush1.msra.mxu0 %v823
    %825 = vmatprep.subr.mxu0 0.0
    %826 = vmatpush1.msra.mxu0 0.0
    %827 = vmatprep.subr.mxu0 0.0
    %828 = vmatpush1.msra.mxu0 0.0
    %829 = vmatprep.subr.mxu0 0.0
    %830 = vmatpush1.msra.mxu0 0.0
    %831 = vmatprep.subr.mxu0 0.0
    %832 = vmatpush1.msra.mxu0 0.0
    %833 = vmatprep.subr.mxu0 0.0
    %834 = vmatpush1.msra.mxu0 0.0
    %835 = vmatprep.subr.mxu0 0.0
    %836 = vmatpush1.msra.mxu0 0.0
    %837 = vmatprep.subr.mxu0 0.0
    %838 = vmatpush1.msra.mxu0 0.0
    %839 = vmatprep.subr.mxu0 0.0
    %840 = vmatpush1.msra.mxu0 0.0
    %841 = vmatprep.subr.mxu0 0.0
    %842 = vmatpush1.msra.mxu0 0.0
    %843 = vmatprep.subr.mxu0 0.0
    %844 = vmatpush1.msra.mxu0 0.0
    %845 = vmatprep.subr.mxu0 0.0
    %846 = vmatpush1.msra.mxu0 0.0
    %847 = vmatprep.subr.mxu0 0.0
    %848 = vmatpush1.msra.mxu0 0.0
    %849 = vmatprep.subr.mxu0 0.0
    %850 = vmatpush1.msra.mxu0 0.0
    %851 = vmatprep.subr.mxu0 0.0
    %852 = vmatpush1.msra.mxu0 0.0
    %853 = vmatprep.subr.mxu0 0.0
    %854 = vmatpush1.msra.mxu0 0.0
    %855 = vmatprep.subr.mxu0 0.0
    %856 = vmatpush1.msra.mxu0 0.0
    %857 = vmatprep.subr.mxu0 0.0
    %858 = vmatpush1.msra.mxu0 0.0
    %859 = vmatprep.subr.mxu0 0.0
    %860 = vmatpush1.msra.mxu0 0.0
    %861 = vmatprep.subr.mxu0 0.0
    %862 = vmatpush1.msra.mxu0 0.0
    %863 = vmatprep.subr.mxu0 0.0
    %864 = vmatpush1.msra.mxu0 0.0
    %865 = vmatprep.subr.mxu0 0.0
    %866 = vmatpush1.msra.mxu0 0.0
    %867 = vmatprep.subr.mxu0 0.0
    %868 = vmatpush1.msra.mxu0 0.0
    %869 = vmatprep.subr.mxu0 0.0
    %870 = vmatpush1.msra.mxu0 0.0
    %871 = vmatprep.subr.mxu0 0.0
    %872 = vmatpush1.msra.mxu0 0.0
    %873 = vmatprep.subr.mxu0 0.0
    %874 = vmatpush1.msra.mxu0 0.0
    %875 = vmatprep.subr.mxu0 0.0
    %876 = vmatpush1.msra.mxu0 0.0
    %877 = vmatprep.subr.mxu0 0.0
    %878 = vmatpush1.msra.mxu0 0.0
    %879 = vmatprep.subr.mxu0 0.0
    %880 = vmatpush1.msra.mxu0 0.0
    %881 = vmatprep.subr.mxu0 0.0
    %882 = vmatpush1.msra.mxu0 0.0
    %883 = vmatprep.mubr.f32.mxu0 0.0
    %v884 = vand.u32 %v707, 4294901760
    %885 = vmatmul.mubr.f32.gmra.mrb[0].mxu0 %v884
    %v886 = vpop.f32.mrb[0].mxu0
    %v887 = vadd.f32 %v791, %v886
    %v888 = vpop.f32.mrb[0].mxu0
    %889 = vmatprep.mubr.f32.mxu0 0.0
    %v890 = vand.u32 %v710, 4294901760
    %891 = vmatmul.mubr.f32.gmra.mrb[0].mxu0 %v890
    %v892 = vpop.f32.mrb[0].mxu0
    %v893 = vadd.f32 %v801, %v892
    %v894 = vpop.f32.mrb[0].mxu0
    %895 = vdwg.mxu0
    %896 = vmatprep.subr.mxu0 0.0
    %v897 = vand.u32 %v688, 4294901760
    %v898 = vsub.f32 %v688, %v897
    %899 = vmatpush1.msra.mxu0 %v898
    %900 = vmatprep.subr.mxu0 0.0
    %v901 = vand.u32 %v689, 4294901760
    %v902 = vsub.f32 %v689, %v901
    %903 = vmatpush1.msra.mxu0 %v902
    %904 = vmatprep.subr.mxu0 0.0
    %v905 = vand.u32 %v714, 4294901760
    %v906 = vsub.f32 %v714, %v905
    %907 = vmatpush1.msra.mxu0 %v906
    %908 = vmatprep.subr.mxu0 0.0
    %909 = vmatpush1.msra.mxu0 0.0
    %910 = vmatprep.subr.mxu0 0.0
    %911 = vmatpush1.msra.mxu0 0.0
    %912 = vmatprep.subr.mxu0 0.0
    %913 = vmatpush1.msra.mxu0 0.0
    %914 = vmatprep.subr.mxu0 0.0
    %915 = vmatpush1.msra.mxu0 0.0
    %916 = vmatprep.subr.mxu0 0.0
    %917 = vmatpush1.msra.mxu0 0.0
    %918 = vmatprep.subr.mxu0 0.0
    %919 = vmatpush1.msra.mxu0 0.0
    %920 = vmatprep.subr.mxu0 0.0
    %921 = vmatpush1.msra.mxu0 0.0
    %922 = vmatprep.subr.mxu0 0.0
    %923 = vmatpush1.msra.mxu0 0.0
    %924 = vmatprep.subr.mxu0 0.0
    %925 = vmatpush1.msra.mxu0 0.0
    %926 = vmatprep.subr.mxu0 0.0
    %927 = vmatpush1.msra.mxu0 0.0
    %928 = vmatprep.subr.mxu0 0.0
    %929 = vmatpush1.msra.mxu0 0.0
    %930 = vmatprep.subr.mxu0 0.0
    %931 = vmatpush1.msra.mxu0 0.0
    %932 = vmatprep.subr.mxu0 0.0
    %933 = vmatpush1.msra.mxu0 0.0
    %934 = vmatprep.subr.mxu0 0.0
    %935 = vmatpush1.msra.mxu0 0.0
    %936 = vmatprep.subr.mxu0 0.0
    %937 = vmatpush1.msra.mxu0 0.0
    %938 = vmatprep.subr.mxu0 0.0
    %939 = vmatpush1.msra.mxu0 0.0
    %940 = vmatprep.subr.mxu0 0.0
    %941 = vmatpush1.msra.mxu0 0.0
    %942 = vmatprep.subr.mxu0 0.0
    %943 = vmatpush1.msra.mxu0 0.0
    %944 = vmatprep.subr.mxu0 0.0
    %945 = vmatpush1.msra.mxu0 0.0
    %946 = vmatprep.subr.mxu0 0.0
    %947 = vmatpush1.msra.mxu0 0.0
    %948 = vmatprep.subr.mxu0 0.0
    %949 = vmatpush1.msra.mxu0 0.0
    %950 = vmatprep.subr.mxu0 0.0
    %951 = vmatpush1.msra.mxu0 0.0
    %952 = vmatprep.subr.mxu0 0.0
    %953 = vmatpush1.msra.mxu0 0.0
    %954 = vmatprep.subr.mxu0 0.0
    %955 = vmatpush1.msra.mxu0 0.0
    %956 = vmatprep.subr.mxu0 0.0
    %957 = vmatpush1.msra.mxu0 0.0
    %958 = vmatprep.subr.mxu0 0.0
    %959 = vmatpush1.msra.mxu0 0.0
    %960 = vmatprep.subr.mxu0 0.0
    %961 = vmatpush1.msra.mxu0 0.0
    %962 = vmatprep.subr.mxu0 0.0
    %963 = vmatpush1.msra.mxu0 0.0
    %964 = vmatprep.subr.mxu0 0.0
    %965 = vmatpush1.msra.mxu0 0.0
    %966 = vmatprep.mubr.f32.mxu0 0.0
    %v967 = vand.u32 %v707, 4294901760
    %v968 = vsub.f32 %v707, %v967
    %969 = vmatmul.mubr.f32.gmra.mrb[0].mxu0 %v968
    %v970 = vpop.f32.mrb[0].mxu0
    %v971 = vadd.f32 %v887, %v970
    %v972 = vpop.f32.mrb[0].mxu0
    %973 = vmatprep.mubr.f32.mxu0 0.0
    %v974 = vand.u32 %v710, 4294901760
    %v975 = vsub.f32 %v710, %v974
    %976 = vmatmul.mubr.f32.gmra.mrb[0].mxu0 %v975
    %v977 = vpop.f32.mrb[0].mxu0
    %v978 = vadd.f32 %v893, %v977
    %v979 = vpop.f32.mrb[0].mxu0
    %980 = vdwg.mxu0
    %981 = vmatprep.subr.mxu0 0.0
    %v982 = vand.u32 %v688, 4294901760
    %983 = vmatpush1.msra.mxu0 %v982
    %984 = vmatprep.subr.mxu0 0.0
    %v985 = vand.u32 %v689, 4294901760
    %986 = vmatpush1.msra.mxu0 %v985
    %987 = vmatprep.subr.mxu0 0.0
    %v988 = vand.u32 %v714, 4294901760
    %989 = vmatpush1.msra.mxu0 %v988
    %990 = vmatprep.subr.mxu0 0.0
    %991 = vmatpush1.msra.mxu0 0.0
    %992 = vmatprep.subr.mxu0 0.0
    %993 = vmatpush1.msra.mxu0 0.0
    %994 = vmatprep.subr.mxu0 0.0
    %995 = vmatpush1.msra.mxu0 0.0
    %996 = vmatprep.subr.mxu0 0.0
    %997 = vmatpush1.msra.mxu0 0.0
    %998 = vmatprep.subr.mxu0 0.0
    %999 = vmatpush1.msra.mxu0 0.0
    %1000 = vmatprep.subr.mxu0 0.0
    %1001 = vmatpush1.msra.mxu0 0.0
    %1002 = vmatprep.subr.mxu0 0.0
    %1003 = vmatpush1.msra.mxu0 0.0
    %1004 = vmatprep.subr.mxu0 0.0
    %1005 = vmatpush1.msra.mxu0 0.0
    %1006 = vmatprep.subr.mxu0 0.0
    %1007 = vmatpush1.msra.mxu0 0.0
    %1008 = vmatprep.subr.mxu0 0.0
    %1009 = vmatpush1.msra.mxu0 0.0
    %1010 = vmatprep.subr.mxu0 0.0
    %1011 = vmatpush1.msra.mxu0 0.0
    %1012 = vmatprep.subr.mxu0 0.0
    %1013 = vmatpush1.msra.mxu0 0.0
    %1014 = vmatprep.subr.mxu0 0.0
    %1015 = vmatpush1.msra.mxu0 0.0
    %1016 = vmatprep.subr.mxu0 0.0
    %1017 = vmatpush1.msra.mxu0 0.0
    %1018 = vmatprep.subr.mxu0 0.0
    %1019 = vmatpush1.msra.mxu0 0.0
    %1020 = vmatprep.subr.mxu0 0.0
    %1021 = vmatpush1.msra.mxu0 0.0
    %1022 = vmatprep.subr.mxu0 0.0
    %1023 = vmatpush1.msra.mxu0 0.0
    %1024 = vmatprep.subr.mxu0 0.0
    %1025 = vmatpush1.msra.mxu0 0.0
    %1026 = vmatprep.subr.mxu0 0.0
    %1027 = vmatpush1.msra.mxu0 0.0
    %1028 = vmatprep.subr.mxu0 0.0
    %1029 = vmatpush1.msra.mxu0 0.0
    %1030 = vmatprep.subr.mxu0 0.0
    %1031 = vmatpush1.msra.mxu0 0.0
    %1032 = vmatprep.subr.mxu0 0.0
    %1033 = vmatpush1.msra.mxu0 0.0
    %1034 = vmatprep.subr.mxu0 0.0
    %1035 = vmatpush1.msra.mxu0 0.0
    %1036 = vmatprep.subr.mxu0 0.0
    %1037 = vmatpush1.msra.mxu0 0.0
    %1038 = vmatprep.subr.mxu0 0.0
    %1039 = vmatpush1.msra.mxu0 0.0
    %1040 = vmatprep.subr.mxu0 0.0
    %1041 = vmatpush1.msra.mxu0 0.0
    %1042 = vmatprep.subr.mxu0 0.0
    %1043 = vmatpush1.msra.mxu0 0.0
    %1044 = vmatprep.subr.mxu0 0.0
    %1045 = vmatpush1.msra.mxu0 0.0
    %1046 = vmatprep.subr.mxu0 0.0
    %1047 = vmatpush1.msra.mxu0 0.0
    %1048 = vmatprep.mubr.f32.mxu0 0.0
    %v1049 = vand.u32 %v707, 4294901760
    %v1050 = vsub.f32 %v707, %v1049
    %v1051 = vand.u32 %v1050, 4294901760
    %1052 = vmatmul.mubr.f32.gmra.mrb[0].mxu0 %v1051
    %v1053 = vpop.f32.mrb[0].mxu0
    %v1054 = vadd.f32 %v971, %v1053
    %v1055 = vpop.f32.mrb[0].mxu0
    %1056 = vmatprep.mubr.f32.mxu0 0.0
    %v1057 = vand.u32 %v710, 4294901760
    %v1058 = vsub.f32 %v710, %v1057
    %v1059 = vand.u32 %v1058, 4294901760
    %1060 = vmatmul.mubr.f32.gmra.mrb[0].mxu0 %v1059
    %v1061 = vpop.f32.mrb[0].mxu0
    %v1062 = vadd.f32 %v978, %v1061
    %v1063 = vpop.f32.mrb[0].mxu0
    %1064 = vdwg.mxu0
    %1065 = vmatprep.subr.mxu0 0.0
    %v1066 = vand.u32 %v688, 4294901760
    %v1067 = vsub.f32 %v688, %v1066
    %v1068 = vand.u32 %v1067, 4294901760
    %1069 = vmatpush1.msra.mxu0 %v1068
    %1070 = vmatprep.subr.mxu0 0.0
    %v1071 = vand.u32 %v689, 4294901760
    %v1072 = vsub.f32 %v689, %v1071
    %v1073 = vand.u32 %v1072, 4294901760
    %1074 = vmatpush1.msra.mxu0 %v1073
    %1075 = vmatprep.subr.mxu0 0.0
    %v1076 = vand.u32 %v714, 4294901760
    %v1077 = vsub.f32 %v714, %v1076
    %v1078 = vand.u32 %v1077, 4294901760
    %1079 = vmatpush1.msra.mxu0 %v1078
    %1080 = vmatprep.subr.mxu0 0.0
    %1081 = vmatpush1.msra.mxu0 0.0
    %1082 = vmatprep.subr.mxu0 0.0
    %1083 = vmatpush1.msra.mxu0 0.0
    %1084 = vmatprep.subr.mxu0 0.0
    %1085 = vmatpush1.msra.mxu0 0.0
    %1086 = vmatprep.subr.mxu0 0.0
    %1087 = vmatpush1.msra.mxu0 0.0
    %1088 = vmatprep.subr.mxu0 0.0
    %1089 = vmatpush1.msra.mxu0 0.0
    %1090 = vmatprep.subr.mxu0 0.0
    %1091 = vmatpush1.msra.mxu0 0.0
    %1092 = vmatprep.subr.mxu0 0.0
    %1093 = vmatpush1.msra.mxu0 0.0
    %1094 = vmatprep.subr.mxu0 0.0
    %1095 = vmatpush1.msra.mxu0 0.0
    %1096 = vmatprep.subr.mxu0 0.0
    %1097 = vmatpush1.msra.mxu0 0.0
    %1098 = vmatprep.subr.mxu0 0.0
    %1099 = vmatpush1.msra.mxu0 0.0
    %1100 = vmatprep.subr.mxu0 0.0
    %1101 = vmatpush1.msra.mxu0 0.0
    %1102 = vmatprep.subr.mxu0 0.0
    %1103 = vmatpush1.msra.mxu0 0.0
    %1104 = vmatprep.subr.mxu0 0.0
    %1105 = vmatpush1.msra.mxu0 0.0
    %1106 = vmatprep.subr.mxu0 0.0
    %1107 = vmatpush1.msra.mxu0 0.0
    %1108 = vmatprep.subr.mxu0 0.0
    %1109 = vmatpush1.msra.mxu0 0.0
    %1110 = vmatprep.subr.mxu0 0.0
    %1111 = vmatpush1.msra.mxu0 0.0
    %1112 = vmatprep.subr.mxu0 0.0
    %1113 = vmatpush1.msra.mxu0 0.0
    %1114 = vmatprep.subr.mxu0 0.0
    %1115 = vmatpush1.msra.mxu0 0.0
    %1116 = vmatprep.subr.mxu0 0.0
    %1117 = vmatpush1.msra.mxu0 0.0
    %1118 = vmatprep.subr.mxu0 0.0
    %1119 = vmatpush1.msra.mxu0 0.0
    %1120 = vmatprep.subr.mxu0 0.0
    %1121 = vmatpush1.msra.mxu0 0.0
    %1122 = vmatprep.subr.mxu0 0.0
    %1123 = vmatpush1.msra.mxu0 0.0
    %1124 = vmatprep.subr.mxu0 0.0
    %1125 = vmatpush1.msra.mxu0 0.0
    %1126 = vmatprep.subr.mxu0 0.0
    %1127 = vmatpush1.msra.mxu0 0.0
    %1128 = vmatprep.subr.mxu0 0.0
    %1129 = vmatpush1.msra.mxu0 0.0
    %1130 = vmatprep.subr.mxu0 0.0
    %1131 = vmatpush1.msra.mxu0 0.0
    %1132 = vmatprep.subr.mxu0 0.0
    %1133 = vmatpush1.msra.mxu0 0.0
    %1134 = vmatprep.subr.mxu0 0.0
    %1135 = vmatpush1.msra.mxu0 0.0
    %1136 = vmatprep.subr.mxu0 0.0
    %1137 = vmatpush1.msra.mxu0 0.0
    %1138 = vmatprep.mubr.f32.mxu0 0.0
    %v1139 = vand.u32 %v707, 4294901760
    %1140 = vmatmul.mubr.f32.gmra.mrb[0].mxu0 %v1139
    %v1141 = vpop.f32.mrb[0].mxu0
    %v1142 = vadd.f32 %v1054, %v1141
    %v1143 = vpop.f32.mrb[0].mxu0
    %1144 = vmatprep.mubr.f32.mxu0 0.0
    %v1145 = vand.u32 %v710, 4294901760
    %1146 = vmatmul.mubr.f32.gmra.mrb[0].mxu0 %v1145
    %v1147 = vpop.f32.mrb[0].mxu0
    %v1148 = vadd.f32 %v1062, %v1147
    %v1149 = vpop.f32.mrb[0].mxu0
    %1150 = vdwg.mxu0
    %1151 = vmatprep.subr.mxu0 0.0
    %v1152 = vand.u32 %v688, 4294901760
    %1153 = vmatpush1.msra.mxu0 %v1152
    %1154 = vmatprep.subr.mxu0 0.0
    %v1155 = vand.u32 %v689, 4294901760
    %1156 = vmatpush1.msra.mxu0 %v1155
    %1157 = vmatprep.subr.mxu0 0.0
    %v1158 = vand.u32 %v714, 4294901760
    %1159 = vmatpush1.msra.mxu0 %v1158
    %1160 = vmatprep.subr.mxu0 0.0
    %1161 = vmatpush1.msra.mxu0 0.0
    %1162 = vmatprep.subr.mxu0 0.0
    %1163 = vmatpush1.msra.mxu0 0.0
    %1164 = vmatprep.subr.mxu0 0.0
    %1165 = vmatpush1.msra.mxu0 0.0
    %1166 = vmatprep.subr.mxu0 0.0
    %1167 = vmatpush1.msra.mxu0 0.0
    %1168 = vmatprep.subr.mxu0 0.0
    %1169 = vmatpush1.msra.mxu0 0.0
    %1170 = vmatprep.subr.mxu0 0.0
    %1171 = vmatpush1.msra.mxu0 0.0
    %1172 = vmatprep.subr.mxu0 0.0
    %1173 = vmatpush1.msra.mxu0 0.0
    %1174 = vmatprep.subr.mxu0 0.0
    %1175 = vmatpush1.msra.mxu0 0.0
    %1176 = vmatprep.subr.mxu0 0.0
    %1177 = vmatpush1.msra.mxu0 0.0
    %1178 = vmatprep.subr.mxu0 0.0
    %1179 = vmatpush1.msra.mxu0 0.0
    %1180 = vmatprep.subr.mxu0 0.0
    %1181 = vmatpush1.msra.mxu0 0.0
    %1182 = vmatprep.subr.mxu0 0.0
    %1183 = vmatpush1.msra.mxu0 0.0
    %1184 = vmatprep.subr.mxu0 0.0
    %1185 = vmatpush1.msra.mxu0 0.0
    %1186 = vmatprep.subr.mxu0 0.0
    %1187 = vmatpush1.msra.mxu0 0.0
    %1188 = vmatprep.subr.mxu0 0.0
    %1189 = vmatpush1.msra.mxu0 0.0
    %1190 = vmatprep.subr.mxu0 0.0
    %1191 = vmatpush1.msra.mxu0 0.0
    %1192 = vmatprep.subr.mxu0 0.0
    %1193 = vmatpush1.msra.mxu0 0.0
    %1194 = vmatprep.subr.mxu0 0.0
    %1195 = vmatpush1.msra.mxu0 0.0
    %1196 = vmatprep.subr.mxu0 0.0
    %1197 = vmatpush1.msra.mxu0 0.0
    %1198 = vmatprep.subr.mxu0 0.0
    %1199 = vmatpush1.msra.mxu0 0.0
    %1200 = vmatprep.subr.mxu0 0.0
    %1201 = vmatpush1.msra.mxu0 0.0
    %1202 = vmatprep.subr.mxu0 0.0
    %1203 = vmatpush1.msra.mxu0 0.0
    %1204 = vmatprep.subr.mxu0 0.0
    %1205 = vmatpush1.msra.mxu0 0.0
    %1206 = vmatprep.subr.mxu0 0.0
    %1207 = vmatpush1.msra.mxu0 0.0
    %1208 = vmatprep.subr.mxu0 0.0
    %1209 = vmatpush1.msra.mxu0 0.0
    %1210 = vmatprep.subr.mxu0 0.0
    %1211 = vmatpush1.msra.mxu0 0.0
    %1212 = vmatprep.subr.mxu0 0.0
    %1213 = vmatpush1.msra.mxu0 0.0
    %1214 = vmatprep.subr.mxu0 0.0
    %1215 = vmatpush1.msra.mxu0 0.0
    %1216 = vmatprep.subr.mxu0 0.0
    %1217 = vmatpush1.msra.mxu0 0.0
    %1218 = vmatprep.mubr.f32.mxu0 0.0
    %v1219 = vand.u32 %v707, 4294901760
    %1220 = vmatmul.mubr.f32.gmra.mrb[0].mxu0 %v1219
    %v1221 = vpop.f32.mrb[0].mxu0
    %v1222 = vadd.f32 %v1142, %v1221
    %v1223 = vpop.f32.mrb[0].mxu0
    %1224 = vmatprep.mubr.f32.mxu0 0.0
    %v1225 = vand.u32 %v710, 4294901760
    %1226 = vmatmul.mubr.f32.gmra.mrb[0].mxu0 %v1225
    %v1227 = vpop.f32.mrb[0].mxu0
    %v1228 = vadd.f32 %v1148, %v1227
    %v1229 = vpop.f32.mrb[0].mxu0
    %1230 = vdwg.mxu0
    %v1231 = vmul.f32 %v685, %v605
    %v1232 = vmul.f32 %v687, %v606
    %v1233 = vsel %vm661, %v1231, 0.0
    %1234 = vadd.xlane.f32.xlu0 %v1233
    %v1235 = vpop.xlane.xlu0 %1234
    %v1236 = vsel %vm661, %v1232, 0.0
    %1237 = vadd.xlane.f32.xlu0 %v1236
    %v1238 = vpop.xlane.xlu0 %1237
    %v1239 = vld [vmem:[%s5 + $0x1] sm:$0x1]
    %v1240 = vlaneseq
    %v1241 = vshrl.u32 %v1240, 7
    %v1242 = vsub.s32 0, %v1241
    %v1243 = vrot.slane %v1239, %v1242
    %v1244 = vmul.f32 %v1235, %v1243
    %v1245 = vmul.f32 %v1238, %v1243
    %v1246 = vadd.f32 %v1222, %v1244
    %v1247 = vadd.f32 %v1228, %v1245
    %v1248 = vmul.f32 %v685, %v616
    %v1249 = vmul.f32 %v687, %v617
    %v1250 = vsel %vm661, %v1248, 0.0
    %1251 = vadd.xlane.f32.xlu0 %v1250
    %v1252 = vpop.xlane.xlu0 %1251
    %v1253 = vsel %vm661, %v1249, 0.0
    %1254 = vadd.xlane.f32.xlu0 %v1253
    %v1255 = vpop.xlane.xlu0 %1254
    %v1256 = vld [vmem:[%s5 + $0x2] sm:$0x1]
    %v1257 = vlaneseq
    %v1258 = vshrl.u32 %v1257, 7
    %v1259 = vsub.s32 0, %v1258
    %v1260 = vrot.slane %v1256, %v1259
    %v1261 = vmul.f32 %v1252, %v1260
    %v1262 = vmul.f32 %v1255, %v1260
    %v1263 = vadd.f32 %v1246, %v1261
    %v1264 = vadd.f32 %v1247, %v1262
    %v1265 = vmul.f32 %v685, %v627
    %v1266 = vmul.f32 %v687, %v628
    %v1267 = vsel %vm661, %v1265, 0.0
    %1268 = vadd.xlane.f32.xlu0 %v1267
    %v1269 = vpop.xlane.xlu0 %1268
    %v1270 = vsel %vm661, %v1266, 0.0
    %1271 = vadd.xlane.f32.xlu0 %v1270
    %v1272 = vpop.xlane.xlu0 %1271
    %v1273 = vld [vmem:[%s5 + $0x3] sm:$0x1]
    %v1274 = vlaneseq
    %v1275 = vshrl.u32 %v1274, 7
    %v1276 = vsub.s32 0, %v1275
    %v1277 = vrot.slane %v1273, %v1276
    %v1278 = vmul.f32 %v1269, %v1277
    %v1279 = vmul.f32 %v1272, %v1277
    %v1280 = vadd.f32 %v1263, %v1278
    %v1281 = vadd.f32 %v1264, %v1279
    %v1282 = vadd.f32 %v1280, %v46
    %v1283 = vadd.f32 %v1281, %v47
    %vm1284 = vcmp.gt.f32.partialorder %v1282, 0.0
    %vm1285 = vcmp.gt.f32.partialorder %v1283, 0.0
    %v1286 = vmin.f32 %v1282, 0.0
    %v1287 = vmin.f32 %v1283, 0.0
    %v1288 = vmul.f32 %v1286, 1.442695
    %v1289 = vpow.pop %v1288
    %v1290 = vmul.f32 %v1287, 1.442695
    %v1291 = vpow.pop %v1290
    %v1292 = vsub.f32 %v1289, 1.0
    %v1293 = vsub.f32 %v1291, 1.0
    %v1294 = vsel %vm1284, %v1282, %v1292
    %v1295 = vsel %vm1285, %v1283, %v1293
    %1296 = vst.msk [vmem:[%s8] sm:$0xff] %vm52, %v1294
    %1297 = vst.msk [vmem:[%s8 + $0x8] sm:$0xff] %vm52, %v1295
    // Predicated region
    $region38: #{model_forward.11} parent=1 // pred_check
      _
    $region39: #{model_forward.11} parent=1 // pred_check_branch
      %1299 = sbr.rel (0) target = $region41
    $region40: #{model_forward.11} parent=1 // pred_region
      _
    $region41: #{model_forward.11} parent=1 // pred_fallthru
      _
    // Predicated region
    $region42: #{model_forward.11} parent=1 // pred_check
      _
    $region43: #{model_forward.11} parent=1 // pred_check_branch
      %1301 = sbr.rel (0) target = $region45
    $region44: #{model_forward.11} parent=1 // pred_region
      _
    $region45: #{model_forward.11} parent=1 // pred_fallthru
      _
    %1302 = vsyncpa [#allocation3], 1

// kernel: model_forward.10
$region0: #{model_forward.10}
  #allocation0 [shape = 'u32[]', space=smem, size = 0x4, offset = 0x4, fixed_abs, tag = 'smem constant byte address 0x4 - core index']
  #allocation1 [shape = 'u32[144,128]{1,0:T(1,128)}', space=vmem, size = 0x12000, scoped, tag = 'internal scratch']
  %s0 = inlined_call_operand.vmem [shape: f32[4], index: 0, kind: input, shape index: {}]
  %s1 = inlined_call_operand.vmem [shape: f32[12,32], index: 1, kind: input, shape index: {}]
  %s2 = inlined_call_operand.vmem [shape: f32[1,12], index: 2, kind: input, shape index: {}]
  %s3 = inlined_call_operand.vmem [shape: f32[20,32], index: 3, kind: input, shape index: {}]
  %s4 = inlined_call_operand.vmem [shape: f32[32,1], index: 4, kind: input, shape index: {}]
  %s5 = inlined_call_operand.vmem [shape: f32[4,32], index: 5, kind: input, shape index: {}]
  %s6 = inlined_call_operand.vmem [shape: bf16[4,20,12], index: 6, kind: input, shape index: {}]
  %s7 = inlined_call_operand.vmem [shape: bf16[20,12], index: 7, kind: input, shape index: {}]
  %s8 = inlined_call_operand.vmem [shape: f32[20,32], index: 8, kind: output, shape index: {}]
  %s9 = sld [smem:[#allocation0]]
  $region179: #{model_forward.10} parent=0
    _
  %s11 = ssub.s32 1, %s9
  %s12 = scalar_select 0, %s11, %s9
  $region1: #{model_forward.10} parent=0
    #allocation2 [shape = 'u8[512]{0}', space=smem, size = 0x200, scoped, tag = 'input window, operand 0, single buffered']
    #allocation3 [shape = 's32[2]{0}', space=sflag, size = 0x8, scoped, tag = 'scoped memory for model_forward.10']
    #allocation4 [shape = 'u8[32768]{0}', space=vmem, size = 0x8000, scoped, tag = 'input window, operand 6']
    #allocation5 [shape = 'u8[16384]{0}', space=vmem, size = 0x4000, scoped, tag = 'output window, operand 0']
    %13 = vsyncpa [#allocation3], 0
    loop: start=0, step=1, limit=4
    $region2: #{model_forward.10} parent=1 // loop_pre_header
      _
    $region3: #{model_forward.10} parent=1 // loop_header
      %s15 = sphi 0, %s19
      %p16 = scmp.ge.s32.totalorder %s15, 4
      %s23 = sphi 0, %s23
      %s25 = sphi 0, %s23
      %s26 = sphi 0, %s25
      %s40 = sphi 0, %s26
      %s44 = sphi 0, %s44
      %s46 = sphi 0, %s44
      %s47 = sphi 0, %s46
      %s61 = sphi 0, %s47
      %s65 = sphi 0, %s65
      %s67 = sphi 0, %s65
      %s68 = sphi 0, %s67
      %s82 = sphi 0, %s68
      %s88 = sphi 0, %s90
      %s91 = sphi 0, %s88
      %s92 = sphi 0, %s91
      %s108 = sphi 0, %s92
      %s112 = sphi 0, %s112
      %s114 = sphi 0, %s112
      %s115 = sphi 0, %s114
      %s129 = sphi 0, %s115
      %s133 = sphi 0, %s133
      %s135 = sphi 0, %s133
      %s136 = sphi 0, %s135
      %s150 = sphi 0, %s136
      %s156 = sphi 0, %s158
      %s159 = sphi 0, %s156
      %s160 = sphi 0, %s159
      %s176 = sphi 0, %s160
      %s182 = sphi 0, %s184
      %s185 = sphi 0, %s182
      %s186 = sphi 0, %s185
      %s202 = sphi 0, %s186
      %s208 = sphi 0, %s210
      %s211 = sphi 0, %s208
      %s212 = sphi 0, %s211
      %s228 = sphi 0, %s212
    $region4: #{model_forward.10} parent=1 // loop_header_branch
      %18 = sbr.rel (%p16) target = $region8
    $region5: #{model_forward.10} parent=1 // loop_body
      %s20 = ssub.s32 %s15, 1
      %s21 = ssub.s32 %s15, 2
      %s22 = sadd.s32 %s15, 1
      %s24 = sadd.s32 %s23, 1
      %p27 = scmp.eq.s32.totalorder %s15, 1
      %p28 = scmp.ne.s32.totalorder %s23, %s25
      %p29 = scmp.eq.s32.totalorder %s15, 0
      %p30 = por %p28, %p29
      %p31 = scmp.ne.s32.totalorder %s23, %s25
      %p32 = scmp.eq.s32.totalorder %s20, 1
      %p33 = por %p31, %p32
      %p34 = scmp.ne.s32.totalorder %s25, %s26
      %p35 = scmp.eq.s32.totalorder %s20, 0
      %p36 = por %p34, %p35
      %p37 = scmp.ne.s32.totalorder %s25, %s26
      %p38 = scmp.eq.s32.totalorder %s21, 1
      %p39 = por %p37, %p38
      %p41 = scmp.ne.s32.totalorder %s26, %s40
      %p42 = scmp.eq.s32.totalorder %s21, 0
      %p43 = por %p41, %p42
      %s45 = sadd.s32 %s44, 1
      %p48 = scmp.eq.s32.totalorder %s15, 1
      %p49 = scmp.ne.s32.totalorder %s44, %s46
      %p50 = scmp.eq.s32.totalorder %s15, 0
      %p51 = por %p49, %p50
      %p52 = scmp.ne.s32.totalorder %s44, %s46
      %p53 = scmp.eq.s32.totalorder %s20, 1
      %p54 = por %p52, %p53
      %p55 = scmp.ne.s32.totalorder %s46, %s47
      %p56 = scmp.eq.s32.totalorder %s20, 0
      %p57 = por %p55, %p56
      %p58 = scmp.ne.s32.totalorder %s46, %s47
      %p59 = scmp.eq.s32.totalorder %s21, 1
      %p60 = por %p58, %p59
      %p62 = scmp.ne.s32.totalorder %s47, %s61
      %p63 = scmp.eq.s32.totalorder %s21, 0
      %p64 = por %p62, %p63
      %s66 = sadd.s32 %s65, 1
      %p69 = scmp.eq.s32.totalorder %s15, 1
      %p70 = scmp.ne.s32.totalorder %s65, %s67
      %p71 = scmp.eq.s32.totalorder %s15, 0
      %p72 = por %p70, %p71
      %p73 = scmp.ne.s32.totalorder %s65, %s67
      %p74 = scmp.eq.s32.totalorder %s20, 1
      %p75 = por %p73, %p74
      %p76 = scmp.ne.s32.totalorder %s67, %s68
      %p77 = scmp.eq.s32.totalorder %s20, 0
      %p78 = por %p76, %p77
      %p79 = scmp.ne.s32.totalorder %s67, %s68
      %p80 = scmp.eq.s32.totalorder %s21, 1
      %p81 = por %p79, %p80
      %p83 = scmp.ne.s32.totalorder %s68, %s82
      %p84 = scmp.eq.s32.totalorder %s21, 0
      %p85 = por %p83, %p84
      %s86 = ssub.s32 %s15, %s22
      %p87 = scmp.eq.s32.totalorder %s86, 0
      %s89 = sadd.s32 %s88, 1
      %s90 = scalar_select %p87, %s88, %s89
      %p93 = pneg %p87
      %p94 = scmp.eq.s32.totalorder %s15, 1
      %p95 = por %p93, %p94
      %p96 = scmp.ne.s32.totalorder %s88, %s91
      %p97 = scmp.eq.s32.totalorder %s15, 0
      %p98 = por %p96, %p97
      %p99 = scmp.ne.s32.totalorder %s88, %s91
      %p100 = scmp.eq.s32.totalorder %s20, 1
      %p101 = por %p99, %p100
      %p102 = scmp.ne.s32.totalorder %s91, %s92
      %p103 = scmp.eq.s32.totalorder %s20, 0
      %p104 = por %p102, %p103
      %p105 = scmp.ne.s32.totalorder %s91, %s92
      %p106 = scmp.eq.s32.totalorder %s21, 1
      %p107 = por %p105, %p106
      %p109 = scmp.ne.s32.totalorder %s92, %s108
      %p110 = scmp.eq.s32.totalorder %s21, 0
      %p111 = por %p109, %p110
      %s113 = sadd.s32 %s112, 1
      %p116 = scmp.eq.s32.totalorder %s15, 1
      %p117 = scmp.ne.s32.totalorder %s112, %s114
      %p118 = scmp.eq.s32.totalorder %s15, 0
      %p119 = por %p117, %p118
      %p120 = scmp.ne.s32.totalorder %s112, %s114
      %p121 = scmp.eq.s32.totalorder %s20, 1
      %p122 = por %p120, %p121
      %p123 = scmp.ne.s32.totalorder %s114, %s115
      %p124 = scmp.eq.s32.totalorder %s20, 0
      %p125 = por %p123, %p124
      %p126 = scmp.ne.s32.totalorder %s114, %s115
      %p127 = scmp.eq.s32.totalorder %s21, 1
      %p128 = por %p126, %p127
      %p130 = scmp.ne.s32.totalorder %s115, %s129
      %p131 = scmp.eq.s32.totalorder %s21, 0
      %p132 = por %p130, %p131
      %s134 = sadd.s32 %s133, 1
      %p137 = scmp.eq.s32.totalorder %s15, 1
      %p138 = scmp.ne.s32.totalorder %s133, %s135
      %p139 = scmp.eq.s32.totalorder %s15, 0
      %p140 = por %p138, %p139
      %p141 = scmp.ne.s32.totalorder %s133, %s135
      %p142 = scmp.eq.s32.totalorder %s20, 1
      %p143 = por %p141, %p142
      %p144 = scmp.ne.s32.totalorder %s135, %s136
      %p145 = scmp.eq.s32.totalorder %s20, 0
      %p146 = por %p144, %p145
      %p147 = scmp.ne.s32.totalorder %s135, %s136
      %p148 = scmp.eq.s32.totalorder %s21, 1
      %p149 = por %p147, %p148
      %p151 = scmp.ne.s32.totalorder %s136, %s150
      %p152 = scmp.eq.s32.totalorder %s21, 0
      %p153 = por %p151, %p152
      %s154 = ssub.s32 %s15, %s22
      %p155 = scmp.eq.s32.totalorder %s154, 0
      %s157 = sadd.s32 %s156, 1
      %s158 = scalar_select %p155, %s156, %s157
      %p161 = pneg %p155
      %p162 = scmp.eq.s32.totalorder %s15, 1
      %p163 = por %p161, %p162
      %p164 = scmp.ne.s32.totalorder %s156, %s159
      %p165 = scmp.eq.s32.totalorder %s15, 0
      %p166 = por %p164, %p165
      %p167 = scmp.ne.s32.totalorder %s156, %s159
      %p168 = scmp.eq.s32.totalorder %s20, 1
      %p169 = por %p167, %p168
      %p170 = scmp.ne.s32.totalorder %s159, %s160
      %p171 = scmp.eq.s32.totalorder %s20, 0
      %p172 = por %p170, %p171
      %p173 = scmp.ne.s32.totalorder %s159, %s160
      %p174 = scmp.eq.s32.totalorder %s21, 1
      %p175 = por %p173, %p174
      %p177 = scmp.ne.s32.totalorder %s160, %s176
      %p178 = scmp.eq.s32.totalorder %s21, 0
      %p179 = por %p177, %p178
      %s180 = ssub.s32 %s15, %s22
      %p181 = scmp.eq.s32.totalorder %s180, 0
      %s183 = sadd.s32 %s182, 1
      %s184 = scalar_select %p181, %s182, %s183
      %p187 = pneg %p181
      %p188 = scmp.eq.s32.totalorder %s15, 1
      %p189 = por %p187, %p188
      %p190 = scmp.ne.s32.totalorder %s182, %s185
      %p191 = scmp.eq.s32.totalorder %s15, 0
      %p192 = por %p190, %p191
      %p193 = scmp.ne.s32.totalorder %s182, %s185
      %p194 = scmp.eq.s32.totalorder %s20, 1
      %p195 = por %p193, %p194
      %p196 = scmp.ne.s32.totalorder %s185, %s186
      %p197 = scmp.eq.s32.totalorder %s20, 0
      %p198 = por %p196, %p197
      %p199 = scmp.ne.s32.totalorder %s185, %s186
      %p200 = scmp.eq.s32.totalorder %s21, 1
      %p201 = por %p199, %p200
      %p203 = scmp.ne.s32.totalorder %s186, %s202
      %p204 = scmp.eq.s32.totalorder %s21, 0
      %p205 = por %p203, %p204
      %s206 = ssub.s32 %s15, %s22
      %p207 = scmp.eq.s32.totalorder %s206, 0
      %s209 = sadd.s32 %s208, 1
      %s210 = scalar_select %p207, %s208, %s209
      %p213 = pneg %p207
      %p214 = scmp.eq.s32.totalorder %s15, 1
      %p215 = por %p213, %p214
      %p216 = scmp.ne.s32.totalorder %s208, %s211
      %p217 = scmp.eq.s32.totalorder %s15, 0
      %p218 = por %p216, %p217
      %p219 = scmp.ne.s32.totalorder %s208, %s211
      %p220 = scmp.eq.s32.totalorder %s20, 1
      %p221 = por %p219, %p220
      %p222 = scmp.ne.s32.totalorder %s211, %s212
      %p223 = scmp.eq.s32.totalorder %s20, 0
      %p224 = por %p222, %p223
      %p225 = scmp.ne.s32.totalorder %s211, %s212
      %p226 = scmp.eq.s32.totalorder %s21, 1
      %p227 = por %p225, %p226
      %p229 = scmp.ne.s32.totalorder %s212, %s228
      %p230 = scmp.eq.s32.totalorder %s21, 0
      %p231 = por %p229, %p230
      %p232 = scmp.le.s32.totalorder 1, %s15
      %p233 = scmp.lt.s32.totalorder %s15, 3
      %p234 = pnand %p232, %p233
      %p235 = pneg %p234
      // Predicated region
      $region9: #{model_forward.10} parent=5 // pred_check
        _
      $region10: #{model_forward.10} parent=5 // pred_check_branch
        %237 = sbr.rel (%p234) target = $region12
      $region11: #{model_forward.10} parent=5 // pred_region
        %s238 = ssub.s32 %s15, 1
        // Predicated region
        $region13: #{model_forward.10} parent=11 // pred_check
          %p239 = pneg %p36
        $region14: #{model_forward.10} parent=11 // pred_check_branch
          %241 = sbr.rel (%p239) target = $region16
        $region15: #{model_forward.10} parent=11 // pred_region
          %s243 = ssub.s32 16, 16
          %244 = vsyncadd [#allocation3], %s243
          %s246 = sshll.u32 %s0, 4
          %s247 = int_to_ptr.vmem [resolvable:$true] %s246
          %249 = dma.vmem_to_smem %s247, 16, [#allocation2], [#allocation3]
        $region16: #{model_forward.10} parent=11 // pred_fallthru
          _
        // Predicated region
        $region17: #{model_forward.10} parent=11 // pred_check
          %p250 = pneg %p57
        $region18: #{model_forward.10} parent=11 // pred_check_branch
          %252 = sbr.rel (%p250) target = $region20
        $region19: #{model_forward.10} parent=11 // pred_region
          _
        $region20: #{model_forward.10} parent=11 // pred_fallthru
          _
        // Predicated region
        $region21: #{model_forward.10} parent=11 // pred_check
          %p253 = pneg %p78
        $region22: #{model_forward.10} parent=11 // pred_check_branch
          %255 = sbr.rel (%p253) target = $region24
        $region23: #{model_forward.10} parent=11 // pred_region
          _
        $region24: #{model_forward.10} parent=11 // pred_fallthru
          _
        // Predicated region
        $region25: #{model_forward.10} parent=11 // pred_check
          %p256 = pneg %p125
        $region26: #{model_forward.10} parent=11 // pred_check_branch
          %258 = sbr.rel (%p256) target = $region28
        $region27: #{model_forward.10} parent=11 // pred_region
          _
        $region28: #{model_forward.10} parent=11 // pred_fallthru
          _
        // Predicated region
        $region29: #{model_forward.10} parent=11 // pred_check
          %p259 = pneg %p146
        $region30: #{model_forward.10} parent=11 // pred_check_branch
          %261 = sbr.rel (%p259) target = $region32
        $region31: #{model_forward.10} parent=11 // pred_region
          _
        $region32: #{model_forward.10} parent=11 // pred_fallthru
          _
      $region12: #{model_forward.10} parent=5 // pred_fallthru
        _
      %p262 = scmp.lt.s32.totalorder %s15, 2
      // Predicated region
      $region33: #{model_forward.10} parent=5 // pred_check
        %p263 = pneg %p262
      $region34: #{model_forward.10} parent=5 // pred_check_branch
        %265 = sbr.rel (%p263) target = $region36
      $region35: #{model_forward.10} parent=5 // pred_region
        // Predicated region
        $region37: #{model_forward.10} parent=35 // pred_check
          %p266 = pneg %p98
        $region38: #{model_forward.10} parent=35 // pred_check_branch
          %268 = sbr.rel (%p266) target = $region40
        $region39: #{model_forward.10} parent=35 // pred_region
          %s269 = smul.u32 2, %s15
          %s270 = ssub.s32 3, %s269
          %p271 = scmp.lt.s32.totalorder %s270, 2
          %s272 = scalar_select %p271, %s270, 2
          %s273 = smul.u32 128, %s272
          %p274 = scmp.lt.s32.totalorder %s269, 2
          %s275 = scalar_select %p274, %s269, 2
          %s276 = smul.addr %s275, 8
          %s277 = scalar_lea.vmem %s3, %s276
          %s278 = smul.u32 2, %s15
          %s279 = ssub.s32 3, %s278
          %p280 = scmp.lt.s32.totalorder %s279, 2
          %s281 = scalar_select %p280, %s279, 2
          %s282 = smul.u32 128, %s281
        $region40: #{model_forward.10} parent=35 // pred_fallthru
          _
        // Predicated region
        $region41: #{model_forward.10} parent=35 // pred_check
          %p283 = pneg %p166
        $region42: #{model_forward.10} parent=35 // pred_check_branch
          %285 = sbr.rel (%p283) target = $region44
        $region43: #{model_forward.10} parent=35 // pred_region
          %s286 = sand.u32 %s156, 1
          %s287 = sand.u32 %s156, 1
          %s288 = smul.addr %s287, 32
          %s289 = scalar_lea.vmem [#allocation4], %s288
          %s290 = smul.u32 2, %s15
          %s291 = ssub.s32 3, %s290
          %p292 = scmp.lt.s32.totalorder %s291, 2
          %s293 = scalar_select %p292, %s291, 2
          %s294 = smul.u32 256, %s293
          %p295 = scmp.ne.s32.totalorder 0, %s294
          %s296 = smul.addr %s290, 4
          %s297 = scalar_lea.vmem %s6, %s296
          // Predicated region
          $region45: #{model_forward.10} parent=43 // pred_check
            %p298 = pneg %p295
          $region46: #{model_forward.10} parent=43 // pred_check_branch
            %300 = sbr.rel (%p298) target = $region48
          $region47: #{model_forward.10} parent=43 // pred_region
            // Predicated region
            $region49: #{model_forward.10} parent=47 // pred_check
              _
            $region50: #{model_forward.10} parent=47 // pred_check_branch
              %302 = sbr.rel target = $region52
            $region51: #{model_forward.10} parent=47 // pred_region
              // Predicated region
              $region71: #{model_forward.10} parent=51 // pred_check
                _
              $region72: #{model_forward.10} parent=51 // pred_check_branch
                %371 = sbr.rel (0) target = $region74
              $region73: #{model_forward.10} parent=51 // pred_region
                %s372 = sshrl.u32 %s293, 1
                // While loop
                $region75: #{model_forward.10} parent=73 // loop_pre_header
                  _
                $region76: #{model_forward.10} parent=73 // loop_header
                  %s374 = sphi 0, %s376
                  %p375 = scmp.ge.s32.totalorder %s374, %s372
                  %s379 = sphi 0, %s384
                  %s380 = sphi %s297, %s387
                  %s381 = sphi %s289, %s388
                $region77: #{model_forward.10} parent=73 // loop_header_branch
                  %378 = sbr.rel (%p375) target = $region81
                $region78: #{model_forward.10} parent=73 // loop_body
                  %s382 = sadd.s32 1, %s379
                  %p383 = scmp.ge.s32.totalorder %s382, %s372
                  %s384 = scalar_select %p383, 0, %s382
                  %s385 = smul.u32 %s384, 8
                  %s386 = smul.u32 %s384, 8
                  %s387 = scalar_lea.vmem %s297, %s385
                  %s388 = scalar_lea.vmem %s289, %s386 [#allocation4]
                $region79: #{model_forward.10} parent=73 // loop_footer
                  %s376 = sadd.s32 %s374, 1
                $region80: #{model_forward.10} parent=73 // loop_footer_branch
                  %373 = sbr.rel target = $region76
                $region81: #{model_forward.10} parent=73 // loop_exit
                  _
                %s389 = sshrl.u32 %s293, 1
                %s390 = sand.u32 %s293, 1
                %s391 = smul.u32 %s389, 2
                %s392 = smul.u32 4, %s391
                %s393 = scalar_lea.vmem %s297, %s392
                %s394 = smul.u32 4, %s391
                %s395 = scalar_lea.vmem %s289, %s394 [#allocation4]
                // While loop
                $region82: #{model_forward.10} parent=73 // loop_pre_header
                  _
                $region83: #{model_forward.10} parent=73 // loop_header
                  %s397 = sphi 0, %s399
                  %p398 = scmp.ge.s32.totalorder %s397, %s390
                  %s402 = sphi 0, %s407
                  %s403 = sphi %s393, %s410
                  %s404 = sphi %s395, %s411
                $region84: #{model_forward.10} parent=73 // loop_header_branch
                  %401 = sbr.rel (%p398) target = $region88
                $region85: #{model_forward.10} parent=73 // loop_body
                  %s405 = sadd.s32 1, %s402
                  %p406 = scmp.ge.s32.totalorder %s405, %s390
                  %s407 = scalar_select %p406, 0, %s405
                  %s408 = smul.u32 %s407, 4
                  %s409 = smul.u32 %s407, 4
                  %s410 = scalar_lea.vmem %s393, %s408
                  %s411 = scalar_lea.vmem %s395, %s409 [#allocation4]
                $region86: #{model_forward.10} parent=73 // loop_footer
                  %s399 = sadd.s32 %s397, 1
                $region87: #{model_forward.10} parent=73 // loop_footer_branch
                  %396 = sbr.rel target = $region83
                $region88: #{model_forward.10} parent=73 // loop_exit
                  _
                %s413 = sshrl.u32 %s293, 1
                // While loop
                $region89: #{model_forward.10} parent=73 // loop_pre_header
                  _
                $region90: #{model_forward.10} parent=73 // loop_header
                  %s415 = sphi 0, %s417
                  %p416 = scmp.ge.s32.totalorder %s415, %s413
                  %s420 = sphi 0, %s441
                  %s421 = sphi %s297, %s444
                  %s422 = sphi %s289, %s445
                $region91: #{model_forward.10} parent=73 // loop_header_branch
                  %419 = sbr.rel (%p416) target = $region95
                $region92: #{model_forward.10} parent=73 // loop_body
                  %v423 = vld [vmem:[%s421] sm:$0xf]
                  %424 = vst [vmem:[%s422] sm:$0xf] %v423
                  %v425 = vld [vmem:[%s421 + $0x4] sm:$0xf]
                  %426 = vst [vmem:[%s422 + $0x4] sm:$0xf] %v425
                  %v427 = vld [vmem:[%s421 + $0xc] sm:$0xf]
                  %428 = vst [vmem:[%s422 + $0x8] sm:$0xf] %v427
                  %v429 = vld [vmem:[%s421 + $0x10] sm:$0xf]
                  %430 = vst [vmem:[%s422 + $0xc] sm:$0xf] %v429
                  %v431 = vld [vmem:[%s421 + $0x18] sm:$0xf]
                  %432 = vst [vmem:[%s422 + $0x10] sm:$0xf] %v431
                  %v433 = vld [vmem:[%s421 + $0x1c] sm:$0xf]
                  %434 = vst [vmem:[%s422 + $0x14] sm:$0xf] %v433
                  %v435 = vld [vmem:[%s421 + $0x24] sm:$0xf]
                  %436 = vst [vmem:[%s422 + $0x18] sm:$0xf] %v435
                  %v437 = vld [vmem:[%s421 + $0x28] sm:$0xf]
                  %438 = vst [vmem:[%s422 + $0x1c] sm:$0xf] %v437
                  %s439 = sadd.s32 1, %s420
                  %p440 = scmp.ge.s32.totalorder %s439, %s413
                  %s441 = scalar_select %p440, 0, %s439
                  %s442 = smul.u32 %s441, 8
                  %s443 = smul.u32 %s441, 8
                  %s444 = scalar_lea.vmem %s297, %s442
                  %s445 = scalar_lea.vmem %s289, %s443 [#allocation4]
                $region93: #{model_forward.10} parent=73 // loop_footer
                  %s417 = sadd.s32 %s415, 1
                $region94: #{model_forward.10} parent=73 // loop_footer_branch
                  %414 = sbr.rel target = $region90
                $region95: #{model_forward.10} parent=73 // loop_exit
                  _
                %s446 = sshrl.u32 %s293, 1
                %s447 = sand.u32 %s293, 1
                %s448 = smul.u32 %s446, 2
                %s449 = smul.u32 4, %s448
                %s450 = scalar_lea.vmem %s297, %s449
                %s451 = smul.u32 4, %s448
                %s452 = scalar_lea.vmem %s289, %s451 [#allocation4]
                // While loop
                $region96: #{model_forward.10} parent=73 // loop_pre_header
                  _
                $region97: #{model_forward.10} parent=73 // loop_header
                  %s454 = sphi 0, %s456
                  %p455 = scmp.ge.s32.totalorder %s454, %s447
                  %s459 = sphi 0, %s472
                  %s460 = sphi %s450, %s475
                  %s461 = sphi %s452, %s476
                $region98: #{model_forward.10} parent=73 // loop_header_branch
                  %458 = sbr.rel (%p455) target = $region102
                $region99: #{model_forward.10} parent=73 // loop_body
                  %v462 = vld [vmem:[%s460] sm:$0xf]
                  %463 = vst [vmem:[%s461] sm:$0xf] %v462
                  %v464 = vld [vmem:[%s460 + $0xc] sm:$0xf]
                  %465 = vst [vmem:[%s461 + $0x8] sm:$0xf] %v464
                  %v466 = vld [vmem:[%s460 + $0x18] sm:$0xf]
                  %467 = vst [vmem:[%s461 + $0x10] sm:$0xf] %v466
                  %v468 = vld [vmem:[%s460 + $0x24] sm:$0xf]
                  %469 = vst [vmem:[%s461 + $0x18] sm:$0xf] %v468
                  %s470 = sadd.s32 1, %s459
                  %p471 = scmp.ge.s32.totalorder %s470, %s447
                  %s472 = scalar_select %p471, 0, %s470
                  %s473 = smul.u32 %s472, 4
                  %s474 = smul.u32 %s472, 4
                  %s475 = scalar_lea.vmem %s450, %s473
                  %s476 = scalar_lea.vmem %s452, %s474 [#allocation4]
                $region100: #{model_forward.10} parent=73 // loop_footer
                  %s456 = sadd.s32 %s454, 1
                $region101: #{model_forward.10} parent=73 // loop_footer_branch
                  %453 = sbr.rel target = $region97
                $region102: #{model_forward.10} parent=73 // loop_exit
                  _
              $region74: #{model_forward.10} parent=51 // pred_fallthru
                _
            $region52: #{model_forward.10} parent=47 // pred_fallthru
              _
            // Predicated region
            $region53: #{model_forward.10} parent=47 // pred_check
              _
            $region54: #{model_forward.10} parent=47 // pred_check_branch
              %304 = sbr.rel (0) target = $region56
            $region55: #{model_forward.10} parent=47 // pred_region
              %s306 = sshrl.u32 %s293, 1
              // While loop
              $region57: #{model_forward.10} parent=55 // loop_pre_header
                _
              $region58: #{model_forward.10} parent=55 // loop_header
                %s308 = sphi 0, %s310
                %p309 = scmp.ge.s32.totalorder %s308, %s306
                %s313 = sphi 0, %s334
                %s314 = sphi %s297, %s337
                %s315 = sphi %s289, %s338
              $region59: #{model_forward.10} parent=55 // loop_header_branch
                %312 = sbr.rel (%p309) target = $region63
              $region60: #{model_forward.10} parent=55 // loop_body
                %v316 = vld [vmem:[%s314] sm:$0xf]
                %317 = vst [vmem:[%s315] sm:$0xf] %v316
                %v318 = vld [vmem:[%s314 + $0x4] sm:$0xf]
                %319 = vst [vmem:[%s315 + $0x4] sm:$0xf] %v318
                %v320 = vld [vmem:[%s314 + $0xc] sm:$0xf]
                %321 = vst [vmem:[%s315 + $0x8] sm:$0xf] %v320
                %v322 = vld [vmem:[%s314 + $0x10] sm:$0xf]
                %323 = vst [vmem:[%s315 + $0xc] sm:$0xf] %v322
                %v324 = vld [vmem:[%s314 + $0x18] sm:$0xf]
                %325 = vst [vmem:[%s315 + $0x10] sm:$0xf] %v324
                %v326 = vld [vmem:[%s314 + $0x1c] sm:$0xf]
                %327 = vst [vmem:[%s315 + $0x14] sm:$0xf] %v326
                %v328 = vld [vmem:[%s314 + $0x24] sm:$0xf]
                %329 = vst [vmem:[%s315 + $0x18] sm:$0xf] %v328
                %v330 = vld [vmem:[%s314 + $0x28] sm:$0xf]
                %331 = vst [vmem:[%s315 + $0x1c] sm:$0xf] %v330
                %s332 = sadd.s32 1, %s313
                %p333 = scmp.ge.s32.totalorder %s332, %s306
                %s334 = scalar_select %p333, 0, %s332
                %s335 = smul.u32 %s334, 8
                %s336 = smul.u32 %s334, 8
                %s337 = scalar_lea.vmem %s297, %s335
                %s338 = scalar_lea.vmem %s289, %s336 [#allocation4]
              $region61: #{model_forward.10} parent=55 // loop_footer
                %s310 = sadd.s32 %s308, 1
              $region62: #{model_forward.10} parent=55 // loop_footer_branch
                %307 = sbr.rel target = $region58
              $region63: #{model_forward.10} parent=55 // loop_exit
                _
              %s339 = sshrl.u32 %s293, 1
              %s340 = sand.u32 %s293, 1
              %s341 = smul.u32 %s339, 2
              %s342 = smul.u32 4, %s341
              %s343 = scalar_lea.vmem %s297, %s342
              %s344 = smul.u32 4, %s341
              %s345 = scalar_lea.vmem %s289, %s344 [#allocation4]
              // While loop
              $region64: #{model_forward.10} parent=55 // loop_pre_header
                _
              $region65: #{model_forward.10} parent=55 // loop_header
                %s347 = sphi 0, %s349
                %p348 = scmp.ge.s32.totalorder %s347, %s340
                %s352 = sphi 0, %s365
                %s353 = sphi %s343, %s368
                %s354 = sphi %s345, %s369
              $region66: #{model_forward.10} parent=55 // loop_header_branch
                %351 = sbr.rel (%p348) target = $region70
              $region67: #{model_forward.10} parent=55 // loop_body
                %v355 = vld [vmem:[%s353] sm:$0xf]
                %356 = vst [vmem:[%s354] sm:$0xf] %v355
                %v357 = vld [vmem:[%s353 + $0xc] sm:$0xf]
                %358 = vst [vmem:[%s354 + $0x8] sm:$0xf] %v357
                %v359 = vld [vmem:[%s353 + $0x18] sm:$0xf]
                %360 = vst [vmem:[%s354 + $0x10] sm:$0xf] %v359
                %v361 = vld [vmem:[%s353 + $0x24] sm:$0xf]
                %362 = vst [vmem:[%s354 + $0x18] sm:$0xf] %v361
                %s363 = sadd.s32 1, %s352
                %p364 = scmp.ge.s32.totalorder %s363, %s340
                %s365 = scalar_select %p364, 0, %s363
                %s366 = smul.u32 %s365, 4
                %s367 = smul.u32 %s365, 4
                %s368 = scalar_lea.vmem %s343, %s366
                %s369 = scalar_lea.vmem %s345, %s367 [#allocation4]
              $region68: #{model_forward.10} parent=55 // loop_footer
                %s349 = sadd.s32 %s347, 1
              $region69: #{model_forward.10} parent=55 // loop_footer_branch
                %346 = sbr.rel target = $region65
              $region70: #{model_forward.10} parent=55 // loop_exit
                _
            $region56: #{model_forward.10} parent=47 // pred_fallthru
              _
          $region48: #{model_forward.10} parent=43 // pred_fallthru
            _
          %477 = vnop
        $region44: #{model_forward.10} parent=35 // pred_fallthru
          _
        // Predicated region
        $region103: #{model_forward.10} parent=35 // pred_check
          %p478 = pneg %p192
        $region104: #{model_forward.10} parent=35 // pred_check_branch
          %480 = sbr.rel (%p478) target = $region106
        $region105: #{model_forward.10} parent=35 // pred_region
          %s481 = smul.u32 2, %s15
          %s482 = ssub.s32 3, %s481
          %p483 = scmp.lt.s32.totalorder %s482, 2
          %s484 = scalar_select %p483, %s482, 2
          %s485 = smul.u32 64, %s484
          %p486 = scmp.lt.s32.totalorder %s481, 2
          %s487 = scalar_select %p486, %s481, 2
          %s488 = smul.addr %s487, 4
          %s489 = scalar_lea.vmem %s7, %s488
          %s490 = smul.u32 2, %s15
          %s491 = ssub.s32 3, %s490
          %p492 = scmp.lt.s32.totalorder %s491, 2
          %s493 = scalar_select %p492, %s491, 2
          %s494 = smul.u32 64, %s493
        $region106: #{model_forward.10} parent=35 // pred_fallthru
          _
      $region36: #{model_forward.10} parent=5 // pred_fallthru
        _
      %p495 = scmp.le.s32.totalorder 1, %s15
      %p496 = scmp.lt.s32.totalorder %s15, 3
      %p497 = pnand %p495, %p496
      %p498 = pneg %p497
      // Predicated region
      $region107: #{model_forward.10} parent=5 // pred_check
        _
      $region108: #{model_forward.10} parent=5 // pred_check_branch
        %500 = sbr.rel (%p497) target = $region110
      $region109: #{model_forward.10} parent=5 // pred_region
        %s501 = ssub.s32 %s15, 1
        // Predicated region
        $region111: #{model_forward.10} parent=109 // pred_check
          %p502 = pneg %p36
        $region112: #{model_forward.10} parent=109 // pred_check_branch
          %504 = sbr.rel (%p502) target = $region114
        $region113: #{model_forward.10} parent=109 // pred_region
          %505 = dma.done [#allocation3], 16
        $region114: #{model_forward.10} parent=109 // pred_fallthru
          _
        %s506 = sand.u32 %s159, 1
        %s507 = sand.u32 %s159, 1
        %s508 = smul.addr %s507, 32
        %s509 = scalar_lea.vmem [#allocation4], %s508
        // Predicated region
        $region115: #{model_forward.10} parent=109 // pred_check
          %p510 = pneg %p172
        $region116: #{model_forward.10} parent=109 // pred_check_branch
          %512 = sbr.rel (%p510) target = $region118
        $region117: #{model_forward.10} parent=109 // pred_region
          _
        $region118: #{model_forward.10} parent=109 // pred_fallthru
          _
        %513 = sfence
        %p514 = pneg %p36
        %p515 = pneg %p33
        %p516 = pneg %p57
        %p517 = pneg %p54
        %p518 = pneg %p78
        %p519 = pneg %p75
        %s520 = smul.u32 2, %s20
        %s521 = ssub.s32 3, %s520
        %p522 = scmp.lt.s32.totalorder %s521, 2
        %s523 = scalar_select %p522, %s521, 2
        %s524 = smul.u32 128, %s523
        %p525 = scmp.lt.s32.totalorder %s520, 2
        %s526 = scalar_select %p525, %s520, 2
        %s527 = smul.addr %s526, 8
        %s528 = scalar_lea.vmem %s3, %s527
        %p529 = pneg %p104
        %p530 = pneg %p101
        %p531 = pneg %p125
        %p532 = pneg %p122
        %p533 = pneg %p146
        %p534 = pneg %p143
        %s535 = sand.u32 %s159, 1
        %s536 = sand.u32 %s159, 1
        %s537 = smul.addr %s536, 32
        %s538 = scalar_lea.vmem [#allocation4], %s537
        %p539 = pneg %p172
        %p540 = pneg %p169
        %s541 = smul.u32 2, %s20
        %s542 = ssub.s32 3, %s541
        %p543 = scmp.lt.s32.totalorder %s542, 2
        %s544 = scalar_select %p543, %s542, 2
        %s545 = smul.u32 64, %s544
        %p546 = scmp.lt.s32.totalorder %s541, 2
        %s547 = scalar_select %p546, %s541, 2
        %s548 = smul.addr %s547, 4
        %s549 = scalar_lea.vmem %s7, %s548
        %p550 = pneg %p198
        %p551 = pneg %p195
        %p552 = pneg %p224
        %p553 = pneg %p221
        %s554 = sand.u32 %s211, 1
        %s555 = sand.u32 %s211, 1
        %s556 = smul.addr %s555, 16
        %s557 = scalar_lea.vmem [#allocation5], %s556
        %s558 = smul.u32 2, %s20
        %s559 = ssub.s32 3, %s558
        %p560 = scmp.lt.s32.totalorder %s559, 2
        %s561 = scalar_select %p560, %s559, 2
        %s562 = smul.u32 128, %s561
        %p563 = scmp.lt.s32.totalorder %s558, 2
        %s564 = scalar_select %p563, %s558, 2
        %s565 = smul.addr %s564, 8
        %s566 = scalar_lea.vmem %s3, %s565
        %s567 = smul.u32 2, %s20
        %s568 = ssub.s32 3, %s567
        %p569 = scmp.lt.s32.totalorder %s568, 2
        %s570 = scalar_select %p569, %s568, 2
        %s571 = smul.u32 128, %s570
        %s572 = smul.u32 2, %s20
        %s573 = ssub.s32 3, %s572
        %p574 = scmp.lt.s32.totalorder %s573, 2
        %s575 = scalar_select %p574, %s573, 2
        %s576 = smul.u32 256, %s575
        %s577 = smul.u32 2, %s20
        %s578 = ssub.s32 3, %s577
        %p579 = scmp.lt.s32.totalorder %s578, 2
        %s580 = scalar_select %p579, %s578, 2
        %s581 = smul.u32 64, %s580
        %p582 = scmp.lt.s32.totalorder %s577, 2
        %s583 = scalar_select %p582, %s577, 2
        %s584 = smul.addr %s583, 4
        %s585 = scalar_lea.vmem %s7, %s584
        %s586 = smul.u32 2, %s20
        %s587 = ssub.s32 3, %s586
        %p588 = scmp.lt.s32.totalorder %s587, 2
        %s589 = scalar_select %p588, %s587, 2
        %s590 = smul.u32 64, %s589
        %s591 = smul.u32 2, %s20
        %s592 = ssub.s32 3, %s591
        %p593 = scmp.lt.s32.totalorder %s592, 2
        %s594 = scalar_select %p593, %s592, 2
        %s595 = smul.u32 128, %s594
        %v596 = vld [vmem:[%s585] sm:$0xf]
        %v597 = vld [vmem:[%s585 + $0x4] sm:$0xf]
        %v598 = vunpack.c.l.bf16 %v596
        %v599 = vunpack.c.l.bf16 %v597
        %v600 = vld [vmem:[%s566] sm:$0xff]
        %v601 = vld [vmem:[%s566 + $0x8] sm:$0xff]
        %v602 = vld [vmem:[%s4] sm:$0xff]
        %v603 = vld [vmem:[%s4 + $0x8] sm:$0xff]
        %v604 = vld [vmem:[%s4 + $0x10] sm:$0xff]
        %v605 = vld [vmem:[%s4 + $0x18] sm:$0xff]
        %vm606 = vcmask 261120
        %v608 = vsel %vm606, %v600, 0
        %v611 = vsel %vm606, %v601, 0
        %613 = vmatprep.subr.mxu0 0.0
        %v614 = vand.u32 %v602, 4294901760
        %615 = vmatpush1.msra.mxu0 %v614
        %616 = vmatprep.subr.mxu0 0.0
        %v617 = vand.u32 %v603, 4294901760
        %618 = vmatpush1.msra.mxu0 %v617
        %619 = vmatprep.subr.mxu0 0.0
        %v620 = vand.u32 %v604, 4294901760
        %621 = vmatpush1.msra.mxu0 %v620
        %622 = vmatprep.subr.mxu0 0.0
        %v623 = vand.u32 %v605, 4294901760
        %624 = vmatpush1.msra.mxu0 %v623
        %625 = vmatprep.subr.mxu0 0.0
        %626 = vmatpush1.msra.mxu0 0.0
        %627 = vmatprep.subr.mxu0 0.0
        %628 = vmatpush1.msra.mxu0 0.0
        %629 = vmatprep.subr.mxu0 0.0
        %630 = vmatpush1.msra.mxu0 0.0
        %631 = vmatprep.subr.mxu0 0.0
        %632 = vmatpush1.msra.mxu0 0.0
        %633 = vmatprep.subr.mxu0 0.0
        %634 = vmatpush1.msra.mxu0 0.0
        %635 = vmatprep.subr.mxu0 0.0
        %636 = vmatpush1.msra.mxu0 0.0
        %637 = vmatprep.subr.mxu0 0.0
        %638 = vmatpush1.msra.mxu0 0.0
        %639 = vmatprep.subr.mxu0 0.0
        %640 = vmatpush1.msra.mxu0 0.0
        %641 = vmatprep.subr.mxu0 0.0
        %642 = vmatpush1.msra.mxu0 0.0
        %643 = vmatprep.subr.mxu0 0.0
        %644 = vmatpush1.msra.mxu0 0.0
        %645 = vmatprep.subr.mxu0 0.0
        %646 = vmatpush1.msra.mxu0 0.0
        %647 = vmatprep.subr.mxu0 0.0
        %648 = vmatpush1.msra.mxu0 0.0
        %649 = vmatprep.subr.mxu0 0.0
        %650 = vmatpush1.msra.mxu0 0.0
        %651 = vmatprep.subr.mxu0 0.0
        %652 = vmatpush1.msra.mxu0 0.0
        %653 = vmatprep.subr.mxu0 0.0
        %654 = vmatpush1.msra.mxu0 0.0
        %655 = vmatprep.subr.mxu0 0.0
        %656 = vmatpush1.msra.mxu0 0.0
        %657 = vmatprep.subr.mxu0 0.0
        %658 = vmatpush1.msra.mxu0 0.0
        %659 = vmatprep.subr.mxu0 0.0
        %660 = vmatpush1.msra.mxu0 0.0
        %661 = vmatprep.subr.mxu0 0.0
        %662 = vmatpush1.msra.mxu0 0.0
        %663 = vmatprep.subr.mxu0 0.0
        %664 = vmatpush1.msra.mxu0 0.0
        %665 = vmatprep.subr.mxu0 0.0
        %666 = vmatpush1.msra.mxu0 0.0
        %667 = vmatprep.subr.mxu0 0.0
        %668 = vmatpush1.msra.mxu0 0.0
        %669 = vmatprep.subr.mxu0 0.0
        %670 = vmatpush1.msra.mxu0 0.0
        %671 = vmatprep.subr.mxu0 0.0
        %672 = vmatpush1.msra.mxu0 0.0
        %673 = vmatprep.subr.mxu0 0.0
        %674 = vmatpush1.msra.mxu0 0.0
        %675 = vmatprep.subr.mxu0 0.0
        %676 = vmatpush1.msra.mxu0 0.0
        %677 = vmatprep.subr.mxu0 0.0
        %678 = vmatpush1.msra.mxu0 0.0
        %679 = vmatprep.subr.mxu0 0.0
        %680 = vmatpush1.msra.mxu0 0.0
        %681 = vmatprep.mubr.f32.mxu0 0.0
        %v682 = vand.u32 %v608, 4294901760
        %v683 = vsub.f32 %v608, %v682
        %v684 = vand.u32 %v683, 4294901760
        %v685 = vsub.f32 %v683, %v684
        %v686 = vand.u32 %v685, 4294901760
        %687 = vmatmul.mubr.f32.gmra.mrb[0].mxu0 %v686
        %v688 = vpop.f32.mrb[0].mxu0
        %v689 = vadd.f32 0.0, %v688
        %v690 = vpop.f32.mrb[0].mxu0
        %691 = vmatprep.mubr.f32.mxu0 0.0
        %v692 = vand.u32 %v611, 4294901760
        %v693 = vsub.f32 %v611, %v692
        %v694 = vand.u32 %v693, 4294901760
        %v695 = vsub.f32 %v693, %v694
        %v696 = vand.u32 %v695, 4294901760
        %697 = vmatmul.mubr.f32.gmra.mrb[0].mxu0 %v696
        %v698 = vpop.f32.mrb[0].mxu0
        %v699 = vadd.f32 0.0, %v698
        %v700 = vpop.f32.mrb[0].mxu0
        %701 = vdwg.mxu0
        %702 = vmatprep.subr.mxu0 0.0
        %v703 = vand.u32 %v602, 4294901760
        %v704 = vsub.f32 %v602, %v703
        %v705 = vand.u32 %v704, 4294901760
        %v706 = vsub.f32 %v704, %v705
        %v707 = vand.u32 %v706, 4294901760
        %708 = vmatpush1.msra.mxu0 %v707
        %709 = vmatprep.subr.mxu0 0.0
        %v710 = vand.u32 %v603, 4294901760
        %v711 = vsub.f32 %v603, %v710
        %v712 = vand.u32 %v711, 4294901760
        %v713 = vsub.f32 %v711, %v712
        %v714 = vand.u32 %v713, 4294901760
        %715 = vmatpush1.msra.mxu0 %v714
        %716 = vmatprep.subr.mxu0 0.0
        %v717 = vand.u32 %v604, 4294901760
        %v718 = vsub.f32 %v604, %v717
        %v719 = vand.u32 %v718, 4294901760
        %v720 = vsub.f32 %v718, %v719
        %v721 = vand.u32 %v720, 4294901760
        %722 = vmatpush1.msra.mxu0 %v721
        %723 = vmatprep.subr.mxu0 0.0
        %v724 = vand.u32 %v605, 4294901760
        %v725 = vsub.f32 %v605, %v724
        %v726 = vand.u32 %v725, 4294901760
        %v727 = vsub.f32 %v725, %v726
        %v728 = vand.u32 %v727, 4294901760
        %729 = vmatpush1.msra.mxu0 %v728
        %730 = vmatprep.subr.mxu0 0.0
        %731 = vmatpush1.msra.mxu0 0.0
        %732 = vmatprep.subr.mxu0 0.0
        %733 = vmatpush1.msra.mxu0 0.0
        %734 = vmatprep.subr.mxu0 0.0
        %735 = vmatpush1.msra.mxu0 0.0
        %736 = vmatprep.subr.mxu0 0.0
        %737 = vmatpush1.msra.mxu0 0.0
        %738 = vmatprep.subr.mxu0 0.0
        %739 = vmatpush1.msra.mxu0 0.0
        %740 = vmatprep.subr.mxu0 0.0
        %741 = vmatpush1.msra.mxu0 0.0
        %742 = vmatprep.subr.mxu0 0.0
        %743 = vmatpush1.msra.mxu0 0.0
        %744 = vmatprep.subr.mxu0 0.0
        %745 = vmatpush1.msra.mxu0 0.0
        %746 = vmatprep.subr.mxu0 0.0
        %747 = vmatpush1.msra.mxu0 0.0
        %748 = vmatprep.subr.mxu0 0.0
        %749 = vmatpush1.msra.mxu0 0.0
        %750 = vmatprep.subr.mxu0 0.0
        %751 = vmatpush1.msra.mxu0 0.0
        %752 = vmatprep.subr.mxu0 0.0
        %753 = vmatpush1.msra.mxu0 0.0
        %754 = vmatprep.subr.mxu0 0.0
        %755 = vmatpush1.msra.mxu0 0.0
        %756 = vmatprep.subr.mxu0 0.0
        %757 = vmatpush1.msra.mxu0 0.0
        %758 = vmatprep.subr.mxu0 0.0
        %759 = vmatpush1.msra.mxu0 0.0
        %760 = vmatprep.subr.mxu0 0.0
        %761 = vmatpush1.msra.mxu0 0.0
        %762 = vmatprep.subr.mxu0 0.0
        %763 = vmatpush1.msra.mxu0 0.0
        %764 = vmatprep.subr.mxu0 0.0
        %765 = vmatpush1.msra.mxu0 0.0
        %766 = vmatprep.subr.mxu0 0.0
        %767 = vmatpush1.msra.mxu0 0.0
        %768 = vmatprep.subr.mxu0 0.0
        %769 = vmatpush1.msra.mxu0 0.0
        %770 = vmatprep.subr.mxu0 0.0
        %771 = vmatpush1.msra.mxu0 0.0
        %772 = vmatprep.subr.mxu0 0.0
        %773 = vmatpush1.msra.mxu0 0.0
        %774 = vmatprep.subr.mxu0 0.0
        %775 = vmatpush1.msra.mxu0 0.0
        %776 = vmatprep.subr.mxu0 0.0
        %777 = vmatpush1.msra.mxu0 0.0
        %778 = vmatprep.subr.mxu0 0.0
        %779 = vmatpush1.msra.mxu0 0.0
        %780 = vmatprep.subr.mxu0 0.0
        %781 = vmatpush1.msra.mxu0 0.0
        %782 = vmatprep.subr.mxu0 0.0
        %783 = vmatpush1.msra.mxu0 0.0
        %784 = vmatprep.subr.mxu0 0.0
        %785 = vmatpush1.msra.mxu0 0.0
        %786 = vmatprep.mubr.f32.mxu0 0.0
        %v787 = vand.u32 %v608, 4294901760
        %788 = vmatmul.mubr.f32.gmra.mrb[0].mxu0 %v787
        %v789 = vpop.f32.mrb[0].mxu0
        %v790 = vadd.f32 %v689, %v789
        %v791 = vpop.f32.mrb[0].mxu0
        %792 = vmatprep.mubr.f32.mxu0 0.0
        %v793 = vand.u32 %v611, 4294901760
        %794 = vmatmul.mubr.f32.gmra.mrb[0].mxu0 %v793
        %v795 = vpop.f32.mrb[0].mxu0
        %v796 = vadd.f32 %v699, %v795
        %v797 = vpop.f32.mrb[0].mxu0
        %798 = vdwg.mxu0
        %799 = vmatprep.subr.mxu0 0.0
        %v800 = vand.u32 %v602, 4294901760
        %v801 = vsub.f32 %v602, %v800
        %802 = vmatpush1.msra.mxu0 %v801
        %803 = vmatprep.subr.mxu0 0.0
        %v804 = vand.u32 %v603, 4294901760
        %v805 = vsub.f32 %v603, %v804
        %806 = vmatpush1.msra.mxu0 %v805
        %807 = vmatprep.subr.mxu0 0.0
        %v808 = vand.u32 %v604, 4294901760
        %v809 = vsub.f32 %v604, %v808
        %810 = vmatpush1.msra.mxu0 %v809
        %811 = vmatprep.subr.mxu0 0.0
        %v812 = vand.u32 %v605, 4294901760
        %v813 = vsub.f32 %v605, %v812
        %814 = vmatpush1.msra.mxu0 %v813
        %815 = vmatprep.subr.mxu0 0.0
        %816 = vmatpush1.msra.mxu0 0.0
        %817 = vmatprep.subr.mxu0 0.0
        %818 = vmatpush1.msra.mxu0 0.0
        %819 = vmatprep.subr.mxu0 0.0
        %820 = vmatpush1.msra.mxu0 0.0
        %821 = vmatprep.subr.mxu0 0.0
        %822 = vmatpush1.msra.mxu0 0.0
        %823 = vmatprep.subr.mxu0 0.0
        %824 = vmatpush1.msra.mxu0 0.0
        %825 = vmatprep.subr.mxu0 0.0
        %826 = vmatpush1.msra.mxu0 0.0
        %827 = vmatprep.subr.mxu0 0.0
        %828 = vmatpush1.msra.mxu0 0.0
        %829 = vmatprep.subr.mxu0 0.0
        %830 = vmatpush1.msra.mxu0 0.0
        %831 = vmatprep.subr.mxu0 0.0
        %832 = vmatpush1.msra.mxu0 0.0
        %833 = vmatprep.subr.mxu0 0.0
        %834 = vmatpush1.msra.mxu0 0.0
        %835 = vmatprep.subr.mxu0 0.0
        %836 = vmatpush1.msra.mxu0 0.0
        %837 = vmatprep.subr.mxu0 0.0
        %838 = vmatpush1.msra.mxu0 0.0
        %839 = vmatprep.subr.mxu0 0.0
        %840 = vmatpush1.msra.mxu0 0.0
        %841 = vmatprep.subr.mxu0 0.0
        %842 = vmatpush1.msra.mxu0 0.0
        %843 = vmatprep.subr.mxu0 0.0
        %844 = vmatpush1.msra.mxu0 0.0
        %845 = vmatprep.subr.mxu0 0.0
        %846 = vmatpush1.msra.mxu0 0.0
        %847 = vmatprep.subr.mxu0 0.0
        %848 = vmatpush1.msra.mxu0 0.0
        %849 = vmatprep.subr.mxu0 0.0
        %850 = vmatpush1.msra.mxu0 0.0
        %851 = vmatprep.subr.mxu0 0.0
        %852 = vmatpush1.msra.mxu0 0.0
        %853 = vmatprep.subr.mxu0 0.0
        %854 = vmatpush1.msra.mxu0 0.0
        %855 = vmatprep.subr.mxu0 0.0
        %856 = vmatpush1.msra.mxu0 0.0
        %857 = vmatprep.subr.mxu0 0.0
        %858 = vmatpush1.msra.mxu0 0.0
        %859 = vmatprep.subr.mxu0 0.0
        %860 = vmatpush1.msra.mxu0 0.0
        %861 = vmatprep.subr.mxu0 0.0
        %862 = vmatpush1.msra.mxu0 0.0
        %863 = vmatprep.subr.mxu0 0.0
        %864 = vmatpush1.msra.mxu0 0.0
        %865 = vmatprep.subr.mxu0 0.0
        %866 = vmatpush1.msra.mxu0 0.0
        %867 = vmatprep.subr.mxu0 0.0
        %868 = vmatpush1.msra.mxu0 0.0
        %869 = vmatprep.subr.mxu0 0.0
        %870 = vmatpush1.msra.mxu0 0.0
        %871 = vmatprep.mubr.f32.mxu0 0.0
        %v872 = vand.u32 %v608, 4294901760
        %v873 = vsub.f32 %v608, %v872
        %874 = vmatmul.mubr.f32.gmra.mrb[0].mxu0 %v873
        %v875 = vpop.f32.mrb[0].mxu0
        %v876 = vadd.f32 %v790, %v875
        %v877 = vpop.f32.mrb[0].mxu0
        %878 = vmatprep.mubr.f32.mxu0 0.0
        %v879 = vand.u32 %v611, 4294901760
        %v880 = vsub.f32 %v611, %v879
        %881 = vmatmul.mubr.f32.gmra.mrb[0].mxu0 %v880
        %v882 = vpop.f32.mrb[0].mxu0
        %v883 = vadd.f32 %v796, %v882
        %v884 = vpop.f32.mrb[0].mxu0
        %885 = vdwg.mxu0
        %886 = vmatprep.subr.mxu0 0.0
        %v887 = vand.u32 %v602, 4294901760
        %888 = vmatpush1.msra.mxu0 %v887
        %889 = vmatprep.subr.mxu0 0.0
        %v890 = vand.u32 %v603, 4294901760
        %891 = vmatpush1.msra.mxu0 %v890
        %892 = vmatprep.subr.mxu0 0.0
        %v893 = vand.u32 %v604, 4294901760
        %894 = vmatpush1.msra.mxu0 %v893
        %895 = vmatprep.subr.mxu0 0.0
        %v896 = vand.u32 %v605, 4294901760
        %897 = vmatpush1.msra.mxu0 %v896
        %898 = vmatprep.subr.mxu0 0.0
        %899 = vmatpush1.msra.mxu0 0.0
        %900 = vmatprep.subr.mxu0 0.0
        %901 = vmatpush1.msra.mxu0 0.0
        %902 = vmatprep.subr.mxu0 0.0
        %903 = vmatpush1.msra.mxu0 0.0
        %904 = vmatprep.subr.mxu0 0.0
        %905 = vmatpush1.msra.mxu0 0.0
        %906 = vmatprep.subr.mxu0 0.0
        %907 = vmatpush1.msra.mxu0 0.0
        %908 = vmatprep.subr.mxu0 0.0
        %909 = vmatpush1.msra.mxu0 0.0
        %910 = vmatprep.subr.mxu0 0.0
        %911 = vmatpush1.msra.mxu0 0.0
        %912 = vmatprep.subr.mxu0 0.0
        %913 = vmatpush1.msra.mxu0 0.0
        %914 = vmatprep.subr.mxu0 0.0
        %915 = vmatpush1.msra.mxu0 0.0
        %916 = vmatprep.subr.mxu0 0.0
        %917 = vmatpush1.msra.mxu0 0.0
        %918 = vmatprep.subr.mxu0 0.0
        %919 = vmatpush1.msra.mxu0 0.0
        %920 = vmatprep.subr.mxu0 0.0
        %921 = vmatpush1.msra.mxu0 0.0
        %922 = vmatprep.subr.mxu0 0.0
        %923 = vmatpush1.msra.mxu0 0.0
        %924 = vmatprep.subr.mxu0 0.0
        %925 = vmatpush1.msra.mxu0 0.0
        %926 = vmatprep.subr.mxu0 0.0
        %927 = vmatpush1.msra.mxu0 0.0
        %928 = vmatprep.subr.mxu0 0.0
        %929 = vmatpush1.msra.mxu0 0.0
        %930 = vmatprep.subr.mxu0 0.0
        %931 = vmatpush1.msra.mxu0 0.0
        %932 = vmatprep.subr.mxu0 0.0
        %933 = vmatpush1.msra.mxu0 0.0
        %934 = vmatprep.subr.mxu0 0.0
        %935 = vmatpush1.msra.mxu0 0.0
        %936 = vmatprep.subr.mxu0 0.0
        %937 = vmatpush1.msra.mxu0 0.0
        %938 = vmatprep.subr.mxu0 0.0
        %939 = vmatpush1.msra.mxu0 0.0
        %940 = vmatprep.subr.mxu0 0.0
        %941 = vmatpush1.msra.mxu0 0.0
        %942 = vmatprep.subr.mxu0 0.0
        %943 = vmatpush1.msra.mxu0 0.0
        %944 = vmatprep.subr.mxu0 0.0
        %945 = vmatpush1.msra.mxu0 0.0
        %946 = vmatprep.subr.mxu0 0.0
        %947 = vmatpush1.msra.mxu0 0.0
        %948 = vmatprep.subr.mxu0 0.0
        %949 = vmatpush1.msra.mxu0 0.0
        %950 = vmatprep.subr.mxu0 0.0
        %951 = vmatpush1.msra.mxu0 0.0
        %952 = vmatprep.subr.mxu0 0.0
        %953 = vmatpush1.msra.mxu0 0.0
        %954 = vmatprep.mubr.f32.mxu0 0.0
        %v955 = vand.u32 %v608, 4294901760
        %v956 = vsub.f32 %v608, %v955
        %v957 = vand.u32 %v956, 4294901760
        %958 = vmatmul.mubr.f32.gmra.mrb[0].mxu0 %v957
        %v959 = vpop.f32.mrb[0].mxu0
        %v960 = vadd.f32 %v876, %v959
        %v961 = vpop.f32.mrb[0].mxu0
        %962 = vmatprep.mubr.f32.mxu0 0.0
        %v963 = vand.u32 %v611, 4294901760
        %v964 = vsub.f32 %v611, %v963
        %v965 = vand.u32 %v964, 4294901760
        %966 = vmatmul.mubr.f32.gmra.mrb[0].mxu0 %v965
        %v967 = vpop.f32.mrb[0].mxu0
        %v968 = vadd.f32 %v883, %v967
        %v969 = vpop.f32.mrb[0].mxu0
        %970 = vdwg.mxu0
        %971 = vmatprep.subr.mxu0 0.0
        %v972 = vand.u32 %v602, 4294901760
        %v973 = vsub.f32 %v602, %v972
        %v974 = vand.u32 %v973, 4294901760
        %975 = vmatpush1.msra.mxu0 %v974
        %976 = vmatprep.subr.mxu0 0.0
        %v977 = vand.u32 %v603, 4294901760
        %v978 = vsub.f32 %v603, %v977
        %v979 = vand.u32 %v978, 4294901760
        %980 = vmatpush1.msra.mxu0 %v979
        %981 = vmatprep.subr.mxu0 0.0
        %v982 = vand.u32 %v604, 4294901760
        %v983 = vsub.f32 %v604, %v982
        %v984 = vand.u32 %v983, 4294901760
        %985 = vmatpush1.msra.mxu0 %v984
        %986 = vmatprep.subr.mxu0 0.0
        %v987 = vand.u32 %v605, 4294901760
        %v988 = vsub.f32 %v605, %v987
        %v989 = vand.u32 %v988, 4294901760
        %990 = vmatpush1.msra.mxu0 %v989
        %991 = vmatprep.subr.mxu0 0.0
        %992 = vmatpush1.msra.mxu0 0.0
        %993 = vmatprep.subr.mxu0 0.0
        %994 = vmatpush1.msra.mxu0 0.0
        %995 = vmatprep.subr.mxu0 0.0
        %996 = vmatpush1.msra.mxu0 0.0
        %997 = vmatprep.subr.mxu0 0.0
        %998 = vmatpush1.msra.mxu0 0.0
        %999 = vmatprep.subr.mxu0 0.0
        %1000 = vmatpush1.msra.mxu0 0.0
        %1001 = vmatprep.subr.mxu0 0.0
        %1002 = vmatpush1.msra.mxu0 0.0
        %1003 = vmatprep.subr.mxu0 0.0
        %1004 = vmatpush1.msra.mxu0 0.0
        %1005 = vmatprep.subr.mxu0 0.0
        %1006 = vmatpush1.msra.mxu0 0.0
        %1007 = vmatprep.subr.mxu0 0.0
        %1008 = vmatpush1.msra.mxu0 0.0
        %1009 = vmatprep.subr.mxu0 0.0
        %1010 = vmatpush1.msra.mxu0 0.0
        %1011 = vmatprep.subr.mxu0 0.0
        %1012 = vmatpush1.msra.mxu0 0.0
        %1013 = vmatprep.subr.mxu0 0.0
        %1014 = vmatpush1.msra.mxu0 0.0
        %1015 = vmatprep.subr.mxu0 0.0
        %1016 = vmatpush1.msra.mxu0 0.0
        %1017 = vmatprep.subr.mxu0 0.0
        %1018 = vmatpush1.msra.mxu0 0.0
        %1019 = vmatprep.subr.mxu0 0.0
        %1020 = vmatpush1.msra.mxu0 0.0
        %1021 = vmatprep.subr.mxu0 0.0
        %1022 = vmatpush1.msra.mxu0 0.0
        %1023 = vmatprep.subr.mxu0 0.0
        %1024 = vmatpush1.msra.mxu0 0.0
        %1025 = vmatprep.subr.mxu0 0.0
        %1026 = vmatpush1.msra.mxu0 0.0
        %1027 = vmatprep.subr.mxu0 0.0
        %1028 = vmatpush1.msra.mxu0 0.0
        %1029 = vmatprep.subr.mxu0 0.0
        %1030 = vmatpush1.msra.mxu0 0.0
        %1031 = vmatprep.subr.mxu0 0.0
        %1032 = vmatpush1.msra.mxu0 0.0
        %1033 = vmatprep.subr.mxu0 0.0
        %1034 = vmatpush1.msra.mxu0 0.0
        %1035 = vmatprep.subr.mxu0 0.0
        %1036 = vmatpush1.msra.mxu0 0.0
        %1037 = vmatprep.subr.mxu0 0.0
        %1038 = vmatpush1.msra.mxu0 0.0
        %1039 = vmatprep.subr.mxu0 0.0
        %1040 = vmatpush1.msra.mxu0 0.0
        %1041 = vmatprep.subr.mxu0 0.0
        %1042 = vmatpush1.msra.mxu0 0.0
        %1043 = vmatprep.subr.mxu0 0.0
        %1044 = vmatpush1.msra.mxu0 0.0
        %1045 = vmatprep.subr.mxu0 0.0
        %1046 = vmatpush1.msra.mxu0 0.0
        %1047 = vmatprep.mubr.f32.mxu0 0.0
        %v1048 = vand.u32 %v608, 4294901760
        %1049 = vmatmul.mubr.f32.gmra.mrb[0].mxu0 %v1048
        %v1050 = vpop.f32.mrb[0].mxu0
        %v1051 = vadd.f32 %v960, %v1050
        %v1052 = vpop.f32.mrb[0].mxu0
        %1053 = vmatprep.mubr.f32.mxu0 0.0
        %v1054 = vand.u32 %v611, 4294901760
        %1055 = vmatmul.mubr.f32.gmra.mrb[0].mxu0 %v1054
        %v1056 = vpop.f32.mrb[0].mxu0
        %v1057 = vadd.f32 %v968, %v1056
        %v1058 = vpop.f32.mrb[0].mxu0
        %1059 = vdwg.mxu0
        %1060 = vmatprep.subr.mxu0 0.0
        %v1061 = vand.u32 %v602, 4294901760
        %1062 = vmatpush1.msra.mxu0 %v1061
        %1063 = vmatprep.subr.mxu0 0.0
        %v1064 = vand.u32 %v603, 4294901760
        %1065 = vmatpush1.msra.mxu0 %v1064
        %1066 = vmatprep.subr.mxu0 0.0
        %v1067 = vand.u32 %v604, 4294901760
        %1068 = vmatpush1.msra.mxu0 %v1067
        %1069 = vmatprep.subr.mxu0 0.0
        %v1070 = vand.u32 %v605, 4294901760
        %1071 = vmatpush1.msra.mxu0 %v1070
        %1072 = vmatprep.subr.mxu0 0.0
        %1073 = vmatpush1.msra.mxu0 0.0
        %1074 = vmatprep.subr.mxu0 0.0
        %1075 = vmatpush1.msra.mxu0 0.0
        %1076 = vmatprep.subr.mxu0 0.0
        %1077 = vmatpush1.msra.mxu0 0.0
        %1078 = vmatprep.subr.mxu0 0.0
        %1079 = vmatpush1.msra.mxu0 0.0
        %1080 = vmatprep.subr.mxu0 0.0
        %1081 = vmatpush1.msra.mxu0 0.0
        %1082 = vmatprep.subr.mxu0 0.0
        %1083 = vmatpush1.msra.mxu0 0.0
        %1084 = vmatprep.subr.mxu0 0.0
        %1085 = vmatpush1.msra.mxu0 0.0
        %1086 = vmatprep.subr.mxu0 0.0
        %1087 = vmatpush1.msra.mxu0 0.0
        %1088 = vmatprep.subr.mxu0 0.0
        %1089 = vmatpush1.msra.mxu0 0.0
        %1090 = vmatprep.subr.mxu0 0.0
        %1091 = vmatpush1.msra.mxu0 0.0
        %1092 = vmatprep.subr.mxu0 0.0
        %1093 = vmatpush1.msra.mxu0 0.0
        %1094 = vmatprep.subr.mxu0 0.0
        %1095 = vmatpush1.msra.mxu0 0.0
        %1096 = vmatprep.subr.mxu0 0.0
        %1097 = vmatpush1.msra.mxu0 0.0
        %1098 = vmatprep.subr.mxu0 0.0
        %1099 = vmatpush1.msra.mxu0 0.0
        %1100 = vmatprep.subr.mxu0 0.0
        %1101 = vmatpush1.msra.mxu0 0.0
        %1102 = vmatprep.subr.mxu0 0.0
        %1103 = vmatpush1.msra.mxu0 0.0
        %1104 = vmatprep.subr.mxu0 0.0
        %1105 = vmatpush1.msra.mxu0 0.0
        %1106 = vmatprep.subr.mxu0 0.0
        %1107 = vmatpush1.msra.mxu0 0.0
        %1108 = vmatprep.subr.mxu0 0.0
        %1109 = vmatpush1.msra.mxu0 0.0
        %1110 = vmatprep.subr.mxu0 0.0
        %1111 = vmatpush1.msra.mxu0 0.0
        %1112 = vmatprep.subr.mxu0 0.0
        %1113 = vmatpush1.msra.mxu0 0.0
        %1114 = vmatprep.subr.mxu0 0.0
        %1115 = vmatpush1.msra.mxu0 0.0
        %1116 = vmatprep.subr.mxu0 0.0
        %1117 = vmatpush1.msra.mxu0 0.0
        %1118 = vmatprep.subr.mxu0 0.0
        %1119 = vmatpush1.msra.mxu0 0.0
        %1120 = vmatprep.subr.mxu0 0.0
        %1121 = vmatpush1.msra.mxu0 0.0
        %1122 = vmatprep.subr.mxu0 0.0
        %1123 = vmatpush1.msra.mxu0 0.0
        %1124 = vmatprep.subr.mxu0 0.0
        %1125 = vmatpush1.msra.mxu0 0.0
        %1126 = vmatprep.subr.mxu0 0.0
        %1127 = vmatpush1.msra.mxu0 0.0
        %1128 = vmatprep.mubr.f32.mxu0 0.0
        %v1129 = vand.u32 %v608, 4294901760
        %1130 = vmatmul.mubr.f32.gmra.mrb[0].mxu0 %v1129
        %v1131 = vpop.f32.mrb[0].mxu0
        %v1132 = vadd.f32 %v1051, %v1131
        %v1133 = vpop.f32.mrb[0].mxu0
        %1134 = vmatprep.mubr.f32.mxu0 0.0
        %v1135 = vand.u32 %v611, 4294901760
        %1136 = vmatmul.mubr.f32.gmra.mrb[0].mxu0 %v1135
        %v1137 = vpop.f32.mrb[0].mxu0
        %v1138 = vadd.f32 %v1057, %v1137
        %v1139 = vpop.f32.mrb[0].mxu0
        %1140 = vdwg.mxu0
        %v1141 = vsub.f32 %v598, 1.0
        %v1142 = vsub.f32 %v599, 1.0
        %v1143 = vmul.f32 %v1141, 1e+30
        %v1144 = vmul.f32 %v1142, 1e+30
        %s1145 = sld [smem:[#allocation2]]
        %v1146 = vld [vmem:[%s509] sm:$0xf]
        %v1147 = vld [vmem:[%s509 + $0x4] sm:$0xf]
        %v1148 = vunpack.c.l.bf16 %v1146
        %v1149 = vunpack.c.l.bf16 %v1147
        %v1150 = vstv %s1145
        %v1151 = vmul.f32 %v1150, %v1148
        %v1152 = vmul.f32 %v1150, %v1149
        %v1153 = vadd.f32 %v1143, %v1151
        %v1154 = vadd.f32 %v1144, %v1152
        %s1155 = sld [smem:[#allocation2 + $0x1]]
        %s1156 = scalar_lea.vmem %s509, 8 [#allocation4]
        %v1157 = vld [vmem:[%s1156] sm:$0xf]
        %v1158 = vld [vmem:[%s1156 + $0x4] sm:$0xf]
        %v1159 = vunpack.c.l.bf16 %v1157
        %v1160 = vunpack.c.l.bf16 %v1158
        %v1161 = vstv %s1155
        %v1162 = vmul.f32 %v1161, %v1159
        %v1163 = vmul.f32 %v1161, %v1160
        %v1164 = vadd.f32 %v1153, %v1162
        %v1165 = vadd.f32 %v1154, %v1163
        %s1166 = sld [smem:[#allocation2 + $0x2]]
        %s1167 = scalar_lea.vmem %s509, 16 [#allocation4]
        %v1168 = vld [vmem:[%s1167] sm:$0xf]
        %v1169 = vld [vmem:[%s1167 + $0x4] sm:$0xf]
        %v1170 = vunpack.c.l.bf16 %v1168
        %v1171 = vunpack.c.l.bf16 %v1169
        %v1172 = vstv %s1166
        %v1173 = vmul.f32 %v1172, %v1170
        %v1174 = vmul.f32 %v1172, %v1171
        %v1175 = vadd.f32 %v1164, %v1173
        %v1176 = vadd.f32 %v1165, %v1174
        %s1177 = sld [smem:[#allocation2 + $0x3]]
        %s1178 = scalar_lea.vmem %s509, 24 [#allocation4]
        %v1179 = vld [vmem:[%s1178] sm:$0xf]
        %v1180 = vld [vmem:[%s1178 + $0x4] sm:$0xf]
        %v1181 = vunpack.c.l.bf16 %v1179
        %v1182 = vunpack.c.l.bf16 %v1180
        %v1183 = vstv %s1177
        %v1184 = vmul.f32 %v1183, %v1181
        %v1185 = vmul.f32 %v1183, %v1182
        %v1186 = vadd.f32 %v1175, %v1184
        %v1187 = vadd.f32 %v1176, %v1185
        %v1188 = vld [vmem:[%s2] sm:$0x1]
        %1190 = vset.pattern.permute.xlu0 0
        %1191 = vperm.xlu0 %1190, %v1132
        %v1192 = vpop.permute.xlu0 %1191
        %1195 = vset.pattern.permute.xlu0 0
        %1196 = vperm.xlu0 %1195, %v1138
        %v1197 = vpop.permute.xlu0 %1196
        %v1200 = vlaneseq
        %v1201 = vshrl.u32 %v1200, 7
        %v1202 = vsub.s32 0, %v1201
        %v1203 = vrot.slane %v1188, %v1202
        %v1205 = vadd.f32 %v1192, %v1203
        %v1206 = vadd.f32 %v1197, %v1203
        %v1207 = vadd.f32 %v1205, %v1186
        %v1208 = vadd.f32 %v1206, %v1187
        %vm1209 = vcmp.gt.f32.partialorder %v1207, 0.0
        %vm1210 = vcmp.gt.f32.partialorder %v1208, 0.0
        %v1211 = vmul.f32 %v1207, 0.01
        %v1212 = vmul.f32 %v1208, 0.01
        %v1213 = vsel %vm1209, %v1207, %v1211
        %v1214 = vsel %vm1210, %v1208, %v1212
        %vm1215 = vcmask 97280
        %v1216 = vsel %vm1215, %v1213, -inf
        %1217 = vmax.xlane.f32.xlu0 %v1216
        %v1218 = vpop.xlane.xlu0 %1217
        %v1219 = vsel %vm1215, %v1214, -inf
        %1220 = vmax.xlane.f32.xlu0 %v1219
        %v1221 = vpop.xlane.xlu0 %1220
        %v1222 = vsub.f32 %v1213, %v1218
        %v1223 = vsub.f32 %v1214, %v1221
        %v1224 = vmul.f32 %v1222, 1.442695
        %v1225 = vpow.pop %v1224
        %v1226 = vmul.f32 %v1223, 1.442695
        %v1227 = vpow.pop %v1226
        %v1228 = vmul.f32 %v1225, %v598
        %v1229 = vmul.f32 %v1227, %v599
        %v1230 = vsel %vm1215, %v1228, 0.0
        %1231 = vadd.xlane.f32.xlu0 %v1230
        %v1232 = vpop.xlane.xlu0 %1231
        %v1233 = vsel %vm1215, %v1229, 0.0
        %1234 = vadd.xlane.f32.xlu0 %v1233
        %v1235 = vpop.xlane.xlu0 %1234
        %v1236 = vmax.f32 %v1232, 1e-30
        %v1237 = vmax.f32 %v1235, 1e-30
        %v1238 = vrcp.pop %v1236
        %v1239 = vmul.f32 %v1228, %v1238
        %v1240 = vrcp.pop %v1237
        %v1241 = vmul.f32 %v1229, %v1240
        %v1242 = vld [vmem:[%s1] sm:$0xff]
        %v1243 = vld [vmem:[%s1 + $0x8] sm:$0xf]
        %v1244 = vmul.f32 %v1239, %v1148
        %v1245 = vmul.f32 %v1241, %v1149
        %v1246 = vsel %vm1215, %v1244, 0.0
        %1247 = vadd.xlane.f32.xlu0 %v1246
        %v1248 = vpop.xlane.xlu0 %1247
        %v1249 = vsel %vm1215, %v1245, 0.0
        %1250 = vadd.xlane.f32.xlu0 %v1249
        %v1251 = vpop.xlane.xlu0 %1250
        %v1252 = vld [vmem:[%s5] sm:$0x1]
        %v1253 = vlaneseq
        %v1254 = vshrl.u32 %v1253, 7
        %v1255 = vsub.s32 0, %v1254
        %v1256 = vrot.slane %v1252, %v1255
        %v1257 = vmul.f32 %v1248, %v1256
        %v1258 = vmul.f32 %v1251, %v1256
        %v1260 = vsel %vm1215, %v1239, 0
        %v1263 = vsel %vm1215, %v1241, 0
        %vm1265 = vcmask 1043456
        %v1267 = vsel %vm1265, %v1243, 0
        %1269 = vmatprep.subr.mxu0 0.0
        %v1270 = vand.u32 %v1242, 4294901760
        %1271 = vmatpush1.msra.mxu0 %v1270
        %1272 = vmatprep.subr.mxu0 0.0
        %v1273 = vand.u32 %v1267, 4294901760
        %1274 = vmatpush1.msra.mxu0 %v1273
        %1275 = vmatprep.subr.mxu0 0.0
        %1276 = vmatpush1.msra.mxu0 0.0
        %1277 = vmatprep.subr.mxu0 0.0
        %1278 = vmatpush1.msra.mxu0 0.0
        %1279 = vmatprep.subr.mxu0 0.0
        %1280 = vmatpush1.msra.mxu0 0.0
        %1281 = vmatprep.subr.mxu0 0.0
        %1282 = vmatpush1.msra.mxu0 0.0
        %1283 = vmatprep.subr.mxu0 0.0
        %1284 = vmatpush1.msra.mxu0 0.0
        %1285 = vmatprep.subr.mxu0 0.0
        %1286 = vmatpush1.msra.mxu0 0.0
        %1287 = vmatprep.subr.mxu0 0.0
        %1288 = vmatpush1.msra.mxu0 0.0
        %1289 = vmatprep.subr.mxu0 0.0
        %1290 = vmatpush1.msra.mxu0 0.0
        %1291 = vmatprep.subr.mxu0 0.0
        %1292 = vmatpush1.msra.mxu0 0.0
        %1293 = vmatprep.subr.mxu0 0.0
        %1294 = vmatpush1.msra.mxu0 0.0
        %1295 = vmatprep.subr.mxu0 0.0
        %1296 = vmatpush1.msra.mxu0 0.0
        %1297 = vmatprep.subr.mxu0 0.0
        %1298 = vmatpush1.msra.mxu0 0.0
        %1299 = vmatprep.subr.mxu0 0.0
        %1300 = vmatpush1.msra.mxu0 0.0
        %1301 = vmatprep.subr.mxu0 0.0
        %1302 = vmatpush1.msra.mxu0 0.0
        %1303 = vmatprep.subr.mxu0 0.0
        %1304 = vmatpush1.msra.mxu0 0.0
        %1305 = vmatprep.subr.mxu0 0.0
        %1306 = vmatpush1.msra.mxu0 0.0
        %1307 = vmatprep.subr.mxu0 0.0
        %1308 = vmatpush1.msra.mxu0 0.0
        %1309 = vmatprep.subr.mxu0 0.0
        %1310 = vmatpush1.msra.mxu0 0.0
        %1311 = vmatprep.subr.mxu0 0.0
        %1312 = vmatpush1.msra.mxu0 0.0
        %1313 = vmatprep.subr.mxu0 0.0
        %1314 = vmatpush1.msra.mxu0 0.0
        %1315 = vmatprep.subr.mxu0 0.0
        %1316 = vmatpush1.msra.mxu0 0.0
        %1317 = vmatprep.subr.mxu0 0.0
        %1318 = vmatpush1.msra.mxu0 0.0
        %1319 = vmatprep.subr.mxu0 0.0
        %1320 = vmatpush1.msra.mxu0 0.0
        %1321 = vmatprep.subr.mxu0 0.0
        %1322 = vmatpush1.msra.mxu0 0.0
        %1323 = vmatprep.subr.mxu0 0.0
        %1324 = vmatpush1.msra.mxu0 0.0
        %1325 = vmatprep.subr.mxu0 0.0
        %1326 = vmatpush1.msra.mxu0 0.0
        %1327 = vmatprep.subr.mxu0 0.0
        %1328 = vmatpush1.msra.mxu0 0.0
        %1329 = vmatprep.subr.mxu0 0.0
        %1330 = vmatpush1.msra.mxu0 0.0
        %1331 = vmatprep.subr.mxu0 0.0
        %1332 = vmatpush1.msra.mxu0 0.0
        %1333 = vmatprep.subr.mxu0 0.0
        %1334 = vmatpush1.msra.mxu0 0.0
        %1335 = vmatprep.mubr.f32.mxu0 0.0
        %v1336 = vand.u32 %v1260, 4294901760
        %v1337 = vsub.f32 %v1260, %v1336
        %v1338 = vand.u32 %v1337, 4294901760
        %v1339 = vsub.f32 %v1337, %v1338
        %v1340 = vand.u32 %v1339, 4294901760
        %1341 = vmatmul.mubr.f32.gmra.mrb[0].mxu0 %v1340
        %v1342 = vpop.f32.mrb[0].mxu0
        %v1343 = vadd.f32 %v1257, %v1342
        %v1344 = vpop.f32.mrb[0].mxu0
        %1345 = vmatprep.mubr.f32.mxu0 0.0
        %v1346 = vand.u32 %v1263, 4294901760
        %v1347 = vsub.f32 %v1263, %v1346
        %v1348 = vand.u32 %v1347, 4294901760
        %v1349 = vsub.f32 %v1347, %v1348
        %v1350 = vand.u32 %v1349, 4294901760
        %1351 = vmatmul.mubr.f32.gmra.mrb[0].mxu0 %v1350
        %v1352 = vpop.f32.mrb[0].mxu0
        %v1353 = vadd.f32 %v1258, %v1352
        %v1354 = vpop.f32.mrb[0].mxu0
        %1355 = vdwg.mxu0
        %1356 = vmatprep.subr.mxu0 0.0
        %v1357 = vand.u32 %v1242, 4294901760
        %v1358 = vsub.f32 %v1242, %v1357
        %v1359 = vand.u32 %v1358, 4294901760
        %v1360 = vsub.f32 %v1358, %v1359
        %v1361 = vand.u32 %v1360, 4294901760
        %1362 = vmatpush1.msra.mxu0 %v1361
        %1363 = vmatprep.subr.mxu0 0.0
        %v1364 = vand.u32 %v1267, 4294901760
        %v1365 = vsub.f32 %v1267, %v1364
        %v1366 = vand.u32 %v1365, 4294901760
        %v1367 = vsub.f32 %v1365, %v1366
        %v1368 = vand.u32 %v1367, 4294901760
        %1369 = vmatpush1.msra.mxu0 %v1368
        %1370 = vmatprep.subr.mxu0 0.0
        %1371 = vmatpush1.msra.mxu0 0.0
        %1372 = vmatprep.subr.mxu0 0.0
        %1373 = vmatpush1.msra.mxu0 0.0
        %1374 = vmatprep.subr.mxu0 0.0
        %1375 = vmatpush1.msra.mxu0 0.0
        %1376 = vmatprep.subr.mxu0 0.0
        %1377 = vmatpush1.msra.mxu0 0.0
        %1378 = vmatprep.subr.mxu0 0.0
        %1379 = vmatpush1.msra.mxu0 0.0
        %1380 = vmatprep.subr.mxu0 0.0
        %1381 = vmatpush1.msra.mxu0 0.0
        %1382 = vmatprep.subr.mxu0 0.0
        %1383 = vmatpush1.msra.mxu0 0.0
        %1384 = vmatprep.subr.mxu0 0.0
        %1385 = vmatpush1.msra.mxu0 0.0
        %1386 = vmatprep.subr.mxu0 0.0
        %1387 = vmatpush1.msra.mxu0 0.0
        %1388 = vmatprep.subr.mxu0 0.0
        %1389 = vmatpush1.msra.mxu0 0.0
        %1390 = vmatprep.subr.mxu0 0.0
        %1391 = vmatpush1.msra.mxu0 0.0
        %1392 = vmatprep.subr.mxu0 0.0
        %1393 = vmatpush1.msra.mxu0 0.0
        %1394 = vmatprep.subr.mxu0 0.0
        %1395 = vmatpush1.msra.mxu0 0.0
        %1396 = vmatprep.subr.mxu0 0.0
        %1397 = vmatpush1.msra.mxu0 0.0
        %1398 = vmatprep.subr.mxu0 0.0
        %1399 = vmatpush1.msra.mxu0 0.0
        %1400 = vmatprep.subr.mxu0 0.0
        %1401 = vmatpush1.msra.mxu0 0.0
        %1402 = vmatprep.subr.mxu0 0.0
        %1403 = vmatpush1.msra.mxu0 0.0
        %1404 = vmatprep.subr.mxu0 0.0
        %1405 = vmatpush1.msra.mxu0 0.0
        %1406 = vmatprep.subr.mxu0 0.0
        %1407 = vmatpush1.msra.mxu0 0.0
        %1408 = vmatprep.subr.mxu0 0.0
        %1409 = vmatpush1.msra.mxu0 0.0
        %1410 = vmatprep.subr.mxu0 0.0
        %1411 = vmatpush1.msra.mxu0 0.0
        %1412 = vmatprep.subr.mxu0 0.0
        %1413 = vmatpush1.msra.mxu0 0.0
        %1414 = vmatprep.subr.mxu0 0.0
        %1415 = vmatpush1.msra.mxu0 0.0
        %1416 = vmatprep.subr.mxu0 0.0
        %1417 = vmatpush1.msra.mxu0 0.0
        %1418 = vmatprep.subr.mxu0 0.0
        %1419 = vmatpush1.msra.mxu0 0.0
        %1420 = vmatprep.subr.mxu0 0.0
        %1421 = vmatpush1.msra.mxu0 0.0
        %1422 = vmatprep.subr.mxu0 0.0
        %1423 = vmatpush1.msra.mxu0 0.0
        %1424 = vmatprep.subr.mxu0 0.0
        %1425 = vmatpush1.msra.mxu0 0.0
        %1426 = vmatprep.subr.mxu0 0.0
        %1427 = vmatpush1.msra.mxu0 0.0
        %1428 = vmatprep.subr.mxu0 0.0
        %1429 = vmatpush1.msra.mxu0 0.0
        %1430 = vmatprep.mubr.f32.mxu0 0.0
        %v1431 = vand.u32 %v1260, 4294901760
        %1432 = vmatmul.mubr.f32.gmra.mrb[0].mxu0 %v1431
        %v1433 = vpop.f32.mrb[0].mxu0
        %v1434 = vadd.f32 %v1343, %v1433
        %v1435 = vpop.f32.mrb[0].mxu0
        %1436 = vmatprep.mubr.f32.mxu0 0.0
        %v1437 = vand.u32 %v1263, 4294901760
        %1438 = vmatmul.mubr.f32.gmra.mrb[0].mxu0 %v1437
        %v1439 = vpop.f32.mrb[0].mxu0
        %v1440 = vadd.f32 %v1353, %v1439
        %v1441 = vpop.f32.mrb[0].mxu0
        %1442 = vdwg.mxu0
        %1443 = vmatprep.subr.mxu0 0.0
        %v1444 = vand.u32 %v1242, 4294901760
        %v1445 = vsub.f32 %v1242, %v1444
        %1446 = vmatpush1.msra.mxu0 %v1445
        %1447 = vmatprep.subr.mxu0 0.0
        %v1448 = vand.u32 %v1267, 4294901760
        %v1449 = vsub.f32 %v1267, %v1448
        %1450 = vmatpush1.msra.mxu0 %v1449
        %1451 = vmatprep.subr.mxu0 0.0
        %1452 = vmatpush1.msra.mxu0 0.0
        %1453 = vmatprep.subr.mxu0 0.0
        %1454 = vmatpush1.msra.mxu0 0.0
        %1455 = vmatprep.subr.mxu0 0.0
        %1456 = vmatpush1.msra.mxu0 0.0
        %1457 = vmatprep.subr.mxu0 0.0
        %1458 = vmatpush1.msra.mxu0 0.0
        %1459 = vmatprep.subr.mxu0 0.0
        %1460 = vmatpush1.msra.mxu0 0.0
        %1461 = vmatprep.subr.mxu0 0.0
        %1462 = vmatpush1.msra.mxu0 0.0
        %1463 = vmatprep.subr.mxu0 0.0
        %1464 = vmatpush1.msra.mxu0 0.0
        %1465 = vmatprep.subr.mxu0 0.0
        %1466 = vmatpush1.msra.mxu0 0.0
        %1467 = vmatprep.subr.mxu0 0.0
        %1468 = vmatpush1.msra.mxu0 0.0
        %1469 = vmatprep.subr.mxu0 0.0
        %1470 = vmatpush1.msra.mxu0 0.0
        %1471 = vmatprep.subr.mxu0 0.0
        %1472 = vmatpush1.msra.mxu0 0.0
        %1473 = vmatprep.subr.mxu0 0.0
        %1474 = vmatpush1.msra.mxu0 0.0
        %1475 = vmatprep.subr.mxu0 0.0
        %1476 = vmatpush1.msra.mxu0 0.0
        %1477 = vmatprep.subr.mxu0 0.0
        %1478 = vmatpush1.msra.mxu0 0.0
        %1479 = vmatprep.subr.mxu0 0.0
        %1480 = vmatpush1.msra.mxu0 0.0
        %1481 = vmatprep.subr.mxu0 0.0
        %1482 = vmatpush1.msra.mxu0 0.0
        %1483 = vmatprep.subr.mxu0 0.0
        %1484 = vmatpush1.msra.mxu0 0.0
        %1485 = vmatprep.subr.mxu0 0.0
        %1486 = vmatpush1.msra.mxu0 0.0
        %1487 = vmatprep.subr.mxu0 0.0
        %1488 = vmatpush1.msra.mxu0 0.0
        %1489 = vmatprep.subr.mxu0 0.0
        %1490 = vmatpush1.msra.mxu0 0.0
        %1491 = vmatprep.subr.mxu0 0.0
        %1492 = vmatpush1.msra.mxu0 0.0
        %1493 = vmatprep.subr.mxu0 0.0
        %1494 = vmatpush1.msra.mxu0 0.0
        %1495 = vmatprep.subr.mxu0 0.0
        %1496 = vmatpush1.msra.mxu0 0.0
        %1497 = vmatprep.subr.mxu0 0.0
        %1498 = vmatpush1.msra.mxu0 0.0
        %1499 = vmatprep.subr.mxu0 0.0
        %1500 = vmatpush1.msra.mxu0 0.0
        %1501 = vmatprep.subr.mxu0 0.0
        %1502 = vmatpush1.msra.mxu0 0.0
        %1503 = vmatprep.subr.mxu0 0.0
        %1504 = vmatpush1.msra.mxu0 0.0
        %1505 = vmatprep.subr.mxu0 0.0
        %1506 = vmatpush1.msra.mxu0 0.0
        %1507 = vmatprep.subr.mxu0 0.0
        %1508 = vmatpush1.msra.mxu0 0.0
        %1509 = vmatprep.subr.mxu0 0.0
        %1510 = vmatpush1.msra.mxu0 0.0
        %1511 = vmatprep.mubr.f32.mxu0 0.0
        %v1512 = vand.u32 %v1260, 4294901760
        %v1513 = vsub.f32 %v1260, %v1512
        %1514 = vmatmul.mubr.f32.gmra.mrb[0].mxu0 %v1513
        %v1515 = vpop.f32.mrb[0].mxu0
        %v1516 = vadd.f32 %v1434, %v1515
        %v1517 = vpop.f32.mrb[0].mxu0
        %1518 = vmatprep.mubr.f32.mxu0 0.0
        %v1519 = vand.u32 %v1263, 4294901760
        %v1520 = vsub.f32 %v1263, %v1519
        %1521 = vmatmul.mubr.f32.gmra.mrb[0].mxu0 %v1520
        %v1522 = vpop.f32.mrb[0].mxu0
        %v1523 = vadd.f32 %v1440, %v1522
        %v1524 = vpop.f32.mrb[0].mxu0
        %1525 = vdwg.mxu0
        %1526 = vmatprep.subr.mxu0 0.0
        %v1527 = vand.u32 %v1242, 4294901760
        %1528 = vmatpush1.msra.mxu0 %v1527
        %1529 = vmatprep.subr.mxu0 0.0
        %v1530 = vand.u32 %v1267, 4294901760
        %1531 = vmatpush1.msra.mxu0 %v1530
        %1532 = vmatprep.subr.mxu0 0.0
        %1533 = vmatpush1.msra.mxu0 0.0
        %1534 = vmatprep.subr.mxu0 0.0
        %1535 = vmatpush1.msra.mxu0 0.0
        %1536 = vmatprep.subr.mxu0 0.0
        %1537 = vmatpush1.msra.mxu0 0.0
        %1538 = vmatprep.subr.mxu0 0.0
        %1539 = vmatpush1.msra.mxu0 0.0
        %1540 = vmatprep.subr.mxu0 0.0
        %1541 = vmatpush1.msra.mxu0 0.0
        %1542 = vmatprep.subr.mxu0 0.0
        %1543 = vmatpush1.msra.mxu0 0.0
        %1544 = vmatprep.subr.mxu0 0.0
        %1545 = vmatpush1.msra.mxu0 0.0
        %1546 = vmatprep.subr.mxu0 0.0
        %1547 = vmatpush1.msra.mxu0 0.0
        %1548 = vmatprep.subr.mxu0 0.0
        %1549 = vmatpush1.msra.mxu0 0.0
        %1550 = vmatprep.subr.mxu0 0.0
        %1551 = vmatpush1.msra.mxu0 0.0
        %1552 = vmatprep.subr.mxu0 0.0
        %1553 = vmatpush1.msra.mxu0 0.0
        %1554 = vmatprep.subr.mxu0 0.0
        %1555 = vmatpush1.msra.mxu0 0.0
        %1556 = vmatprep.subr.mxu0 0.0
        %1557 = vmatpush1.msra.mxu0 0.0
        %1558 = vmatprep.subr.mxu0 0.0
        %1559 = vmatpush1.msra.mxu0 0.0
        %1560 = vmatprep.subr.mxu0 0.0
        %1561 = vmatpush1.msra.mxu0 0.0
        %1562 = vmatprep.subr.mxu0 0.0
        %1563 = vmatpush1.msra.mxu0 0.0
        %1564 = vmatprep.subr.mxu0 0.0
        %1565 = vmatpush1.msra.mxu0 0.0
        %1566 = vmatprep.subr.mxu0 0.0
        %1567 = vmatpush1.msra.mxu0 0.0
        %1568 = vmatprep.subr.mxu0 0.0
        %1569 = vmatpush1.msra.mxu0 0.0
        %1570 = vmatprep.subr.mxu0 0.0
        %1571 = vmatpush1.msra.mxu0 0.0
        %1572 = vmatprep.subr.mxu0 0.0
        %1573 = vmatpush1.msra.mxu0 0.0
        %1574 = vmatprep.subr.mxu0 0.0
        %1575 = vmatpush1.msra.mxu0 0.0
        %1576 = vmatprep.subr.mxu0 0.0
        %1577 = vmatpush1.msra.mxu0 0.0
        %1578 = vmatprep.subr.mxu0 0.0
        %1579 = vmatpush1.msra.mxu0 0.0
        %1580 = vmatprep.subr.mxu0 0.0
        %1581 = vmatpush1.msra.mxu0 0.0
        %1582 = vmatprep.subr.mxu0 0.0
        %1583 = vmatpush1.msra.mxu0 0.0
        %1584 = vmatprep.subr.mxu0 0.0
        %1585 = vmatpush1.msra.mxu0 0.0
        %1586 = vmatprep.subr.mxu0 0.0
        %1587 = vmatpush1.msra.mxu0 0.0
        %1588 = vmatprep.subr.mxu0 0.0
        %1589 = vmatpush1.msra.mxu0 0.0
        %1590 = vmatprep.subr.mxu0 0.0
        %1591 = vmatpush1.msra.mxu0 0.0
        %1592 = vmatprep.mubr.f32.mxu0 0.0
        %v1593 = vand.u32 %v1260, 4294901760
        %v1594 = vsub.f32 %v1260, %v1593
        %v1595 = vand.u32 %v1594, 4294901760
        %1596 = vmatmul.mubr.f32.gmra.mrb[0].mxu0 %v1595
        %v1597 = vpop.f32.mrb[0].mxu0
        %v1598 = vadd.f32 %v1516, %v1597
        %v1599 = vpop.f32.mrb[0].mxu0
        %1600 = vmatprep.mubr.f32.mxu0 0.0
        %v1601 = vand.u32 %v1263, 4294901760
        %v1602 = vsub.f32 %v1263, %v1601
        %v1603 = vand.u32 %v1602, 4294901760
        %1604 = vmatmul.mubr.f32.gmra.mrb[0].mxu0 %v1603
        %v1605 = vpop.f32.mrb[0].mxu0
        %v1606 = vadd.f32 %v1523, %v1605
        %v1607 = vpop.f32.mrb[0].mxu0
        %1608 = vdwg.mxu0
        %1609 = vmatprep.subr.mxu0 0.0
        %v1610 = vand.u32 %v1242, 4294901760
        %v1611 = vsub.f32 %v1242, %v1610
        %v1612 = vand.u32 %v1611, 4294901760
        %1613 = vmatpush1.msra.mxu0 %v1612
        %1614 = vmatprep.subr.mxu0 0.0
        %v1615 = vand.u32 %v1267, 4294901760
        %v1616 = vsub.f32 %v1267, %v1615
        %v1617 = vand.u32 %v1616, 4294901760
        %1618 = vmatpush1.msra.mxu0 %v1617
        %1619 = vmatprep.subr.mxu0 0.0
        %1620 = vmatpush1.msra.mxu0 0.0
        %1621 = vmatprep.subr.mxu0 0.0
        %1622 = vmatpush1.msra.mxu0 0.0
        %1623 = vmatprep.subr.mxu0 0.0
        %1624 = vmatpush1.msra.mxu0 0.0
        %1625 = vmatprep.subr.mxu0 0.0
        %1626 = vmatpush1.msra.mxu0 0.0
        %1627 = vmatprep.subr.mxu0 0.0
        %1628 = vmatpush1.msra.mxu0 0.0
        %1629 = vmatprep.subr.mxu0 0.0
        %1630 = vmatpush1.msra.mxu0 0.0
        %1631 = vmatprep.subr.mxu0 0.0
        %1632 = vmatpush1.msra.mxu0 0.0
        %1633 = vmatprep.subr.mxu0 0.0
        %1634 = vmatpush1.msra.mxu0 0.0
        %1635 = vmatprep.subr.mxu0 0.0
        %1636 = vmatpush1.msra.mxu0 0.0
        %1637 = vmatprep.subr.mxu0 0.0
        %1638 = vmatpush1.msra.mxu0 0.0
        %1639 = vmatprep.subr.mxu0 0.0
        %1640 = vmatpush1.msra.mxu0 0.0
        %1641 = vmatprep.subr.mxu0 0.0
        %1642 = vmatpush1.msra.mxu0 0.0
        %1643 = vmatprep.subr.mxu0 0.0
        %1644 = vmatpush1.msra.mxu0 0.0
        %1645 = vmatprep.subr.mxu0 0.0
        %1646 = vmatpush1.msra.mxu0 0.0
        %1647 = vmatprep.subr.mxu0 0.0
        %1648 = vmatpush1.msra.mxu0 0.0
        %1649 = vmatprep.subr.mxu0 0.0
        %1650 = vmatpush1.msra.mxu0 0.0
        %1651 = vmatprep.subr.mxu0 0.0
        %1652 = vmatpush1.msra.mxu0 0.0
        %1653 = vmatprep.subr.mxu0 0.0
        %1654 = vmatpush1.msra.mxu0 0.0
        %1655 = vmatprep.subr.mxu0 0.0
        %1656 = vmatpush1.msra.mxu0 0.0
        %1657 = vmatprep.subr.mxu0 0.0
        %1658 = vmatpush1.msra.mxu0 0.0
        %1659 = vmatprep.subr.mxu0 0.0
        %1660 = vmatpush1.msra.mxu0 0.0
        %1661 = vmatprep.subr.mxu0 0.0
        %1662 = vmatpush1.msra.mxu0 0.0
        %1663 = vmatprep.subr.mxu0 0.0
        %1664 = vmatpush1.msra.mxu0 0.0
        %1665 = vmatprep.subr.mxu0 0.0
        %1666 = vmatpush1.msra.mxu0 0.0
        %1667 = vmatprep.subr.mxu0 0.0
        %1668 = vmatpush1.msra.mxu0 0.0
        %1669 = vmatprep.subr.mxu0 0.0
        %1670 = vmatpush1.msra.mxu0 0.0
        %1671 = vmatprep.subr.mxu0 0.0
        %1672 = vmatpush1.msra.mxu0 0.0
        %1673 = vmatprep.subr.mxu0 0.0
        %1674 = vmatpush1.msra.mxu0 0.0
        %1675 = vmatprep.subr.mxu0 0.0
        %1676 = vmatpush1.msra.mxu0 0.0
        %1677 = vmatprep.subr.mxu0 0.0
        %1678 = vmatpush1.msra.mxu0 0.0
        %1679 = vmatprep.mubr.f32.mxu0 0.0
        %v1680 = vand.u32 %v1260, 4294901760
        %1681 = vmatmul.mubr.f32.gmra.mrb[0].mxu0 %v1680
        %v1682 = vpop.f32.mrb[0].mxu0
        %v1683 = vadd.f32 %v1598, %v1682
        %v1684 = vpop.f32.mrb[0].mxu0
        %1685 = vmatprep.mubr.f32.mxu0 0.0
        %v1686 = vand.u32 %v1263, 4294901760
        %1687 = vmatmul.mubr.f32.gmra.mrb[0].mxu0 %v1686
        %v1688 = vpop.f32.mrb[0].mxu0
        %v1689 = vadd.f32 %v1606, %v1688
        %v1690 = vpop.f32.mrb[0].mxu0
        %1691 = vdwg.mxu0
        %1692 = vmatprep.subr.mxu0 0.0
        %v1693 = vand.u32 %v1242, 4294901760
        %1694 = vmatpush1.msra.mxu0 %v1693
        %1695 = vmatprep.subr.mxu0 0.0
        %v1696 = vand.u32 %v1267, 4294901760
        %1697 = vmatpush1.msra.mxu0 %v1696
        %1698 = vmatprep.subr.mxu0 0.0
        %1699 = vmatpush1.msra.mxu0 0.0
        %1700 = vmatprep.subr.mxu0 0.0
        %1701 = vmatpush1.msra.mxu0 0.0
        %1702 = vmatprep.subr.mxu0 0.0
        %1703 = vmatpush1.msra.mxu0 0.0
        %1704 = vmatprep.subr.mxu0 0.0
        %1705 = vmatpush1.msra.mxu0 0.0
        %1706 = vmatprep.subr.mxu0 0.0
        %1707 = vmatpush1.msra.mxu0 0.0
        %1708 = vmatprep.subr.mxu0 0.0
        %1709 = vmatpush1.msra.mxu0 0.0
        %1710 = vmatprep.subr.mxu0 0.0
        %1711 = vmatpush1.msra.mxu0 0.0
        %1712 = vmatprep.subr.mxu0 0.0
        %1713 = vmatpush1.msra.mxu0 0.0
        %1714 = vmatprep.subr.mxu0 0.0
        %1715 = vmatpush1.msra.mxu0 0.0
        %1716 = vmatprep.subr.mxu0 0.0
        %1717 = vmatpush1.msra.mxu0 0.0
        %1718 = vmatprep.subr.mxu0 0.0
        %1719 = vmatpush1.msra.mxu0 0.0
        %1720 = vmatprep.subr.mxu0 0.0
        %1721 = vmatpush1.msra.mxu0 0.0
        %1722 = vmatprep.subr.mxu0 0.0
        %1723 = vmatpush1.msra.mxu0 0.0
        %1724 = vmatprep.subr.mxu0 0.0
        %1725 = vmatpush1.msra.mxu0 0.0
        %1726 = vmatprep.subr.mxu0 0.0
        %1727 = vmatpush1.msra.mxu0 0.0
        %1728 = vmatprep.subr.mxu0 0.0
        %1729 = vmatpush1.msra.mxu0 0.0
        %1730 = vmatprep.subr.mxu0 0.0
        %1731 = vmatpush1.msra.mxu0 0.0
        %1732 = vmatprep.subr.mxu0 0.0
        %1733 = vmatpush1.msra.mxu0 0.0
        %1734 = vmatprep.subr.mxu0 0.0
        %1735 = vmatpush1.msra.mxu0 0.0
        %1736 = vmatprep.subr.mxu0 0.0
        %1737 = vmatpush1.msra.mxu0 0.0
        %1738 = vmatprep.subr.mxu0 0.0
        %1739 = vmatpush1.msra.mxu0 0.0
        %1740 = vmatprep.subr.mxu0 0.0
        %1741 = vmatpush1.msra.mxu0 0.0
        %1742 = vmatprep.subr.mxu0 0.0
        %1743 = vmatpush1.msra.mxu0 0.0
        %1744 = vmatprep.subr.mxu0 0.0
        %1745 = vmatpush1.msra.mxu0 0.0
        %1746 = vmatprep.subr.mxu0 0.0
        %1747 = vmatpush1.msra.mxu0 0.0
        %1748 = vmatprep.subr.mxu0 0.0
        %1749 = vmatpush1.msra.mxu0 0.0
        %1750 = vmatprep.subr.mxu0 0.0
        %1751 = vmatpush1.msra.mxu0 0.0
        %1752 = vmatprep.subr.mxu0 0.0
        %1753 = vmatpush1.msra.mxu0 0.0
        %1754 = vmatprep.subr.mxu0 0.0
        %1755 = vmatpush1.msra.mxu0 0.0
        %1756 = vmatprep.subr.mxu0 0.0
        %1757 = vmatpush1.msra.mxu0 0.0
        %1758 = vmatprep.mubr.f32.mxu0 0.0
        %v1759 = vand.u32 %v1260, 4294901760
        %1760 = vmatmul.mubr.f32.gmra.mrb[0].mxu0 %v1759
        %v1761 = vpop.f32.mrb[0].mxu0
        %v1762 = vadd.f32 %v1683, %v1761
        %v1763 = vpop.f32.mrb[0].mxu0
        %1764 = vmatprep.mubr.f32.mxu0 0.0
        %v1765 = vand.u32 %v1263, 4294901760
        %1766 = vmatmul.mubr.f32.gmra.mrb[0].mxu0 %v1765
        %v1767 = vpop.f32.mrb[0].mxu0
        %v1768 = vadd.f32 %v1689, %v1767
        %v1769 = vpop.f32.mrb[0].mxu0
        %1770 = vdwg.mxu0
        %v1771 = vmul.f32 %v1239, %v1159
        %v1772 = vmul.f32 %v1241, %v1160
        %v1773 = vsel %vm1215, %v1771, 0.0
        %1774 = vadd.xlane.f32.xlu0 %v1773
        %v1775 = vpop.xlane.xlu0 %1774
        %v1776 = vsel %vm1215, %v1772, 0.0
        %1777 = vadd.xlane.f32.xlu0 %v1776
        %v1778 = vpop.xlane.xlu0 %1777
        %v1779 = vld [vmem:[%s5 + $0x1] sm:$0x1]
        %v1780 = vlaneseq
        %v1781 = vshrl.u32 %v1780, 7
        %v1782 = vsub.s32 0, %v1781
        %v1783 = vrot.slane %v1779, %v1782
        %v1784 = vmul.f32 %v1775, %v1783
        %v1785 = vmul.f32 %v1778, %v1783
        %v1786 = vadd.f32 %v1762, %v1784
        %v1787 = vadd.f32 %v1768, %v1785
        %v1788 = vmul.f32 %v1239, %v1170
        %v1789 = vmul.f32 %v1241, %v1171
        %v1790 = vsel %vm1215, %v1788, 0.0
        %1791 = vadd.xlane.f32.xlu0 %v1790
        %v1792 = vpop.xlane.xlu0 %1791
        %v1793 = vsel %vm1215, %v1789, 0.0
        %1794 = vadd.xlane.f32.xlu0 %v1793
        %v1795 = vpop.xlane.xlu0 %1794
        %v1796 = vld [vmem:[%s5 + $0x2] sm:$0x1]
        %v1797 = vlaneseq
        %v1798 = vshrl.u32 %v1797, 7
        %v1799 = vsub.s32 0, %v1798
        %v1800 = vrot.slane %v1796, %v1799
        %v1801 = vmul.f32 %v1792, %v1800
        %v1802 = vmul.f32 %v1795, %v1800
        %v1803 = vadd.f32 %v1786, %v1801
        %v1804 = vadd.f32 %v1787, %v1802
        %v1805 = vmul.f32 %v1239, %v1181
        %v1806 = vmul.f32 %v1241, %v1182
        %v1807 = vsel %vm1215, %v1805, 0.0
        %1808 = vadd.xlane.f32.xlu0 %v1807
        %v1809 = vpop.xlane.xlu0 %1808
        %v1810 = vsel %vm1215, %v1806, 0.0
        %1811 = vadd.xlane.f32.xlu0 %v1810
        %v1812 = vpop.xlane.xlu0 %1811
        %v1813 = vld [vmem:[%s5 + $0x3] sm:$0x1]
        %v1814 = vlaneseq
        %v1815 = vshrl.u32 %v1814, 7
        %v1816 = vsub.s32 0, %v1815
        %v1817 = vrot.slane %v1813, %v1816
        %v1818 = vmul.f32 %v1809, %v1817
        %v1819 = vmul.f32 %v1812, %v1817
        %v1820 = vadd.f32 %v1803, %v1818
        %v1821 = vadd.f32 %v1804, %v1819
        %v1822 = vadd.f32 %v1820, %v600
        %v1823 = vadd.f32 %v1821, %v601
        %vm1824 = vcmp.gt.f32.partialorder %v1822, 0.0
        %vm1825 = vcmp.gt.f32.partialorder %v1823, 0.0
        %v1826 = vmin.f32 %v1822, 0.0
        %v1827 = vmin.f32 %v1823, 0.0
        %v1828 = vmul.f32 %v1826, 1.442695
        %v1829 = vpow.pop %v1828
        %v1830 = vmul.f32 %v1827, 1.442695
        %v1831 = vpow.pop %v1830
        %v1832 = vsub.f32 %v1829, 1.0
        %v1833 = vsub.f32 %v1831, 1.0
        %v1834 = vsel %vm1824, %v1822, %v1832
        %v1835 = vsel %vm1825, %v1823, %v1833
        %1836 = vst.msk [vmem:[%s557] sm:$0xff] %vm606, %v1834
        %1837 = vst.msk [vmem:[%s557 + $0x8] sm:$0xff] %vm606, %v1835
        %s1838 = sand.u32 %s211, 1
        %s1839 = sand.u32 %s211, 1
        %s1840 = smul.addr %s1839, 16
        %s1841 = scalar_lea.vmem [#allocation5], %s1840
        // Predicated region
        $region119: #{model_forward.10} parent=109 // pred_check
          %p1842 = pneg %p221
        $region120: #{model_forward.10} parent=109 // pred_check_branch
          %1844 = sbr.rel (%p1842) target = $region122
        $region121: #{model_forward.10} parent=109 // pred_region
          %s1845 = smul.u32 2, %s20
          %s1846 = ssub.s32 3, %s1845
          %p1847 = scmp.lt.s32.totalorder %s1846, 2
          %s1848 = scalar_select %p1847, %s1846, 2
          %s1849 = smul.u32 128, %s1848
          %p1850 = scmp.ne.s32.totalorder 0, %s1849
          %s1851 = smul.addr %s1845, 8
          %s1852 = scalar_lea.vmem %s8, %s1851
          // Predicated region
          $region123: #{model_forward.10} parent=121 // pred_check
            %p1853 = pneg %p1850
          $region124: #{model_forward.10} parent=121 // pred_check_branch
            %1855 = sbr.rel (%p1853) target = $region126
          $region125: #{model_forward.10} parent=121 // pred_region
            // Predicated region
            $region127: #{model_forward.10} parent=125 // pred_check
              _
            $region128: #{model_forward.10} parent=125 // pred_check_branch
              %1857 = sbr.rel (0) target = $region130
            $region129: #{model_forward.10} parent=125 // pred_region
              // Predicated region
              $region149: #{model_forward.10} parent=129 // pred_check
                _
              $region150: #{model_forward.10} parent=129 // pred_check_branch
                %1908 = sbr.rel (0) target = $region152
              $region151: #{model_forward.10} parent=129 // pred_region
                %s1909 = sshrl.u32 %s1848, 1
                // While loop
                $region153: #{model_forward.10} parent=151 // loop_pre_header
                  _
                $region154: #{model_forward.10} parent=151 // loop_header
                  %s1911 = sphi 0, %s1913
                  %p1912 = scmp.ge.s32.totalorder %s1911, %s1909
                  %s1916 = sphi 0, %s1925
                  %s1917 = sphi %s1841, %s1928
                  %s1918 = sphi %s1852, %s1929
                $region155: #{model_forward.10} parent=151 // loop_header_branch
                  %1915 = sbr.rel (%p1912) target = $region159
                $region156: #{model_forward.10} parent=151 // loop_body
                  %v1919 = vld [vmem:[%s1917] sm:$0xff]
                  %1920 = vst [vmem:[%s1918] sm:$0xff] %v1919
                  %v1921 = vld [vmem:[%s1917 + $0x8] sm:$0xff]
                  %1922 = vst [vmem:[%s1918 + $0x8] sm:$0xff] %v1921
                  %s1923 = sadd.s32 1, %s1916
                  %p1924 = scmp.ge.s32.totalorder %s1923, %s1909
                  %s1925 = scalar_select %p1924, 0, %s1923
                  %s1926 = smul.u32 %s1925, 16
                  %s1927 = smul.u32 %s1925, 16
                  %s1928 = scalar_lea.vmem %s1841, %s1926 [#allocation5]
                  %s1929 = scalar_lea.vmem %s1852, %s1927
                $region157: #{model_forward.10} parent=151 // loop_footer
                  %s1913 = sadd.s32 %s1911, 1
                $region158: #{model_forward.10} parent=151 // loop_footer_branch
                  %1910 = sbr.rel target = $region154
                $region159: #{model_forward.10} parent=151 // loop_exit
                  _
                %s1930 = sshrl.u32 %s1848, 1
                %s1931 = sand.u32 %s1848, 1
                %s1932 = smul.u32 %s1930, 2
                %s1933 = smul.u32 8, %s1932
                %s1934 = scalar_lea.vmem %s1841, %s1933 [#allocation5]
                %s1935 = smul.u32 8, %s1932
                %s1936 = scalar_lea.vmem %s1852, %s1935
                // While loop
                $region160: #{model_forward.10} parent=151 // loop_pre_header
                  _
                $region161: #{model_forward.10} parent=151 // loop_header
                  %s1938 = sphi 0, %s1940
                  %p1939 = scmp.ge.s32.totalorder %s1938, %s1931
                  %s1943 = sphi 0, %s1950
                  %s1944 = sphi %s1934, %s1953
                  %s1945 = sphi %s1936, %s1954
                $region162: #{model_forward.10} parent=151 // loop_header_branch
                  %1942 = sbr.rel (%p1939) target = $region166
                $region163: #{model_forward.10} parent=151 // loop_body
                  %v1946 = vld [vmem:[%s1944] sm:$0xff]
                  %1947 = vst [vmem:[%s1945] sm:$0xff] %v1946
                  %s1948 = sadd.s32 1, %s1943
                  %p1949 = scmp.ge.s32.totalorder %s1948, %s1931
                  %s1950 = scalar_select %p1949, 0, %s1948
                  %s1951 = smul.u32 %s1950, 8
                  %s1952 = smul.u32 %s1950, 8
                  %s1953 = scalar_lea.vmem %s1934, %s1951 [#allocation5]
                  %s1954 = scalar_lea.vmem %s1936, %s1952
                $region164: #{model_forward.10} parent=151 // loop_footer
                  %s1940 = sadd.s32 %s1938, 1
                $region165: #{model_forward.10} parent=151 // loop_footer_branch
                  %1937 = sbr.rel target = $region161
                $region166: #{model_forward.10} parent=151 // loop_exit
                  _
              $region152: #{model_forward.10} parent=129 // pred_fallthru
                _
              // Predicated region
              $region167: #{model_forward.10} parent=129 // pred_check
                _
              $region168: #{model_forward.10} parent=129 // pred_check_branch
                %1956 = sbr.rel target = $region170
              $region169: #{model_forward.10} parent=129 // pred_region
                _
              $region170: #{model_forward.10} parent=129 // pred_fallthru
                _
            $region130: #{model_forward.10} parent=125 // pred_fallthru
              _
            // Predicated region
            $region131: #{model_forward.10} parent=125 // pred_check
              _
            $region132: #{model_forward.10} parent=125 // pred_check_branch
              %1859 = sbr.rel target = $region134
            $region133: #{model_forward.10} parent=125 // pred_region
              %s1861 = sshrl.u32 %s1848, 1
              // While loop
              $region135: #{model_forward.10} parent=133 // loop_pre_header
                _
              $region136: #{model_forward.10} parent=133 // loop_header
                %s1863 = sphi 0, %s1865
                %p1864 = scmp.ge.s32.totalorder %s1863, %s1861
                %s1868 = sphi 0, %s1877
                %s1869 = sphi %s1841, %s1880
                %s1870 = sphi %s1852, %s1881
              $region137: #{model_forward.10} parent=133 // loop_header_branch
                %1867 = sbr.rel (%p1864) target = $region141
              $region138: #{model_forward.10} parent=133 // loop_body
                %v1871 = vld [vmem:[%s1869] sm:$0xff]
                %1872 = vst [vmem:[%s1870] sm:$0xff] %v1871
                %v1873 = vld [vmem:[%s1869 + $0x8] sm:$0xff]
                %1874 = vst [vmem:[%s1870 + $0x8] sm:$0xff] %v1873
                %s1875 = sadd.s32 1, %s1868
                %p1876 = scmp.ge.s32.totalorder %s1875, %s1861
                %s1877 = scalar_select %p1876, 0, %s1875
                %s1878 = smul.u32 %s1877, 16
                %s1879 = smul.u32 %s1877, 16
                %s1880 = scalar_lea.vmem %s1841, %s1878 [#allocation5]
                %s1881 = scalar_lea.vmem %s1852, %s1879
              $region139: #{model_forward.10} parent=133 // loop_footer
                %s1865 = sadd.s32 %s1863, 1
              $region140: #{model_forward.10} parent=133 // loop_footer_branch
                %1862 = sbr.rel target = $region136
              $region141: #{model_forward.10} parent=133 // loop_exit
                _
              %s1882 = sshrl.u32 %s1848, 1
              %s1883 = sand.u32 %s1848, 1
              %s1884 = smul.u32 %s1882, 2
              %s1885 = smul.u32 8, %s1884
              %s1886 = scalar_lea.vmem %s1841, %s1885 [#allocation5]
              %s1887 = smul.u32 8, %s1884
              %s1888 = scalar_lea.vmem %s1852, %s1887
              // While loop
              $region142: #{model_forward.10} parent=133 // loop_pre_header
                _
              $region143: #{model_forward.10} parent=133 // loop_header
                %s1890 = sphi 0, %s1892
                %p1891 = scmp.ge.s32.totalorder %s1890, %s1883
                %s1895 = sphi 0, %s1902
                %s1896 = sphi %s1886, %s1905
                %s1897 = sphi %s1888, %s1906
              $region144: #{model_forward.10} parent=133 // loop_header_branch
                %1894 = sbr.rel (%p1891) target = $region148
              $region145: #{model_forward.10} parent=133 // loop_body
                %v1898 = vld [vmem:[%s1896] sm:$0xff]
                %1899 = vst [vmem:[%s1897] sm:$0xff] %v1898
                %s1900 = sadd.s32 1, %s1895
                %p1901 = scmp.ge.s32.totalorder %s1900, %s1883
                %s1902 = scalar_select %p1901, 0, %s1900
                %s1903 = smul.u32 %s1902, 8
                %s1904 = smul.u32 %s1902, 8
                %s1905 = scalar_lea.vmem %s1886, %s1903 [#allocation5]
                %s1906 = scalar_lea.vmem %s1888, %s1904
              $region146: #{model_forward.10} parent=133 // loop_footer
                %s1892 = sadd.s32 %s1890, 1
              $region147: #{model_forward.10} parent=133 // loop_footer_branch
                %1889 = sbr.rel target = $region143
              $region148: #{model_forward.10} parent=133 // loop_exit
                _
            $region134: #{model_forward.10} parent=125 // pred_fallthru
              _
          $region126: #{model_forward.10} parent=121 // pred_fallthru
            _
          %1957 = vnop
        $region122: #{model_forward.10} parent=109 // pred_fallthru
          _
      $region110: #{model_forward.10} parent=5 // pred_fallthru
        _
      %p1958 = scmp.le.s32.totalorder 2, %s15
      // Predicated region
      $region171: #{model_forward.10} parent=5 // pred_check
        %p1959 = pneg %p1958
      $region172: #{model_forward.10} parent=5 // pred_check_branch
        %1961 = sbr.rel (%p1959) target = $region174
      $region173: #{model_forward.10} parent=5 // pred_region
        %s1962 = ssub.s32 %s15, 2
        // Predicated region
        $region175: #{model_forward.10} parent=173 // pred_check
          %p1963 = pneg %p227
        $region176: #{model_forward.10} parent=173 // pred_check_branch
          %1965 = sbr.rel (%p1963) target = $region178
        $region177: #{model_forward.10} parent=173 // pred_region
          %s1966 = sand.u32 %s212, 1
          %s1967 = sand.u32 %s212, 1
          %s1968 = smul.addr %s1967, 16
          %s1969 = scalar_lea.vmem [#allocation5], %s1968
        $region178: #{model_forward.10} parent=173 // pred_fallthru
          _
      $region174: #{model_forward.10} parent=5 // pred_fallthru
        _
    $region6: #{model_forward.10} parent=1 // loop_footer
      %s19 = sadd.s32 1, %s15
    $region7: #{model_forward.10} parent=1 // loop_footer_branch
      %14 = sbr.rel target = $region3
    $region8: #{model_forward.10} parent=1 // loop_exit
      _
    %1970 = vsyncpa [#allocation3], 1
    %s1971 = scalar_lea.sflag [#allocation3], 1
    %1972 = vsyncpa %s1971, 1

// kernel: model_forward.14
$region0: #{model_forward.14}
  #allocation0 [shape = 'u32[]', space=smem, size = 0x4, offset = 0x4, fixed_abs, tag = 'smem constant byte address 0x4 - core index']
  #allocation1 [shape = 'u32[144,128]{1,0:T(1,128)}', space=vmem, size = 0x12000, scoped, tag = 'internal scratch']
  %s0 = inlined_call_operand.vmem [shape: f32[20,32], index: 0, kind: input, shape index: {}]
  %s1 = inlined_call_operand.vmem [shape: f32[32,16], index: 1, kind: input, shape index: {}]
  %s2 = inlined_call_operand.vmem [shape: f32[1,16], index: 2, kind: input, shape index: {}]
  %s3 = inlined_call_operand.vmem [shape: f32[16,32], index: 3, kind: input, shape index: {}]
  %s4 = inlined_call_operand.vmem [shape: f32[1,32], index: 4, kind: input, shape index: {}]
  %s5 = inlined_call_operand.vmem [shape: f32[32,10], index: 5, kind: input, shape index: {}]
  %s6 = inlined_call_operand.vmem [shape: f32[1,10], index: 6, kind: input, shape index: {}]
  %s7 = inlined_call_operand.vmem [shape: f32[20,16], index: 7, kind: output, shape index: {0}]
  %s8 = inlined_call_operand.vmem [shape: f32[20,10], index: 8, kind: output, shape index: {1}]
  %9 = xla_tuple %s7, %s8
  %s10 = sld [smem:[#allocation0]]
  $region69: #{model_forward.14} parent=0
    _
  %s12 = ssub.s32 1, %s10
  %s13 = scalar_select 0, %s12, %s10
  loop: start=0, step=1, limit=5
  $region2: #{model_forward.14} parent=0 // loop_pre_header
    _
  $region3: #{model_forward.14} parent=0 // loop_header
    %s15 = sphi 0, %s19
    %p16 = scmp.ge.s32.totalorder %s15, 5
    %s25 = sphi 0, %s27
    %s28 = sphi 0, %s25
    %s29 = sphi 0, %s28
    %s45 = sphi 0, %s29
    %s49 = sphi 0, %s49
    %s51 = sphi 0, %s49
    %s52 = sphi 0, %s51
    %s66 = sphi 0, %s52
    %s70 = sphi 0, %s70
    %s72 = sphi 0, %s70
    %s73 = sphi 0, %s72
    %s87 = sphi 0, %s73
    %s91 = sphi 0, %s91
    %s93 = sphi 0, %s91
    %s94 = sphi 0, %s93
    %s108 = sphi 0, %s94
    %s112 = sphi 0, %s112
    %s114 = sphi 0, %s112
    %s115 = sphi 0, %s114
    %s129 = sphi 0, %s115
    %s133 = sphi 0, %s133
    %s135 = sphi 0, %s133
    %s136 = sphi 0, %s135
    %s150 = sphi 0, %s136
    %s154 = sphi 0, %s154
    %s156 = sphi 0, %s154
    %s157 = sphi 0, %s156
    %s171 = sphi 0, %s157
    %s177 = sphi 0, %s179
    %s180 = sphi 0, %s177
    %s181 = sphi 0, %s180
    %s197 = sphi 0, %s181
    %s203 = sphi 0, %s205
    %s206 = sphi 0, %s203
    %s207 = sphi 0, %s206
    %s223 = sphi 0, %s207
  $region4: #{model_forward.14} parent=0 // loop_header_branch
    %18 = sbr.rel (%p16) target = $region8
  $region5: #{model_forward.14} parent=0 // loop_body
    %s20 = ssub.s32 %s15, 1
    %s21 = ssub.s32 %s15, 2
    %s22 = sadd.s32 %s15, 1
    %s23 = ssub.s32 %s15, %s22
    %p24 = scmp.eq.s32.totalorder %s23, 0
    %s26 = sadd.s32 %s25, 1
    %s27 = scalar_select %p24, %s25, %s26
    %p30 = pneg %p24
    %p31 = scmp.eq.s32.totalorder %s15, 2
    %p32 = por %p30, %p31
    %p33 = scmp.ne.s32.totalorder %s25, %s28
    %p34 = scmp.eq.s32.totalorder %s15, 0
    %p35 = por %p33, %p34
    %p36 = scmp.ne.s32.totalorder %s25, %s28
    %p37 = scmp.eq.s32.totalorder %s20, 2
    %p38 = por %p36, %p37
    %p39 = scmp.ne.s32.totalorder %s28, %s29
    %p40 = scmp.eq.s32.totalorder %s20, 0
    %p41 = por %p39, %p40
    %p42 = scmp.ne.s32.totalorder %s28, %s29
    %p43 = scmp.eq.s32.totalorder %s21, 2
    %p44 = por %p42, %p43
    %p46 = scmp.ne.s32.totalorder %s29, %s45
    %p47 = scmp.eq.s32.totalorder %s21, 0
    %p48 = por %p46, %p47
    %s50 = sadd.s32 %s49, 1
    %p53 = scmp.eq.s32.totalorder %s15, 2
    %p54 = scmp.ne.s32.totalorder %s49, %s51
    %p55 = scmp.eq.s32.totalorder %s15, 0
    %p56 = por %p54, %p55
    %p57 = scmp.ne.s32.totalorder %s49, %s51
    %p58 = scmp.eq.s32.totalorder %s20, 2
    %p59 = por %p57, %p58
    %p60 = scmp.ne.s32.totalorder %s51, %s52
    %p61 = scmp.eq.s32.totalorder %s20, 0
    %p62 = por %p60, %p61
    %p63 = scmp.ne.s32.totalorder %s51, %s52
    %p64 = scmp.eq.s32.totalorder %s21, 2
    %p65 = por %p63, %p64
    %p67 = scmp.ne.s32.totalorder %s52, %s66
    %p68 = scmp.eq.s32.totalorder %s21, 0
    %p69 = por %p67, %p68
    %s71 = sadd.s32 %s70, 1
    %p74 = scmp.eq.s32.totalorder %s15, 2
    %p75 = scmp.ne.s32.totalorder %s70, %s72
    %p76 = scmp.eq.s32.totalorder %s15, 0
    %p77 = por %p75, %p76
    %p78 = scmp.ne.s32.totalorder %s70, %s72
    %p79 = scmp.eq.s32.totalorder %s20, 2
    %p80 = por %p78, %p79
    %p81 = scmp.ne.s32.totalorder %s72, %s73
    %p82 = scmp.eq.s32.totalorder %s20, 0
    %p83 = por %p81, %p82
    %p84 = scmp.ne.s32.totalorder %s72, %s73
    %p85 = scmp.eq.s32.totalorder %s21, 2
    %p86 = por %p84, %p85
    %p88 = scmp.ne.s32.totalorder %s73, %s87
    %p89 = scmp.eq.s32.totalorder %s21, 0
    %p90 = por %p88, %p89
    %s92 = sadd.s32 %s91, 1
    %p95 = scmp.eq.s32.totalorder %s15, 2
    %p96 = scmp.ne.s32.totalorder %s91, %s93
    %p97 = scmp.eq.s32.totalorder %s15, 0
    %p98 = por %p96, %p97
    %p99 = scmp.ne.s32.totalorder %s91, %s93
    %p100 = scmp.eq.s32.totalorder %s20, 2
    %p101 = por %p99, %p100
    %p102 = scmp.ne.s32.totalorder %s93, %s94
    %p103 = scmp.eq.s32.totalorder %s20, 0
    %p104 = por %p102, %p103
    %p105 = scmp.ne.s32.totalorder %s93, %s94
    %p106 = scmp.eq.s32.totalorder %s21, 2
    %p107 = por %p105, %p106
    %p109 = scmp.ne.s32.totalorder %s94, %s108
    %p110 = scmp.eq.s32.totalorder %s21, 0
    %p111 = por %p109, %p110
    %s113 = sadd.s32 %s112, 1
    %p116 = scmp.eq.s32.totalorder %s15, 2
    %p117 = scmp.ne.s32.totalorder %s112, %s114
    %p118 = scmp.eq.s32.totalorder %s15, 0
    %p119 = por %p117, %p118
    %p120 = scmp.ne.s32.totalorder %s112, %s114
    %p121 = scmp.eq.s32.totalorder %s20, 2
    %p122 = por %p120, %p121
    %p123 = scmp.ne.s32.totalorder %s114, %s115
    %p124 = scmp.eq.s32.totalorder %s20, 0
    %p125 = por %p123, %p124
    %p126 = scmp.ne.s32.totalorder %s114, %s115
    %p127 = scmp.eq.s32.totalorder %s21, 2
    %p128 = por %p126, %p127
    %p130 = scmp.ne.s32.totalorder %s115, %s129
    %p131 = scmp.eq.s32.totalorder %s21, 0
    %p132 = por %p130, %p131
    %s134 = sadd.s32 %s133, 1
    %p137 = scmp.eq.s32.totalorder %s15, 2
    %p138 = scmp.ne.s32.totalorder %s133, %s135
    %p139 = scmp.eq.s32.totalorder %s15, 0
    %p140 = por %p138, %p139
    %p141 = scmp.ne.s32.totalorder %s133, %s135
    %p142 = scmp.eq.s32.totalorder %s20, 2
    %p143 = por %p141, %p142
    %p144 = scmp.ne.s32.totalorder %s135, %s136
    %p145 = scmp.eq.s32.totalorder %s20, 0
    %p146 = por %p144, %p145
    %p147 = scmp.ne.s32.totalorder %s135, %s136
    %p148 = scmp.eq.s32.totalorder %s21, 2
    %p149 = por %p147, %p148
    %p151 = scmp.ne.s32.totalorder %s136, %s150
    %p152 = scmp.eq.s32.totalorder %s21, 0
    %p153 = por %p151, %p152
    %s155 = sadd.s32 %s154, 1
    %p158 = scmp.eq.s32.totalorder %s15, 2
    %p159 = scmp.ne.s32.totalorder %s154, %s156
    %p160 = scmp.eq.s32.totalorder %s15, 0
    %p161 = por %p159, %p160
    %p162 = scmp.ne.s32.totalorder %s154, %s156
    %p163 = scmp.eq.s32.totalorder %s20, 2
    %p164 = por %p162, %p163
    %p165 = scmp.ne.s32.totalorder %s156, %s157
    %p166 = scmp.eq.s32.totalorder %s20, 0
    %p167 = por %p165, %p166
    %p168 = scmp.ne.s32.totalorder %s156, %s157
    %p169 = scmp.eq.s32.totalorder %s21, 2
    %p170 = por %p168, %p169
    %p172 = scmp.ne.s32.totalorder %s157, %s171
    %p173 = scmp.eq.s32.totalorder %s21, 0
    %p174 = por %p172, %p173
    %s175 = ssub.s32 %s15, %s22
    %p176 = scmp.eq.s32.totalorder %s175, 0
    %s178 = sadd.s32 %s177, 1
    %s179 = scalar_select %p176, %s177, %s178
    %p182 = pneg %p176
    %p183 = scmp.eq.s32.totalorder %s15, 2
    %p184 = por %p182, %p183
    %p185 = scmp.ne.s32.totalorder %s177, %s180
    %p186 = scmp.eq.s32.totalorder %s15, 0
    %p187 = por %p185, %p186
    %p188 = scmp.ne.s32.totalorder %s177, %s180
    %p189 = scmp.eq.s32.totalorder %s20, 2
    %p190 = por %p188, %p189
    %p191 = scmp.ne.s32.totalorder %s180, %s181
    %p192 = scmp.eq.s32.totalorder %s20, 0
    %p193 = por %p191, %p192
    %p194 = scmp.ne.s32.totalorder %s180, %s181
    %p195 = scmp.eq.s32.totalorder %s21, 2
    %p196 = por %p194, %p195
    %p198 = scmp.ne.s32.totalorder %s181, %s197
    %p199 = scmp.eq.s32.totalorder %s21, 0
    %p200 = por %p198, %p199
    %s201 = ssub.s32 %s15, %s22
    %p202 = scmp.eq.s32.totalorder %s201, 0
    %s204 = sadd.s32 %s203, 1
    %s205 = scalar_select %p202, %s203, %s204
    %p208 = pneg %p202
    %p209 = scmp.eq.s32.totalorder %s15, 2
    %p210 = por %p208, %p209
    %p211 = scmp.ne.s32.totalorder %s203, %s206
    %p212 = scmp.eq.s32.totalorder %s15, 0
    %p213 = por %p211, %p212
    %p214 = scmp.ne.s32.totalorder %s203, %s206
    %p215 = scmp.eq.s32.totalorder %s20, 2
    %p216 = por %p214, %p215
    %p217 = scmp.ne.s32.totalorder %s206, %s207
    %p218 = scmp.eq.s32.totalorder %s20, 0
    %p219 = por %p217, %p218
    %p220 = scmp.ne.s32.totalorder %s206, %s207
    %p221 = scmp.eq.s32.totalorder %s21, 2
    %p222 = por %p220, %p221
    %p224 = scmp.ne.s32.totalorder %s207, %s223
    %p225 = scmp.eq.s32.totalorder %s21, 0
    %p226 = por %p224, %p225
    %p227 = scmp.le.s32.totalorder 1, %s15
    %p228 = scmp.lt.s32.totalorder %s15, 4
    %p229 = pnand %p227, %p228
    %p230 = pneg %p229
    // Predicated region
    $region9: #{model_forward.14} parent=5 // pred_check
      _
    $region10: #{model_forward.14} parent=5 // pred_check_branch
      %232 = sbr.rel (%p229) target = $region12
    $region11: #{model_forward.14} parent=5 // pred_region
      %s233 = ssub.s32 %s15, 1
      // Predicated region
      $region13: #{model_forward.14} parent=11 // pred_check
        %p234 = pneg %p62
      $region14: #{model_forward.14} parent=11 // pred_check_branch
        %236 = sbr.rel (%p234) target = $region16
      $region15: #{model_forward.14} parent=11 // pred_region
        _
      $region16: #{model_forward.14} parent=11 // pred_fallthru
        _
      // Predicated region
      $region17: #{model_forward.14} parent=11 // pred_check
        %p237 = pneg %p83
      $region18: #{model_forward.14} parent=11 // pred_check_branch
        %239 = sbr.rel (%p237) target = $region20
      $region19: #{model_forward.14} parent=11 // pred_region
        _
      $region20: #{model_forward.14} parent=11 // pred_fallthru
        _
      // Predicated region
      $region21: #{model_forward.14} parent=11 // pred_check
        %p240 = pneg %p104
      $region22: #{model_forward.14} parent=11 // pred_check_branch
        %242 = sbr.rel (%p240) target = $region24
      $region23: #{model_forward.14} parent=11 // pred_region
        _
      $region24: #{model_forward.14} parent=11 // pred_fallthru
        _
      // Predicated region
      $region25: #{model_forward.14} parent=11 // pred_check
        %p243 = pneg %p125
      $region26: #{model_forward.14} parent=11 // pred_check_branch
        %245 = sbr.rel (%p243) target = $region28
      $region27: #{model_forward.14} parent=11 // pred_region
        _
      $region28: #{model_forward.14} parent=11 // pred_fallthru
        _
      // Predicated region
      $region29: #{model_forward.14} parent=11 // pred_check
        %p246 = pneg %p146
      $region30: #{model_forward.14} parent=11 // pred_check_branch
        %248 = sbr.rel (%p246) target = $region32
      $region31: #{model_forward.14} parent=11 // pred_region
        _
      $region32: #{model_forward.14} parent=11 // pred_fallthru
        _
      // Predicated region
      $region33: #{model_forward.14} parent=11 // pred_check
        %p249 = pneg %p167
      $region34: #{model_forward.14} parent=11 // pred_check_branch
        %251 = sbr.rel (%p249) target = $region36
      $region35: #{model_forward.14} parent=11 // pred_region
        _
      $region36: #{model_forward.14} parent=11 // pred_fallthru
        _
    $region12: #{model_forward.14} parent=5 // pred_fallthru
      _
    %p252 = scmp.lt.s32.totalorder %s15, 3
    // Predicated region
    $region37: #{model_forward.14} parent=5 // pred_check
      %p253 = pneg %p252
    $region38: #{model_forward.14} parent=5 // pred_check_branch
      %255 = sbr.rel (%p253) target = $region40
    $region39: #{model_forward.14} parent=5 // pred_region
      // Predicated region
      $region41: #{model_forward.14} parent=39 // pred_check
        %p256 = pneg %p35
      $region42: #{model_forward.14} parent=39 // pred_check_branch
        %258 = sbr.rel (%p256) target = $region44
      $region43: #{model_forward.14} parent=39 // pred_region
        %p259 = scmp.lt.s32.totalorder %s15, 2
        %s260 = scalar_select %p259, %s15, 2
        %s261 = smul.addr %s260, 8
        %s262 = scalar_lea.vmem %s0, %s261
      $region44: #{model_forward.14} parent=39 // pred_fallthru
        _
    $region40: #{model_forward.14} parent=5 // pred_fallthru
      _
    %p263 = scmp.le.s32.totalorder 1, %s15
    %p264 = scmp.lt.s32.totalorder %s15, 4
    %p265 = pnand %p263, %p264
    %p266 = pneg %p265
    // Predicated region
    $region45: #{model_forward.14} parent=5 // pred_check
      _
    $region46: #{model_forward.14} parent=5 // pred_check_branch
      %268 = sbr.rel (%p265) target = $region48
    $region47: #{model_forward.14} parent=5 // pred_region
      %s269 = ssub.s32 %s15, 1
      %p270 = scmp.lt.s32.totalorder %s20, 2
      %s271 = scalar_select %p270, %s20, 2
      %s272 = smul.addr %s271, 8
      %s273 = scalar_lea.vmem %s0, %s272
      %p274 = pneg %p41
      %p275 = pneg %p38
      %p276 = pneg %p62
      %p277 = pneg %p59
      %p278 = pneg %p83
      %p279 = pneg %p80
      %p280 = pneg %p104
      %p281 = pneg %p101
      %p282 = pneg %p125
      %p283 = pneg %p122
      %p284 = pneg %p146
      %p285 = pneg %p143
      %p286 = pneg %p167
      %p287 = pneg %p164
      %p288 = pneg %p193
      %p289 = pneg %p190
      %p290 = scmp.lt.s32.totalorder %s20, 2
      %s291 = scalar_select %p290, %s20, 2
      %s292 = smul.addr %s291, 8
      %s293 = scalar_lea.vmem %s7, %s292
      %p294 = pneg %p219
      %p295 = pneg %p216
      %p296 = scmp.lt.s32.totalorder %s20, 2
      %s297 = scalar_select %p296, %s20, 2
      %s298 = smul.addr %s297, 8
      %s299 = scalar_lea.vmem %s8, %s298
      %p300 = scmp.lt.s32.totalorder %s20, 2
      %s301 = scalar_select %p300, %s20, 2
      %s302 = smul.addr %s301, 8
      %s303 = scalar_lea.vmem %s0, %s302
      %p304 = scmp.lt.s32.totalorder %s20, 2
      %s305 = scalar_select %p304, %s20, 2
      %s306 = smul.addr %s305, 8
      %s307 = scalar_lea.vmem %s7, %s306
      %p308 = scmp.lt.s32.totalorder %s20, 2
      %s309 = scalar_select %p308, %s20, 2
      %s310 = smul.addr %s309, 8
      %s311 = scalar_lea.vmem %s8, %s310
      %v312 = vld [vmem:[%s303] sm:$0xff]
      %v313 = vld [vmem:[%s1] sm:$0xff]
      %v314 = vld [vmem:[%s1 + $0x8] sm:$0xff]
      %v315 = vld [vmem:[%s1 + $0x10] sm:$0xff]
      %v316 = vld [vmem:[%s1 + $0x18] sm:$0xff]
      %v317 = vld [vmem:[%s2] sm:$0x1]
      %v319 = vlaneseq
      %v320 = vshrl.u32 %v319, 7
      %v321 = vsub.s32 0, %v320
      %v322 = vrot.slane %v317, %v321
      %vm324 = vcmask 261120
      %v326 = vsel %vm324, %v312, 0
      %328 = vmatprep.subr.mxu0 0.0
      %v329 = vand.u32 %v313, 4294901760
      %330 = vmatpush1.msra.mxu0 %v329
      %331 = vmatprep.subr.mxu0 0.0
      %v332 = vand.u32 %v314, 4294901760
      %333 = vmatpush1.msra.mxu0 %v332
      %334 = vmatprep.subr.mxu0 0.0
      %v335 = vand.u32 %v315, 4294901760
      %336 = vmatpush1.msra.mxu0 %v335
      %337 = vmatprep.subr.mxu0 0.0
      %v338 = vand.u32 %v316, 4294901760
      %339 = vmatpush1.msra.mxu0 %v338
      %340 = vmatprep.subr.mxu0 0.0
      %341 = vmatpush1.msra.mxu0 0.0
      %342 = vmatprep.subr.mxu0 0.0
      %343 = vmatpush1.msra.mxu0 0.0
      %344 = vmatprep.subr.mxu0 0.0
      %345 = vmatpush1.msra.mxu0 0.0
      %346 = vmatprep.subr.mxu0 0.0
      %347 = vmatpush1.msra.mxu0 0.0
      %348 = vmatprep.subr.mxu0 0.0
      %349 = vmatpush1.msra.mxu0 0.0
      %350 = vmatprep.subr.mxu0 0.0
      %351 = vmatpush1.msra.mxu0 0.0
      %352 = vmatprep.subr.mxu0 0.0
      %353 = vmatpush1.msra.mxu0 0.0
      %354 = vmatprep.subr.mxu0 0.0
      %355 = vmatpush1.msra.mxu0 0.0
      %356 = vmatprep.subr.mxu0 0.0
      %357 = vmatpush1.msra.mxu0 0.0
      %358 = vmatprep.subr.mxu0 0.0
      %359 = vmatpush1.msra.mxu0 0.0
      %360 = vmatprep.subr.mxu0 0.0
      %361 = vmatpush1.msra.mxu0 0.0
      %362 = vmatprep.subr.mxu0 0.0
      %363 = vmatpush1.msra.mxu0 0.0
      %364 = vmatprep.subr.mxu0 0.0
      %365 = vmatpush1.msra.mxu0 0.0
      %366 = vmatprep.subr.mxu0 0.0
      %367 = vmatpush1.msra.mxu0 0.0
      %368 = vmatprep.subr.mxu0 0.0
      %369 = vmatpush1.msra.mxu0 0.0
      %370 = vmatprep.subr.mxu0 0.0
      %371 = vmatpush1.msra.mxu0 0.0
      %372 = vmatprep.subr.mxu0 0.0
      %373 = vmatpush1.msra.mxu0 0.0
      %374 = vmatprep.subr.mxu0 0.0
      %375 = vmatpush1.msra.mxu0 0.0
      %376 = vmatprep.subr.mxu0 0.0
      %377 = vmatpush1.msra.mxu0 0.0
      %378 = vmatprep.subr.mxu0 0.0
      %379 = vmatpush1.msra.mxu0 0.0
      %380 = vmatprep.subr.mxu0 0.0
      %381 = vmatpush1.msra.mxu0 0.0
      %382 = vmatprep.subr.mxu0 0.0
      %383 = vmatpush1.msra.mxu0 0.0
      %384 = vmatprep.subr.mxu0 0.0
      %385 = vmatpush1.msra.mxu0 0.0
      %386 = vmatprep.subr.mxu0 0.0
      %387 = vmatpush1.msra.mxu0 0.0
      %388 = vmatprep.subr.mxu0 0.0
      %389 = vmatpush1.msra.mxu0 0.0
      %390 = vmatprep.subr.mxu0 0.0
      %391 = vmatpush1.msra.mxu0 0.0
      %392 = vmatprep.subr.mxu0 0.0
      %393 = vmatpush1.msra.mxu0 0.0
      %394 = vmatprep.subr.mxu0 0.0
      %395 = vmatpush1.msra.mxu0 0.0
      %396 = vmatprep.mubr.f32.mxu0 0.0
      %v397 = vand.u32 %v326, 4294901760
      %v398 = vsub.f32 %v326, %v397
      %v399 = vand.u32 %v398, 4294901760
      %v400 = vsub.f32 %v398, %v399
      %v401 = vand.u32 %v400, 4294901760
      %402 = vmatmul.mubr.f32.gmra.mrb[0].mxu0 %v401
      %v403 = vpop.f32.mrb[0].mxu0
      %v404 = vadd.f32 %v322, %v403
      %v405 = vpop.f32.mrb[0].mxu0
      %406 = vdwg.mxu0
      %407 = vmatprep.subr.mxu0 0.0
      %v408 = vand.u32 %v313, 4294901760
      %v409 = vsub.f32 %v313, %v408
      %v410 = vand.u32 %v409, 4294901760
      %v411 = vsub.f32 %v409, %v410
      %v412 = vand.u32 %v411, 4294901760
      %413 = vmatpush1.msra.mxu0 %v412
      %414 = vmatprep.subr.mxu0 0.0
      %v415 = vand.u32 %v314, 4294901760
      %v416 = vsub.f32 %v314, %v415
      %v417 = vand.u32 %v416, 4294901760
      %v418 = vsub.f32 %v416, %v417
      %v419 = vand.u32 %v418, 4294901760
      %420 = vmatpush1.msra.mxu0 %v419
      %421 = vmatprep.subr.mxu0 0.0
      %v422 = vand.u32 %v315, 4294901760
      %v423 = vsub.f32 %v315, %v422
      %v424 = vand.u32 %v423, 4294901760
      %v425 = vsub.f32 %v423, %v424
      %v426 = vand.u32 %v425, 4294901760
      %427 = vmatpush1.msra.mxu0 %v426
      %428 = vmatprep.subr.mxu0 0.0
      %v429 = vand.u32 %v316, 4294901760
      %v430 = vsub.f32 %v316, %v429
      %v431 = vand.u32 %v430, 4294901760
      %v432 = vsub.f32 %v430, %v431
      %v433 = vand.u32 %v432, 4294901760
      %434 = vmatpush1.msra.mxu0 %v433
      %435 = vmatprep.subr.mxu0 0.0
      %436 = vmatpush1.msra.mxu0 0.0
      %437 = vmatprep.subr.mxu0 0.0
      %438 = vmatpush1.msra.mxu0 0.0
      %439 = vmatprep.subr.mxu0 0.0
      %440 = vmatpush1.msra.mxu0 0.0
      %441 = vmatprep.subr.mxu0 0.0
      %442 = vmatpush1.msra.mxu0 0.0
      %443 = vmatprep.subr.mxu0 0.0
      %444 = vmatpush1.msra.mxu0 0.0
      %445 = vmatprep.subr.mxu0 0.0
      %446 = vmatpush1.msra.mxu0 0.0
      %447 = vmatprep.subr.mxu0 0.0
      %448 = vmatpush1.msra.mxu0 0.0
      %449 = vmatprep.subr.mxu0 0.0
      %450 = vmatpush1.msra.mxu0 0.0
      %451 = vmatprep.subr.mxu0 0.0
      %452 = vmatpush1.msra.mxu0 0.0
      %453 = vmatprep.subr.mxu0 0.0
      %454 = vmatpush1.msra.mxu0 0.0
      %455 = vmatprep.subr.mxu0 0.0
      %456 = vmatpush1.msra.mxu0 0.0
      %457 = vmatprep.subr.mxu0 0.0
      %458 = vmatpush1.msra.mxu0 0.0
      %459 = vmatprep.subr.mxu0 0.0
      %460 = vmatpush1.msra.mxu0 0.0
      %461 = vmatprep.subr.mxu0 0.0
      %462 = vmatpush1.msra.mxu0 0.0
      %463 = vmatprep.subr.mxu0 0.0
      %464 = vmatpush1.msra.mxu0 0.0
      %465 = vmatprep.subr.mxu0 0.0
      %466 = vmatpush1.msra.mxu0 0.0
      %467 = vmatprep.subr.mxu0 0.0
      %468 = vmatpush1.msra.mxu0 0.0
      %469 = vmatprep.subr.mxu0 0.0
      %470 = vmatpush1.msra.mxu0 0.0
      %471 = vmatprep.subr.mxu0 0.0
      %472 = vmatpush1.msra.mxu0 0.0
      %473 = vmatprep.subr.mxu0 0.0
      %474 = vmatpush1.msra.mxu0 0.0
      %475 = vmatprep.subr.mxu0 0.0
      %476 = vmatpush1.msra.mxu0 0.0
      %477 = vmatprep.subr.mxu0 0.0
      %478 = vmatpush1.msra.mxu0 0.0
      %479 = vmatprep.subr.mxu0 0.0
      %480 = vmatpush1.msra.mxu0 0.0
      %481 = vmatprep.subr.mxu0 0.0
      %482 = vmatpush1.msra.mxu0 0.0
      %483 = vmatprep.subr.mxu0 0.0
      %484 = vmatpush1.msra.mxu0 0.0
      %485 = vmatprep.subr.mxu0 0.0
      %486 = vmatpush1.msra.mxu0 0.0
      %487 = vmatprep.subr.mxu0 0.0
      %488 = vmatpush1.msra.mxu0 0.0
      %489 = vmatprep.subr.mxu0 0.0
      %490 = vmatpush1.msra.mxu0 0.0
      %491 = vmatprep.mubr.f32.mxu0 0.0
      %v492 = vand.u32 %v326, 4294901760
      %493 = vmatmul.mubr.f32.gmra.mrb[0].mxu0 %v492
      %v494 = vpop.f32.mrb[0].mxu0
      %v495 = vadd.f32 %v404, %v494
      %v496 = vpop.f32.mrb[0].mxu0
      %497 = vdwg.mxu0
      %498 = vmatprep.subr.mxu0 0.0
      %v499 = vand.u32 %v313, 4294901760
      %v500 = vsub.f32 %v313, %v499
      %501 = vmatpush1.msra.mxu0 %v500
      %502 = vmatprep.subr.mxu0 0.0
      %v503 = vand.u32 %v314, 4294901760
      %v504 = vsub.f32 %v314, %v503
      %505 = vmatpush1.msra.mxu0 %v504
      %506 = vmatprep.subr.mxu0 0.0
      %v507 = vand.u32 %v315, 4294901760
      %v508 = vsub.f32 %v315, %v507
      %509 = vmatpush1.msra.mxu0 %v508
      %510 = vmatprep.subr.mxu0 0.0
      %v511 = vand.u32 %v316, 4294901760
      %v512 = vsub.f32 %v316, %v511
      %513 = vmatpush1.msra.mxu0 %v512
      %514 = vmatprep.subr.mxu0 0.0
      %515 = vmatpush1.msra.mxu0 0.0
      %516 = vmatprep.subr.mxu0 0.0
      %517 = vmatpush1.msra.mxu0 0.0
      %518 = vmatprep.subr.mxu0 0.0
      %519 = vmatpush1.msra.mxu0 0.0
      %520 = vmatprep.subr.mxu0 0.0
      %521 = vmatpush1.msra.mxu0 0.0
      %522 = vmatprep.subr.mxu0 0.0
      %523 = vmatpush1.msra.mxu0 0.0
      %524 = vmatprep.subr.mxu0 0.0
      %525 = vmatpush1.msra.mxu0 0.0
      %526 = vmatprep.subr.mxu0 0.0
      %527 = vmatpush1.msra.mxu0 0.0
      %528 = vmatprep.subr.mxu0 0.0
      %529 = vmatpush1.msra.mxu0 0.0
      %530 = vmatprep.subr.mxu0 0.0
      %531 = vmatpush1.msra.mxu0 0.0
      %532 = vmatprep.subr.mxu0 0.0
      %533 = vmatpush1.msra.mxu0 0.0
      %534 = vmatprep.subr.mxu0 0.0
      %535 = vmatpush1.msra.mxu0 0.0
      %536 = vmatprep.subr.mxu0 0.0
      %537 = vmatpush1.msra.mxu0 0.0
      %538 = vmatprep.subr.mxu0 0.0
      %539 = vmatpush1.msra.mxu0 0.0
      %540 = vmatprep.subr.mxu0 0.0
      %541 = vmatpush1.msra.mxu0 0.0
      %542 = vmatprep.subr.mxu0 0.0
      %543 = vmatpush1.msra.mxu0 0.0
      %544 = vmatprep.subr.mxu0 0.0
      %545 = vmatpush1.msra.mxu0 0.0
      %546 = vmatprep.subr.mxu0 0.0
      %547 = vmatpush1.msra.mxu0 0.0
      %548 = vmatprep.subr.mxu0 0.0
      %549 = vmatpush1.msra.mxu0 0.0
      %550 = vmatprep.subr.mxu0 0.0
      %551 = vmatpush1.msra.mxu0 0.0
      %552 = vmatprep.subr.mxu0 0.0
      %553 = vmatpush1.msra.mxu0 0.0
      %554 = vmatprep.subr.mxu0 0.0
      %555 = vmatpush1.msra.mxu0 0.0
      %556 = vmatprep.subr.mxu0 0.0
      %557 = vmatpush1.msra.mxu0 0.0
      %558 = vmatprep.subr.mxu0 0.0
      %559 = vmatpush1.msra.mxu0 0.0
      %560 = vmatprep.subr.mxu0 0.0
      %561 = vmatpush1.msra.mxu0 0.0
      %562 = vmatprep.subr.mxu0 0.0
      %563 = vmatpush1.msra.mxu0 0.0
      %564 = vmatprep.subr.mxu0 0.0
      %565 = vmatpush1.msra.mxu0 0.0
      %566 = vmatprep.subr.mxu0 0.0
      %567 = vmatpush1.msra.mxu0 0.0
      %568 = vmatprep.subr.mxu0 0.0
      %569 = vmatpush1.msra.mxu0 0.0
      %570 = vmatprep.mubr.f32.mxu0 0.0
      %v571 = vand.u32 %v326, 4294901760
      %v572 = vsub.f32 %v326, %v571
      %573 = vmatmul.mubr.f32.gmra.mrb[0].mxu0 %v572
      %v574 = vpop.f32.mrb[0].mxu0
      %v575 = vadd.f32 %v495, %v574
      %v576 = vpop.f32.mrb[0].mxu0
      %577 = vdwg.mxu0
      %578 = vmatprep.subr.mxu0 0.0
      %v579 = vand.u32 %v313, 4294901760
      %580 = vmatpush1.msra.mxu0 %v579
      %581 = vmatprep.subr.mxu0 0.0
      %v582 = vand.u32 %v314, 4294901760
      %583 = vmatpush1.msra.mxu0 %v582
      %584 = vmatprep.subr.mxu0 0.0
      %v585 = vand.u32 %v315, 4294901760
      %586 = vmatpush1.msra.mxu0 %v585
      %587 = vmatprep.subr.mxu0 0.0
      %v588 = vand.u32 %v316, 4294901760
      %589 = vmatpush1.msra.mxu0 %v588
      %590 = vmatprep.subr.mxu0 0.0
      %591 = vmatpush1.msra.mxu0 0.0
      %592 = vmatprep.subr.mxu0 0.0
      %593 = vmatpush1.msra.mxu0 0.0
      %594 = vmatprep.subr.mxu0 0.0
      %595 = vmatpush1.msra.mxu0 0.0
      %596 = vmatprep.subr.mxu0 0.0
      %597 = vmatpush1.msra.mxu0 0.0
      %598 = vmatprep.subr.mxu0 0.0
      %599 = vmatpush1.msra.mxu0 0.0
      %600 = vmatprep.subr.mxu0 0.0
      %601 = vmatpush1.msra.mxu0 0.0
      %602 = vmatprep.subr.mxu0 0.0
      %603 = vmatpush1.msra.mxu0 0.0
      %604 = vmatprep.subr.mxu0 0.0
      %605 = vmatpush1.msra.mxu0 0.0
      %606 = vmatprep.subr.mxu0 0.0
      %607 = vmatpush1.msra.mxu0 0.0
      %608 = vmatprep.subr.mxu0 0.0
      %609 = vmatpush1.msra.mxu0 0.0
      %610 = vmatprep.subr.mxu0 0.0
      %611 = vmatpush1.msra.mxu0 0.0
      %612 = vmatprep.subr.mxu0 0.0
      %613 = vmatpush1.msra.mxu0 0.0
      %614 = vmatprep.subr.mxu0 0.0
      %615 = vmatpush1.msra.mxu0 0.0
      %616 = vmatprep.subr.mxu0 0.0
      %617 = vmatpush1.msra.mxu0 0.0
      %618 = vmatprep.subr.mxu0 0.0
      %619 = vmatpush1.msra.mxu0 0.0
      %620 = vmatprep.subr.mxu0 0.0
      %621 = vmatpush1.msra.mxu0 0.0
      %622 = vmatprep.subr.mxu0 0.0
      %623 = vmatpush1.msra.mxu0 0.0
      %624 = vmatprep.subr.mxu0 0.0
      %625 = vmatpush1.msra.mxu0 0.0
      %626 = vmatprep.subr.mxu0 0.0
      %627 = vmatpush1.msra.mxu0 0.0
      %628 = vmatprep.subr.mxu0 0.0
      %629 = vmatpush1.msra.mxu0 0.0
      %630 = vmatprep.subr.mxu0 0.0
      %631 = vmatpush1.msra.mxu0 0.0
      %632 = vmatprep.subr.mxu0 0.0
      %633 = vmatpush1.msra.mxu0 0.0
      %634 = vmatprep.subr.mxu0 0.0
      %635 = vmatpush1.msra.mxu0 0.0
      %636 = vmatprep.subr.mxu0 0.0
      %637 = vmatpush1.msra.mxu0 0.0
      %638 = vmatprep.subr.mxu0 0.0
      %639 = vmatpush1.msra.mxu0 0.0
      %640 = vmatprep.subr.mxu0 0.0
      %641 = vmatpush1.msra.mxu0 0.0
      %642 = vmatprep.subr.mxu0 0.0
      %643 = vmatpush1.msra.mxu0 0.0
      %644 = vmatprep.subr.mxu0 0.0
      %645 = vmatpush1.msra.mxu0 0.0
      %646 = vmatprep.mubr.f32.mxu0 0.0
      %v647 = vand.u32 %v326, 4294901760
      %v648 = vsub.f32 %v326, %v647
      %v649 = vand.u32 %v648, 4294901760
      %650 = vmatmul.mubr.f32.gmra.mrb[0].mxu0 %v649
      %v651 = vpop.f32.mrb[0].mxu0
      %v652 = vadd.f32 %v575, %v651
      %v653 = vpop.f32.mrb[0].mxu0
      %654 = vdwg.mxu0
      %655 = vmatprep.subr.mxu0 0.0
      %v656 = vand.u32 %v313, 4294901760
      %v657 = vsub.f32 %v313, %v656
      %v658 = vand.u32 %v657, 4294901760
      %659 = vmatpush1.msra.mxu0 %v658
      %660 = vmatprep.subr.mxu0 0.0
      %v661 = vand.u32 %v314, 4294901760
      %v662 = vsub.f32 %v314, %v661
      %v663 = vand.u32 %v662, 4294901760
      %664 = vmatpush1.msra.mxu0 %v663
      %665 = vmatprep.subr.mxu0 0.0
      %v666 = vand.u32 %v315, 4294901760
      %v667 = vsub.f32 %v315, %v666
      %v668 = vand.u32 %v667, 4294901760
      %669 = vmatpush1.msra.mxu0 %v668
      %670 = vmatprep.subr.mxu0 0.0
      %v671 = vand.u32 %v316, 4294901760
      %v672 = vsub.f32 %v316, %v671
      %v673 = vand.u32 %v672, 4294901760
      %674 = vmatpush1.msra.mxu0 %v673
      %675 = vmatprep.subr.mxu0 0.0
      %676 = vmatpush1.msra.mxu0 0.0
      %677 = vmatprep.subr.mxu0 0.0
      %678 = vmatpush1.msra.mxu0 0.0
      %679 = vmatprep.subr.mxu0 0.0
      %680 = vmatpush1.msra.mxu0 0.0
      %681 = vmatprep.subr.mxu0 0.0
      %682 = vmatpush1.msra.mxu0 0.0
      %683 = vmatprep.subr.mxu0 0.0
      %684 = vmatpush1.msra.mxu0 0.0
      %685 = vmatprep.subr.mxu0 0.0
      %686 = vmatpush1.msra.mxu0 0.0
      %687 = vmatprep.subr.mxu0 0.0
      %688 = vmatpush1.msra.mxu0 0.0
      %689 = vmatprep.subr.mxu0 0.0
      %690 = vmatpush1.msra.mxu0 0.0
      %691 = vmatprep.subr.mxu0 0.0
      %692 = vmatpush1.msra.mxu0 0.0
      %693 = vmatprep.subr.mxu0 0.0
      %694 = vmatpush1.msra.mxu0 0.0
      %695 = vmatprep.subr.mxu0 0.0
      %696 = vmatpush1.msra.mxu0 0.0
      %697 = vmatprep.subr.mxu0 0.0
      %698 = vmatpush1.msra.mxu0 0.0
      %699 = vmatprep.subr.mxu0 0.0
      %700 = vmatpush1.msra.mxu0 0.0
      %701 = vmatprep.subr.mxu0 0.0
      %702 = vmatpush1.msra.mxu0 0.0
      %703 = vmatprep.subr.mxu0 0.0
      %704 = vmatpush1.msra.mxu0 0.0
      %705 = vmatprep.subr.mxu0 0.0
      %706 = vmatpush1.msra.mxu0 0.0
      %707 = vmatprep.subr.mxu0 0.0
      %708 = vmatpush1.msra.mxu0 0.0
      %709 = vmatprep.subr.mxu0 0.0
      %710 = vmatpush1.msra.mxu0 0.0
      %711 = vmatprep.subr.mxu0 0.0
      %712 = vmatpush1.msra.mxu0 0.0
      %713 = vmatprep.subr.mxu0 0.0
      %714 = vmatpush1.msra.mxu0 0.0
      %715 = vmatprep.subr.mxu0 0.0
      %716 = vmatpush1.msra.mxu0 0.0
      %717 = vmatprep.subr.mxu0 0.0
      %718 = vmatpush1.msra.mxu0 0.0
      %719 = vmatprep.subr.mxu0 0.0
      %720 = vmatpush1.msra.mxu0 0.0
      %721 = vmatprep.subr.mxu0 0.0
      %722 = vmatpush1.msra.mxu0 0.0
      %723 = vmatprep.subr.mxu0 0.0
      %724 = vmatpush1.msra.mxu0 0.0
      %725 = vmatprep.subr.mxu0 0.0
      %726 = vmatpush1.msra.mxu0 0.0
      %727 = vmatprep.subr.mxu0 0.0
      %728 = vmatpush1.msra.mxu0 0.0
      %729 = vmatprep.subr.mxu0 0.0
      %730 = vmatpush1.msra.mxu0 0.0
      %731 = vmatprep.mubr.f32.mxu0 0.0
      %v732 = vand.u32 %v326, 4294901760
      %733 = vmatmul.mubr.f32.gmra.mrb[0].mxu0 %v732
      %v734 = vpop.f32.mrb[0].mxu0
      %v735 = vadd.f32 %v652, %v734
      %v736 = vpop.f32.mrb[0].mxu0
      %737 = vdwg.mxu0
      %738 = vmatprep.subr.mxu0 0.0
      %v739 = vand.u32 %v313, 4294901760
      %740 = vmatpush1.msra.mxu0 %v739
      %741 = vmatprep.subr.mxu0 0.0
      %v742 = vand.u32 %v314, 4294901760
      %743 = vmatpush1.msra.mxu0 %v742
      %744 = vmatprep.subr.mxu0 0.0
      %v745 = vand.u32 %v315, 4294901760
      %746 = vmatpush1.msra.mxu0 %v745
      %747 = vmatprep.subr.mxu0 0.0
      %v748 = vand.u32 %v316, 4294901760
      %749 = vmatpush1.msra.mxu0 %v748
      %750 = vmatprep.subr.mxu0 0.0
      %751 = vmatpush1.msra.mxu0 0.0
      %752 = vmatprep.subr.mxu0 0.0
      %753 = vmatpush1.msra.mxu0 0.0
      %754 = vmatprep.subr.mxu0 0.0
      %755 = vmatpush1.msra.mxu0 0.0
      %756 = vmatprep.subr.mxu0 0.0
      %757 = vmatpush1.msra.mxu0 0.0
      %758 = vmatprep.subr.mxu0 0.0
      %759 = vmatpush1.msra.mxu0 0.0
      %760 = vmatprep.subr.mxu0 0.0
      %761 = vmatpush1.msra.mxu0 0.0
      %762 = vmatprep.subr.mxu0 0.0
      %763 = vmatpush1.msra.mxu0 0.0
      %764 = vmatprep.subr.mxu0 0.0
      %765 = vmatpush1.msra.mxu0 0.0
      %766 = vmatprep.subr.mxu0 0.0
      %767 = vmatpush1.msra.mxu0 0.0
      %768 = vmatprep.subr.mxu0 0.0
      %769 = vmatpush1.msra.mxu0 0.0
      %770 = vmatprep.subr.mxu0 0.0
      %771 = vmatpush1.msra.mxu0 0.0
      %772 = vmatprep.subr.mxu0 0.0
      %773 = vmatpush1.msra.mxu0 0.0
      %774 = vmatprep.subr.mxu0 0.0
      %775 = vmatpush1.msra.mxu0 0.0
      %776 = vmatprep.subr.mxu0 0.0
      %777 = vmatpush1.msra.mxu0 0.0
      %778 = vmatprep.subr.mxu0 0.0
      %779 = vmatpush1.msra.mxu0 0.0
      %780 = vmatprep.subr.mxu0 0.0
      %781 = vmatpush1.msra.mxu0 0.0
      %782 = vmatprep.subr.mxu0 0.0
      %783 = vmatpush1.msra.mxu0 0.0
      %784 = vmatprep.subr.mxu0 0.0
      %785 = vmatpush1.msra.mxu0 0.0
      %786 = vmatprep.subr.mxu0 0.0
      %787 = vmatpush1.msra.mxu0 0.0
      %788 = vmatprep.subr.mxu0 0.0
      %789 = vmatpush1.msra.mxu0 0.0
      %790 = vmatprep.subr.mxu0 0.0
      %791 = vmatpush1.msra.mxu0 0.0
      %792 = vmatprep.subr.mxu0 0.0
      %793 = vmatpush1.msra.mxu0 0.0
      %794 = vmatprep.subr.mxu0 0.0
      %795 = vmatpush1.msra.mxu0 0.0
      %796 = vmatprep.subr.mxu0 0.0
      %797 = vmatpush1.msra.mxu0 0.0
      %798 = vmatprep.subr.mxu0 0.0
      %799 = vmatpush1.msra.mxu0 0.0
      %800 = vmatprep.subr.mxu0 0.0
      %801 = vmatpush1.msra.mxu0 0.0
      %802 = vmatprep.subr.mxu0 0.0
      %803 = vmatpush1.msra.mxu0 0.0
      %804 = vmatprep.subr.mxu0 0.0
      %805 = vmatpush1.msra.mxu0 0.0
      %806 = vmatprep.mubr.f32.mxu0 0.0
      %v807 = vand.u32 %v326, 4294901760
      %808 = vmatmul.mubr.f32.gmra.mrb[0].mxu0 %v807
      %v809 = vpop.f32.mrb[0].mxu0
      %v810 = vadd.f32 %v735, %v809
      %v811 = vpop.f32.mrb[0].mxu0
      %812 = vdwg.mxu0
      %vm813 = vcmask 130048
      %814 = vst.msk [vmem:[%s307] sm:$0xff] %vm813, %v810
      %v815 = vld [vmem:[%s3] sm:$0xff]
      %v816 = vld [vmem:[%s3 + $0x8] sm:$0xff]
      %v817 = vld [vmem:[%s4] sm:$0x1]
      %v819 = vlaneseq
      %v820 = vshrl.u32 %v819, 7
      %v821 = vsub.s32 0, %v820
      %v822 = vrot.slane %v817, %v821
      %v825 = vsel %vm813, %v810, 0
      %827 = vmatprep.subr.mxu0 0.0
      %v828 = vand.u32 %v815, 4294901760
      %829 = vmatpush1.msra.mxu0 %v828
      %830 = vmatprep.subr.mxu0 0.0
      %v831 = vand.u32 %v816, 4294901760
      %832 = vmatpush1.msra.mxu0 %v831
      %833 = vmatprep.subr.mxu0 0.0
      %834 = vmatpush1.msra.mxu0 0.0
      %835 = vmatprep.subr.mxu0 0.0
      %836 = vmatpush1.msra.mxu0 0.0
      %837 = vmatprep.subr.mxu0 0.0
      %838 = vmatpush1.msra.mxu0 0.0
      %839 = vmatprep.subr.mxu0 0.0
      %840 = vmatpush1.msra.mxu0 0.0
      %841 = vmatprep.subr.mxu0 0.0
      %842 = vmatpush1.msra.mxu0 0.0
      %843 = vmatprep.subr.mxu0 0.0
      %844 = vmatpush1.msra.mxu0 0.0
      %845 = vmatprep.subr.mxu0 0.0
      %846 = vmatpush1.msra.mxu0 0.0
      %847 = vmatprep.subr.mxu0 0.0
      %848 = vmatpush1.msra.mxu0 0.0
      %849 = vmatprep.subr.mxu0 0.0
      %850 = vmatpush1.msra.mxu0 0.0
      %851 = vmatprep.subr.mxu0 0.0
      %852 = vmatpush1.msra.mxu0 0.0
      %853 = vmatprep.subr.mxu0 0.0
      %854 = vmatpush1.msra.mxu0 0.0
      %855 = vmatprep.subr.mxu0 0.0
      %856 = vmatpush1.msra.mxu0 0.0
      %857 = vmatprep.subr.mxu0 0.0
      %858 = vmatpush1.msra.mxu0 0.0
      %859 = vmatprep.subr.mxu0 0.0
      %860 = vmatpush1.msra.mxu0 0.0
      %861 = vmatprep.subr.mxu0 0.0
      %862 = vmatpush1.msra.mxu0 0.0
      %863 = vmatprep.subr.mxu0 0.0
      %864 = vmatpush1.msra.mxu0 0.0
      %865 = vmatprep.subr.mxu0 0.0
      %866 = vmatpush1.msra.mxu0 0.0
      %867 = vmatprep.subr.mxu0 0.0
      %868 = vmatpush1.msra.mxu0 0.0
      %869 = vmatprep.subr.mxu0 0.0
      %870 = vmatpush1.msra.mxu0 0.0
      %871 = vmatprep.subr.mxu0 0.0
      %872 = vmatpush1.msra.mxu0 0.0
      %873 = vmatprep.subr.mxu0 0.0
      %874 = vmatpush1.msra.mxu0 0.0
      %875 = vmatprep.subr.mxu0 0.0
      %876 = vmatpush1.msra.mxu0 0.0
      %877 = vmatprep.subr.mxu0 0.0
      %878 = vmatpush1.msra.mxu0 0.0
      %879 = vmatprep.subr.mxu0 0.0
      %880 = vmatpush1.msra.mxu0 0.0
      %881 = vmatprep.subr.mxu0 0.0
      %882 = vmatpush1.msra.mxu0 0.0
      %883 = vmatprep.subr.mxu0 0.0
      %884 = vmatpush1.msra.mxu0 0.0
      %885 = vmatprep.subr.mxu0 0.0
      %886 = vmatpush1.msra.mxu0 0.0
      %887 = vmatprep.subr.mxu0 0.0
      %888 = vmatpush1.msra.mxu0 0.0
      %889 = vmatprep.subr.mxu0 0.0
      %890 = vmatpush1.msra.mxu0 0.0
      %891 = vmatprep.subr.mxu0 0.0
      %892 = vmatpush1.msra.mxu0 0.0
      %893 = vmatprep.mubr.f32.mxu0 0.0
      %v894 = vand.u32 %v825, 4294901760
      %v895 = vsub.f32 %v825, %v894
      %v896 = vand.u32 %v895, 4294901760
      %v897 = vsub.f32 %v895, %v896
      %v898 = vand.u32 %v897, 4294901760
      %899 = vmatmul.mubr.f32.gmra.mrb[0].mxu0 %v898
      %v900 = vpop.f32.mrb[0].mxu0
      %v901 = vadd.f32 %v822, %v900
      %v902 = vpop.f32.mrb[0].mxu0
      %903 = vdwg.mxu0
      %904 = vmatprep.subr.mxu0 0.0
      %v905 = vand.u32 %v815, 4294901760
      %v906 = vsub.f32 %v815, %v905
      %v907 = vand.u32 %v906, 4294901760
      %v908 = vsub.f32 %v906, %v907
      %v909 = vand.u32 %v908, 4294901760
      %910 = vmatpush1.msra.mxu0 %v909
      %911 = vmatprep.subr.mxu0 0.0
      %v912 = vand.u32 %v816, 4294901760
      %v913 = vsub.f32 %v816, %v912
      %v914 = vand.u32 %v913, 4294901760
      %v915 = vsub.f32 %v913, %v914
      %v916 = vand.u32 %v915, 4294901760
      %917 = vmatpush1.msra.mxu0 %v916
      %918 = vmatprep.subr.mxu0 0.0
      %919 = vmatpush1.msra.mxu0 0.0
      %920 = vmatprep.subr.mxu0 0.0
      %921 = vmatpush1.msra.mxu0 0.0
      %922 = vmatprep.subr.mxu0 0.0
      %923 = vmatpush1.msra.mxu0 0.0
      %924 = vmatprep.subr.mxu0 0.0
      %925 = vmatpush1.msra.mxu0 0.0
      %926 = vmatprep.subr.mxu0 0.0
      %927 = vmatpush1.msra.mxu0 0.0
      %928 = vmatprep.subr.mxu0 0.0
      %929 = vmatpush1.msra.mxu0 0.0
      %930 = vmatprep.subr.mxu0 0.0
      %931 = vmatpush1.msra.mxu0 0.0
      %932 = vmatprep.subr.mxu0 0.0
      %933 = vmatpush1.msra.mxu0 0.0
      %934 = vmatprep.subr.mxu0 0.0
      %935 = vmatpush1.msra.mxu0 0.0
      %936 = vmatprep.subr.mxu0 0.0
      %937 = vmatpush1.msra.mxu0 0.0
      %938 = vmatprep.subr.mxu0 0.0
      %939 = vmatpush1.msra.mxu0 0.0
      %940 = vmatprep.subr.mxu0 0.0
      %941 = vmatpush1.msra.mxu0 0.0
      %942 = vmatprep.subr.mxu0 0.0
      %943 = vmatpush1.msra.mxu0 0.0
      %944 = vmatprep.subr.mxu0 0.0
      %945 = vmatpush1.msra.mxu0 0.0
      %946 = vmatprep.subr.mxu0 0.0
      %947 = vmatpush1.msra.mxu0 0.0
      %948 = vmatprep.subr.mxu0 0.0
      %949 = vmatpush1.msra.mxu0 0.0
      %950 = vmatprep.subr.mxu0 0.0
      %951 = vmatpush1.msra.mxu0 0.0
      %952 = vmatprep.subr.mxu0 0.0
      %953 = vmatpush1.msra.mxu0 0.0
      %954 = vmatprep.subr.mxu0 0.0
      %955 = vmatpush1.msra.mxu0 0.0
      %956 = vmatprep.subr.mxu0 0.0
      %957 = vmatpush1.msra.mxu0 0.0
      %958 = vmatprep.subr.mxu0 0.0
      %959 = vmatpush1.msra.mxu0 0.0
      %960 = vmatprep.subr.mxu0 0.0
      %961 = vmatpush1.msra.mxu0 0.0
      %962 = vmatprep.subr.mxu0 0.0
      %963 = vmatpush1.msra.mxu0 0.0
      %964 = vmatprep.subr.mxu0 0.0
      %965 = vmatpush1.msra.mxu0 0.0
      %966 = vmatprep.subr.mxu0 0.0
      %967 = vmatpush1.msra.mxu0 0.0
      %968 = vmatprep.subr.mxu0 0.0
      %969 = vmatpush1.msra.mxu0 0.0
      %970 = vmatprep.subr.mxu0 0.0
      %971 = vmatpush1.msra.mxu0 0.0
      %972 = vmatprep.subr.mxu0 0.0
      %973 = vmatpush1.msra.mxu0 0.0
      %974 = vmatprep.subr.mxu0 0.0
      %975 = vmatpush1.msra.mxu0 0.0
      %976 = vmatprep.subr.mxu0 0.0
      %977 = vmatpush1.msra.mxu0 0.0
      %978 = vmatprep.mubr.f32.mxu0 0.0
      %v979 = vand.u32 %v825, 4294901760
      %980 = vmatmul.mubr.f32.gmra.mrb[0].mxu0 %v979
      %v981 = vpop.f32.mrb[0].mxu0
      %v982 = vadd.f32 %v901, %v981
      %v983 = vpop.f32.mrb[0].mxu0
      %984 = vdwg.mxu0
      %985 = vmatprep.subr.mxu0 0.0
      %v986 = vand.u32 %v815, 4294901760
      %v987 = vsub.f32 %v815, %v986
      %988 = vmatpush1.msra.mxu0 %v987
      %989 = vmatprep.subr.mxu0 0.0
      %v990 = vand.u32 %v816, 4294901760
      %v991 = vsub.f32 %v816, %v990
      %992 = vmatpush1.msra.mxu0 %v991
      %993 = vmatprep.subr.mxu0 0.0
      %994 = vmatpush1.msra.mxu0 0.0
      %995 = vmatprep.subr.mxu0 0.0
      %996 = vmatpush1.msra.mxu0 0.0
      %997 = vmatprep.subr.mxu0 0.0
      %998 = vmatpush1.msra.mxu0 0.0
      %999 = vmatprep.subr.mxu0 0.0
      %1000 = vmatpush1.msra.mxu0 0.0
      %1001 = vmatprep.subr.mxu0 0.0
      %1002 = vmatpush1.msra.mxu0 0.0
      %1003 = vmatprep.subr.mxu0 0.0
      %1004 = vmatpush1.msra.mxu0 0.0
      %1005 = vmatprep.subr.mxu0 0.0
      %1006 = vmatpush1.msra.mxu0 0.0
      %1007 = vmatprep.subr.mxu0 0.0
      %1008 = vmatpush1.msra.mxu0 0.0
      %1009 = vmatprep.subr.mxu0 0.0
      %1010 = vmatpush1.msra.mxu0 0.0
      %1011 = vmatprep.subr.mxu0 0.0
      %1012 = vmatpush1.msra.mxu0 0.0
      %1013 = vmatprep.subr.mxu0 0.0
      %1014 = vmatpush1.msra.mxu0 0.0
      %1015 = vmatprep.subr.mxu0 0.0
      %1016 = vmatpush1.msra.mxu0 0.0
      %1017 = vmatprep.subr.mxu0 0.0
      %1018 = vmatpush1.msra.mxu0 0.0
      %1019 = vmatprep.subr.mxu0 0.0
      %1020 = vmatpush1.msra.mxu0 0.0
      %1021 = vmatprep.subr.mxu0 0.0
      %1022 = vmatpush1.msra.mxu0 0.0
      %1023 = vmatprep.subr.mxu0 0.0
      %1024 = vmatpush1.msra.mxu0 0.0
      %1025 = vmatprep.subr.mxu0 0.0
      %1026 = vmatpush1.msra.mxu0 0.0
      %1027 = vmatprep.subr.mxu0 0.0
      %1028 = vmatpush1.msra.mxu0 0.0
      %1029 = vmatprep.subr.mxu0 0.0
      %1030 = vmatpush1.msra.mxu0 0.0
      %1031 = vmatprep.subr.mxu0 0.0
      %1032 = vmatpush1.msra.mxu0 0.0
      %1033 = vmatprep.subr.mxu0 0.0
      %1034 = vmatpush1.msra.mxu0 0.0
      %1035 = vmatprep.subr.mxu0 0.0
      %1036 = vmatpush1.msra.mxu0 0.0
      %1037 = vmatprep.subr.mxu0 0.0
      %1038 = vmatpush1.msra.mxu0 0.0
      %1039 = vmatprep.subr.mxu0 0.0
      %1040 = vmatpush1.msra.mxu0 0.0
      %1041 = vmatprep.subr.mxu0 0.0
      %1042 = vmatpush1.msra.mxu0 0.0
      %1043 = vmatprep.subr.mxu0 0.0
      %1044 = vmatpush1.msra.mxu0 0.0
      %1045 = vmatprep.subr.mxu0 0.0
      %1046 = vmatpush1.msra.mxu0 0.0
      %1047 = vmatprep.subr.mxu0 0.0
      %1048 = vmatpush1.msra.mxu0 0.0
      %1049 = vmatprep.subr.mxu0 0.0
      %1050 = vmatpush1.msra.mxu0 0.0
      %1051 = vmatprep.subr.mxu0 0.0
      %1052 = vmatpush1.msra.mxu0 0.0
      %1053 = vmatprep.mubr.f32.mxu0 0.0
      %v1054 = vand.u32 %v825, 4294901760
      %v1055 = vsub.f32 %v825, %v1054
      %1056 = vmatmul.mubr.f32.gmra.mrb[0].mxu0 %v1055
      %v1057 = vpop.f32.mrb[0].mxu0
      %v1058 = vadd.f32 %v982, %v1057
      %v1059 = vpop.f32.mrb[0].mxu0
      %1060 = vdwg.mxu0
      %1061 = vmatprep.subr.mxu0 0.0
      %v1062 = vand.u32 %v815, 4294901760
      %1063 = vmatpush1.msra.mxu0 %v1062
      %1064 = vmatprep.subr.mxu0 0.0
      %v1065 = vand.u32 %v816, 4294901760
      %1066 = vmatpush1.msra.mxu0 %v1065
      %1067 = vmatprep.subr.mxu0 0.0
      %1068 = vmatpush1.msra.mxu0 0.0
      %1069 = vmatprep.subr.mxu0 0.0
      %1070 = vmatpush1.msra.mxu0 0.0
      %1071 = vmatprep.subr.mxu0 0.0
      %1072 = vmatpush1.msra.mxu0 0.0
      %1073 = vmatprep.subr.mxu0 0.0
      %1074 = vmatpush1.msra.mxu0 0.0
      %1075 = vmatprep.subr.mxu0 0.0
      %1076 = vmatpush1.msra.mxu0 0.0
      %1077 = vmatprep.subr.mxu0 0.0
      %1078 = vmatpush1.msra.mxu0 0.0
      %1079 = vmatprep.subr.mxu0 0.0
      %1080 = vmatpush1.msra.mxu0 0.0
      %1081 = vmatprep.subr.mxu0 0.0
      %1082 = vmatpush1.msra.mxu0 0.0
      %1083 = vmatprep.subr.mxu0 0.0
      %1084 = vmatpush1.msra.mxu0 0.0
      %1085 = vmatprep.subr.mxu0 0.0
      %1086 = vmatpush1.msra.mxu0 0.0
      %1087 = vmatprep.subr.mxu0 0.0
      %1088 = vmatpush1.msra.mxu0 0.0
      %1089 = vmatprep.subr.mxu0 0.0
      %1090 = vmatpush1.msra.mxu0 0.0
      %1091 = vmatprep.subr.mxu0 0.0
      %1092 = vmatpush1.msra.mxu0 0.0
      %1093 = vmatprep.subr.mxu0 0.0
      %1094 = vmatpush1.msra.mxu0 0.0
      %1095 = vmatprep.subr.mxu0 0.0
      %1096 = vmatpush1.msra.mxu0 0.0
      %1097 = vmatprep.subr.mxu0 0.0
      %1098 = vmatpush1.msra.mxu0 0.0
      %1099 = vmatprep.subr.mxu0 0.0
      %1100 = vmatpush1.msra.mxu0 0.0
      %1101 = vmatprep.subr.mxu0 0.0
      %1102 = vmatpush1.msra.mxu0 0.0
      %1103 = vmatprep.subr.mxu0 0.0
      %1104 = vmatpush1.msra.mxu0 0.0
      %1105 = vmatprep.subr.mxu0 0.0
      %1106 = vmatpush1.msra.mxu0 0.0
      %1107 = vmatprep.subr.mxu0 0.0
      %1108 = vmatpush1.msra.mxu0 0.0
      %1109 = vmatprep.subr.mxu0 0.0
      %1110 = vmatpush1.msra.mxu0 0.0
      %1111 = vmatprep.subr.mxu0 0.0
      %1112 = vmatpush1.msra.mxu0 0.0
      %1113 = vmatprep.subr.mxu0 0.0
      %1114 = vmatpush1.msra.mxu0 0.0
      %1115 = vmatprep.subr.mxu0 0.0
      %1116 = vmatpush1.msra.mxu0 0.0
      %1117 = vmatprep.subr.mxu0 0.0
      %1118 = vmatpush1.msra.mxu0 0.0
      %1119 = vmatprep.subr.mxu0 0.0
      %1120 = vmatpush1.msra.mxu0 0.0
      %1121 = vmatprep.subr.mxu0 0.0
      %1122 = vmatpush1.msra.mxu0 0.0
      %1123 = vmatprep.subr.mxu0 0.0
      %1124 = vmatpush1.msra.mxu0 0.0
      %1125 = vmatprep.subr.mxu0 0.0
      %1126 = vmatpush1.msra.mxu0 0.0
      %1127 = vmatprep.mubr.f32.mxu0 0.0
      %v1128 = vand.u32 %v825, 4294901760
      %v1129 = vsub.f32 %v825, %v1128
      %v1130 = vand.u32 %v1129, 4294901760
      %1131 = vmatmul.mubr.f32.gmra.mrb[0].mxu0 %v1130
      %v1132 = vpop.f32.mrb[0].mxu0
      %v1133 = vadd.f32 %v1058, %v1132
      %v1134 = vpop.f32.mrb[0].mxu0
      %1135 = vdwg.mxu0
      %1136 = vmatprep.subr.mxu0 0.0
      %v1137 = vand.u32 %v815, 4294901760
      %v1138 = vsub.f32 %v815, %v1137
      %v1139 = vand.u32 %v1138, 4294901760
      %1140 = vmatpush1.msra.mxu0 %v1139
      %1141 = vmatprep.subr.mxu0 0.0
      %v1142 = vand.u32 %v816, 4294901760
      %v1143 = vsub.f32 %v816, %v1142
      %v1144 = vand.u32 %v1143, 4294901760
      %1145 = vmatpush1.msra.mxu0 %v1144
      %1146 = vmatprep.subr.mxu0 0.0
      %1147 = vmatpush1.msra.mxu0 0.0
      %1148 = vmatprep.subr.mxu0 0.0
      %1149 = vmatpush1.msra.mxu0 0.0
      %1150 = vmatprep.subr.mxu0 0.0
      %1151 = vmatpush1.msra.mxu0 0.0
      %1152 = vmatprep.subr.mxu0 0.0
      %1153 = vmatpush1.msra.mxu0 0.0
      %1154 = vmatprep.subr.mxu0 0.0
      %1155 = vmatpush1.msra.mxu0 0.0
      %1156 = vmatprep.subr.mxu0 0.0
      %1157 = vmatpush1.msra.mxu0 0.0
      %1158 = vmatprep.subr.mxu0 0.0
      %1159 = vmatpush1.msra.mxu0 0.0
      %1160 = vmatprep.subr.mxu0 0.0
      %1161 = vmatpush1.msra.mxu0 0.0
      %1162 = vmatprep.subr.mxu0 0.0
      %1163 = vmatpush1.msra.mxu0 0.0
      %1164 = vmatprep.subr.mxu0 0.0
      %1165 = vmatpush1.msra.mxu0 0.0
      %1166 = vmatprep.subr.mxu0 0.0
      %1167 = vmatpush1.msra.mxu0 0.0
      %1168 = vmatprep.subr.mxu0 0.0
      %1169 = vmatpush1.msra.mxu0 0.0
      %1170 = vmatprep.subr.mxu0 0.0
      %1171 = vmatpush1.msra.mxu0 0.0
      %1172 = vmatprep.subr.mxu0 0.0
      %1173 = vmatpush1.msra.mxu0 0.0
      %1174 = vmatprep.subr.mxu0 0.0
      %1175 = vmatpush1.msra.mxu0 0.0
      %1176 = vmatprep.subr.mxu0 0.0
      %1177 = vmatpush1.msra.mxu0 0.0
      %1178 = vmatprep.subr.mxu0 0.0
      %1179 = vmatpush1.msra.mxu0 0.0
      %1180 = vmatprep.subr.mxu0 0.0
      %1181 = vmatpush1.msra.mxu0 0.0
      %1182 = vmatprep.subr.mxu0 0.0
      %1183 = vmatpush1.msra.mxu0 0.0
      %1184 = vmatprep.subr.mxu0 0.0
      %1185 = vmatpush1.msra.mxu0 0.0
      %1186 = vmatprep.subr.mxu0 0.0
      %1187 = vmatpush1.msra.mxu0 0.0
      %1188 = vmatprep.subr.mxu0 0.0
      %1189 = vmatpush1.msra.mxu0 0.0
      %1190 = vmatprep.subr.mxu0 0.0
      %1191 = vmatpush1.msra.mxu0 0.0
      %1192 = vmatprep.subr.mxu0 0.0
      %1193 = vmatpush1.msra.mxu0 0.0
      %1194 = vmatprep.subr.mxu0 0.0
      %1195 = vmatpush1.msra.mxu0 0.0
      %1196 = vmatprep.subr.mxu0 0.0
      %1197 = vmatpush1.msra.mxu0 0.0
      %1198 = vmatprep.subr.mxu0 0.0
      %1199 = vmatpush1.msra.mxu0 0.0
      %1200 = vmatprep.subr.mxu0 0.0
      %1201 = vmatpush1.msra.mxu0 0.0
      %1202 = vmatprep.subr.mxu0 0.0
      %1203 = vmatpush1.msra.mxu0 0.0
      %1204 = vmatprep.subr.mxu0 0.0
      %1205 = vmatpush1.msra.mxu0 0.0
      %1206 = vmatprep.mubr.f32.mxu0 0.0
      %v1207 = vand.u32 %v825, 4294901760
      %1208 = vmatmul.mubr.f32.gmra.mrb[0].mxu0 %v1207
      %v1209 = vpop.f32.mrb[0].mxu0
      %v1210 = vadd.f32 %v1133, %v1209
      %v1211 = vpop.f32.mrb[0].mxu0
      %1212 = vdwg.mxu0
      %1213 = vmatprep.subr.mxu0 0.0
      %v1214 = vand.u32 %v815, 4294901760
      %1215 = vmatpush1.msra.mxu0 %v1214
      %1216 = vmatprep.subr.mxu0 0.0
      %v1217 = vand.u32 %v816, 4294901760
      %1218 = vmatpush1.msra.mxu0 %v1217
      %1219 = vmatprep.subr.mxu0 0.0
      %1220 = vmatpush1.msra.mxu0 0.0
      %1221 = vmatprep.subr.mxu0 0.0
      %1222 = vmatpush1.msra.mxu0 0.0
      %1223 = vmatprep.subr.mxu0 0.0
      %1224 = vmatpush1.msra.mxu0 0.0
      %1225 = vmatprep.subr.mxu0 0.0
      %1226 = vmatpush1.msra.mxu0 0.0
      %1227 = vmatprep.subr.mxu0 0.0
      %1228 = vmatpush1.msra.mxu0 0.0
      %1229 = vmatprep.subr.mxu0 0.0
      %1230 = vmatpush1.msra.mxu0 0.0
      %1231 = vmatprep.subr.mxu0 0.0
      %1232 = vmatpush1.msra.mxu0 0.0
      %1233 = vmatprep.subr.mxu0 0.0
      %1234 = vmatpush1.msra.mxu0 0.0
      %1235 = vmatprep.subr.mxu0 0.0
      %1236 = vmatpush1.msra.mxu0 0.0
      %1237 = vmatprep.subr.mxu0 0.0
      %1238 = vmatpush1.msra.mxu0 0.0
      %1239 = vmatprep.subr.mxu0 0.0
      %1240 = vmatpush1.msra.mxu0 0.0
      %1241 = vmatprep.subr.mxu0 0.0
      %1242 = vmatpush1.msra.mxu0 0.0
      %1243 = vmatprep.subr.mxu0 0.0
      %1244 = vmatpush1.msra.mxu0 0.0
      %1245 = vmatprep.subr.mxu0 0.0
      %1246 = vmatpush1.msra.mxu0 0.0
      %1247 = vmatprep.subr.mxu0 0.0
      %1248 = vmatpush1.msra.mxu0 0.0
      %1249 = vmatprep.subr.mxu0 0.0
      %1250 = vmatpush1.msra.mxu0 0.0
      %1251 = vmatprep.subr.mxu0 0.0
      %1252 = vmatpush1.msra.mxu0 0.0
      %1253 = vmatprep.subr.mxu0 0.0
      %1254 = vmatpush1.msra.mxu0 0.0
      %1255 = vmatprep.subr.mxu0 0.0
      %1256 = vmatpush1.msra.mxu0 0.0
      %1257 = vmatprep.subr.mxu0 0.0
      %1258 = vmatpush1.msra.mxu0 0.0
      %1259 = vmatprep.subr.mxu0 0.0
      %1260 = vmatpush1.msra.mxu0 0.0
      %1261 = vmatprep.subr.mxu0 0.0
      %1262 = vmatpush1.msra.mxu0 0.0
      %1263 = vmatprep.subr.mxu0 0.0
      %1264 = vmatpush1.msra.mxu0 0.0
      %1265 = vmatprep.subr.mxu0 0.0
      %1266 = vmatpush1.msra.mxu0 0.0
      %1267 = vmatprep.subr.mxu0 0.0
      %1268 = vmatpush1.msra.mxu0 0.0
      %1269 = vmatprep.subr.mxu0 0.0
      %1270 = vmatpush1.msra.mxu0 0.0
      %1271 = vmatprep.subr.mxu0 0.0
      %1272 = vmatpush1.msra.mxu0 0.0
      %1273 = vmatprep.subr.mxu0 0.0
      %1274 = vmatpush1.msra.mxu0 0.0
      %1275 = vmatprep.subr.mxu0 0.0
      %1276 = vmatpush1.msra.mxu0 0.0
      %1277 = vmatprep.subr.mxu0 0.0
      %1278 = vmatpush1.msra.mxu0 0.0
      %1279 = vmatprep.mubr.f32.mxu0 0.0
      %v1280 = vand.u32 %v825, 4294901760
      %1281 = vmatmul.mubr.f32.gmra.mrb[0].mxu0 %v1280
      %v1282 = vpop.f32.mrb[0].mxu0
      %v1283 = vadd.f32 %v1210, %v1282
      %v1284 = vpop.f32.mrb[0].mxu0
      %1285 = vdwg.mxu0
      %v1286 = vmax.f32 %v1283, 0.0
      %v1287 = vld [vmem:[%s5] sm:$0xff]
      %v1288 = vld [vmem:[%s5 + $0x8] sm:$0xff]
      %v1289 = vld [vmem:[%s5 + $0x10] sm:$0xff]
      %v1290 = vld [vmem:[%s5 + $0x18] sm:$0xff]
      %v1291 = vld [vmem:[%s6] sm:$0x1]
      %v1293 = vlaneseq
      %v1294 = vshrl.u32 %v1293, 7
      %v1295 = vsub.s32 0, %v1294
      %v1296 = vrot.slane %v1291, %v1295
      %v1299 = vsel %vm324, %v1286, 0
      %1301 = vmatprep.subr.mxu0 0.0
      %v1302 = vand.u32 %v1287, 4294901760
      %1303 = vmatpush1.msra.mxu0 %v1302
      %1304 = vmatprep.subr.mxu0 0.0
      %v1305 = vand.u32 %v1288, 4294901760
      %1306 = vmatpush1.msra.mxu0 %v1305
      %1307 = vmatprep.subr.mxu0 0.0
      %v1308 = vand.u32 %v1289, 4294901760
      %1309 = vmatpush1.msra.mxu0 %v1308
      %1310 = vmatprep.subr.mxu0 0.0
      %v1311 = vand.u32 %v1290, 4294901760
      %1312 = vmatpush1.msra.mxu0 %v1311
      %1313 = vmatprep.subr.mxu0 0.0
      %1314 = vmatpush1.msra.mxu0 0.0
      %1315 = vmatprep.subr.mxu0 0.0
      %1316 = vmatpush1.msra.mxu0 0.0
      %1317 = vmatprep.subr.mxu0 0.0
      %1318 = vmatpush1.msra.mxu0 0.0
      %1319 = vmatprep.subr.mxu0 0.0
      %1320 = vmatpush1.msra.mxu0 0.0
      %1321 = vmatprep.subr.mxu0 0.0
      %1322 = vmatpush1.msra.mxu0 0.0
      %1323 = vmatprep.subr.mxu0 0.0
      %1324 = vmatpush1.msra.mxu0 0.0
      %1325 = vmatprep.subr.mxu0 0.0
      %1326 = vmatpush1.msra.mxu0 0.0
      %1327 = vmatprep.subr.mxu0 0.0
      %1328 = vmatpush1.msra.mxu0 0.0
      %1329 = vmatprep.subr.mxu0 0.0
      %1330 = vmatpush1.msra.mxu0 0.0
      %1331 = vmatprep.subr.mxu0 0.0
      %1332 = vmatpush1.msra.mxu0 0.0
      %1333 = vmatprep.subr.mxu0 0.0
      %1334 = vmatpush1.msra.mxu0 0.0
      %1335 = vmatprep.subr.mxu0 0.0
      %1336 = vmatpush1.msra.mxu0 0.0
      %1337 = vmatprep.subr.mxu0 0.0
      %1338 = vmatpush1.msra.mxu0 0.0
      %1339 = vmatprep.subr.mxu0 0.0
      %1340 = vmatpush1.msra.mxu0 0.0
      %1341 = vmatprep.subr.mxu0 0.0
      %1342 = vmatpush1.msra.mxu0 0.0
      %1343 = vmatprep.subr.mxu0 0.0
      %1344 = vmatpush1.msra.mxu0 0.0
      %1345 = vmatprep.subr.mxu0 0.0
      %1346 = vmatpush1.msra.mxu0 0.0
      %1347 = vmatprep.subr.mxu0 0.0
      %1348 = vmatpush1.msra.mxu0 0.0
      %1349 = vmatprep.subr.mxu0 0.0
      %1350 = vmatpush1.msra.mxu0 0.0
      %1351 = vmatprep.subr.mxu0 0.0
      %1352 = vmatpush1.msra.mxu0 0.0
      %1353 = vmatprep.subr.mxu0 0.0
      %1354 = vmatpush1.msra.mxu0 0.0
      %1355 = vmatprep.subr.mxu0 0.0
      %1356 = vmatpush1.msra.mxu0 0.0
      %1357 = vmatprep.subr.mxu0 0.0
      %1358 = vmatpush1.msra.mxu0 0.0
      %1359 = vmatprep.subr.mxu0 0.0
      %1360 = vmatpush1.msra.mxu0 0.0
      %1361 = vmatprep.subr.mxu0 0.0
      %1362 = vmatpush1.msra.mxu0 0.0
      %1363 = vmatprep.subr.mxu0 0.0
      %1364 = vmatpush1.msra.mxu0 0.0
      %1365 = vmatprep.subr.mxu0 0.0
      %1366 = vmatpush1.msra.mxu0 0.0
      %1367 = vmatprep.subr.mxu0 0.0
      %1368 = vmatpush1.msra.mxu0 0.0
      %1369 = vmatprep.mubr.f32.mxu0 0.0
      %v1370 = vand.u32 %v1299, 4294901760
      %v1371 = vsub.f32 %v1299, %v1370
      %v1372 = vand.u32 %v1371, 4294901760
      %v1373 = vsub.f32 %v1371, %v1372
      %v1374 = vand.u32 %v1373, 4294901760
      %1375 = vmatmul.mubr.f32.gmra.mrb[0].mxu0 %v1374
      %v1376 = vpop.f32.mrb[0].mxu0
      %v1377 = vadd.f32 %v1296, %v1376
      %v1378 = vpop.f32.mrb[0].mxu0
      %1379 = vdwg.mxu0
      %1380 = vmatprep.subr.mxu0 0.0
      %v1381 = vand.u32 %v1287, 4294901760
      %v1382 = vsub.f32 %v1287, %v1381
      %v1383 = vand.u32 %v1382, 4294901760
      %v1384 = vsub.f32 %v1382, %v1383
      %v1385 = vand.u32 %v1384, 4294901760
      %1386 = vmatpush1.msra.mxu0 %v1385
      %1387 = vmatprep.subr.mxu0 0.0
      %v1388 = vand.u32 %v1288, 4294901760
      %v1389 = vsub.f32 %v1288, %v1388
      %v1390 = vand.u32 %v1389, 4294901760
      %v1391 = vsub.f32 %v1389, %v1390
      %v1392 = vand.u32 %v1391, 4294901760
      %1393 = vmatpush1.msra.mxu0 %v1392
      %1394 = vmatprep.subr.mxu0 0.0
      %v1395 = vand.u32 %v1289, 4294901760
      %v1396 = vsub.f32 %v1289, %v1395
      %v1397 = vand.u32 %v1396, 4294901760
      %v1398 = vsub.f32 %v1396, %v1397
      %v1399 = vand.u32 %v1398, 4294901760
      %1400 = vmatpush1.msra.mxu0 %v1399
      %1401 = vmatprep.subr.mxu0 0.0
      %v1402 = vand.u32 %v1290, 4294901760
      %v1403 = vsub.f32 %v1290, %v1402
      %v1404 = vand.u32 %v1403, 4294901760
      %v1405 = vsub.f32 %v1403, %v1404
      %v1406 = vand.u32 %v1405, 4294901760
      %1407 = vmatpush1.msra.mxu0 %v1406
      %1408 = vmatprep.subr.mxu0 0.0
      %1409 = vmatpush1.msra.mxu0 0.0
      %1410 = vmatprep.subr.mxu0 0.0
      %1411 = vmatpush1.msra.mxu0 0.0
      %1412 = vmatprep.subr.mxu0 0.0
      %1413 = vmatpush1.msra.mxu0 0.0
      %1414 = vmatprep.subr.mxu0 0.0
      %1415 = vmatpush1.msra.mxu0 0.0
      %1416 = vmatprep.subr.mxu0 0.0
      %1417 = vmatpush1.msra.mxu0 0.0
      %1418 = vmatprep.subr.mxu0 0.0
      %1419 = vmatpush1.msra.mxu0 0.0
      %1420 = vmatprep.subr.mxu0 0.0
      %1421 = vmatpush1.msra.mxu0 0.0
      %1422 = vmatprep.subr.mxu0 0.0
      %1423 = vmatpush1.msra.mxu0 0.0
      %1424 = vmatprep.subr.mxu0 0.0
      %1425 = vmatpush1.msra.mxu0 0.0
      %1426 = vmatprep.subr.mxu0 0.0
      %1427 = vmatpush1.msra.mxu0 0.0
      %1428 = vmatprep.subr.mxu0 0.0
      %1429 = vmatpush1.msra.mxu0 0.0
      %1430 = vmatprep.subr.mxu0 0.0
      %1431 = vmatpush1.msra.mxu0 0.0
      %1432 = vmatprep.subr.mxu0 0.0
      %1433 = vmatpush1.msra.mxu0 0.0
      %1434 = vmatprep.subr.mxu0 0.0
      %1435 = vmatpush1.msra.mxu0 0.0
      %1436 = vmatprep.subr.mxu0 0.0
      %1437 = vmatpush1.msra.mxu0 0.0
      %1438 = vmatprep.subr.mxu0 0.0
      %1439 = vmatpush1.msra.mxu0 0.0
      %1440 = vmatprep.subr.mxu0 0.0
      %1441 = vmatpush1.msra.mxu0 0.0
      %1442 = vmatprep.subr.mxu0 0.0
      %1443 = vmatpush1.msra.mxu0 0.0
      %1444 = vmatprep.subr.mxu0 0.0
      %1445 = vmatpush1.msra.mxu0 0.0
      %1446 = vmatprep.subr.mxu0 0.0
      %1447 = vmatpush1.msra.mxu0 0.0
      %1448 = vmatprep.subr.mxu0 0.0
      %1449 = vmatpush1.msra.mxu0 0.0
      %1450 = vmatprep.subr.mxu0 0.0
      %1451 = vmatpush1.msra.mxu0 0.0
      %1452 = vmatprep.subr.mxu0 0.0
      %1453 = vmatpush1.msra.mxu0 0.0
      %1454 = vmatprep.subr.mxu0 0.0
      %1455 = vmatpush1.msra.mxu0 0.0
      %1456 = vmatprep.subr.mxu0 0.0
      %1457 = vmatpush1.msra.mxu0 0.0
      %1458 = vmatprep.subr.mxu0 0.0
      %1459 = vmatpush1.msra.mxu0 0.0
      %1460 = vmatprep.subr.mxu0 0.0
      %1461 = vmatpush1.msra.mxu0 0.0
      %1462 = vmatprep.subr.mxu0 0.0
      %1463 = vmatpush1.msra.mxu0 0.0
      %1464 = vmatprep.mubr.f32.mxu0 0.0
      %v1465 = vand.u32 %v1299, 4294901760
      %1466 = vmatmul.mubr.f32.gmra.mrb[0].mxu0 %v1465
      %v1467 = vpop.f32.mrb[0].mxu0
      %v1468 = vadd.f32 %v1377, %v1467
      %v1469 = vpop.f32.mrb[0].mxu0
      %1470 = vdwg.mxu0
      %1471 = vmatprep.subr.mxu0 0.0
      %v1472 = vand.u32 %v1287, 4294901760
      %v1473 = vsub.f32 %v1287, %v1472
      %1474 = vmatpush1.msra.mxu0 %v1473
      %1475 = vmatprep.subr.mxu0 0.0
      %v1476 = vand.u32 %v1288, 4294901760
      %v1477 = vsub.f32 %v1288, %v1476
      %1478 = vmatpush1.msra.mxu0 %v1477
      %1479 = vmatprep.subr.mxu0 0.0
      %v1480 = vand.u32 %v1289, 4294901760
      %v1481 = vsub.f32 %v1289, %v1480
      %1482 = vmatpush1.msra.mxu0 %v1481
      %1483 = vmatprep.subr.mxu0 0.0
      %v1484 = vand.u32 %v1290, 4294901760
      %v1485 = vsub.f32 %v1290, %v1484
      %1486 = vmatpush1.msra.mxu0 %v1485
      %1487 = vmatprep.subr.mxu0 0.0
      %1488 = vmatpush1.msra.mxu0 0.0
      %1489 = vmatprep.subr.mxu0 0.0
      %1490 = vmatpush1.msra.mxu0 0.0
      %1491 = vmatprep.subr.mxu0 0.0
      %1492 = vmatpush1.msra.mxu0 0.0
      %1493 = vmatprep.subr.mxu0 0.0
      %1494 = vmatpush1.msra.mxu0 0.0
      %1495 = vmatprep.subr.mxu0 0.0
      %1496 = vmatpush1.msra.mxu0 0.0
      %1497 = vmatprep.subr.mxu0 0.0
      %1498 = vmatpush1.msra.mxu0 0.0
      %1499 = vmatprep.subr.mxu0 0.0
      %1500 = vmatpush1.msra.mxu0 0.0
      %1501 = vmatprep.subr.mxu0 0.0
      %1502 = vmatpush1.msra.mxu0 0.0
      %1503 = vmatprep.subr.mxu0 0.0
      %1504 = vmatpush1.msra.mxu0 0.0
      %1505 = vmatprep.subr.mxu0 0.0
      %1506 = vmatpush1.msra.mxu0 0.0
      %1507 = vmatprep.subr.mxu0 0.0
      %1508 = vmatpush1.msra.mxu0 0.0
      %1509 = vmatprep.subr.mxu0 0.0
      %1510 = vmatpush1.msra.mxu0 0.0
      %1511 = vmatprep.subr.mxu0 0.0
      %1512 = vmatpush1.msra.mxu0 0.0
      %1513 = vmatprep.subr.mxu0 0.0
      %1514 = vmatpush1.msra.mxu0 0.0
      %1515 = vmatprep.subr.mxu0 0.0
      %1516 = vmatpush1.msra.mxu0 0.0
      %1517 = vmatprep.subr.mxu0 0.0
      %1518 = vmatpush1.msra.mxu0 0.0
      %1519 = vmatprep.subr.mxu0 0.0
      %1520 = vmatpush1.msra.mxu0 0.0
      %1521 = vmatprep.subr.mxu0 0.0
      %1522 = vmatpush1.msra.mxu0 0.0
      %1523 = vmatprep.subr.mxu0 0.0
      %1524 = vmatpush1.msra.mxu0 0.0
      %1525 = vmatprep.subr.mxu0 0.0
      %1526 = vmatpush1.msra.mxu0 0.0
      %1527 = vmatprep.subr.mxu0 0.0
      %1528 = vmatpush1.msra.mxu0 0.0
      %1529 = vmatprep.subr.mxu0 0.0
      %1530 = vmatpush1.msra.mxu0 0.0
      %1531 = vmatprep.subr.mxu0 0.0
      %1532 = vmatpush1.msra.mxu0 0.0
      %1533 = vmatprep.subr.mxu0 0.0
      %1534 = vmatpush1.msra.mxu0 0.0
      %1535 = vmatprep.subr.mxu0 0.0
      %1536 = vmatpush1.msra.mxu0 0.0
      %1537 = vmatprep.subr.mxu0 0.0
      %1538 = vmatpush1.msra.mxu0 0.0
      %1539 = vmatprep.subr.mxu0 0.0
      %1540 = vmatpush1.msra.mxu0 0.0
      %1541 = vmatprep.subr.mxu0 0.0
      %1542 = vmatpush1.msra.mxu0 0.0
      %1543 = vmatprep.mubr.f32.mxu0 0.0
      %v1544 = vand.u32 %v1299, 4294901760
      %v1545 = vsub.f32 %v1299, %v1544
      %1546 = vmatmul.mubr.f32.gmra.mrb[0].mxu0 %v1545
      %v1547 = vpop.f32.mrb[0].mxu0
      %v1548 = vadd.f32 %v1468, %v1547
      %v1549 = vpop.f32.mrb[0].mxu0
      %1550 = vdwg.mxu0
      %1551 = vmatprep.subr.mxu0 0.0
      %v1552 = vand.u32 %v1287, 4294901760
      %1553 = vmatpush1.msra.mxu0 %v1552
      %1554 = vmatprep.subr.mxu0 0.0
      %v1555 = vand.u32 %v1288, 4294901760
      %1556 = vmatpush1.msra.mxu0 %v1555
      %1557 = vmatprep.subr.mxu0 0.0
      %v1558 = vand.u32 %v1289, 4294901760
      %1559 = vmatpush1.msra.mxu0 %v1558
      %1560 = vmatprep.subr.mxu0 0.0
      %v1561 = vand.u32 %v1290, 4294901760
      %1562 = vmatpush1.msra.mxu0 %v1561
      %1563 = vmatprep.subr.mxu0 0.0
      %1564 = vmatpush1.msra.mxu0 0.0
      %1565 = vmatprep.subr.mxu0 0.0
      %1566 = vmatpush1.msra.mxu0 0.0
      %1567 = vmatprep.subr.mxu0 0.0
      %1568 = vmatpush1.msra.mxu0 0.0
      %1569 = vmatprep.subr.mxu0 0.0
      %1570 = vmatpush1.msra.mxu0 0.0
      %1571 = vmatprep.subr.mxu0 0.0
      %1572 = vmatpush1.msra.mxu0 0.0
      %1573 = vmatprep.subr.mxu0 0.0
      %1574 = vmatpush1.msra.mxu0 0.0
      %1575 = vmatprep.subr.mxu0 0.0
      %1576 = vmatpush1.msra.mxu0 0.0
      %1577 = vmatprep.subr.mxu0 0.0
      %1578 = vmatpush1.msra.mxu0 0.0
      %1579 = vmatprep.subr.mxu0 0.0
      %1580 = vmatpush1.msra.mxu0 0.0
      %1581 = vmatprep.subr.mxu0 0.0
      %1582 = vmatpush1.msra.mxu0 0.0
      %1583 = vmatprep.subr.mxu0 0.0
      %1584 = vmatpush1.msra.mxu0 0.0
      %1585 = vmatprep.subr.mxu0 0.0
      %1586 = vmatpush1.msra.mxu0 0.0
      %1587 = vmatprep.subr.mxu0 0.0
      %1588 = vmatpush1.msra.mxu0 0.0
      %1589 = vmatprep.subr.mxu0 0.0
      %1590 = vmatpush1.msra.mxu0 0.0
      %1591 = vmatprep.subr.mxu0 0.0
      %1592 = vmatpush1.msra.mxu0 0.0
      %1593 = vmatprep.subr.mxu0 0.0
      %1594 = vmatpush1.msra.mxu0 0.0
      %1595 = vmatprep.subr.mxu0 0.0
      %1596 = vmatpush1.msra.mxu0 0.0
      %1597 = vmatprep.subr.mxu0 0.0
      %1598 = vmatpush1.msra.mxu0 0.0
      %1599 = vmatprep.subr.mxu0 0.0
      %1600 = vmatpush1.msra.mxu0 0.0
      %1601 = vmatprep.subr.mxu0 0.0
      %1602 = vmatpush1.msra.mxu0 0.0
      %1603 = vmatprep.subr.mxu0 0.0
      %1604 = vmatpush1.msra.mxu0 0.0
      %1605 = vmatprep.subr.mxu0 0.0
      %1606 = vmatpush1.msra.mxu0 0.0
      %1607 = vmatprep.subr.mxu0 0.0
      %1608 = vmatpush1.msra.mxu0 0.0
      %1609 = vmatprep.subr.mxu0 0.0
      %1610 = vmatpush1.msra.mxu0 0.0
      %1611 = vmatprep.subr.mxu0 0.0
      %1612 = vmatpush1.msra.mxu0 0.0
      %1613 = vmatprep.subr.mxu0 0.0
      %1614 = vmatpush1.msra.mxu0 0.0
      %1615 = vmatprep.subr.mxu0 0.0
      %1616 = vmatpush1.msra.mxu0 0.0
      %1617 = vmatprep.subr.mxu0 0.0
      %1618 = vmatpush1.msra.mxu0 0.0
      %1619 = vmatprep.mubr.f32.mxu0 0.0
      %v1620 = vand.u32 %v1299, 4294901760
      %v1621 = vsub.f32 %v1299, %v1620
      %v1622 = vand.u32 %v1621, 4294901760
      %1623 = vmatmul.mubr.f32.gmra.mrb[0].mxu0 %v1622
      %v1624 = vpop.f32.mrb[0].mxu0
      %v1625 = vadd.f32 %v1548, %v1624
      %v1626 = vpop.f32.mrb[0].mxu0
      %1627 = vdwg.mxu0
      %1628 = vmatprep.subr.mxu0 0.0
      %v1629 = vand.u32 %v1287, 4294901760
      %v1630 = vsub.f32 %v1287, %v1629
      %v1631 = vand.u32 %v1630, 4294901760
      %1632 = vmatpush1.msra.mxu0 %v1631
      %1633 = vmatprep.subr.mxu0 0.0
      %v1634 = vand.u32 %v1288, 4294901760
      %v1635 = vsub.f32 %v1288, %v1634
      %v1636 = vand.u32 %v1635, 4294901760
      %1637 = vmatpush1.msra.mxu0 %v1636
      %1638 = vmatprep.subr.mxu0 0.0
      %v1639 = vand.u32 %v1289, 4294901760
      %v1640 = vsub.f32 %v1289, %v1639
      %v1641 = vand.u32 %v1640, 4294901760
      %1642 = vmatpush1.msra.mxu0 %v1641
      %1643 = vmatprep.subr.mxu0 0.0
      %v1644 = vand.u32 %v1290, 4294901760
      %v1645 = vsub.f32 %v1290, %v1644
      %v1646 = vand.u32 %v1645, 4294901760
      %1647 = vmatpush1.msra.mxu0 %v1646
      %1648 = vmatprep.subr.mxu0 0.0
      %1649 = vmatpush1.msra.mxu0 0.0
      %1650 = vmatprep.subr.mxu0 0.0
      %1651 = vmatpush1.msra.mxu0 0.0
      %1652 = vmatprep.subr.mxu0 0.0
      %1653 = vmatpush1.msra.mxu0 0.0
      %1654 = vmatprep.subr.mxu0 0.0
      %1655 = vmatpush1.msra.mxu0 0.0
      %1656 = vmatprep.subr.mxu0 0.0
      %1657 = vmatpush1.msra.mxu0 0.0
      %1658 = vmatprep.subr.mxu0 0.0
      %1659 = vmatpush1.msra.mxu0 0.0
      %1660 = vmatprep.subr.mxu0 0.0
      %1661 = vmatpush1.msra.mxu0 0.0
      %1662 = vmatprep.subr.mxu0 0.0
      %1663 = vmatpush1.msra.mxu0 0.0
      %1664 = vmatprep.subr.mxu0 0.0
      %1665 = vmatpush1.msra.mxu0 0.0
      %1666 = vmatprep.subr.mxu0 0.0
      %1667 = vmatpush1.msra.mxu0 0.0
      %1668 = vmatprep.subr.mxu0 0.0
      %1669 = vmatpush1.msra.mxu0 0.0
      %1670 = vmatprep.subr.mxu0 0.0
      %1671 = vmatpush1.msra.mxu0 0.0
      %1672 = vmatprep.subr.mxu0 0.0
      %1673 = vmatpush1.msra.mxu0 0.0
      %1674 = vmatprep.subr.mxu0 0.0
      %1675 = vmatpush1.msra.mxu0 0.0
      %1676 = vmatprep.subr.mxu0 0.0
      %1677 = vmatpush1.msra.mxu0 0.0
      %1678 = vmatprep.subr.mxu0 0.0
      %1679 = vmatpush1.msra.mxu0 0.0
      %1680 = vmatprep.subr.mxu0 0.0
      %1681 = vmatpush1.msra.mxu0 0.0
      %1682 = vmatprep.subr.mxu0 0.0
      %1683 = vmatpush1.msra.mxu0 0.0
      %1684 = vmatprep.subr.mxu0 0.0
      %1685 = vmatpush1.msra.mxu0 0.0
      %1686 = vmatprep.subr.mxu0 0.0
      %1687 = vmatpush1.msra.mxu0 0.0
      %1688 = vmatprep.subr.mxu0 0.0
      %1689 = vmatpush1.msra.mxu0 0.0
      %1690 = vmatprep.subr.mxu0 0.0
      %1691 = vmatpush1.msra.mxu0 0.0
      %1692 = vmatprep.subr.mxu0 0.0
      %1693 = vmatpush1.msra.mxu0 0.0
      %1694 = vmatprep.subr.mxu0 0.0
      %1695 = vmatpush1.msra.mxu0 0.0
      %1696 = vmatprep.subr.mxu0 0.0
      %1697 = vmatpush1.msra.mxu0 0.0
      %1698 = vmatprep.subr.mxu0 0.0
      %1699 = vmatpush1.msra.mxu0 0.0
      %1700 = vmatprep.subr.mxu0 0.0
      %1701 = vmatpush1.msra.mxu0 0.0
      %1702 = vmatprep.subr.mxu0 0.0
      %1703 = vmatpush1.msra.mxu0 0.0
      %1704 = vmatprep.mubr.f32.mxu0 0.0
      %v1705 = vand.u32 %v1299, 4294901760
      %1706 = vmatmul.mubr.f32.gmra.mrb[0].mxu0 %v1705
      %v1707 = vpop.f32.mrb[0].mxu0
      %v1708 = vadd.f32 %v1625, %v1707
      %v1709 = vpop.f32.mrb[0].mxu0
      %1710 = vdwg.mxu0
      %1711 = vmatprep.subr.mxu0 0.0
      %v1712 = vand.u32 %v1287, 4294901760
      %1713 = vmatpush1.msra.mxu0 %v1712
      %1714 = vmatprep.subr.mxu0 0.0
      %v1715 = vand.u32 %v1288, 4294901760
      %1716 = vmatpush1.msra.mxu0 %v1715
      %1717 = vmatprep.subr.mxu0 0.0
      %v1718 = vand.u32 %v1289, 4294901760
      %1719 = vmatpush1.msra.mxu0 %v1718
      %1720 = vmatprep.subr.mxu0 0.0
      %v1721 = vand.u32 %v1290, 4294901760
      %1722 = vmatpush1.msra.mxu0 %v1721
      %1723 = vmatprep.subr.mxu0 0.0
      %1724 = vmatpush1.msra.mxu0 0.0
      %1725 = vmatprep.subr.mxu0 0.0
      %1726 = vmatpush1.msra.mxu0 0.0
      %1727 = vmatprep.subr.mxu0 0.0
      %1728 = vmatpush1.msra.mxu0 0.0
      %1729 = vmatprep.subr.mxu0 0.0
      %1730 = vmatpush1.msra.mxu0 0.0
      %1731 = vmatprep.subr.mxu0 0.0
      %1732 = vmatpush1.msra.mxu0 0.0
      %1733 = vmatprep.subr.mxu0 0.0
      %1734 = vmatpush1.msra.mxu0 0.0
      %1735 = vmatprep.subr.mxu0 0.0
      %1736 = vmatpush1.msra.mxu0 0.0
      %1737 = vmatprep.subr.mxu0 0.0
      %1738 = vmatpush1.msra.mxu0 0.0
      %1739 = vmatprep.subr.mxu0 0.0
      %1740 = vmatpush1.msra.mxu0 0.0
      %1741 = vmatprep.subr.mxu0 0.0
      %1742 = vmatpush1.msra.mxu0 0.0
      %1743 = vmatprep.subr.mxu0 0.0
      %1744 = vmatpush1.msra.mxu0 0.0
      %1745 = vmatprep.subr.mxu0 0.0
      %1746 = vmatpush1.msra.mxu0 0.0
      %1747 = vmatprep.subr.mxu0 0.0
      %1748 = vmatpush1.msra.mxu0 0.0
      %1749 = vmatprep.subr.mxu0 0.0
      %1750 = vmatpush1.msra.mxu0 0.0
      %1751 = vmatprep.subr.mxu0 0.0
      %1752 = vmatpush1.msra.mxu0 0.0
      %1753 = vmatprep.subr.mxu0 0.0
      %1754 = vmatpush1.msra.mxu0 0.0
      %1755 = vmatprep.subr.mxu0 0.0
      %1756 = vmatpush1.msra.mxu0 0.0
      %1757 = vmatprep.subr.mxu0 0.0
      %1758 = vmatpush1.msra.mxu0 0.0
      %1759 = vmatprep.subr.mxu0 0.0
      %1760 = vmatpush1.msra.mxu0 0.0
      %1761 = vmatprep.subr.mxu0 0.0
      %1762 = vmatpush1.msra.mxu0 0.0
      %1763 = vmatprep.subr.mxu0 0.0
      %1764 = vmatpush1.msra.mxu0 0.0
      %1765 = vmatprep.subr.mxu0 0.0
      %1766 = vmatpush1.msra.mxu0 0.0
      %1767 = vmatprep.subr.mxu0 0.0
      %1768 = vmatpush1.msra.mxu0 0.0
      %1769 = vmatprep.subr.mxu0 0.0
      %1770 = vmatpush1.msra.mxu0 0.0
      %1771 = vmatprep.subr.mxu0 0.0
      %1772 = vmatpush1.msra.mxu0 0.0
      %1773 = vmatprep.subr.mxu0 0.0
      %1774 = vmatpush1.msra.mxu0 0.0
      %1775 = vmatprep.subr.mxu0 0.0
      %1776 = vmatpush1.msra.mxu0 0.0
      %1777 = vmatprep.subr.mxu0 0.0
      %1778 = vmatpush1.msra.mxu0 0.0
      %1779 = vmatprep.mubr.f32.mxu0 0.0
      %v1780 = vand.u32 %v1299, 4294901760
      %1781 = vmatmul.mubr.f32.gmra.mrb[0].mxu0 %v1780
      %v1782 = vpop.f32.mrb[0].mxu0
      %v1783 = vadd.f32 %v1708, %v1782
      %v1784 = vpop.f32.mrb[0].mxu0
      %1785 = vdwg.mxu0
      %vm1786 = vcmask 80896
      %1787 = vst.msk [vmem:[%s311] sm:$0xff] %vm1786, %v1783
      %p1788 = scmp.lt.s32.totalorder %s20, 2
      %s1789 = scalar_select %p1788, %s20, 2
      %s1790 = smul.addr %s1789, 8
      %s1791 = scalar_lea.vmem %s7, %s1790
      %p1792 = scmp.lt.s32.totalorder %s20, 2
      %s1793 = scalar_select %p1792, %s20, 2
      %s1794 = smul.addr %s1793, 8
      %s1795 = scalar_lea.vmem %s8, %s1794
      // Predicated region
      $region49: #{model_forward.14} parent=47 // pred_check
        %p1796 = pneg %p190
      $region50: #{model_forward.14} parent=47 // pred_check_branch
        %1798 = sbr.rel (%p1796) target = $region52
      $region51: #{model_forward.14} parent=47 // pred_region
        _
      $region52: #{model_forward.14} parent=47 // pred_fallthru
        _
      // Predicated region
      $region53: #{model_forward.14} parent=47 // pred_check
        %p1799 = pneg %p216
      $region54: #{model_forward.14} parent=47 // pred_check_branch
        %1801 = sbr.rel (%p1799) target = $region56
      $region55: #{model_forward.14} parent=47 // pred_region
        _
      $region56: #{model_forward.14} parent=47 // pred_fallthru
        _
    $region48: #{model_forward.14} parent=5 // pred_fallthru
      _
    %p1802 = scmp.le.s32.totalorder 2, %s15
    // Predicated region
    $region57: #{model_forward.14} parent=5 // pred_check
      %p1803 = pneg %p1802
    $region58: #{model_forward.14} parent=5 // pred_check_branch
      %1805 = sbr.rel (%p1803) target = $region60
    $region59: #{model_forward.14} parent=5 // pred_region
      %s1806 = ssub.s32 %s15, 2
      // Predicated region
      $region61: #{model_forward.14} parent=59 // pred_check
        %p1807 = pneg %p196
      $region62: #{model_forward.14} parent=59 // pred_check_branch
        %1809 = sbr.rel (%p1807) target = $region64
      $region63: #{model_forward.14} parent=59 // pred_region
        %p1810 = scmp.lt.s32.totalorder %s21, 2
        %s1811 = scalar_select %p1810, %s21, 2
        %s1812 = smul.addr %s1811, 8
        %s1813 = scalar_lea.vmem %s7, %s1812
      $region64: #{model_forward.14} parent=59 // pred_fallthru
        _
      // Predicated region
      $region65: #{model_forward.14} parent=59 // pred_check
        %p1814 = pneg %p222
      $region66: #{model_forward.14} parent=59 // pred_check_branch
        %1816 = sbr.rel (%p1814) target = $region68
      $region67: #{model_forward.14} parent=59 // pred_region
        %p1817 = scmp.lt.s32.totalorder %s21, 2
        %s1818 = scalar_select %p1817, %s21, 2
        %s1819 = smul.addr %s1818, 8
        %s1820 = scalar_lea.vmem %s8, %s1819
      $region68: #{model_forward.14} parent=59 // pred_fallthru
        _
    $region60: #{model_forward.14} parent=5 // pred_fallthru
      _
  $region6: #{model_forward.14} parent=0 // loop_footer
    %s19 = sadd.s32 1, %s15
  $region7: #{model_forward.14} parent=0 // loop_footer_branch
    %14 = sbr.rel target = $region3
  $region8: #{model_forward.14} parent=0 // loop_exit
    _

// kernel: model_forward.15
$region0: #{model_forward.15}
  #allocation0 [shape = 'u32[]', space=smem, size = 0x4, offset = 0x4, fixed_abs, tag = 'smem constant byte address 0x4 - core index']
  #allocation1 [shape = 'u32[144,128]{1,0:T(1,128)}', space=vmem, size = 0x12000, scoped, tag = 'internal scratch']
  %s0 = inlined_call_operand.vmem [shape: f32[12,32], index: 0, kind: input, shape index: {}]
  %s1 = inlined_call_operand.vmem [shape: f32[32,16], index: 1, kind: input, shape index: {}]
  %s2 = inlined_call_operand.vmem [shape: f32[1,16], index: 2, kind: input, shape index: {}]
  %s3 = inlined_call_operand.vmem [shape: f32[16,32], index: 3, kind: input, shape index: {}]
  %s4 = inlined_call_operand.vmem [shape: f32[1,32], index: 4, kind: input, shape index: {}]
  %s5 = inlined_call_operand.vmem [shape: f32[32,6], index: 5, kind: input, shape index: {}]
  %s6 = inlined_call_operand.vmem [shape: f32[1,6], index: 6, kind: input, shape index: {}]
  %s7 = inlined_call_operand.hbm [shape: f32[12,16], index: 7, kind: output, shape index: {0}]
  %s8 = inlined_call_operand.vmem [shape: f32[12,6], index: 8, kind: output, shape index: {1}]
  %9 = xla_tuple %s7, %s8
  %s10 = sld [smem:[#allocation0]]
  $region69: #{model_forward.15} parent=0
    _
  %s12 = ssub.s32 1, %s10
  %s13 = scalar_select 0, %s12, %s10
  $region1: #{model_forward.15} parent=0
    #allocation2 [shape = 'u8[8192]{0}', space=vmem, size = 0x2000, scoped, tag = 'output window, operand 0']
    #allocation3 [shape = 's32[2]{0}', space=sflag, size = 0x8, scoped, tag = 'scoped memory for model_forward.15']
    %14 = vsyncpa [#allocation3], 0
    %s15 = scalar_lea.sflag [#allocation3], 1
    %16 = vsyncpa %s15, 0
    loop: start=0, step=1, limit=4
    $region2: #{model_forward.15} parent=1 // loop_pre_header
      _
    $region3: #{model_forward.15} parent=1 // loop_header
      %s18 = sphi 0, %s22
      %p19 = scmp.ge.s32.totalorder %s18, 4
      %s28 = sphi 0, %s30
      %s31 = sphi 0, %s28
      %s32 = sphi 0, %s31
      %s48 = sphi 0, %s32
      %s52 = sphi 0, %s52
      %s54 = sphi 0, %s52
      %s55 = sphi 0, %s54
      %s69 = sphi 0, %s55
      %s73 = sphi 0, %s73
      %s75 = sphi 0, %s73
      %s76 = sphi 0, %s75
      %s90 = sphi 0, %s76
      %s94 = sphi 0, %s94
      %s96 = sphi 0, %s94
      %s97 = sphi 0, %s96
      %s111 = sphi 0, %s97
      %s115 = sphi 0, %s115
      %s117 = sphi 0, %s115
      %s118 = sphi 0, %s117
      %s132 = sphi 0, %s118
      %s136 = sphi 0, %s136
      %s138 = sphi 0, %s136
      %s139 = sphi 0, %s138
      %s153 = sphi 0, %s139
      %s157 = sphi 0, %s157
      %s159 = sphi 0, %s157
      %s160 = sphi 0, %s159
      %s174 = sphi 0, %s160
      %s180 = sphi 0, %s182
      %s183 = sphi 0, %s180
      %s184 = sphi 0, %s183
      %s200 = sphi 0, %s184
      %s206 = sphi 0, %s208
      %s209 = sphi 0, %s206
      %s210 = sphi 0, %s209
      %s226 = sphi 0, %s210
    $region4: #{model_forward.15} parent=1 // loop_header_branch
      %21 = sbr.rel (%p19) target = $region8
    $region5: #{model_forward.15} parent=1 // loop_body
      %s23 = ssub.s32 %s18, 1
      %s24 = ssub.s32 %s18, 2
      %s25 = sadd.s32 %s18, 1
      %s26 = ssub.s32 %s18, %s25
      %p27 = scmp.eq.s32.totalorder %s26, 0
      %s29 = sadd.s32 %s28, 1
      %s30 = scalar_select %p27, %s28, %s29
      %p33 = pneg %p27
      %p34 = scmp.eq.s32.totalorder %s18, 1
      %p35 = por %p33, %p34
      %p36 = scmp.ne.s32.totalorder %s28, %s31
      %p37 = scmp.eq.s32.totalorder %s18, 0
      %p38 = por %p36, %p37
      %p39 = scmp.ne.s32.totalorder %s28, %s31
      %p40 = scmp.eq.s32.totalorder %s23, 1
      %p41 = por %p39, %p40
      %p42 = scmp.ne.s32.totalorder %s31, %s32
      %p43 = scmp.eq.s32.totalorder %s23, 0
      %p44 = por %p42, %p43
      %p45 = scmp.ne.s32.totalorder %s31, %s32
      %p46 = scmp.eq.s32.totalorder %s24, 1
      %p47 = por %p45, %p46
      %p49 = scmp.ne.s32.totalorder %s32, %s48
      %p50 = scmp.eq.s32.totalorder %s24, 0
      %p51 = por %p49, %p50
      %s53 = sadd.s32 %s52, 1
      %p56 = scmp.eq.s32.totalorder %s18, 1
      %p57 = scmp.ne.s32.totalorder %s52, %s54
      %p58 = scmp.eq.s32.totalorder %s18, 0
      %p59 = por %p57, %p58
      %p60 = scmp.ne.s32.totalorder %s52, %s54
      %p61 = scmp.eq.s32.totalorder %s23, 1
      %p62 = por %p60, %p61
      %p63 = scmp.ne.s32.totalorder %s54, %s55
      %p64 = scmp.eq.s32.totalorder %s23, 0
      %p65 = por %p63, %p64
      %p66 = scmp.ne.s32.totalorder %s54, %s55
      %p67 = scmp.eq.s32.totalorder %s24, 1
      %p68 = por %p66, %p67
      %p70 = scmp.ne.s32.totalorder %s55, %s69
      %p71 = scmp.eq.s32.totalorder %s24, 0
      %p72 = por %p70, %p71
      %s74 = sadd.s32 %s73, 1
      %p77 = scmp.eq.s32.totalorder %s18, 1
      %p78 = scmp.ne.s32.totalorder %s73, %s75
      %p79 = scmp.eq.s32.totalorder %s18, 0
      %p80 = por %p78, %p79
      %p81 = scmp.ne.s32.totalorder %s73, %s75
      %p82 = scmp.eq.s32.totalorder %s23, 1
      %p83 = por %p81, %p82
      %p84 = scmp.ne.s32.totalorder %s75, %s76
      %p85 = scmp.eq.s32.totalorder %s23, 0
      %p86 = por %p84, %p85
      %p87 = scmp.ne.s32.totalorder %s75, %s76
      %p88 = scmp.eq.s32.totalorder %s24, 1
      %p89 = por %p87, %p88
      %p91 = scmp.ne.s32.totalorder %s76, %s90
      %p92 = scmp.eq.s32.totalorder %s24, 0
      %p93 = por %p91, %p92
      %s95 = sadd.s32 %s94, 1
      %p98 = scmp.eq.s32.totalorder %s18, 1
      %p99 = scmp.ne.s32.totalorder %s94, %s96
      %p100 = scmp.eq.s32.totalorder %s18, 0
      %p101 = por %p99, %p100
      %p102 = scmp.ne.s32.totalorder %s94, %s96
      %p103 = scmp.eq.s32.totalorder %s23, 1
      %p104 = por %p102, %p103
      %p105 = scmp.ne.s32.totalorder %s96, %s97
      %p106 = scmp.eq.s32.totalorder %s23, 0
      %p107 = por %p105, %p106
      %p108 = scmp.ne.s32.totalorder %s96, %s97
      %p109 = scmp.eq.s32.totalorder %s24, 1
      %p110 = por %p108, %p109
      %p112 = scmp.ne.s32.totalorder %s97, %s111
      %p113 = scmp.eq.s32.totalorder %s24, 0
      %p114 = por %p112, %p113
      %s116 = sadd.s32 %s115, 1
      %p119 = scmp.eq.s32.totalorder %s18, 1
      %p120 = scmp.ne.s32.totalorder %s115, %s117
      %p121 = scmp.eq.s32.totalorder %s18, 0
      %p122 = por %p120, %p121
      %p123 = scmp.ne.s32.totalorder %s115, %s117
      %p124 = scmp.eq.s32.totalorder %s23, 1
      %p125 = por %p123, %p124
      %p126 = scmp.ne.s32.totalorder %s117, %s118
      %p127 = scmp.eq.s32.totalorder %s23, 0
      %p128 = por %p126, %p127
      %p129 = scmp.ne.s32.totalorder %s117, %s118
      %p130 = scmp.eq.s32.totalorder %s24, 1
      %p131 = por %p129, %p130
      %p133 = scmp.ne.s32.totalorder %s118, %s132
      %p134 = scmp.eq.s32.totalorder %s24, 0
      %p135 = por %p133, %p134
      %s137 = sadd.s32 %s136, 1
      %p140 = scmp.eq.s32.totalorder %s18, 1
      %p141 = scmp.ne.s32.totalorder %s136, %s138
      %p142 = scmp.eq.s32.totalorder %s18, 0
      %p143 = por %p141, %p142
      %p144 = scmp.ne.s32.totalorder %s136, %s138
      %p145 = scmp.eq.s32.totalorder %s23, 1
      %p146 = por %p144, %p145
      %p147 = scmp.ne.s32.totalorder %s138, %s139
      %p148 = scmp.eq.s32.totalorder %s23, 0
      %p149 = por %p147, %p148
      %p150 = scmp.ne.s32.totalorder %s138, %s139
      %p151 = scmp.eq.s32.totalorder %s24, 1
      %p152 = por %p150, %p151
      %p154 = scmp.ne.s32.totalorder %s139, %s153
      %p155 = scmp.eq.s32.totalorder %s24, 0
      %p156 = por %p154, %p155
      %s158 = sadd.s32 %s157, 1
      %p161 = scmp.eq.s32.totalorder %s18, 1
      %p162 = scmp.ne.s32.totalorder %s157, %s159
      %p163 = scmp.eq.s32.totalorder %s18, 0
      %p164 = por %p162, %p163
      %p165 = scmp.ne.s32.totalorder %s157, %s159
      %p166 = scmp.eq.s32.totalorder %s23, 1
      %p167 = por %p165, %p166
      %p168 = scmp.ne.s32.totalorder %s159, %s160
      %p169 = scmp.eq.s32.totalorder %s23, 0
      %p170 = por %p168, %p169
      %p171 = scmp.ne.s32.totalorder %s159, %s160
      %p172 = scmp.eq.s32.totalorder %s24, 1
      %p173 = por %p171, %p172
      %p175 = scmp.ne.s32.totalorder %s160, %s174
      %p176 = scmp.eq.s32.totalorder %s24, 0
      %p177 = por %p175, %p176
      %s178 = ssub.s32 %s18, %s25
      %p179 = scmp.eq.s32.totalorder %s178, 0
      %s181 = sadd.s32 %s180, 1
      %s182 = scalar_select %p179, %s180, %s181
      %p185 = pneg %p179
      %p186 = scmp.eq.s32.totalorder %s18, 1
      %p187 = por %p185, %p186
      %p188 = scmp.ne.s32.totalorder %s180, %s183
      %p189 = scmp.eq.s32.totalorder %s18, 0
      %p190 = por %p188, %p189
      %p191 = scmp.ne.s32.totalorder %s180, %s183
      %p192 = scmp.eq.s32.totalorder %s23, 1
      %p193 = por %p191, %p192
      %p194 = scmp.ne.s32.totalorder %s183, %s184
      %p195 = scmp.eq.s32.totalorder %s23, 0
      %p196 = por %p194, %p195
      %p197 = scmp.ne.s32.totalorder %s183, %s184
      %p198 = scmp.eq.s32.totalorder %s24, 1
      %p199 = por %p197, %p198
      %p201 = scmp.ne.s32.totalorder %s184, %s200
      %p202 = scmp.eq.s32.totalorder %s24, 0
      %p203 = por %p201, %p202
      %s204 = ssub.s32 %s18, %s25
      %p205 = scmp.eq.s32.totalorder %s204, 0
      %s207 = sadd.s32 %s206, 1
      %s208 = scalar_select %p205, %s206, %s207
      %p211 = pneg %p205
      %p212 = scmp.eq.s32.totalorder %s18, 1
      %p213 = por %p211, %p212
      %p214 = scmp.ne.s32.totalorder %s206, %s209
      %p215 = scmp.eq.s32.totalorder %s18, 0
      %p216 = por %p214, %p215
      %p217 = scmp.ne.s32.totalorder %s206, %s209
      %p218 = scmp.eq.s32.totalorder %s23, 1
      %p219 = por %p217, %p218
      %p220 = scmp.ne.s32.totalorder %s209, %s210
      %p221 = scmp.eq.s32.totalorder %s23, 0
      %p222 = por %p220, %p221
      %p223 = scmp.ne.s32.totalorder %s209, %s210
      %p224 = scmp.eq.s32.totalorder %s24, 1
      %p225 = por %p223, %p224
      %p227 = scmp.ne.s32.totalorder %s210, %s226
      %p228 = scmp.eq.s32.totalorder %s24, 0
      %p229 = por %p227, %p228
      %p230 = scmp.le.s32.totalorder 1, %s18
      %p231 = scmp.lt.s32.totalorder %s18, 3
      %p232 = pnand %p230, %p231
      %p233 = pneg %p232
      // Predicated region
      $region9: #{model_forward.15} parent=5 // pred_check
        _
      $region10: #{model_forward.15} parent=5 // pred_check_branch
        %235 = sbr.rel (%p232) target = $region12
      $region11: #{model_forward.15} parent=5 // pred_region
        %s236 = ssub.s32 %s18, 1
        // Predicated region
        $region13: #{model_forward.15} parent=11 // pred_check
          %p237 = pneg %p65
        $region14: #{model_forward.15} parent=11 // pred_check_branch
          %239 = sbr.rel (%p237) target = $region16
        $region15: #{model_forward.15} parent=11 // pred_region
          _
        $region16: #{model_forward.15} parent=11 // pred_fallthru
          _
        // Predicated region
        $region17: #{model_forward.15} parent=11 // pred_check
          %p240 = pneg %p86
        $region18: #{model_forward.15} parent=11 // pred_check_branch
          %242 = sbr.rel (%p240) target = $region20
        $region19: #{model_forward.15} parent=11 // pred_region
          _
        $region20: #{model_forward.15} parent=11 // pred_fallthru
          _
        // Predicated region
        $region21: #{model_forward.15} parent=11 // pred_check
          %p243 = pneg %p107
        $region22: #{model_forward.15} parent=11 // pred_check_branch
          %245 = sbr.rel (%p243) target = $region24
        $region23: #{model_forward.15} parent=11 // pred_region
          _
        $region24: #{model_forward.15} parent=11 // pred_fallthru
          _
        // Predicated region
        $region25: #{model_forward.15} parent=11 // pred_check
          %p246 = pneg %p128
        $region26: #{model_forward.15} parent=11 // pred_check_branch
          %248 = sbr.rel (%p246) target = $region28
        $region27: #{model_forward.15} parent=11 // pred_region
          _
        $region28: #{model_forward.15} parent=11 // pred_fallthru
          _
        // Predicated region
        $region29: #{model_forward.15} parent=11 // pred_check
          %p249 = pneg %p149
        $region30: #{model_forward.15} parent=11 // pred_check_branch
          %251 = sbr.rel (%p249) target = $region32
        $region31: #{model_forward.15} parent=11 // pred_region
          _
        $region32: #{model_forward.15} parent=11 // pred_fallthru
          _
        // Predicated region
        $region33: #{model_forward.15} parent=11 // pred_check
          %p252 = pneg %p170
        $region34: #{model_forward.15} parent=11 // pred_check_branch
          %254 = sbr.rel (%p252) target = $region36
        $region35: #{model_forward.15} parent=11 // pred_region
          _
        $region36: #{model_forward.15} parent=11 // pred_fallthru
          _
      $region12: #{model_forward.15} parent=5 // pred_fallthru
        _
      %p255 = scmp.lt.s32.totalorder %s18, 2
      // Predicated region
      $region37: #{model_forward.15} parent=5 // pred_check
        %p256 = pneg %p255
      $region38: #{model_forward.15} parent=5 // pred_check_branch
        %258 = sbr.rel (%p256) target = $region40
      $region39: #{model_forward.15} parent=5 // pred_region
        // Predicated region
        $region41: #{model_forward.15} parent=39 // pred_check
          %p259 = pneg %p38
        $region42: #{model_forward.15} parent=39 // pred_check_branch
          %261 = sbr.rel (%p259) target = $region44
        $region43: #{model_forward.15} parent=39 // pred_region
          %p262 = scmp.lt.s32.totalorder %s18, 1
          %s263 = scalar_select %p262, %s18, 1
          %s264 = smul.addr %s263, 8
          %s265 = scalar_lea.vmem %s0, %s264
        $region44: #{model_forward.15} parent=39 // pred_fallthru
          _
      $region40: #{model_forward.15} parent=5 // pred_fallthru
        _
      %p266 = scmp.le.s32.totalorder 1, %s18
      %p267 = scmp.lt.s32.totalorder %s18, 3
      %p268 = pnand %p266, %p267
      %p269 = pneg %p268
      // Predicated region
      $region45: #{model_forward.15} parent=5 // pred_check
        _
      $region46: #{model_forward.15} parent=5 // pred_check_branch
        %271 = sbr.rel (%p268) target = $region48
      $region47: #{model_forward.15} parent=5 // pred_region
        %s272 = ssub.s32 %s18, 1
        %p273 = scmp.lt.s32.totalorder %s23, 1
        %s274 = scalar_select %p273, %s23, 1
        %s275 = smul.addr %s274, 8
        %s276 = scalar_lea.vmem %s0, %s275
        %p277 = pneg %p44
        %p278 = pneg %p41
        %p279 = pneg %p65
        %p280 = pneg %p62
        %p281 = pneg %p86
        %p282 = pneg %p83
        %p283 = pneg %p107
        %p284 = pneg %p104
        %p285 = pneg %p128
        %p286 = pneg %p125
        %p287 = pneg %p149
        %p288 = pneg %p146
        %p289 = pneg %p170
        %p290 = pneg %p167
        %p291 = pneg %p196
        %p292 = pneg %p193
        %s293 = sand.u32 %s183, 1
        %s294 = scalar_lea.sflag [#allocation3], %s293
        %s295 = sand.u32 %s183, 1
        %s296 = smul.addr %s295, 8
        %s297 = scalar_lea.vmem [#allocation2], %s296
        %p298 = pneg %p222
        %p299 = pneg %p219
        %p300 = scmp.lt.s32.totalorder %s23, 1
        %s301 = scalar_select %p300, %s23, 1
        %s302 = smul.addr %s301, 8
        %s303 = scalar_lea.vmem %s8, %s302
        %p304 = scmp.lt.s32.totalorder %s23, 1
        %s305 = scalar_select %p304, %s23, 1
        %s306 = smul.addr %s305, 8
        %s307 = scalar_lea.vmem %s0, %s306
        %p308 = scmp.lt.s32.totalorder %s23, 1
        %s309 = scalar_select %p308, %s23, 1
        %s310 = smul.addr %s309, 8
        %s311 = scalar_lea.vmem %s8, %s310
        %v312 = vld [vmem:[%s307] sm:$0xff]
        %v313 = vld [vmem:[%s1] sm:$0xff]
        %v314 = vld [vmem:[%s1 + $0x8] sm:$0xff]
        %v315 = vld [vmem:[%s1 + $0x10] sm:$0xff]
        %v316 = vld [vmem:[%s1 + $0x18] sm:$0xff]
        %v317 = vld [vmem:[%s2] sm:$0x1]
        %v319 = vlaneseq
        %v320 = vshrl.u32 %v319, 7
        %v321 = vsub.s32 0, %v320
        %v322 = vrot.slane %v317, %v321
        %vm324 = vcmask 261120
        %v326 = vsel %vm324, %v312, 0
        %328 = vmatprep.subr.mxu0 0.0
        %v329 = vand.u32 %v313, 4294901760
        %330 = vmatpush1.msra.mxu0 %v329
        %331 = vmatprep.subr.mxu0 0.0
        %v332 = vand.u32 %v314, 4294901760
        %333 = vmatpush1.msra.mxu0 %v332
        %334 = vmatprep.subr.mxu0 0.0
        %v335 = vand.u32 %v315, 4294901760
        %336 = vmatpush1.msra.mxu0 %v335
        %337 = vmatprep.subr.mxu0 0.0
        %v338 = vand.u32 %v316, 4294901760
        %339 = vmatpush1.msra.mxu0 %v338
        %340 = vmatprep.subr.mxu0 0.0
        %341 = vmatpush1.msra.mxu0 0.0
        %342 = vmatprep.subr.mxu0 0.0
        %343 = vmatpush1.msra.mxu0 0.0
        %344 = vmatprep.subr.mxu0 0.0
        %345 = vmatpush1.msra.mxu0 0.0
        %346 = vmatprep.subr.mxu0 0.0
        %347 = vmatpush1.msra.mxu0 0.0
        %348 = vmatprep.subr.mxu0 0.0
        %349 = vmatpush1.msra.mxu0 0.0
        %350 = vmatprep.subr.mxu0 0.0
        %351 = vmatpush1.msra.mxu0 0.0
        %352 = vmatprep.subr.mxu0 0.0
        %353 = vmatpush1.msra.mxu0 0.0
        %354 = vmatprep.subr.mxu0 0.0
        %355 = vmatpush1.msra.mxu0 0.0
        %356 = vmatprep.subr.mxu0 0.0
        %357 = vmatpush1.msra.mxu0 0.0
        %358 = vmatprep.subr.mxu0 0.0
        %359 = vmatpush1.msra.mxu0 0.0
        %360 = vmatprep.subr.mxu0 0.0
        %361 = vmatpush1.msra.mxu0 0.0
        %362 = vmatprep.subr.mxu0 0.0
        %363 = vmatpush1.msra.mxu0 0.0
        %364 = vmatprep.subr.mxu0 0.0
        %365 = vmatpush1.msra.mxu0 0.0
        %366 = vmatprep.subr.mxu0 0.0
        %367 = vmatpush1.msra.mxu0 0.0
        %368 = vmatprep.subr.mxu0 0.0
        %369 = vmatpush1.msra.mxu0 0.0
        %370 = vmatprep.subr.mxu0 0.0
        %371 = vmatpush1.msra.mxu0 0.0
        %372 = vmatprep.subr.mxu0 0.0
        %373 = vmatpush1.msra.mxu0 0.0
        %374 = vmatprep.subr.mxu0 0.0
        %375 = vmatpush1.msra.mxu0 0.0
        %376 = vmatprep.subr.mxu0 0.0
        %377 = vmatpush1.msra.mxu0 0.0
        %378 = vmatprep.subr.mxu0 0.0
        %379 = vmatpush1.msra.mxu0 0.0
        %380 = vmatprep.subr.mxu0 0.0
        %381 = vmatpush1.msra.mxu0 0.0
        %382 = vmatprep.subr.mxu0 0.0
        %383 = vmatpush1.msra.mxu0 0.0
        %384 = vmatprep.subr.mxu0 0.0
        %385 = vmatpush1.msra.mxu0 0.0
        %386 = vmatprep.subr.mxu0 0.0
        %387 = vmatpush1.msra.mxu0 0.0
        %388 = vmatprep.subr.mxu0 0.0
        %389 = vmatpush1.msra.mxu0 0.0
        %390 = vmatprep.subr.mxu0 0.0
        %391 = vmatpush1.msra.mxu0 0.0
        %392 = vmatprep.subr.mxu0 0.0
        %393 = vmatpush1.msra.mxu0 0.0
        %394 = vmatprep.subr.mxu0 0.0
        %395 = vmatpush1.msra.mxu0 0.0
        %396 = vmatprep.mubr.f32.mxu0 0.0
        %v397 = vand.u32 %v326, 4294901760
        %v398 = vsub.f32 %v326, %v397
        %v399 = vand.u32 %v398, 4294901760
        %v400 = vsub.f32 %v398, %v399
        %v401 = vand.u32 %v400, 4294901760
        %402 = vmatmul.mubr.f32.gmra.mrb[0].mxu0 %v401
        %v403 = vpop.f32.mrb[0].mxu0
        %v404 = vadd.f32 %v322, %v403
        %v405 = vpop.f32.mrb[0].mxu0
        %406 = vdwg.mxu0
        %407 = vmatprep.subr.mxu0 0.0
        %v408 = vand.u32 %v313, 4294901760
        %v409 = vsub.f32 %v313, %v408
        %v410 = vand.u32 %v409, 4294901760
        %v411 = vsub.f32 %v409, %v410
        %v412 = vand.u32 %v411, 4294901760
        %413 = vmatpush1.msra.mxu0 %v412
        %414 = vmatprep.subr.mxu0 0.0
        %v415 = vand.u32 %v314, 4294901760
        %v416 = vsub.f32 %v314, %v415
        %v417 = vand.u32 %v416, 4294901760
        %v418 = vsub.f32 %v416, %v417
        %v419 = vand.u32 %v418, 4294901760
        %420 = vmatpush1.msra.mxu0 %v419
        %421 = vmatprep.subr.mxu0 0.0
        %v422 = vand.u32 %v315, 4294901760
        %v423 = vsub.f32 %v315, %v422
        %v424 = vand.u32 %v423, 4294901760
        %v425 = vsub.f32 %v423, %v424
        %v426 = vand.u32 %v425, 4294901760
        %427 = vmatpush1.msra.mxu0 %v426
        %428 = vmatprep.subr.mxu0 0.0
        %v429 = vand.u32 %v316, 4294901760
        %v430 = vsub.f32 %v316, %v429
        %v431 = vand.u32 %v430, 4294901760
        %v432 = vsub.f32 %v430, %v431
        %v433 = vand.u32 %v432, 4294901760
        %434 = vmatpush1.msra.mxu0 %v433
        %435 = vmatprep.subr.mxu0 0.0
        %436 = vmatpush1.msra.mxu0 0.0
        %437 = vmatprep.subr.mxu0 0.0
        %438 = vmatpush1.msra.mxu0 0.0
        %439 = vmatprep.subr.mxu0 0.0
        %440 = vmatpush1.msra.mxu0 0.0
        %441 = vmatprep.subr.mxu0 0.0
        %442 = vmatpush1.msra.mxu0 0.0
        %443 = vmatprep.subr.mxu0 0.0
        %444 = vmatpush1.msra.mxu0 0.0
        %445 = vmatprep.subr.mxu0 0.0
        %446 = vmatpush1.msra.mxu0 0.0
        %447 = vmatprep.subr.mxu0 0.0
        %448 = vmatpush1.msra.mxu0 0.0
        %449 = vmatprep.subr.mxu0 0.0
        %450 = vmatpush1.msra.mxu0 0.0
        %451 = vmatprep.subr.mxu0 0.0
        %452 = vmatpush1.msra.mxu0 0.0
        %453 = vmatprep.subr.mxu0 0.0
        %454 = vmatpush1.msra.mxu0 0.0
        %455 = vmatprep.subr.mxu0 0.0
        %456 = vmatpush1.msra.mxu0 0.0
        %457 = vmatprep.subr.mxu0 0.0
        %458 = vmatpush1.msra.mxu0 0.0
        %459 = vmatprep.subr.mxu0 0.0
        %460 = vmatpush1.msra.mxu0 0.0
        %461 = vmatprep.subr.mxu0 0.0
        %462 = vmatpush1.msra.mxu0 0.0
        %463 = vmatprep.subr.mxu0 0.0
        %464 = vmatpush1.msra.mxu0 0.0
        %465 = vmatprep.subr.mxu0 0.0
        %466 = vmatpush1.msra.mxu0 0.0
        %467 = vmatprep.subr.mxu0 0.0
        %468 = vmatpush1.msra.mxu0 0.0
        %469 = vmatprep.subr.mxu0 0.0
        %470 = vmatpush1.msra.mxu0 0.0
        %471 = vmatprep.subr.mxu0 0.0
        %472 = vmatpush1.msra.mxu0 0.0
        %473 = vmatprep.subr.mxu0 0.0
        %474 = vmatpush1.msra.mxu0 0.0
        %475 = vmatprep.subr.mxu0 0.0
        %476 = vmatpush1.msra.mxu0 0.0
        %477 = vmatprep.subr.mxu0 0.0
        %478 = vmatpush1.msra.mxu0 0.0
        %479 = vmatprep.subr.mxu0 0.0
        %480 = vmatpush1.msra.mxu0 0.0
        %481 = vmatprep.subr.mxu0 0.0
        %482 = vmatpush1.msra.mxu0 0.0
        %483 = vmatprep.subr.mxu0 0.0
        %484 = vmatpush1.msra.mxu0 0.0
        %485 = vmatprep.subr.mxu0 0.0
        %486 = vmatpush1.msra.mxu0 0.0
        %487 = vmatprep.subr.mxu0 0.0
        %488 = vmatpush1.msra.mxu0 0.0
        %489 = vmatprep.subr.mxu0 0.0
        %490 = vmatpush1.msra.mxu0 0.0
        %491 = vmatprep.mubr.f32.mxu0 0.0
        %v492 = vand.u32 %v326, 4294901760
        %493 = vmatmul.mubr.f32.gmra.mrb[0].mxu0 %v492
        %v494 = vpop.f32.mrb[0].mxu0
        %v495 = vadd.f32 %v404, %v494
        %v496 = vpop.f32.mrb[0].mxu0
        %497 = vdwg.mxu0
        %498 = vmatprep.subr.mxu0 0.0
        %v499 = vand.u32 %v313, 4294901760
        %v500 = vsub.f32 %v313, %v499
        %501 = vmatpush1.msra.mxu0 %v500
        %502 = vmatprep.subr.mxu0 0.0
        %v503 = vand.u32 %v314, 4294901760
        %v504 = vsub.f32 %v314, %v503
        %505 = vmatpush1.msra.mxu0 %v504
        %506 = vmatprep.subr.mxu0 0.0
        %v507 = vand.u32 %v315, 4294901760
        %v508 = vsub.f32 %v315, %v507
        %509 = vmatpush1.msra.mxu0 %v508
        %510 = vmatprep.subr.mxu0 0.0
        %v511 = vand.u32 %v316, 4294901760
        %v512 = vsub.f32 %v316, %v511
        %513 = vmatpush1.msra.mxu0 %v512
        %514 = vmatprep.subr.mxu0 0.0
        %515 = vmatpush1.msra.mxu0 0.0
        %516 = vmatprep.subr.mxu0 0.0
        %517 = vmatpush1.msra.mxu0 0.0
        %518 = vmatprep.subr.mxu0 0.0
        %519 = vmatpush1.msra.mxu0 0.0
        %520 = vmatprep.subr.mxu0 0.0
        %521 = vmatpush1.msra.mxu0 0.0
        %522 = vmatprep.subr.mxu0 0.0
        %523 = vmatpush1.msra.mxu0 0.0
        %524 = vmatprep.subr.mxu0 0.0
        %525 = vmatpush1.msra.mxu0 0.0
        %526 = vmatprep.subr.mxu0 0.0
        %527 = vmatpush1.msra.mxu0 0.0
        %528 = vmatprep.subr.mxu0 0.0
        %529 = vmatpush1.msra.mxu0 0.0
        %530 = vmatprep.subr.mxu0 0.0
        %531 = vmatpush1.msra.mxu0 0.0
        %532 = vmatprep.subr.mxu0 0.0
        %533 = vmatpush1.msra.mxu0 0.0
        %534 = vmatprep.subr.mxu0 0.0
        %535 = vmatpush1.msra.mxu0 0.0
        %536 = vmatprep.subr.mxu0 0.0
        %537 = vmatpush1.msra.mxu0 0.0
        %538 = vmatprep.subr.mxu0 0.0
        %539 = vmatpush1.msra.mxu0 0.0
        %540 = vmatprep.subr.mxu0 0.0
        %541 = vmatpush1.msra.mxu0 0.0
        %542 = vmatprep.subr.mxu0 0.0
        %543 = vmatpush1.msra.mxu0 0.0
        %544 = vmatprep.subr.mxu0 0.0
        %545 = vmatpush1.msra.mxu0 0.0
        %546 = vmatprep.subr.mxu0 0.0
        %547 = vmatpush1.msra.mxu0 0.0
        %548 = vmatprep.subr.mxu0 0.0
        %549 = vmatpush1.msra.mxu0 0.0
        %550 = vmatprep.subr.mxu0 0.0
        %551 = vmatpush1.msra.mxu0 0.0
        %552 = vmatprep.subr.mxu0 0.0
        %553 = vmatpush1.msra.mxu0 0.0
        %554 = vmatprep.subr.mxu0 0.0
        %555 = vmatpush1.msra.mxu0 0.0
        %556 = vmatprep.subr.mxu0 0.0
        %557 = vmatpush1.msra.mxu0 0.0
        %558 = vmatprep.subr.mxu0 0.0
        %559 = vmatpush1.msra.mxu0 0.0
        %560 = vmatprep.subr.mxu0 0.0
        %561 = vmatpush1.msra.mxu0 0.0
        %562 = vmatprep.subr.mxu0 0.0
        %563 = vmatpush1.msra.mxu0 0.0
        %564 = vmatprep.subr.mxu0 0.0
        %565 = vmatpush1.msra.mxu0 0.0
        %566 = vmatprep.subr.mxu0 0.0
        %567 = vmatpush1.msra.mxu0 0.0
        %568 = vmatprep.subr.mxu0 0.0
        %569 = vmatpush1.msra.mxu0 0.0
        %570 = vmatprep.mubr.f32.mxu0 0.0
        %v571 = vand.u32 %v326, 4294901760
        %v572 = vsub.f32 %v326, %v571
        %573 = vmatmul.mubr.f32.gmra.mrb[0].mxu0 %v572
        %v574 = vpop.f32.mrb[0].mxu0
        %v575 = vadd.f32 %v495, %v574
        %v576 = vpop.f32.mrb[0].mxu0
        %577 = vdwg.mxu0
        %578 = vmatprep.subr.mxu0 0.0
        %v579 = vand.u32 %v313, 4294901760
        %580 = vmatpush1.msra.mxu0 %v579
        %581 = vmatprep.subr.mxu0 0.0
        %v582 = vand.u32 %v314, 4294901760
        %583 = vmatpush1.msra.mxu0 %v582
        %584 = vmatprep.subr.mxu0 0.0
        %v585 = vand.u32 %v315, 4294901760
        %586 = vmatpush1.msra.mxu0 %v585
        %587 = vmatprep.subr.mxu0 0.0
        %v588 = vand.u32 %v316, 4294901760
        %589 = vmatpush1.msra.mxu0 %v588
        %590 = vmatprep.subr.mxu0 0.0
        %591 = vmatpush1.msra.mxu0 0.0
        %592 = vmatprep.subr.mxu0 0.0
        %593 = vmatpush1.msra.mxu0 0.0
        %594 = vmatprep.subr.mxu0 0.0
        %595 = vmatpush1.msra.mxu0 0.0
        %596 = vmatprep.subr.mxu0 0.0
        %597 = vmatpush1.msra.mxu0 0.0
        %598 = vmatprep.subr.mxu0 0.0
        %599 = vmatpush1.msra.mxu0 0.0
        %600 = vmatprep.subr.mxu0 0.0
        %601 = vmatpush1.msra.mxu0 0.0
        %602 = vmatprep.subr.mxu0 0.0
        %603 = vmatpush1.msra.mxu0 0.0
        %604 = vmatprep.subr.mxu0 0.0
        %605 = vmatpush1.msra.mxu0 0.0
        %606 = vmatprep.subr.mxu0 0.0
        %607 = vmatpush1.msra.mxu0 0.0
        %608 = vmatprep.subr.mxu0 0.0
        %609 = vmatpush1.msra.mxu0 0.0
        %610 = vmatprep.subr.mxu0 0.0
        %611 = vmatpush1.msra.mxu0 0.0
        %612 = vmatprep.subr.mxu0 0.0
        %613 = vmatpush1.msra.mxu0 0.0
        %614 = vmatprep.subr.mxu0 0.0
        %615 = vmatpush1.msra.mxu0 0.0
        %616 = vmatprep.subr.mxu0 0.0
        %617 = vmatpush1.msra.mxu0 0.0
        %618 = vmatprep.subr.mxu0 0.0
        %619 = vmatpush1.msra.mxu0 0.0
        %620 = vmatprep.subr.mxu0 0.0
        %621 = vmatpush1.msra.mxu0 0.0
        %622 = vmatprep.subr.mxu0 0.0
        %623 = vmatpush1.msra.mxu0 0.0
        %624 = vmatprep.subr.mxu0 0.0
        %625 = vmatpush1.msra.mxu0 0.0
        %626 = vmatprep.subr.mxu0 0.0
        %627 = vmatpush1.msra.mxu0 0.0
        %628 = vmatprep.subr.mxu0 0.0
        %629 = vmatpush1.msra.mxu0 0.0
        %630 = vmatprep.subr.mxu0 0.0
        %631 = vmatpush1.msra.mxu0 0.0
        %632 = vmatprep.subr.mxu0 0.0
        %633 = vmatpush1.msra.mxu0 0.0
        %634 = vmatprep.subr.mxu0 0.0
        %635 = vmatpush1.msra.mxu0 0.0
        %636 = vmatprep.subr.mxu0 0.0
        %637 = vmatpush1.msra.mxu0 0.0
        %638 = vmatprep.subr.mxu0 0.0
        %639 = vmatpush1.msra.mxu0 0.0
        %640 = vmatprep.subr.mxu0 0.0
        %641 = vmatpush1.msra.mxu0 0.0
        %642 = vmatprep.subr.mxu0 0.0
        %643 = vmatpush1.msra.mxu0 0.0
        %644 = vmatprep.subr.mxu0 0.0
        %645 = vmatpush1.msra.mxu0 0.0
        %646 = vmatprep.mubr.f32.mxu0 0.0
        %v647 = vand.u32 %v326, 4294901760
        %v648 = vsub.f32 %v326, %v647
        %v649 = vand.u32 %v648, 4294901760
        %650 = vmatmul.mubr.f32.gmra.mrb[0].mxu0 %v649
        %v651 = vpop.f32.mrb[0].mxu0
        %v652 = vadd.f32 %v575, %v651
        %v653 = vpop.f32.mrb[0].mxu0
        %654 = vdwg.mxu0
        %655 = vmatprep.subr.mxu0 0.0
        %v656 = vand.u32 %v313, 4294901760
        %v657 = vsub.f32 %v313, %v656
        %v658 = vand.u32 %v657, 4294901760
        %659 = vmatpush1.msra.mxu0 %v658
        %660 = vmatprep.subr.mxu0 0.0
        %v661 = vand.u32 %v314, 4294901760
        %v662 = vsub.f32 %v314, %v661
        %v663 = vand.u32 %v662, 4294901760
        %664 = vmatpush1.msra.mxu0 %v663
        %665 = vmatprep.subr.mxu0 0.0
        %v666 = vand.u32 %v315, 4294901760
        %v667 = vsub.f32 %v315, %v666
        %v668 = vand.u32 %v667, 4294901760
        %669 = vmatpush1.msra.mxu0 %v668
        %670 = vmatprep.subr.mxu0 0.0
        %v671 = vand.u32 %v316, 4294901760
        %v672 = vsub.f32 %v316, %v671
        %v673 = vand.u32 %v672, 4294901760
        %674 = vmatpush1.msra.mxu0 %v673
        %675 = vmatprep.subr.mxu0 0.0
        %676 = vmatpush1.msra.mxu0 0.0
        %677 = vmatprep.subr.mxu0 0.0
        %678 = vmatpush1.msra.mxu0 0.0
        %679 = vmatprep.subr.mxu0 0.0
        %680 = vmatpush1.msra.mxu0 0.0
        %681 = vmatprep.subr.mxu0 0.0
        %682 = vmatpush1.msra.mxu0 0.0
        %683 = vmatprep.subr.mxu0 0.0
        %684 = vmatpush1.msra.mxu0 0.0
        %685 = vmatprep.subr.mxu0 0.0
        %686 = vmatpush1.msra.mxu0 0.0
        %687 = vmatprep.subr.mxu0 0.0
        %688 = vmatpush1.msra.mxu0 0.0
        %689 = vmatprep.subr.mxu0 0.0
        %690 = vmatpush1.msra.mxu0 0.0
        %691 = vmatprep.subr.mxu0 0.0
        %692 = vmatpush1.msra.mxu0 0.0
        %693 = vmatprep.subr.mxu0 0.0
        %694 = vmatpush1.msra.mxu0 0.0
        %695 = vmatprep.subr.mxu0 0.0
        %696 = vmatpush1.msra.mxu0 0.0
        %697 = vmatprep.subr.mxu0 0.0
        %698 = vmatpush1.msra.mxu0 0.0
        %699 = vmatprep.subr.mxu0 0.0
        %700 = vmatpush1.msra.mxu0 0.0
        %701 = vmatprep.subr.mxu0 0.0
        %702 = vmatpush1.msra.mxu0 0.0
        %703 = vmatprep.subr.mxu0 0.0
        %704 = vmatpush1.msra.mxu0 0.0
        %705 = vmatprep.subr.mxu0 0.0
        %706 = vmatpush1.msra.mxu0 0.0
        %707 = vmatprep.subr.mxu0 0.0
        %708 = vmatpush1.msra.mxu0 0.0
        %709 = vmatprep.subr.mxu0 0.0
        %710 = vmatpush1.msra.mxu0 0.0
        %711 = vmatprep.subr.mxu0 0.0
        %712 = vmatpush1.msra.mxu0 0.0
        %713 = vmatprep.subr.mxu0 0.0
        %714 = vmatpush1.msra.mxu0 0.0
        %715 = vmatprep.subr.mxu0 0.0
        %716 = vmatpush1.msra.mxu0 0.0
        %717 = vmatprep.subr.mxu0 0.0
        %718 = vmatpush1.msra.mxu0 0.0
        %719 = vmatprep.subr.mxu0 0.0
        %720 = vmatpush1.msra.mxu0 0.0
        %721 = vmatprep.subr.mxu0 0.0
        %722 = vmatpush1.msra.mxu0 0.0
        %723 = vmatprep.subr.mxu0 0.0
        %724 = vmatpush1.msra.mxu0 0.0
        %725 = vmatprep.subr.mxu0 0.0
        %726 = vmatpush1.msra.mxu0 0.0
        %727 = vmatprep.subr.mxu0 0.0
        %728 = vmatpush1.msra.mxu0 0.0
        %729 = vmatprep.subr.mxu0 0.0
        %730 = vmatpush1.msra.mxu0 0.0
        %731 = vmatprep.mubr.f32.mxu0 0.0
        %v732 = vand.u32 %v326, 4294901760
        %733 = vmatmul.mubr.f32.gmra.mrb[0].mxu0 %v732
        %v734 = vpop.f32.mrb[0].mxu0
        %v735 = vadd.f32 %v652, %v734
        %v736 = vpop.f32.mrb[0].mxu0
        %737 = vdwg.mxu0
        %738 = vmatprep.subr.mxu0 0.0
        %v739 = vand.u32 %v313, 4294901760
        %740 = vmatpush1.msra.mxu0 %v739
        %741 = vmatprep.subr.mxu0 0.0
        %v742 = vand.u32 %v314, 4294901760
        %743 = vmatpush1.msra.mxu0 %v742
        %744 = vmatprep.subr.mxu0 0.0
        %v745 = vand.u32 %v315, 4294901760
        %746 = vmatpush1.msra.mxu0 %v745
        %747 = vmatprep.subr.mxu0 0.0
        %v748 = vand.u32 %v316, 4294901760
        %749 = vmatpush1.msra.mxu0 %v748
        %750 = vmatprep.subr.mxu0 0.0
        %751 = vmatpush1.msra.mxu0 0.0
        %752 = vmatprep.subr.mxu0 0.0
        %753 = vmatpush1.msra.mxu0 0.0
        %754 = vmatprep.subr.mxu0 0.0
        %755 = vmatpush1.msra.mxu0 0.0
        %756 = vmatprep.subr.mxu0 0.0
        %757 = vmatpush1.msra.mxu0 0.0
        %758 = vmatprep.subr.mxu0 0.0
        %759 = vmatpush1.msra.mxu0 0.0
        %760 = vmatprep.subr.mxu0 0.0
        %761 = vmatpush1.msra.mxu0 0.0
        %762 = vmatprep.subr.mxu0 0.0
        %763 = vmatpush1.msra.mxu0 0.0
        %764 = vmatprep.subr.mxu0 0.0
        %765 = vmatpush1.msra.mxu0 0.0
        %766 = vmatprep.subr.mxu0 0.0
        %767 = vmatpush1.msra.mxu0 0.0
        %768 = vmatprep.subr.mxu0 0.0
        %769 = vmatpush1.msra.mxu0 0.0
        %770 = vmatprep.subr.mxu0 0.0
        %771 = vmatpush1.msra.mxu0 0.0
        %772 = vmatprep.subr.mxu0 0.0
        %773 = vmatpush1.msra.mxu0 0.0
        %774 = vmatprep.subr.mxu0 0.0
        %775 = vmatpush1.msra.mxu0 0.0
        %776 = vmatprep.subr.mxu0 0.0
        %777 = vmatpush1.msra.mxu0 0.0
        %778 = vmatprep.subr.mxu0 0.0
        %779 = vmatpush1.msra.mxu0 0.0
        %780 = vmatprep.subr.mxu0 0.0
        %781 = vmatpush1.msra.mxu0 0.0
        %782 = vmatprep.subr.mxu0 0.0
        %783 = vmatpush1.msra.mxu0 0.0
        %784 = vmatprep.subr.mxu0 0.0
        %785 = vmatpush1.msra.mxu0 0.0
        %786 = vmatprep.subr.mxu0 0.0
        %787 = vmatpush1.msra.mxu0 0.0
        %788 = vmatprep.subr.mxu0 0.0
        %789 = vmatpush1.msra.mxu0 0.0
        %790 = vmatprep.subr.mxu0 0.0
        %791 = vmatpush1.msra.mxu0 0.0
        %792 = vmatprep.subr.mxu0 0.0
        %793 = vmatpush1.msra.mxu0 0.0
        %794 = vmatprep.subr.mxu0 0.0
        %795 = vmatpush1.msra.mxu0 0.0
        %796 = vmatprep.subr.mxu0 0.0
        %797 = vmatpush1.msra.mxu0 0.0
        %798 = vmatprep.subr.mxu0 0.0
        %799 = vmatpush1.msra.mxu0 0.0
        %800 = vmatprep.subr.mxu0 0.0
        %801 = vmatpush1.msra.mxu0 0.0
        %802 = vmatprep.subr.mxu0 0.0
        %803 = vmatpush1.msra.mxu0 0.0
        %804 = vmatprep.subr.mxu0 0.0
        %805 = vmatpush1.msra.mxu0 0.0
        %806 = vmatprep.mubr.f32.mxu0 0.0
        %v807 = vand.u32 %v326, 4294901760
        %808 = vmatmul.mubr.f32.gmra.mrb[0].mxu0 %v807
        %v809 = vpop.f32.mrb[0].mxu0
        %v810 = vadd.f32 %v735, %v809
        %v811 = vpop.f32.mrb[0].mxu0
        %812 = vdwg.mxu0
        %vm813 = vcmask 130048
        %814 = vst.msk [vmem:[%s297] sm:$0xff] %vm813, %v810
        %v815 = vld [vmem:[%s3] sm:$0xff]
        %v816 = vld [vmem:[%s3 + $0x8] sm:$0xff]
        %v817 = vld [vmem:[%s4] sm:$0x1]
        %v819 = vlaneseq
        %v820 = vshrl.u32 %v819, 7
        %v821 = vsub.s32 0, %v820
        %v822 = vrot.slane %v817, %v821
        %v825 = vsel %vm813, %v810, 0
        %827 = vmatprep.subr.mxu0 0.0
        %v828 = vand.u32 %v815, 4294901760
        %829 = vmatpush1.msra.mxu0 %v828
        %830 = vmatprep.subr.mxu0 0.0
        %v831 = vand.u32 %v816, 4294901760
        %832 = vmatpush1.msra.mxu0 %v831
        %833 = vmatprep.subr.mxu0 0.0
        %834 = vmatpush1.msra.mxu0 0.0
        %835 = vmatprep.subr.mxu0 0.0
        %836 = vmatpush1.msra.mxu0 0.0
        %837 = vmatprep.subr.mxu0 0.0
        %838 = vmatpush1.msra.mxu0 0.0
        %839 = vmatprep.subr.mxu0 0.0
        %840 = vmatpush1.msra.mxu0 0.0
        %841 = vmatprep.subr.mxu0 0.0
        %842 = vmatpush1.msra.mxu0 0.0
        %843 = vmatprep.subr.mxu0 0.0
        %844 = vmatpush1.msra.mxu0 0.0
        %845 = vmatprep.subr.mxu0 0.0
        %846 = vmatpush1.msra.mxu0 0.0
        %847 = vmatprep.subr.mxu0 0.0
        %848 = vmatpush1.msra.mxu0 0.0
        %849 = vmatprep.subr.mxu0 0.0
        %850 = vmatpush1.msra.mxu0 0.0
        %851 = vmatprep.subr.mxu0 0.0
        %852 = vmatpush1.msra.mxu0 0.0
        %853 = vmatprep.subr.mxu0 0.0
        %854 = vmatpush1.msra.mxu0 0.0
        %855 = vmatprep.subr.mxu0 0.0
        %856 = vmatpush1.msra.mxu0 0.0
        %857 = vmatprep.subr.mxu0 0.0
        %858 = vmatpush1.msra.mxu0 0.0
        %859 = vmatprep.subr.mxu0 0.0
        %860 = vmatpush1.msra.mxu0 0.0
        %861 = vmatprep.subr.mxu0 0.0
        %862 = vmatpush1.msra.mxu0 0.0
        %863 = vmatprep.subr.mxu0 0.0
        %864 = vmatpush1.msra.mxu0 0.0
        %865 = vmatprep.subr.mxu0 0.0
        %866 = vmatpush1.msra.mxu0 0.0
        %867 = vmatprep.subr.mxu0 0.0
        %868 = vmatpush1.msra.mxu0 0.0
        %869 = vmatprep.subr.mxu0 0.0
        %870 = vmatpush1.msra.mxu0 0.0
        %871 = vmatprep.subr.mxu0 0.0
        %872 = vmatpush1.msra.mxu0 0.0
        %873 = vmatprep.subr.mxu0 0.0
        %874 = vmatpush1.msra.mxu0 0.0
        %875 = vmatprep.subr.mxu0 0.0
        %876 = vmatpush1.msra.mxu0 0.0
        %877 = vmatprep.subr.mxu0 0.0
        %878 = vmatpush1.msra.mxu0 0.0
        %879 = vmatprep.subr.mxu0 0.0
        %880 = vmatpush1.msra.mxu0 0.0
        %881 = vmatprep.subr.mxu0 0.0
        %882 = vmatpush1.msra.mxu0 0.0
        %883 = vmatprep.subr.mxu0 0.0
        %884 = vmatpush1.msra.mxu0 0.0
        %885 = vmatprep.subr.mxu0 0.0
        %886 = vmatpush1.msra.mxu0 0.0
        %887 = vmatprep.subr.mxu0 0.0
        %888 = vmatpush1.msra.mxu0 0.0
        %889 = vmatprep.subr.mxu0 0.0
        %890 = vmatpush1.msra.mxu0 0.0
        %891 = vmatprep.subr.mxu0 0.0
        %892 = vmatpush1.msra.mxu0 0.0
        %893 = vmatprep.mubr.f32.mxu0 0.0
        %v894 = vand.u32 %v825, 4294901760
        %v895 = vsub.f32 %v825, %v894
        %v896 = vand.u32 %v895, 4294901760
        %v897 = vsub.f32 %v895, %v896
        %v898 = vand.u32 %v897, 4294901760
        %899 = vmatmul.mubr.f32.gmra.mrb[0].mxu0 %v898
        %v900 = vpop.f32.mrb[0].mxu0
        %v901 = vadd.f32 %v822, %v900
        %v902 = vpop.f32.mrb[0].mxu0
        %903 = vdwg.mxu0
        %904 = vmatprep.subr.mxu0 0.0
        %v905 = vand.u32 %v815, 4294901760
        %v906 = vsub.f32 %v815, %v905
        %v907 = vand.u32 %v906, 4294901760
        %v908 = vsub.f32 %v906, %v907
        %v909 = vand.u32 %v908, 4294901760
        %910 = vmatpush1.msra.mxu0 %v909
        %911 = vmatprep.subr.mxu0 0.0
        %v912 = vand.u32 %v816, 4294901760
        %v913 = vsub.f32 %v816, %v912
        %v914 = vand.u32 %v913, 4294901760
        %v915 = vsub.f32 %v913, %v914
        %v916 = vand.u32 %v915, 4294901760
        %917 = vmatpush1.msra.mxu0 %v916
        %918 = vmatprep.subr.mxu0 0.0
        %919 = vmatpush1.msra.mxu0 0.0
        %920 = vmatprep.subr.mxu0 0.0
        %921 = vmatpush1.msra.mxu0 0.0
        %922 = vmatprep.subr.mxu0 0.0
        %923 = vmatpush1.msra.mxu0 0.0
        %924 = vmatprep.subr.mxu0 0.0
        %925 = vmatpush1.msra.mxu0 0.0
        %926 = vmatprep.subr.mxu0 0.0
        %927 = vmatpush1.msra.mxu0 0.0
        %928 = vmatprep.subr.mxu0 0.0
        %929 = vmatpush1.msra.mxu0 0.0
        %930 = vmatprep.subr.mxu0 0.0
        %931 = vmatpush1.msra.mxu0 0.0
        %932 = vmatprep.subr.mxu0 0.0
        %933 = vmatpush1.msra.mxu0 0.0
        %934 = vmatprep.subr.mxu0 0.0
        %935 = vmatpush1.msra.mxu0 0.0
        %936 = vmatprep.subr.mxu0 0.0
        %937 = vmatpush1.msra.mxu0 0.0
        %938 = vmatprep.subr.mxu0 0.0
        %939 = vmatpush1.msra.mxu0 0.0
        %940 = vmatprep.subr.mxu0 0.0
        %941 = vmatpush1.msra.mxu0 0.0
        %942 = vmatprep.subr.mxu0 0.0
        %943 = vmatpush1.msra.mxu0 0.0
        %944 = vmatprep.subr.mxu0 0.0
        %945 = vmatpush1.msra.mxu0 0.0
        %946 = vmatprep.subr.mxu0 0.0
        %947 = vmatpush1.msra.mxu0 0.0
        %948 = vmatprep.subr.mxu0 0.0
        %949 = vmatpush1.msra.mxu0 0.0
        %950 = vmatprep.subr.mxu0 0.0
        %951 = vmatpush1.msra.mxu0 0.0
        %952 = vmatprep.subr.mxu0 0.0
        %953 = vmatpush1.msra.mxu0 0.0
        %954 = vmatprep.subr.mxu0 0.0
        %955 = vmatpush1.msra.mxu0 0.0
        %956 = vmatprep.subr.mxu0 0.0
        %957 = vmatpush1.msra.mxu0 0.0
        %958 = vmatprep.subr.mxu0 0.0
        %959 = vmatpush1.msra.mxu0 0.0
        %960 = vmatprep.subr.mxu0 0.0
        %961 = vmatpush1.msra.mxu0 0.0
        %962 = vmatprep.subr.mxu0 0.0
        %963 = vmatpush1.msra.mxu0 0.0
        %964 = vmatprep.subr.mxu0 0.0
        %965 = vmatpush1.msra.mxu0 0.0
        %966 = vmatprep.subr.mxu0 0.0
        %967 = vmatpush1.msra.mxu0 0.0
        %968 = vmatprep.subr.mxu0 0.0
        %969 = vmatpush1.msra.mxu0 0.0
        %970 = vmatprep.subr.mxu0 0.0
        %971 = vmatpush1.msra.mxu0 0.0
        %972 = vmatprep.subr.mxu0 0.0
        %973 = vmatpush1.msra.mxu0 0.0
        %974 = vmatprep.subr.mxu0 0.0
        %975 = vmatpush1.msra.mxu0 0.0
        %976 = vmatprep.subr.mxu0 0.0
        %977 = vmatpush1.msra.mxu0 0.0
        %978 = vmatprep.mubr.f32.mxu0 0.0
        %v979 = vand.u32 %v825, 4294901760
        %980 = vmatmul.mubr.f32.gmra.mrb[0].mxu0 %v979
        %v981 = vpop.f32.mrb[0].mxu0
        %v982 = vadd.f32 %v901, %v981
        %v983 = vpop.f32.mrb[0].mxu0
        %984 = vdwg.mxu0
        %985 = vmatprep.subr.mxu0 0.0
        %v986 = vand.u32 %v815, 4294901760
        %v987 = vsub.f32 %v815, %v986
        %988 = vmatpush1.msra.mxu0 %v987
        %989 = vmatprep.subr.mxu0 0.0
        %v990 = vand.u32 %v816, 4294901760
        %v991 = vsub.f32 %v816, %v990
        %992 = vmatpush1.msra.mxu0 %v991
        %993 = vmatprep.subr.mxu0 0.0
        %994 = vmatpush1.msra.mxu0 0.0
        %995 = vmatprep.subr.mxu0 0.0
        %996 = vmatpush1.msra.mxu0 0.0
        %997 = vmatprep.subr.mxu0 0.0
        %998 = vmatpush1.msra.mxu0 0.0
        %999 = vmatprep.subr.mxu0 0.0
        %1000 = vmatpush1.msra.mxu0 0.0
        %1001 = vmatprep.subr.mxu0 0.0
        %1002 = vmatpush1.msra.mxu0 0.0
        %1003 = vmatprep.subr.mxu0 0.0
        %1004 = vmatpush1.msra.mxu0 0.0
        %1005 = vmatprep.subr.mxu0 0.0
        %1006 = vmatpush1.msra.mxu0 0.0
        %1007 = vmatprep.subr.mxu0 0.0
        %1008 = vmatpush1.msra.mxu0 0.0
        %1009 = vmatprep.subr.mxu0 0.0
        %1010 = vmatpush1.msra.mxu0 0.0
        %1011 = vmatprep.subr.mxu0 0.0
        %1012 = vmatpush1.msra.mxu0 0.0
        %1013 = vmatprep.subr.mxu0 0.0
        %1014 = vmatpush1.msra.mxu0 0.0
        %1015 = vmatprep.subr.mxu0 0.0
        %1016 = vmatpush1.msra.mxu0 0.0
        %1017 = vmatprep.subr.mxu0 0.0
        %1018 = vmatpush1.msra.mxu0 0.0
        %1019 = vmatprep.subr.mxu0 0.0
        %1020 = vmatpush1.msra.mxu0 0.0
        %1021 = vmatprep.subr.mxu0 0.0
        %1022 = vmatpush1.msra.mxu0 0.0
        %1023 = vmatprep.subr.mxu0 0.0
        %1024 = vmatpush1.msra.mxu0 0.0
        %1025 = vmatprep.subr.mxu0 0.0
        %1026 = vmatpush1.msra.mxu0 0.0
        %1027 = vmatprep.subr.mxu0 0.0
        %1028 = vmatpush1.msra.mxu0 0.0
        %1029 = vmatprep.subr.mxu0 0.0
        %1030 = vmatpush1.msra.mxu0 0.0
        %1031 = vmatprep.subr.mxu0 0.0
        %1032 = vmatpush1.msra.mxu0 0.0
        %1033 = vmatprep.subr.mxu0 0.0
        %1034 = vmatpush1.msra.mxu0 0.0
        %1035 = vmatprep.subr.mxu0 0.0
        %1036 = vmatpush1.msra.mxu0 0.0
        %1037 = vmatprep.subr.mxu0 0.0
        %1038 = vmatpush1.msra.mxu0 0.0
        %1039 = vmatprep.subr.mxu0 0.0
        %1040 = vmatpush1.msra.mxu0 0.0
        %1041 = vmatprep.subr.mxu0 0.0
        %1042 = vmatpush1.msra.mxu0 0.0
        %1043 = vmatprep.subr.mxu0 0.0
        %1044 = vmatpush1.msra.mxu0 0.0
        %1045 = vmatprep.subr.mxu0 0.0
        %1046 = vmatpush1.msra.mxu0 0.0
        %1047 = vmatprep.subr.mxu0 0.0
        %1048 = vmatpush1.msra.mxu0 0.0
        %1049 = vmatprep.subr.mxu0 0.0
        %1050 = vmatpush1.msra.mxu0 0.0
        %1051 = vmatprep.subr.mxu0 0.0
        %1052 = vmatpush1.msra.mxu0 0.0
        %1053 = vmatprep.mubr.f32.mxu0 0.0
        %v1054 = vand.u32 %v825, 4294901760
        %v1055 = vsub.f32 %v825, %v1054
        %1056 = vmatmul.mubr.f32.gmra.mrb[0].mxu0 %v1055
        %v1057 = vpop.f32.mrb[0].mxu0
        %v1058 = vadd.f32 %v982, %v1057
        %v1059 = vpop.f32.mrb[0].mxu0
        %1060 = vdwg.mxu0
        %1061 = vmatprep.subr.mxu0 0.0
        %v1062 = vand.u32 %v815, 4294901760
        %1063 = vmatpush1.msra.mxu0 %v1062
        %1064 = vmatprep.subr.mxu0 0.0
        %v1065 = vand.u32 %v816, 4294901760
        %1066 = vmatpush1.msra.mxu0 %v1065
        %1067 = vmatprep.subr.mxu0 0.0
        %1068 = vmatpush1.msra.mxu0 0.0
        %1069 = vmatprep.subr.mxu0 0.0
        %1070 = vmatpush1.msra.mxu0 0.0
        %1071 = vmatprep.subr.mxu0 0.0
        %1072 = vmatpush1.msra.mxu0 0.0
        %1073 = vmatprep.subr.mxu0 0.0
        %1074 = vmatpush1.msra.mxu0 0.0
        %1075 = vmatprep.subr.mxu0 0.0
        %1076 = vmatpush1.msra.mxu0 0.0
        %1077 = vmatprep.subr.mxu0 0.0
        %1078 = vmatpush1.msra.mxu0 0.0
        %1079 = vmatprep.subr.mxu0 0.0
        %1080 = vmatpush1.msra.mxu0 0.0
        %1081 = vmatprep.subr.mxu0 0.0
        %1082 = vmatpush1.msra.mxu0 0.0
        %1083 = vmatprep.subr.mxu0 0.0
        %1084 = vmatpush1.msra.mxu0 0.0
        %1085 = vmatprep.subr.mxu0 0.0
        %1086 = vmatpush1.msra.mxu0 0.0
        %1087 = vmatprep.subr.mxu0 0.0
        %1088 = vmatpush1.msra.mxu0 0.0
        %1089 = vmatprep.subr.mxu0 0.0
        %1090 = vmatpush1.msra.mxu0 0.0
        %1091 = vmatprep.subr.mxu0 0.0
        %1092 = vmatpush1.msra.mxu0 0.0
        %1093 = vmatprep.subr.mxu0 0.0
        %1094 = vmatpush1.msra.mxu0 0.0
        %1095 = vmatprep.subr.mxu0 0.0
        %1096 = vmatpush1.msra.mxu0 0.0
        %1097 = vmatprep.subr.mxu0 0.0
        %1098 = vmatpush1.msra.mxu0 0.0
        %1099 = vmatprep.subr.mxu0 0.0
        %1100 = vmatpush1.msra.mxu0 0.0
        %1101 = vmatprep.subr.mxu0 0.0
        %1102 = vmatpush1.msra.mxu0 0.0
        %1103 = vmatprep.subr.mxu0 0.0
        %1104 = vmatpush1.msra.mxu0 0.0
        %1105 = vmatprep.subr.mxu0 0.0
        %1106 = vmatpush1.msra.mxu0 0.0
        %1107 = vmatprep.subr.mxu0 0.0
        %1108 = vmatpush1.msra.mxu0 0.0
        %1109 = vmatprep.subr.mxu0 0.0
        %1110 = vmatpush1.msra.mxu0 0.0
        %1111 = vmatprep.subr.mxu0 0.0
        %1112 = vmatpush1.msra.mxu0 0.0
        %1113 = vmatprep.subr.mxu0 0.0
        %1114 = vmatpush1.msra.mxu0 0.0
        %1115 = vmatprep.subr.mxu0 0.0
        %1116 = vmatpush1.msra.mxu0 0.0
        %1117 = vmatprep.subr.mxu0 0.0
        %1118 = vmatpush1.msra.mxu0 0.0
        %1119 = vmatprep.subr.mxu0 0.0
        %1120 = vmatpush1.msra.mxu0 0.0
        %1121 = vmatprep.subr.mxu0 0.0
        %1122 = vmatpush1.msra.mxu0 0.0
        %1123 = vmatprep.subr.mxu0 0.0
        %1124 = vmatpush1.msra.mxu0 0.0
        %1125 = vmatprep.subr.mxu0 0.0
        %1126 = vmatpush1.msra.mxu0 0.0
        %1127 = vmatprep.mubr.f32.mxu0 0.0
        %v1128 = vand.u32 %v825, 4294901760
        %v1129 = vsub.f32 %v825, %v1128
        %v1130 = vand.u32 %v1129, 4294901760
        %1131 = vmatmul.mubr.f32.gmra.mrb[0].mxu0 %v1130
        %v1132 = vpop.f32.mrb[0].mxu0
        %v1133 = vadd.f32 %v1058, %v1132
        %v1134 = vpop.f32.mrb[0].mxu0
        %1135 = vdwg.mxu0
        %1136 = vmatprep.subr.mxu0 0.0
        %v1137 = vand.u32 %v815, 4294901760
        %v1138 = vsub.f32 %v815, %v1137
        %v1139 = vand.u32 %v1138, 4294901760
        %1140 = vmatpush1.msra.mxu0 %v1139
        %1141 = vmatprep.subr.mxu0 0.0
        %v1142 = vand.u32 %v816, 4294901760
        %v1143 = vsub.f32 %v816, %v1142
        %v1144 = vand.u32 %v1143, 4294901760
        %1145 = vmatpush1.msra.mxu0 %v1144
        %1146 = vmatprep.subr.mxu0 0.0
        %1147 = vmatpush1.msra.mxu0 0.0
        %1148 = vmatprep.subr.mxu0 0.0
        %1149 = vmatpush1.msra.mxu0 0.0
        %1150 = vmatprep.subr.mxu0 0.0
        %1151 = vmatpush1.msra.mxu0 0.0
        %1152 = vmatprep.subr.mxu0 0.0
        %1153 = vmatpush1.msra.mxu0 0.0
        %1154 = vmatprep.subr.mxu0 0.0
        %1155 = vmatpush1.msra.mxu0 0.0
        %1156 = vmatprep.subr.mxu0 0.0
        %1157 = vmatpush1.msra.mxu0 0.0
        %1158 = vmatprep.subr.mxu0 0.0
        %1159 = vmatpush1.msra.mxu0 0.0
        %1160 = vmatprep.subr.mxu0 0.0
        %1161 = vmatpush1.msra.mxu0 0.0
        %1162 = vmatprep.subr.mxu0 0.0
        %1163 = vmatpush1.msra.mxu0 0.0
        %1164 = vmatprep.subr.mxu0 0.0
        %1165 = vmatpush1.msra.mxu0 0.0
        %1166 = vmatprep.subr.mxu0 0.0
        %1167 = vmatpush1.msra.mxu0 0.0
        %1168 = vmatprep.subr.mxu0 0.0
        %1169 = vmatpush1.msra.mxu0 0.0
        %1170 = vmatprep.subr.mxu0 0.0
        %1171 = vmatpush1.msra.mxu0 0.0
        %1172 = vmatprep.subr.mxu0 0.0
        %1173 = vmatpush1.msra.mxu0 0.0
        %1174 = vmatprep.subr.mxu0 0.0
        %1175 = vmatpush1.msra.mxu0 0.0
        %1176 = vmatprep.subr.mxu0 0.0
        %1177 = vmatpush1.msra.mxu0 0.0
        %1178 = vmatprep.subr.mxu0 0.0
        %1179 = vmatpush1.msra.mxu0 0.0
        %1180 = vmatprep.subr.mxu0 0.0
        %1181 = vmatpush1.msra.mxu0 0.0
        %1182 = vmatprep.subr.mxu0 0.0
        %1183 = vmatpush1.msra.mxu0 0.0
        %1184 = vmatprep.subr.mxu0 0.0
        %1185 = vmatpush1.msra.mxu0 0.0
        %1186 = vmatprep.subr.mxu0 0.0
        %1187 = vmatpush1.msra.mxu0 0.0
        %1188 = vmatprep.subr.mxu0 0.0
        %1189 = vmatpush1.msra.mxu0 0.0
        %1190 = vmatprep.subr.mxu0 0.0
        %1191 = vmatpush1.msra.mxu0 0.0
        %1192 = vmatprep.subr.mxu0 0.0
        %1193 = vmatpush1.msra.mxu0 0.0
        %1194 = vmatprep.subr.mxu0 0.0
        %1195 = vmatpush1.msra.mxu0 0.0
        %1196 = vmatprep.subr.mxu0 0.0
        %1197 = vmatpush1.msra.mxu0 0.0
        %1198 = vmatprep.subr.mxu0 0.0
        %1199 = vmatpush1.msra.mxu0 0.0
        %1200 = vmatprep.subr.mxu0 0.0
        %1201 = vmatpush1.msra.mxu0 0.0
        %1202 = vmatprep.subr.mxu0 0.0
        %1203 = vmatpush1.msra.mxu0 0.0
        %1204 = vmatprep.subr.mxu0 0.0
        %1205 = vmatpush1.msra.mxu0 0.0
        %1206 = vmatprep.mubr.f32.mxu0 0.0
        %v1207 = vand.u32 %v825, 4294901760
        %1208 = vmatmul.mubr.f32.gmra.mrb[0].mxu0 %v1207
        %v1209 = vpop.f32.mrb[0].mxu0
        %v1210 = vadd.f32 %v1133, %v1209
        %v1211 = vpop.f32.mrb[0].mxu0
        %1212 = vdwg.mxu0
        %1213 = vmatprep.subr.mxu0 0.0
        %v1214 = vand.u32 %v815, 4294901760
        %1215 = vmatpush1.msra.mxu0 %v1214
        %1216 = vmatprep.subr.mxu0 0.0
        %v1217 = vand.u32 %v816, 4294901760
        %1218 = vmatpush1.msra.mxu0 %v1217
        %1219 = vmatprep.subr.mxu0 0.0
        %1220 = vmatpush1.msra.mxu0 0.0
        %1221 = vmatprep.subr.mxu0 0.0
        %1222 = vmatpush1.msra.mxu0 0.0
        %1223 = vmatprep.subr.mxu0 0.0
        %1224 = vmatpush1.msra.mxu0 0.0
        %1225 = vmatprep.subr.mxu0 0.0
        %1226 = vmatpush1.msra.mxu0 0.0
        %1227 = vmatprep.subr.mxu0 0.0
        %1228 = vmatpush1.msra.mxu0 0.0
        %1229 = vmatprep.subr.mxu0 0.0
        %1230 = vmatpush1.msra.mxu0 0.0
        %1231 = vmatprep.subr.mxu0 0.0
        %1232 = vmatpush1.msra.mxu0 0.0
        %1233 = vmatprep.subr.mxu0 0.0
        %1234 = vmatpush1.msra.mxu0 0.0
        %1235 = vmatprep.subr.mxu0 0.0
        %1236 = vmatpush1.msra.mxu0 0.0
        %1237 = vmatprep.subr.mxu0 0.0
        %1238 = vmatpush1.msra.mxu0 0.0
        %1239 = vmatprep.subr.mxu0 0.0
        %1240 = vmatpush1.msra.mxu0 0.0
        %1241 = vmatprep.subr.mxu0 0.0
        %1242 = vmatpush1.msra.mxu0 0.0
        %1243 = vmatprep.subr.mxu0 0.0
        %1244 = vmatpush1.msra.mxu0 0.0
        %1245 = vmatprep.subr.mxu0 0.0
        %1246 = vmatpush1.msra.mxu0 0.0
        %1247 = vmatprep.subr.mxu0 0.0
        %1248 = vmatpush1.msra.mxu0 0.0
        %1249 = vmatprep.subr.mxu0 0.0
        %1250 = vmatpush1.msra.mxu0 0.0
        %1251 = vmatprep.subr.mxu0 0.0
        %1252 = vmatpush1.msra.mxu0 0.0
        %1253 = vmatprep.subr.mxu0 0.0
        %1254 = vmatpush1.msra.mxu0 0.0
        %1255 = vmatprep.subr.mxu0 0.0
        %1256 = vmatpush1.msra.mxu0 0.0
        %1257 = vmatprep.subr.mxu0 0.0
        %1258 = vmatpush1.msra.mxu0 0.0
        %1259 = vmatprep.subr.mxu0 0.0
        %1260 = vmatpush1.msra.mxu0 0.0
        %1261 = vmatprep.subr.mxu0 0.0
        %1262 = vmatpush1.msra.mxu0 0.0
        %1263 = vmatprep.subr.mxu0 0.0
        %1264 = vmatpush1.msra.mxu0 0.0
        %1265 = vmatprep.subr.mxu0 0.0
        %1266 = vmatpush1.msra.mxu0 0.0
        %1267 = vmatprep.subr.mxu0 0.0
        %1268 = vmatpush1.msra.mxu0 0.0
        %1269 = vmatprep.subr.mxu0 0.0
        %1270 = vmatpush1.msra.mxu0 0.0
        %1271 = vmatprep.subr.mxu0 0.0
        %1272 = vmatpush1.msra.mxu0 0.0
        %1273 = vmatprep.subr.mxu0 0.0
        %1274 = vmatpush1.msra.mxu0 0.0
        %1275 = vmatprep.subr.mxu0 0.0
        %1276 = vmatpush1.msra.mxu0 0.0
        %1277 = vmatprep.subr.mxu0 0.0
        %1278 = vmatpush1.msra.mxu0 0.0
        %1279 = vmatprep.mubr.f32.mxu0 0.0
        %v1280 = vand.u32 %v825, 4294901760
        %1281 = vmatmul.mubr.f32.gmra.mrb[0].mxu0 %v1280
        %v1282 = vpop.f32.mrb[0].mxu0
        %v1283 = vadd.f32 %v1210, %v1282
        %v1284 = vpop.f32.mrb[0].mxu0
        %1285 = vdwg.mxu0
        %v1286 = vmax.f32 %v1283, 0.0
        %v1287 = vld [vmem:[%s5] sm:$0xff]
        %v1288 = vld [vmem:[%s5 + $0x8] sm:$0xff]
        %v1289 = vld [vmem:[%s5 + $0x10] sm:$0xff]
        %v1290 = vld [vmem:[%s5 + $0x18] sm:$0xff]
        %v1291 = vld [vmem:[%s6] sm:$0x1]
        %v1293 = vlaneseq
        %v1294 = vshrl.u32 %v1293, 7
        %v1295 = vsub.s32 0, %v1294
        %v1296 = vrot.slane %v1291, %v1295
        %v1299 = vsel %vm324, %v1286, 0
        %1301 = vmatprep.subr.mxu0 0.0
        %v1302 = vand.u32 %v1287, 4294901760
        %1303 = vmatpush1.msra.mxu0 %v1302
        %1304 = vmatprep.subr.mxu0 0.0
        %v1305 = vand.u32 %v1288, 4294901760
        %1306 = vmatpush1.msra.mxu0 %v1305
        %1307 = vmatprep.subr.mxu0 0.0
        %v1308 = vand.u32 %v1289, 4294901760
        %1309 = vmatpush1.msra.mxu0 %v1308
        %1310 = vmatprep.subr.mxu0 0.0
        %v1311 = vand.u32 %v1290, 4294901760
        %1312 = vmatpush1.msra.mxu0 %v1311
        %1313 = vmatprep.subr.mxu0 0.0
        %1314 = vmatpush1.msra.mxu0 0.0
        %1315 = vmatprep.subr.mxu0 0.0
        %1316 = vmatpush1.msra.mxu0 0.0
        %1317 = vmatprep.subr.mxu0 0.0
        %1318 = vmatpush1.msra.mxu0 0.0
        %1319 = vmatprep.subr.mxu0 0.0
        %1320 = vmatpush1.msra.mxu0 0.0
        %1321 = vmatprep.subr.mxu0 0.0
        %1322 = vmatpush1.msra.mxu0 0.0
        %1323 = vmatprep.subr.mxu0 0.0
        %1324 = vmatpush1.msra.mxu0 0.0
        %1325 = vmatprep.subr.mxu0 0.0
        %1326 = vmatpush1.msra.mxu0 0.0
        %1327 = vmatprep.subr.mxu0 0.0
        %1328 = vmatpush1.msra.mxu0 0.0
        %1329 = vmatprep.subr.mxu0 0.0
        %1330 = vmatpush1.msra.mxu0 0.0
        %1331 = vmatprep.subr.mxu0 0.0
        %1332 = vmatpush1.msra.mxu0 0.0
        %1333 = vmatprep.subr.mxu0 0.0
        %1334 = vmatpush1.msra.mxu0 0.0
        %1335 = vmatprep.subr.mxu0 0.0
        %1336 = vmatpush1.msra.mxu0 0.0
        %1337 = vmatprep.subr.mxu0 0.0
        %1338 = vmatpush1.msra.mxu0 0.0
        %1339 = vmatprep.subr.mxu0 0.0
        %1340 = vmatpush1.msra.mxu0 0.0
        %1341 = vmatprep.subr.mxu0 0.0
        %1342 = vmatpush1.msra.mxu0 0.0
        %1343 = vmatprep.subr.mxu0 0.0
        %1344 = vmatpush1.msra.mxu0 0.0
        %1345 = vmatprep.subr.mxu0 0.0
        %1346 = vmatpush1.msra.mxu0 0.0
        %1347 = vmatprep.subr.mxu0 0.0
        %1348 = vmatpush1.msra.mxu0 0.0
        %1349 = vmatprep.subr.mxu0 0.0
        %1350 = vmatpush1.msra.mxu0 0.0
        %1351 = vmatprep.subr.mxu0 0.0
        %1352 = vmatpush1.msra.mxu0 0.0
        %1353 = vmatprep.subr.mxu0 0.0
        %1354 = vmatpush1.msra.mxu0 0.0
        %1355 = vmatprep.subr.mxu0 0.0
        %1356 = vmatpush1.msra.mxu0 0.0
        %1357 = vmatprep.subr.mxu0 0.0
        %1358 = vmatpush1.msra.mxu0 0.0
        %1359 = vmatprep.subr.mxu0 0.0
        %1360 = vmatpush1.msra.mxu0 0.0
        %1361 = vmatprep.subr.mxu0 0.0
        %1362 = vmatpush1.msra.mxu0 0.0
        %1363 = vmatprep.subr.mxu0 0.0
        %1364 = vmatpush1.msra.mxu0 0.0
        %1365 = vmatprep.subr.mxu0 0.0
        %1366 = vmatpush1.msra.mxu0 0.0
        %1367 = vmatprep.subr.mxu0 0.0
        %1368 = vmatpush1.msra.mxu0 0.0
        %1369 = vmatprep.mubr.f32.mxu0 0.0
        %v1370 = vand.u32 %v1299, 4294901760
        %v1371 = vsub.f32 %v1299, %v1370
        %v1372 = vand.u32 %v1371, 4294901760
        %v1373 = vsub.f32 %v1371, %v1372
        %v1374 = vand.u32 %v1373, 4294901760
        %1375 = vmatmul.mubr.f32.gmra.mrb[0].mxu0 %v1374
        %v1376 = vpop.f32.mrb[0].mxu0
        %v1377 = vadd.f32 %v1296, %v1376
        %v1378 = vpop.f32.mrb[0].mxu0
        %1379 = vdwg.mxu0
        %1380 = vmatprep.subr.mxu0 0.0
        %v1381 = vand.u32 %v1287, 4294901760
        %v1382 = vsub.f32 %v1287, %v1381
        %v1383 = vand.u32 %v1382, 4294901760
        %v1384 = vsub.f32 %v1382, %v1383
        %v1385 = vand.u32 %v1384, 4294901760
        %1386 = vmatpush1.msra.mxu0 %v1385
        %1387 = vmatprep.subr.mxu0 0.0
        %v1388 = vand.u32 %v1288, 4294901760
        %v1389 = vsub.f32 %v1288, %v1388
        %v1390 = vand.u32 %v1389, 4294901760
        %v1391 = vsub.f32 %v1389, %v1390
        %v1392 = vand.u32 %v1391, 4294901760
        %1393 = vmatpush1.msra.mxu0 %v1392
        %1394 = vmatprep.subr.mxu0 0.0
        %v1395 = vand.u32 %v1289, 4294901760
        %v1396 = vsub.f32 %v1289, %v1395
        %v1397 = vand.u32 %v1396, 4294901760
        %v1398 = vsub.f32 %v1396, %v1397
        %v1399 = vand.u32 %v1398, 4294901760
        %1400 = vmatpush1.msra.mxu0 %v1399
        %1401 = vmatprep.subr.mxu0 0.0
        %v1402 = vand.u32 %v1290, 4294901760
        %v1403 = vsub.f32 %v1290, %v1402
        %v1404 = vand.u32 %v1403, 4294901760
        %v1405 = vsub.f32 %v1403, %v1404
        %v1406 = vand.u32 %v1405, 4294901760
        %1407 = vmatpush1.msra.mxu0 %v1406
        %1408 = vmatprep.subr.mxu0 0.0
        %1409 = vmatpush1.msra.mxu0 0.0
        %1410 = vmatprep.subr.mxu0 0.0
        %1411 = vmatpush1.msra.mxu0 0.0
        %1412 = vmatprep.subr.mxu0 0.0
        %1413 = vmatpush1.msra.mxu0 0.0
        %1414 = vmatprep.subr.mxu0 0.0
        %1415 = vmatpush1.msra.mxu0 0.0
        %1416 = vmatprep.subr.mxu0 0.0
        %1417 = vmatpush1.msra.mxu0 0.0
        %1418 = vmatprep.subr.mxu0 0.0
        %1419 = vmatpush1.msra.mxu0 0.0
        %1420 = vmatprep.subr.mxu0 0.0
        %1421 = vmatpush1.msra.mxu0 0.0
        %1422 = vmatprep.subr.mxu0 0.0
        %1423 = vmatpush1.msra.mxu0 0.0
        %1424 = vmatprep.subr.mxu0 0.0
        %1425 = vmatpush1.msra.mxu0 0.0
        %1426 = vmatprep.subr.mxu0 0.0
        %1427 = vmatpush1.msra.mxu0 0.0
        %1428 = vmatprep.subr.mxu0 0.0
        %1429 = vmatpush1.msra.mxu0 0.0
        %1430 = vmatprep.subr.mxu0 0.0
        %1431 = vmatpush1.msra.mxu0 0.0
        %1432 = vmatprep.subr.mxu0 0.0
        %1433 = vmatpush1.msra.mxu0 0.0
        %1434 = vmatprep.subr.mxu0 0.0
        %1435 = vmatpush1.msra.mxu0 0.0
        %1436 = vmatprep.subr.mxu0 0.0
        %1437 = vmatpush1.msra.mxu0 0.0
        %1438 = vmatprep.subr.mxu0 0.0
        %1439 = vmatpush1.msra.mxu0 0.0
        %1440 = vmatprep.subr.mxu0 0.0
        %1441 = vmatpush1.msra.mxu0 0.0
        %1442 = vmatprep.subr.mxu0 0.0
        %1443 = vmatpush1.msra.mxu0 0.0
        %1444 = vmatprep.subr.mxu0 0.0
        %1445 = vmatpush1.msra.mxu0 0.0
        %1446 = vmatprep.subr.mxu0 0.0
        %1447 = vmatpush1.msra.mxu0 0.0
        %1448 = vmatprep.subr.mxu0 0.0
        %1449 = vmatpush1.msra.mxu0 0.0
        %1450 = vmatprep.subr.mxu0 0.0
        %1451 = vmatpush1.msra.mxu0 0.0
        %1452 = vmatprep.subr.mxu0 0.0
        %1453 = vmatpush1.msra.mxu0 0.0
        %1454 = vmatprep.subr.mxu0 0.0
        %1455 = vmatpush1.msra.mxu0 0.0
        %1456 = vmatprep.subr.mxu0 0.0
        %1457 = vmatpush1.msra.mxu0 0.0
        %1458 = vmatprep.subr.mxu0 0.0
        %1459 = vmatpush1.msra.mxu0 0.0
        %1460 = vmatprep.subr.mxu0 0.0
        %1461 = vmatpush1.msra.mxu0 0.0
        %1462 = vmatprep.subr.mxu0 0.0
        %1463 = vmatpush1.msra.mxu0 0.0
        %1464 = vmatprep.mubr.f32.mxu0 0.0
        %v1465 = vand.u32 %v1299, 4294901760
        %1466 = vmatmul.mubr.f32.gmra.mrb[0].mxu0 %v1465
        %v1467 = vpop.f32.mrb[0].mxu0
        %v1468 = vadd.f32 %v1377, %v1467
        %v1469 = vpop.f32.mrb[0].mxu0
        %1470 = vdwg.mxu0
        %1471 = vmatprep.subr.mxu0 0.0
        %v1472 = vand.u32 %v1287, 4294901760
        %v1473 = vsub.f32 %v1287, %v1472
        %1474 = vmatpush1.msra.mxu0 %v1473
        %1475 = vmatprep.subr.mxu0 0.0
        %v1476 = vand.u32 %v1288, 4294901760
        %v1477 = vsub.f32 %v1288, %v1476
        %1478 = vmatpush1.msra.mxu0 %v1477
        %1479 = vmatprep.subr.mxu0 0.0
        %v1480 = vand.u32 %v1289, 4294901760
        %v1481 = vsub.f32 %v1289, %v1480
        %1482 = vmatpush1.msra.mxu0 %v1481
        %1483 = vmatprep.subr.mxu0 0.0
        %v1484 = vand.u32 %v1290, 4294901760
        %v1485 = vsub.f32 %v1290, %v1484
        %1486 = vmatpush1.msra.mxu0 %v1485
        %1487 = vmatprep.subr.mxu0 0.0
        %1488 = vmatpush1.msra.mxu0 0.0
        %1489 = vmatprep.subr.mxu0 0.0
        %1490 = vmatpush1.msra.mxu0 0.0
        %1491 = vmatprep.subr.mxu0 0.0
        %1492 = vmatpush1.msra.mxu0 0.0
        %1493 = vmatprep.subr.mxu0 0.0
        %1494 = vmatpush1.msra.mxu0 0.0
        %1495 = vmatprep.subr.mxu0 0.0
        %1496 = vmatpush1.msra.mxu0 0.0
        %1497 = vmatprep.subr.mxu0 0.0
        %1498 = vmatpush1.msra.mxu0 0.0
        %1499 = vmatprep.subr.mxu0 0.0
        %1500 = vmatpush1.msra.mxu0 0.0
        %1501 = vmatprep.subr.mxu0 0.0
        %1502 = vmatpush1.msra.mxu0 0.0
        %1503 = vmatprep.subr.mxu0 0.0
        %1504 = vmatpush1.msra.mxu0 0.0
        %1505 = vmatprep.subr.mxu0 0.0
        %1506 = vmatpush1.msra.mxu0 0.0
        %1507 = vmatprep.subr.mxu0 0.0
        %1508 = vmatpush1.msra.mxu0 0.0
        %1509 = vmatprep.subr.mxu0 0.0
        %1510 = vmatpush1.msra.mxu0 0.0
        %1511 = vmatprep.subr.mxu0 0.0
        %1512 = vmatpush1.msra.mxu0 0.0
        %1513 = vmatprep.subr.mxu0 0.0
        %1514 = vmatpush1.msra.mxu0 0.0
        %1515 = vmatprep.subr.mxu0 0.0
        %1516 = vmatpush1.msra.mxu0 0.0
        %1517 = vmatprep.subr.mxu0 0.0
        %1518 = vmatpush1.msra.mxu0 0.0
        %1519 = vmatprep.subr.mxu0 0.0
        %1520 = vmatpush1.msra.mxu0 0.0
        %1521 = vmatprep.subr.mxu0 0.0
        %1522 = vmatpush1.msra.mxu0 0.0
        %1523 = vmatprep.subr.mxu0 0.0
        %1524 = vmatpush1.msra.mxu0 0.0
        %1525 = vmatprep.subr.mxu0 0.0
        %1526 = vmatpush1.msra.mxu0 0.0
        %1527 = vmatprep.subr.mxu0 0.0
        %1528 = vmatpush1.msra.mxu0 0.0
        %1529 = vmatprep.subr.mxu0 0.0
        %1530 = vmatpush1.msra.mxu0 0.0
        %1531 = vmatprep.subr.mxu0 0.0
        %1532 = vmatpush1.msra.mxu0 0.0
        %1533 = vmatprep.subr.mxu0 0.0
        %1534 = vmatpush1.msra.mxu0 0.0
        %1535 = vmatprep.subr.mxu0 0.0
        %1536 = vmatpush1.msra.mxu0 0.0
        %1537 = vmatprep.subr.mxu0 0.0
        %1538 = vmatpush1.msra.mxu0 0.0
        %1539 = vmatprep.subr.mxu0 0.0
        %1540 = vmatpush1.msra.mxu0 0.0
        %1541 = vmatprep.subr.mxu0 0.0
        %1542 = vmatpush1.msra.mxu0 0.0
        %1543 = vmatprep.mubr.f32.mxu0 0.0
        %v1544 = vand.u32 %v1299, 4294901760
        %v1545 = vsub.f32 %v1299, %v1544
        %1546 = vmatmul.mubr.f32.gmra.mrb[0].mxu0 %v1545
        %v1547 = vpop.f32.mrb[0].mxu0
        %v1548 = vadd.f32 %v1468, %v1547
        %v1549 = vpop.f32.mrb[0].mxu0
        %1550 = vdwg.mxu0
        %1551 = vmatprep.subr.mxu0 0.0
        %v1552 = vand.u32 %v1287, 4294901760
        %1553 = vmatpush1.msra.mxu0 %v1552
        %1554 = vmatprep.subr.mxu0 0.0
        %v1555 = vand.u32 %v1288, 4294901760
        %1556 = vmatpush1.msra.mxu0 %v1555
        %1557 = vmatprep.subr.mxu0 0.0
        %v1558 = vand.u32 %v1289, 4294901760
        %1559 = vmatpush1.msra.mxu0 %v1558
        %1560 = vmatprep.subr.mxu0 0.0
        %v1561 = vand.u32 %v1290, 4294901760
        %1562 = vmatpush1.msra.mxu0 %v1561
        %1563 = vmatprep.subr.mxu0 0.0
        %1564 = vmatpush1.msra.mxu0 0.0
        %1565 = vmatprep.subr.mxu0 0.0
        %1566 = vmatpush1.msra.mxu0 0.0
        %1567 = vmatprep.subr.mxu0 0.0
        %1568 = vmatpush1.msra.mxu0 0.0
        %1569 = vmatprep.subr.mxu0 0.0
        %1570 = vmatpush1.msra.mxu0 0.0
        %1571 = vmatprep.subr.mxu0 0.0
        %1572 = vmatpush1.msra.mxu0 0.0
        %1573 = vmatprep.subr.mxu0 0.0
        %1574 = vmatpush1.msra.mxu0 0.0
        %1575 = vmatprep.subr.mxu0 0.0
        %1576 = vmatpush1.msra.mxu0 0.0
        %1577 = vmatprep.subr.mxu0 0.0
        %1578 = vmatpush1.msra.mxu0 0.0
        %1579 = vmatprep.subr.mxu0 0.0
        %1580 = vmatpush1.msra.mxu0 0.0
        %1581 = vmatprep.subr.mxu0 0.0
        %1582 = vmatpush1.msra.mxu0 0.0
        %1583 = vmatprep.subr.mxu0 0.0
        %1584 = vmatpush1.msra.mxu0 0.0
        %1585 = vmatprep.subr.mxu0 0.0
        %1586 = vmatpush1.msra.mxu0 0.0
        %1587 = vmatprep.subr.mxu0 0.0
        %1588 = vmatpush1.msra.mxu0 0.0
        %1589 = vmatprep.subr.mxu0 0.0
        %1590 = vmatpush1.msra.mxu0 0.0
        %1591 = vmatprep.subr.mxu0 0.0
        %1592 = vmatpush1.msra.mxu0 0.0
        %1593 = vmatprep.subr.mxu0 0.0
        %1594 = vmatpush1.msra.mxu0 0.0
        %1595 = vmatprep.subr.mxu0 0.0
        %1596 = vmatpush1.msra.mxu0 0.0
        %1597 = vmatprep.subr.mxu0 0.0
        %1598 = vmatpush1.msra.mxu0 0.0
        %1599 = vmatprep.subr.mxu0 0.0
        %1600 = vmatpush1.msra.mxu0 0.0
        %1601 = vmatprep.subr.mxu0 0.0
        %1602 = vmatpush1.msra.mxu0 0.0
        %1603 = vmatprep.subr.mxu0 0.0
        %1604 = vmatpush1.msra.mxu0 0.0
        %1605 = vmatprep.subr.mxu0 0.0
        %1606 = vmatpush1.msra.mxu0 0.0
        %1607 = vmatprep.subr.mxu0 0.0
        %1608 = vmatpush1.msra.mxu0 0.0
        %1609 = vmatprep.subr.mxu0 0.0
        %1610 = vmatpush1.msra.mxu0 0.0
        %1611 = vmatprep.subr.mxu0 0.0
        %1612 = vmatpush1.msra.mxu0 0.0
        %1613 = vmatprep.subr.mxu0 0.0
        %1614 = vmatpush1.msra.mxu0 0.0
        %1615 = vmatprep.subr.mxu0 0.0
        %1616 = vmatpush1.msra.mxu0 0.0
        %1617 = vmatprep.subr.mxu0 0.0
        %1618 = vmatpush1.msra.mxu0 0.0
        %1619 = vmatprep.mubr.f32.mxu0 0.0
        %v1620 = vand.u32 %v1299, 4294901760
        %v1621 = vsub.f32 %v1299, %v1620
        %v1622 = vand.u32 %v1621, 4294901760
        %1623 = vmatmul.mubr.f32.gmra.mrb[0].mxu0 %v1622
        %v1624 = vpop.f32.mrb[0].mxu0
        %v1625 = vadd.f32 %v1548, %v1624
        %v1626 = vpop.f32.mrb[0].mxu0
        %1627 = vdwg.mxu0
        %1628 = vmatprep.subr.mxu0 0.0
        %v1629 = vand.u32 %v1287, 4294901760
        %v1630 = vsub.f32 %v1287, %v1629
        %v1631 = vand.u32 %v1630, 4294901760
        %1632 = vmatpush1.msra.mxu0 %v1631
        %1633 = vmatprep.subr.mxu0 0.0
        %v1634 = vand.u32 %v1288, 4294901760
        %v1635 = vsub.f32 %v1288, %v1634
        %v1636 = vand.u32 %v1635, 4294901760
        %1637 = vmatpush1.msra.mxu0 %v1636
        %1638 = vmatprep.subr.mxu0 0.0
        %v1639 = vand.u32 %v1289, 4294901760
        %v1640 = vsub.f32 %v1289, %v1639
        %v1641 = vand.u32 %v1640, 4294901760
        %1642 = vmatpush1.msra.mxu0 %v1641
        %1643 = vmatprep.subr.mxu0 0.0
        %v1644 = vand.u32 %v1290, 4294901760
        %v1645 = vsub.f32 %v1290, %v1644
        %v1646 = vand.u32 %v1645, 4294901760
        %1647 = vmatpush1.msra.mxu0 %v1646
        %1648 = vmatprep.subr.mxu0 0.0
        %1649 = vmatpush1.msra.mxu0 0.0
        %1650 = vmatprep.subr.mxu0 0.0
        %1651 = vmatpush1.msra.mxu0 0.0
        %1652 = vmatprep.subr.mxu0 0.0
        %1653 = vmatpush1.msra.mxu0 0.0
        %1654 = vmatprep.subr.mxu0 0.0
        %1655 = vmatpush1.msra.mxu0 0.0
        %1656 = vmatprep.subr.mxu0 0.0
        %1657 = vmatpush1.msra.mxu0 0.0
        %1658 = vmatprep.subr.mxu0 0.0
        %1659 = vmatpush1.msra.mxu0 0.0
        %1660 = vmatprep.subr.mxu0 0.0
        %1661 = vmatpush1.msra.mxu0 0.0
        %1662 = vmatprep.subr.mxu0 0.0
        %1663 = vmatpush1.msra.mxu0 0.0
        %1664 = vmatprep.subr.mxu0 0.0
        %1665 = vmatpush1.msra.mxu0 0.0
        %1666 = vmatprep.subr.mxu0 0.0
        %1667 = vmatpush1.msra.mxu0 0.0
        %1668 = vmatprep.subr.mxu0 0.0
        %1669 = vmatpush1.msra.mxu0 0.0
        %1670 = vmatprep.subr.mxu0 0.0
        %1671 = vmatpush1.msra.mxu0 0.0
        %1672 = vmatprep.subr.mxu0 0.0
        %1673 = vmatpush1.msra.mxu0 0.0
        %1674 = vmatprep.subr.mxu0 0.0
        %1675 = vmatpush1.msra.mxu0 0.0
        %1676 = vmatprep.subr.mxu0 0.0
        %1677 = vmatpush1.msra.mxu0 0.0
        %1678 = vmatprep.subr.mxu0 0.0
        %1679 = vmatpush1.msra.mxu0 0.0
        %1680 = vmatprep.subr.mxu0 0.0
        %1681 = vmatpush1.msra.mxu0 0.0
        %1682 = vmatprep.subr.mxu0 0.0
        %1683 = vmatpush1.msra.mxu0 0.0
        %1684 = vmatprep.subr.mxu0 0.0
        %1685 = vmatpush1.msra.mxu0 0.0
        %1686 = vmatprep.subr.mxu0 0.0
        %1687 = vmatpush1.msra.mxu0 0.0
        %1688 = vmatprep.subr.mxu0 0.0
        %1689 = vmatpush1.msra.mxu0 0.0
        %1690 = vmatprep.subr.mxu0 0.0
        %1691 = vmatpush1.msra.mxu0 0.0
        %1692 = vmatprep.subr.mxu0 0.0
        %1693 = vmatpush1.msra.mxu0 0.0
        %1694 = vmatprep.subr.mxu0 0.0
        %1695 = vmatpush1.msra.mxu0 0.0
        %1696 = vmatprep.subr.mxu0 0.0
        %1697 = vmatpush1.msra.mxu0 0.0
        %1698 = vmatprep.subr.mxu0 0.0
        %1699 = vmatpush1.msra.mxu0 0.0
        %1700 = vmatprep.subr.mxu0 0.0
        %1701 = vmatpush1.msra.mxu0 0.0
        %1702 = vmatprep.subr.mxu0 0.0
        %1703 = vmatpush1.msra.mxu0 0.0
        %1704 = vmatprep.mubr.f32.mxu0 0.0
        %v1705 = vand.u32 %v1299, 4294901760
        %1706 = vmatmul.mubr.f32.gmra.mrb[0].mxu0 %v1705
        %v1707 = vpop.f32.mrb[0].mxu0
        %v1708 = vadd.f32 %v1625, %v1707
        %v1709 = vpop.f32.mrb[0].mxu0
        %1710 = vdwg.mxu0
        %1711 = vmatprep.subr.mxu0 0.0
        %v1712 = vand.u32 %v1287, 4294901760
        %1713 = vmatpush1.msra.mxu0 %v1712
        %1714 = vmatprep.subr.mxu0 0.0
        %v1715 = vand.u32 %v1288, 4294901760
        %1716 = vmatpush1.msra.mxu0 %v1715
        %1717 = vmatprep.subr.mxu0 0.0
        %v1718 = vand.u32 %v1289, 4294901760
        %1719 = vmatpush1.msra.mxu0 %v1718
        %1720 = vmatprep.subr.mxu0 0.0
        %v1721 = vand.u32 %v1290, 4294901760
        %1722 = vmatpush1.msra.mxu0 %v1721
        %1723 = vmatprep.subr.mxu0 0.0
        %1724 = vmatpush1.msra.mxu0 0.0
        %1725 = vmatprep.subr.mxu0 0.0
        %1726 = vmatpush1.msra.mxu0 0.0
        %1727 = vmatprep.subr.mxu0 0.0
        %1728 = vmatpush1.msra.mxu0 0.0
        %1729 = vmatprep.subr.mxu0 0.0
        %1730 = vmatpush1.msra.mxu0 0.0
        %1731 = vmatprep.subr.mxu0 0.0
        %1732 = vmatpush1.msra.mxu0 0.0
        %1733 = vmatprep.subr.mxu0 0.0
        %1734 = vmatpush1.msra.mxu0 0.0
        %1735 = vmatprep.subr.mxu0 0.0
        %1736 = vmatpush1.msra.mxu0 0.0
        %1737 = vmatprep.subr.mxu0 0.0
        %1738 = vmatpush1.msra.mxu0 0.0
        %1739 = vmatprep.subr.mxu0 0.0
        %1740 = vmatpush1.msra.mxu0 0.0
        %1741 = vmatprep.subr.mxu0 0.0
        %1742 = vmatpush1.msra.mxu0 0.0
        %1743 = vmatprep.subr.mxu0 0.0
        %1744 = vmatpush1.msra.mxu0 0.0
        %1745 = vmatprep.subr.mxu0 0.0
        %1746 = vmatpush1.msra.mxu0 0.0
        %1747 = vmatprep.subr.mxu0 0.0
        %1748 = vmatpush1.msra.mxu0 0.0
        %1749 = vmatprep.subr.mxu0 0.0
        %1750 = vmatpush1.msra.mxu0 0.0
        %1751 = vmatprep.subr.mxu0 0.0
        %1752 = vmatpush1.msra.mxu0 0.0
        %1753 = vmatprep.subr.mxu0 0.0
        %1754 = vmatpush1.msra.mxu0 0.0
        %1755 = vmatprep.subr.mxu0 0.0
        %1756 = vmatpush1.msra.mxu0 0.0
        %1757 = vmatprep.subr.mxu0 0.0
        %1758 = vmatpush1.msra.mxu0 0.0
        %1759 = vmatprep.subr.mxu0 0.0
        %1760 = vmatpush1.msra.mxu0 0.0
        %1761 = vmatprep.subr.mxu0 0.0
        %1762 = vmatpush1.msra.mxu0 0.0
        %1763 = vmatprep.subr.mxu0 0.0
        %1764 = vmatpush1.msra.mxu0 0.0
        %1765 = vmatprep.subr.mxu0 0.0
        %1766 = vmatpush1.msra.mxu0 0.0
        %1767 = vmatprep.subr.mxu0 0.0
        %1768 = vmatpush1.msra.mxu0 0.0
        %1769 = vmatprep.subr.mxu0 0.0
        %1770 = vmatpush1.msra.mxu0 0.0
        %1771 = vmatprep.subr.mxu0 0.0
        %1772 = vmatpush1.msra.mxu0 0.0
        %1773 = vmatprep.subr.mxu0 0.0
        %1774 = vmatpush1.msra.mxu0 0.0
        %1775 = vmatprep.subr.mxu0 0.0
        %1776 = vmatpush1.msra.mxu0 0.0
        %1777 = vmatprep.subr.mxu0 0.0
        %1778 = vmatpush1.msra.mxu0 0.0
        %1779 = vmatprep.mubr.f32.mxu0 0.0
        %v1780 = vand.u32 %v1299, 4294901760
        %1781 = vmatmul.mubr.f32.gmra.mrb[0].mxu0 %v1780
        %v1782 = vpop.f32.mrb[0].mxu0
        %v1783 = vadd.f32 %v1708, %v1782
        %v1784 = vpop.f32.mrb[0].mxu0
        %1785 = vdwg.mxu0
        %vm1786 = vcmask 48128
        %1787 = vst.msk [vmem:[%s311] sm:$0xff] %vm1786, %v1783
        %s1788 = sand.u32 %s183, 1
        %s1789 = scalar_lea.sflag [#allocation3], %s1788
        %s1790 = sand.u32 %s183, 1
        %s1791 = smul.addr %s1790, 8
        %s1792 = scalar_lea.vmem [#allocation2], %s1791
        %p1793 = scmp.lt.s32.totalorder %s23, 1
        %s1794 = scalar_select %p1793, %s23, 1
        %s1795 = smul.addr %s1794, 8
        %s1796 = scalar_lea.vmem %s8, %s1795
        // Predicated region
        $region49: #{model_forward.15} parent=47 // pred_check
          %p1797 = pneg %p193
        $region50: #{model_forward.15} parent=47 // pred_check_branch
          %1799 = sbr.rel (%p1797) target = $region52
        $region51: #{model_forward.15} parent=47 // pred_region
          %s1801 = ssub.s32 128, 128
          %1802 = vsyncadd %s1789, %s1801
          %s1803 = smul.addr %s23, 128
          %s1804 = scalar_lea.hbm %s7, %s1803
          %s1806 = sshll.u32 %s1792, 4
          %s1807 = int_to_ptr.vmem [resolvable:$true] %s1806
          %1809 = dma.vmem_to_hbm [thread:$0]  %s1807, 128, %s1804, %s1789
        $region52: #{model_forward.15} parent=47 // pred_fallthru
          _
        // Predicated region
        $region53: #{model_forward.15} parent=47 // pred_check
          %p1810 = pneg %p219
        $region54: #{model_forward.15} parent=47 // pred_check_branch
          %1812 = sbr.rel (%p1810) target = $region56
        $region55: #{model_forward.15} parent=47 // pred_region
          _
        $region56: #{model_forward.15} parent=47 // pred_fallthru
          _
      $region48: #{model_forward.15} parent=5 // pred_fallthru
        _
      %p1813 = scmp.le.s32.totalorder 2, %s18
      // Predicated region
      $region57: #{model_forward.15} parent=5 // pred_check
        %p1814 = pneg %p1813
      $region58: #{model_forward.15} parent=5 // pred_check_branch
        %1816 = sbr.rel (%p1814) target = $region60
      $region59: #{model_forward.15} parent=5 // pred_region
        %s1817 = ssub.s32 %s18, 2
        // Predicated region
        $region61: #{model_forward.15} parent=59 // pred_check
          %p1818 = pneg %p199
        $region62: #{model_forward.15} parent=59 // pred_check_branch
          %1820 = sbr.rel (%p1818) target = $region64
        $region63: #{model_forward.15} parent=59 // pred_region
          %s1821 = sand.u32 %s184, 1
          %s1822 = scalar_lea.sflag [#allocation3], %s1821
          %s1823 = sand.u32 %s184, 1
          %s1824 = smul.addr %s1823, 8
          %s1825 = scalar_lea.vmem [#allocation2], %s1824
          %1826 = dma.done %s1822, 128
        $region64: #{model_forward.15} parent=59 // pred_fallthru
          _
        // Predicated region
        $region65: #{model_forward.15} parent=59 // pred_check
          %p1827 = pneg %p225
        $region66: #{model_forward.15} parent=59 // pred_check_branch
          %1829 = sbr.rel (%p1827) target = $region68
        $region67: #{model_forward.15} parent=59 // pred_region
          %p1830 = scmp.lt.s32.totalorder %s24, 1
          %s1831 = scalar_select %p1830, %s24, 1
          %s1832 = smul.addr %s1831, 8
          %s1833 = scalar_lea.vmem %s8, %s1832
        $region68: #{model_forward.15} parent=59 // pred_fallthru
          _
      $region60: #{model_forward.15} parent=5 // pred_fallthru
        _
    $region6: #{model_forward.15} parent=1 // loop_footer
      %s22 = sadd.s32 1, %s18
    $region7: #{model_forward.15} parent=1 // loop_footer_branch
      %17 = sbr.rel target = $region3
    $region8: #{model_forward.15} parent=1 // loop_exit
      _
    %1834 = vsyncpa [#allocation3], 1
    %s1835 = scalar_lea.sflag [#allocation3], 1
    %1836 = vsyncpa %s1835, 1

</llo_original>
